<compile_context>
chip_gen: v7x
topology: tpu7x:2x2x1
jax: 0.10.0
libtpu: 0.0.40
codegen_flags: <defaults>
</compile_context>

<pallas_src>
import functools
import math

import jax
import jax.numpy as jnp
from jax.experimental import pallas as pl
from jax.experimental.pallas import tpu as pltpu


# ---------------------------------------------------------------------------
# Kernel 1: full-sequence projections.
#   - one fused [tn, cp] @ [cp, 2*dp] matmul per om input -> [key | value-part]
#   - keys written pre-transposed ([dp, tn]) so kernel 2 never transposes
#   - K/V emitted in bf16, f32 accumulation inside
# ---------------------------------------------------------------------------
def _proj_kernel(sp_ref, om1_ref, om2_ref,
                 wom1_ref, wom2_ref, wsp_ref,
                 b1k_ref, b2k_ref, bv_ref,
                 k1t_ref, k2t_ref, v_ref, *, dp):
    f32 = jnp.float32

    def mm(a, b):
        return jax.lax.dot_general(a, b, (((1,), (0,)), ((), ())),
                                   preferred_element_type=f32)

    r1 = mm(om1_ref[...], wom1_ref[...])          # [tn, 2*dp] = [k1 | v_om1]
    r2 = mm(om2_ref[...], wom2_ref[...])          # [tn, 2*dp] = [k2 | v_om2]

    k1 = r1[:, :dp] + b1k_ref[...]
    k2 = r2[:, :dp] + b2k_ref[...]
    v = mm(sp_ref[...], wsp_ref[...]) + r1[:, dp:] + r2[:, dp:] + bv_ref[...]

    k1t_ref[...] = k1.T.astype(k1t_ref.dtype)     # [dp, tn], bf16
    k2t_ref[...] = k2.T.astype(k2t_ref.dtype)
    v_ref[...] = v.astype(v_ref.dtype)


# ---------------------------------------------------------------------------
# Kernel 2: attention + confidence blend, tiled over query rows.
#   - K^T / V / weights are VMEM-resident (constant index maps, 1-buffered)
#   - softmax normalized after the PV matmul
#   - confidence path computed after the attends (smaller live set)
# ---------------------------------------------------------------------------
def _attn_kernel(mask_ref, sp_ref, om1_ref, om2_ref,
                 k1t_ref, k2t_ref, v_ref,
                 wq_c_ref, bq_ref, wc_om_ref, bc_ref,
                 out_ref, *, dp, apply_mask):
    f32 = jnp.float32

    def mm(a, b):
        return jax.lax.dot_general(a, b, (((1,), (0,)), ((), ())),
                                   preferred_element_type=f32)

    sp = sp_ref[...]

    # Fused [q | sp@wc_sp] projection; 1/sqrt(d) is pre-folded into wq/bq.
    qc = mm(sp, wq_c_ref[...])                              # [tq, 2*dp] f32
    q = (qc[:, :dp] + bq_ref[...]).astype(k1t_ref.dtype)    # bf16 query
    sp_c = qc[:, dp:]                                       # conf sp-part (f32)

    v = v_ref[...]                                          # [Np, dp] bf16
    bias = mask_ref[...] if apply_mask else None            # [1, Np] 0 / -1e30

    def attend(kt_ref):
        s = mm(q, kt_ref[...])                              # [tq, Np] f32 acc
        if apply_mask:
            s = s + bias
        m = jnp.max(s, axis=-1, keepdims=True)
        e = jnp.exp(s - m)                                  # f32 exp on the EUP
        r = pl.reciprocal(jnp.sum(e, axis=-1, keepdims=True), approx=True)
        # Normalize after the PV matmul: [tq, dp] multiply instead of [tq, Np].
        return mm(e.astype(v.dtype), v) * r                 # [tq, dp] f32

    attn1 = attend(k1t_ref)
    attn2 = attend(k2t_ref)

    # Confidence path last: c1/c2/w1 are not live across the big score slabs.
    # (conf2 layer of the PyTorch module is unused in forward; conf1 is applied
    # to both [sp, om1] and [sp, om2] — reproduced exactly.)
    c1 = jax.nn.sigmoid(sp_c + mm(om1_ref[...], wc_om_ref[...]) + bc_ref[...])
    c2 = jax.nn.sigmoid(sp_c + mm(om2_ref[...], wc_om_ref[...]) + bc_ref[...])
    w1 = jax.nn.sigmoid(c1 - c2)        # = exp(c1) / (exp(c1) + exp(c2))

    out_ref[...] = (attn2 + w1 * (attn1 - attn2)).astype(out_ref.dtype)


# ---------------------------------------------------------------------------
# Wrapper: lane-dense padding, key masking, BlockSpecs, grids.
# ---------------------------------------------------------------------------
def _round_up(x, m):
    return ((x + m - 1) // m) * m


def _pad2(x, rows, cols):
    return jnp.pad(x, ((0, rows - x.shape[0]), (0, cols - x.shape[1])))


def _pick_tile(n, pref):
    """Largest multiple of 128 that divides n (n is a multiple of 128), <= pref."""
    best, t = 128, 128
    while t <= min(n, pref):
        if n % t == 0:
            best = t
        t += 128
    return best


def _vmem_limit_bytes():
    # Generation-aware: ~75% of physical VMEM (v5e/v6e -> ~96 MiB, v7x -> ~48 MiB),
    # leaving headroom for compiler-internal scratch and the f32 score slab.
    try:
        cap = pltpu.get_tpu_info().vmem_capacity_bytes
    except Exception:
        cap = 64 * 1024 * 1024
    return max(32 * 1024 * 1024, int(cap) * 3 // 4)


def _spec(shape, index_map, buffers):
    if buffers is None:
        return pl.BlockSpec(shape, index_map)
    # Resident operand (constant index map): no need to double-buffer.
    return pl.BlockSpec(shape, index_map, pipeline_mode=pl.Buffered(buffers))


def sc_attn_pallas(sp, om1, om2, params, *, tq=256):
    N, in_ch = sp.shape
    out_ch = params["wq"].shape[1]
    dtype = sp.dtype
    kv_dtype = jnp.bfloat16          # MXU-native storage for q/K/V/P

    cp = _round_up(in_ch, 128)       # lane-dense contraction dim
    dp = _round_up(out_ch, 128)      # lane-dense head / output dim
    Np = _round_up(N, 128)           # lane-dense sequence (padded keys masked)

    # Tile sizes. tq=256 sits inside both recommended ranges (v7x: 128-256,
    # v5e/v6e: 256-512). tn: biggest 128-multiple dividing Np, capped so the
    # triple row-tile stays ~2 MiB (per-step overhead amortized, lane-dense DMA).
    tq = _pick_tile(Np, tq)
    tn_pref = max(128, min(1024, ((2 * 1024 * 1024) // (3 * cp * 4)) // 128 * 128))
    tn = _pick_tile(Np, tn_pref)

    # ---- pad activations (zero rows/cols; exact — see masking below) --------
    spP = _pad2(sp, Np, cp)
    om1P = _pad2(om1, Np, cp)
    om2P = _pad2(om2, Np, cp)

    # ---- pad & pack weights --------------------------------------------------
    scale = 1.0 / math.sqrt(out_ch)
    w1kP = _pad2(params["w1k"], cp, dp)
    w2kP = _pad2(params["w2k"], cp, dp)
    wom1P = jnp.concatenate([w1kP, _pad2(params["wv_o1"], cp, dp)], axis=1)  # [cp,2dp]
    wom2P = jnp.concatenate([w2kP, _pad2(params["wv_o2"], cp, dp)], axis=1)  # [cp,2dp]
    wspP = _pad2(params["wv_sp"], cp, dp)
    b1kP = _pad2(params["b1k"], 1, dp)
    b2kP = _pad2(params["b2k"], 1, dp)
    bvP = _pad2(params["bv"], 1, dp)

    # 1/sqrt(d) folded into wq/bq once; wq packed with wc_sp (sp read once).
    wq_cP = jnp.concatenate([_pad2(params["wq"] * scale, cp, dp),
                             _pad2(params["wc_sp"], cp, dp)], axis=1)        # [cp,2dp]
    bqP = _pad2(params["bq"] * scale, 1, dp)
    wc_omP = _pad2(params["wc_om"], cp, dp)
    bcP = _pad2(params["bc"], 1, dp)

    # Additive score mask for padded keys (only applied when Np != N).
    apply_mask = Np != N
    if apply_mask:
        col = jnp.arange(Np, dtype=jnp.int32)[None, :]
        mask = jnp.where(col < N, 0.0, -1e30).astype(jnp.float32)
    else:
        mask = jnp.zeros((1, Np), jnp.float32)

    cparams = pltpu.CompilerParams(
        dimension_semantics=("parallel",),
        vmem_limit_bytes=_vmem_limit_bytes(),
    )

    row = lambda i: (i, 0)
    colm = lambda i: (0, i)
    rep = lambda i: (0, 0)

    def run(resident_buffers):
        res = lambda shape: _spec(shape, rep, resident_buffers)

        # ---- kernel 1: K / V projections over the full (padded) sequence ----
        k1t, k2t, v = pl.pallas_call(
            functools.partial(_proj_kernel, dp=dp),
            grid=(Np // tn,),
            in_specs=[
                pl.BlockSpec((tn, cp), row),          # sp
                pl.BlockSpec((tn, cp), row),          # om1
                pl.BlockSpec((tn, cp), row),          # om2
                res((cp, 2 * dp)),                    # [w1k | wv_o1]
                res((cp, 2 * dp)),                    # [w2k | wv_o2]
                res((cp, dp)),                        # wv_sp
                res((1, dp)), res((1, dp)), res((1, dp)),   # b1k, b2k, bv
            ],
            out_specs=[
                pl.BlockSpec((dp, tn), colm),         # k1^T
                pl.BlockSpec((dp, tn), colm),         # k2^T
                pl.BlockSpec((tn, dp), row),          # v
            ],
            out_shape=[
                jax.ShapeDtypeStruct((dp, Np), kv_dtype),
                jax.ShapeDtypeStruct((dp, Np), kv_dtype),
                jax.ShapeDtypeStruct((Np, dp), kv_dtype),
            ],
            compiler_params=cparams,
        )(spP, om1P, om2P, wom1P, wom2P, wspP, b1kP, b2kP, bvP)

        # ---- kernel 2: attention + confidence blend over query tiles ---------
        outP = pl.pallas_call(
            functools.partial(_attn_kernel, dp=dp, apply_mask=apply_mask),
            grid=(Np // tq,),
            in_specs=[
                res((1, Np)),                         # key mask bias
                pl.BlockSpec((tq, cp), row),          # sp   (query tile)
                pl.BlockSpec((tq, cp), row),          # om1  (conf path)
                pl.BlockSpec((tq, cp), row),          # om2  (conf path)
                res((dp, Np)),                        # k1^T (resident)
                res((dp, Np)),                        # k2^T (resident)
                res((Np, dp)),                        # v    (resident)
                res((cp, 2 * dp)),                    # [wq*scale | wc_sp]
                res((1, dp)),                         # bq*scale
                res((cp, dp)),                        # wc_om
                res((1, dp)),                         # bc
            ],
            out_specs=pl.BlockSpec((tq, dp), row),
            out_shape=jax.ShapeDtypeStruct((Np, dp), dtype),
            compiler_params=cparams,
        )(mask, spP, om1P, om2P, k1t, k2t, v, wq_cP, bqP, wc_omP, bcP)
        return outP

    try:
        outP = run(1)        # single-buffer resident operands (key on v7x VMEM)
    except Exception:
        outP = run(None)     # fallback: default pipelining (older Pallas)

    return outP[:N, :out_ch]


# ---------------------------------------------------------------------------
# Pure-JAX reference matching the PyTorch forward semantics (unpadded, f32).
# ---------------------------------------------------------------------------
def sc_attn_reference(sp, om1, om2, params):
    q = sp @ params["wq"] + params["bq"]
    om1_k = om1 @ params["w1k"] + params["b1k"]
    om2_k = om2 @ params["w2k"] + params["b2k"]
    om_v = (sp @ params["wv_sp"] + om1 @ params["wv_o1"] + om2 @ params["wv_o2"]
            + params["bv"])
    scale = q.shape[-1] ** 0.5
    attn1 = jax.nn.softmax(q @ om1_k.T / scale, axis=-1) @ om_v
    attn2 = jax.nn.softmax(q @ om2_k.T / scale, axis=-1) @ om_v
    conf1 = jax.nn.sigmoid(sp @ params["wc_sp"] + om1 @ params["wc_om"] + params["bc"])
    conf2 = jax.nn.sigmoid(sp @ params["wc_sp"] + om2 @ params["wc_om"] + params["bc"])
    conf = jax.nn.softmax(jnp.stack([conf1, conf2], axis=-2), axis=-2)
    return conf[:, 0, :] * attn1 + conf[:, 1, :] * attn2


def init_params(key, in_ch, out_ch):
    """Deterministic init, PyTorch-Linear-style uniform bounds.  Weights stored
    pre-transposed as [in, out]; concat layers stored as row blocks."""
    ks = jax.random.split(key, 12)

    def lin(kw, kb, fan_in, fan_out):
        bound = 1.0 / (fan_in ** 0.5)
        w = jax.random.uniform(kw, (fan_in, fan_out), jnp.float32, -bound, bound)
        b = jax.random.uniform(kb, (1, fan_out), jnp.float32, -bound, bound)
        return w, b

    wq, bq = lin(ks[0], ks[1], in_ch, out_ch)
    w1k, b1k = lin(ks[2], ks[3], in_ch, out_ch)
    w2k, b2k = lin(ks[4], ks[5], in_ch, out_ch)
    wv, bv = lin(ks[6], ks[7], 3 * in_ch, out_ch)
    wc, bc = lin(ks[8], ks[9], 2 * in_ch, out_ch)
    _wc2, _bc2 = lin(ks[10], ks[11], 2 * in_ch, out_ch)   # conf2: unused in forward

    return {
        "wq": wq, "bq": bq,
        "w1k": w1k, "b1k": b1k,
        "w2k": w2k, "b2k": b2k,
        "wv_sp": wv[:in_ch], "wv_o1": wv[in_ch:2 * in_ch], "wv_o2": wv[2 * in_ch:],
        "bv": bv,
        "wc_sp": wc[:in_ch], "wc_om": wc[in_ch:], "bc": bc,
    }


if __name__ == "__main__":
    # N deliberately NOT a multiple of 128 to exercise the padded-key masking
    # path; in/out channels not multiples of 128 to exercise lane-dense padding.
    N, in_ch, out_ch = 500, 48, 40
    key = jax.random.PRNGKey(0)
    k_sp, k_o1, k_o2, k_p = jax.random.split(key, 4)

    sp = jax.random.normal(k_sp, (N, in_ch), jnp.float32)
    om1 = jax.random.normal(k_o1, (N, in_ch), jnp.float32)
    om2 = jax.random.normal(k_o2, (N, in_ch), jnp.float32)
    params = init_params(k_p, in_ch, out_ch)

    out = jax.block_until_ready(sc_attn_pallas(sp, om1, om2, params))
    ref = sc_attn_reference(sp, om1, om2, params)

    assert out.shape == (N, out_ch)
    err = float(jnp.max(jnp.abs(out - ref)))
    # bf16 q/K/V/P storage (f32 accumulation) + approx-reciprocal softmax
    # normalization keep the error comfortably below 5e-3 vs the f32 reference.
    assert err < 5e-3, f"mismatch vs reference: max abs err = {err}"
    print("KERNEL_OK")
</pallas_src>

<mosaic_0001>
module attributes {stable_mosaic.version = 11 : i64} {
  func.func @_proj_kernel(%arg0: i32, %arg1: memref<512x128xf32, #tpu.memory_space<vmem>>, %arg2: memref<512x128xf32, #tpu.memory_space<vmem>>, %arg3: memref<512x128xf32, #tpu.memory_space<vmem>>, %arg4: memref<128x256xf32, #tpu.memory_space<vmem>>, %arg5: memref<128x256xf32, #tpu.memory_space<vmem>>, %arg6: memref<128x128xf32, #tpu.memory_space<vmem>>, %arg7: memref<1x128xf32, #tpu.memory_space<vmem>>, %arg8: memref<1x128xf32, #tpu.memory_space<vmem>>, %arg9: memref<1x128xf32, #tpu.memory_space<vmem>>, %arg10: memref<128x512xbf16, #tpu.memory_space<vmem>>, %arg11: memref<128x512xbf16, #tpu.memory_space<vmem>>, %arg12: memref<512x128xbf16, #tpu.memory_space<vmem>>) attributes {dimension_semantics = [#tpu.dimension_semantics<parallel>], iteration_bounds = array<i64: 1>, scalar_prefetch = 0 : i64, scratch_operands = 0 : i64, tpu.core_type = #tpu.core_type<tc>, window_params = [{transform_indices = @transform_0, window_bounds = array<i64: 512, 128>}, {transform_indices = @transform_1, window_bounds = array<i64: 512, 128>}, {transform_indices = @transform_2, window_bounds = array<i64: 512, 128>}, {pipeline_mode = #tpu.pipeline_mode<synchronous>, transform_indices = @transform_3, window_bounds = array<i64: 128, 256>}, {pipeline_mode = #tpu.pipeline_mode<synchronous>, transform_indices = @transform_4, window_bounds = array<i64: 128, 256>}, {pipeline_mode = #tpu.pipeline_mode<synchronous>, transform_indices = @transform_5, window_bounds = array<i64: 128, 128>}, {pipeline_mode = #tpu.pipeline_mode<synchronous>, transform_indices = @transform_6, window_bounds = array<i64: 1, 128>}, {pipeline_mode = #tpu.pipeline_mode<synchronous>, transform_indices = @transform_7, window_bounds = array<i64: 1, 128>}, {pipeline_mode = #tpu.pipeline_mode<synchronous>, transform_indices = @transform_8, window_bounds = array<i64: 1, 128>}, {transform_indices = @transform_9, window_bounds = array<i64: 128, 512>}, {transform_indices = @transform_10, window_bounds = array<i64: 128, 512>}, {transform_indices = @transform_11, window_bounds = array<i64: 512, 128>}]} {
    %c0 = arith.constant 0 : index
    %c0_0 = arith.constant 0 : index
    %0 = vector.load %arg2[%c0, %c0_0] : memref<512x128xf32, #tpu.memory_space<vmem>>, vector<512x128xf32>
    %c0_1 = arith.constant 0 : index
    %c0_2 = arith.constant 0 : index
    %1 = vector.load %arg4[%c0_1, %c0_2] : memref<128x256xf32, #tpu.memory_space<vmem>>, vector<128x256xf32>
    %cst = arith.constant dense<0.000000e+00> : vector<512x256xf32>
    %2 = tpu.matmul %0, %1, %cst {dimension_numbers = #tpu.dot_dimension_numbers<[1], [0], [0], [1], [0, 0, 1, 1], [], []>} : vector<512x128xf32>, vector<128x256xf32>, vector<512x256xf32> -> vector<512x256xf32>
    %c0_3 = arith.constant 0 : index
    %c0_4 = arith.constant 0 : index
    %3 = vector.load %arg3[%c0_3, %c0_4] : memref<512x128xf32, #tpu.memory_space<vmem>>, vector<512x128xf32>
    %c0_5 = arith.constant 0 : index
    %c0_6 = arith.constant 0 : index
    %4 = vector.load %arg5[%c0_5, %c0_6] : memref<128x256xf32, #tpu.memory_space<vmem>>, vector<128x256xf32>
    %cst_7 = arith.constant dense<0.000000e+00> : vector<512x256xf32>
    %5 = tpu.matmul %3, %4, %cst_7 {dimension_numbers = #tpu.dot_dimension_numbers<[1], [0], [0], [1], [0, 0, 1, 1], [], []>} : vector<512x128xf32>, vector<128x256xf32>, vector<512x256xf32> -> vector<512x256xf32>
    %6 = vector.extract_strided_slice %2 {offsets = [0, 0], sizes = [512, 128], strides = [1, 1]} : vector<512x256xf32> to vector<512x128xf32>
    %c0_8 = arith.constant 0 : index
    %c0_9 = arith.constant 0 : index
    %7 = vector.load %arg7[%c0_8, %c0_9] : memref<1x128xf32, #tpu.memory_space<vmem>>, vector<1x128xf32>
    %8 = vector.broadcast %7 : vector<1x128xf32> to vector<512x128xf32>
    %9 = arith.addf %6, %8 : vector<512x128xf32>
    %10 = vector.extract_strided_slice %5 {offsets = [0, 0], sizes = [512, 128], strides = [1, 1]} : vector<512x256xf32> to vector<512x128xf32>
    %c0_10 = arith.constant 0 : index
    %c0_11 = arith.constant 0 : index
    %11 = vector.load %arg8[%c0_10, %c0_11] : memref<1x128xf32, #tpu.memory_space<vmem>>, vector<1x128xf32>
    %12 = vector.broadcast %11 : vector<1x128xf32> to vector<512x128xf32>
    %13 = arith.addf %10, %12 : vector<512x128xf32>
    %c0_12 = arith.constant 0 : index
    %c0_13 = arith.constant 0 : index
    %14 = vector.load %arg1[%c0_12, %c0_13] : memref<512x128xf32, #tpu.memory_space<vmem>>, vector<512x128xf32>
    %c0_14 = arith.constant 0 : index
    %c0_15 = arith.constant 0 : index
    %15 = vector.load %arg6[%c0_14, %c0_15] : memref<128x128xf32, #tpu.memory_space<vmem>>, vector<128x128xf32>
    %cst_16 = arith.constant dense<0.000000e+00> : vector<512x128xf32>
    %16 = tpu.matmul %14, %15, %cst_16 {dimension_numbers = #tpu.dot_dimension_numbers<[1], [0], [0], [1], [0, 0, 1, 1], [], []>} : vector<512x128xf32>, vector<128x128xf32>, vector<512x128xf32> -> vector<512x128xf32>
    %17 = vector.extract_strided_slice %2 {offsets = [0, 128], sizes = [512, 128], strides = [1, 1]} : vector<512x256xf32> to vector<512x128xf32>
    %18 = arith.addf %16, %17 : vector<512x128xf32>
    %19 = vector.extract_strided_slice %5 {offsets = [0, 128], sizes = [512, 128], strides = [1, 1]} : vector<512x256xf32> to vector<512x128xf32>
    %20 = arith.addf %18, %19 : vector<512x128xf32>
    %c0_17 = arith.constant 0 : index
    %c0_18 = arith.constant 0 : index
    %21 = vector.load %arg9[%c0_17, %c0_18] : memref<1x128xf32, #tpu.memory_space<vmem>>, vector<1x128xf32>
    %22 = vector.broadcast %21 : vector<1x128xf32> to vector<512x128xf32>
    %23 = arith.addf %20, %22 : vector<512x128xf32>
    %24 = tpu.transpose %9, [1, 0] : vector<512x128xf32> -> vector<128x512xf32>
    %25 = arith.truncf %24 : vector<128x512xf32> to vector<128x512xbf16>
    %c0_19 = arith.constant 0 : index
    %c0_20 = arith.constant 0 : index
    %26 = vector.load %arg10[%c0_19, %c0_20] : memref<128x512xbf16, #tpu.memory_space<vmem>>, vector<128x512xbf16>
    tpu.vector_store %arg10[%c0_19, %c0_20], %25 {strides = array<i32>} : memref<128x512xbf16, #tpu.memory_space<vmem>>, vector<128x512xbf16>,
    %27 = tpu.transpose %13, [1, 0] : vector<512x128xf32> -> vector<128x512xf32>
    %28 = arith.truncf %27 : vector<128x512xf32> to vector<128x512xbf16>
    %c0_21 = arith.constant 0 : index
    %c0_22 = arith.constant 0 : index
    %29 = vector.load %arg11[%c0_21, %c0_22] : memref<128x512xbf16, #tpu.memory_space<vmem>>, vector<128x512xbf16>
    tpu.vector_store %arg11[%c0_21, %c0_22], %28 {strides = array<i32>} : memref<128x512xbf16, #tpu.memory_space<vmem>>, vector<128x512xbf16>,
    %30 = arith.truncf %23 : vector<512x128xf32> to vector<512x128xbf16>
    %c0_23 = arith.constant 0 : index
    %c0_24 = arith.constant 0 : index
    %31 = vector.load %arg12[%c0_23, %c0_24] : memref<512x128xbf16, #tpu.memory_space<vmem>>, vector<512x128xbf16>
    tpu.vector_store %arg12[%c0_23, %c0_24], %30 {strides = array<i32>} : memref<512x128xbf16, #tpu.memory_space<vmem>>, vector<512x128xbf16>,
    return
  }
  func.func @transform_0(%arg0: i32) -> (i32, i32) {
    %c0_i32 = arith.constant 0 : i32
    %c0_i32_0 = arith.constant 0 : i32
    return %arg0, %c0_i32 : i32, i32
  }
  func.func @transform_1(%arg0: i32) -> (i32, i32) {
    %c0_i32 = arith.constant 0 : i32
    %c0_i32_0 = arith.constant 0 : i32
    return %arg0, %c0_i32 : i32, i32
  }
  func.func @transform_2(%arg0: i32) -> (i32, i32) {
    %c0_i32 = arith.constant 0 : i32
    %c0_i32_0 = arith.constant 0 : i32
    return %arg0, %c0_i32 : i32, i32
  }
  func.func @transform_3(%arg0: i32) -> (i32, i32) {
    %c0_i32 = arith.constant 0 : i32
    %c0_i32_0 = arith.constant 0 : i32
    %c0_i32_1 = arith.constant 0 : i32
    return %c0_i32, %c0_i32_0 : i32, i32
  }
  func.func @transform_4(%arg0: i32) -> (i32, i32) {
    %c0_i32 = arith.constant 0 : i32
    %c0_i32_0 = arith.constant 0 : i32
    %c0_i32_1 = arith.constant 0 : i32
    return %c0_i32, %c0_i32_0 : i32, i32
  }
  func.func @transform_5(%arg0: i32) -> (i32, i32) {
    %c0_i32 = arith.constant 0 : i32
    %c0_i32_0 = arith.constant 0 : i32
    %c0_i32_1 = arith.constant 0 : i32
    return %c0_i32, %c0_i32_0 : i32, i32
  }
  func.func @transform_6(%arg0: i32) -> (i32, i32) {
    %c0_i32 = arith.constant 0 : i32
    %c0_i32_0 = arith.constant 0 : i32
    %c0_i32_1 = arith.constant 0 : i32
    return %c0_i32, %c0_i32_0 : i32, i32
  }
  func.func @transform_7(%arg0: i32) -> (i32, i32) {
    %c0_i32 = arith.constant 0 : i32
    %c0_i32_0 = arith.constant 0 : i32
    %c0_i32_1 = arith.constant 0 : i32
    return %c0_i32, %c0_i32_0 : i32, i32
  }
  func.func @transform_8(%arg0: i32) -> (i32, i32) {
    %c0_i32 = arith.constant 0 : i32
    %c0_i32_0 = arith.constant 0 : i32
    %c0_i32_1 = arith.constant 0 : i32
    return %c0_i32, %c0_i32_0 : i32, i32
  }
  func.func @transform_9(%arg0: i32) -> (i32, i32) {
    %c0_i32 = arith.constant 0 : i32
    %c0_i32_0 = arith.constant 0 : i32
    return %c0_i32, %arg0 : i32, i32
  }
  func.func @transform_10(%arg0: i32) -> (i32, i32) {
    %c0_i32 = arith.constant 0 : i32
    %c0_i32_0 = arith.constant 0 : i32
    return %c0_i32, %arg0 : i32, i32
  }
  func.func @transform_11(%arg0: i32) -> (i32, i32) {
    %c0_i32 = arith.constant 0 : i32
    %c0_i32_0 = arith.constant 0 : i32
    return %arg0, %c0_i32 : i32, i32
  }
}

module attributes {stable_mosaic.version = 11 : i64} {
  func.func @_proj_kernel(%arg0: i32, %arg1: memref<512x128xf32, #tpu.memory_space<vmem>>, %arg2: memref<512x128xf32, #tpu.memory_space<vmem>>, %arg3: memref<512x128xf32, #tpu.memory_space<vmem>>, %arg4: memref<128x256xf32, #tpu.memory_space<vmem>>, %arg5: memref<128x256xf32, #tpu.memory_space<vmem>>, %arg6: memref<128x128xf32, #tpu.memory_space<vmem>>, %arg7: memref<1x128xf32, #tpu.memory_space<vmem>>, %arg8: memref<1x128xf32, #tpu.memory_space<vmem>>, %arg9: memref<1x128xf32, #tpu.memory_space<vmem>>, %arg10: memref<128x512xbf16, #tpu.memory_space<vmem>>, %arg11: memref<128x512xbf16, #tpu.memory_space<vmem>>, %arg12: memref<512x128xbf16, #tpu.memory_space<vmem>>) attributes {dimension_semantics = [#tpu.dimension_semantics<parallel>], iteration_bounds = array<i64: 1>, scalar_prefetch = 0 : i64, scratch_operands = 0 : i64, tpu.core_type = #tpu.core_type<tc>, window_params = [{transform_indices = @transform_0, window_bounds = array<i64: 512, 128>}, {transform_indices = @transform_1, window_bounds = array<i64: 512, 128>}, {transform_indices = @transform_2, window_bounds = array<i64: 512, 128>}, {pipeline_mode = #tpu.pipeline_mode<synchronous>, transform_indices = @transform_3, window_bounds = array<i64: 128, 256>}, {pipeline_mode = #tpu.pipeline_mode<synchronous>, transform_indices = @transform_4, window_bounds = array<i64: 128, 256>}, {pipeline_mode = #tpu.pipeline_mode<synchronous>, transform_indices = @transform_5, window_bounds = array<i64: 128, 128>}, {pipeline_mode = #tpu.pipeline_mode<synchronous>, transform_indices = @transform_6, window_bounds = array<i64: 1, 128>}, {pipeline_mode = #tpu.pipeline_mode<synchronous>, transform_indices = @transform_7, window_bounds = array<i64: 1, 128>}, {pipeline_mode = #tpu.pipeline_mode<synchronous>, transform_indices = @transform_8, window_bounds = array<i64: 1, 128>}, {transform_indices = @transform_9, window_bounds = array<i64: 128, 512>}, {transform_indices = @transform_10, window_bounds = array<i64: 128, 512>}, {transform_indices = @transform_11, window_bounds = array<i64: 512, 128>}]} {
    %c0 = arith.constant 0 : index
    %c0_0 = arith.constant 0 : index
    %0 = vector.load %arg2[%c0, %c0_0] : memref<512x128xf32, #tpu.memory_space<vmem>>, vector<512x128xf32>
    %c0_1 = arith.constant 0 : index
    %c0_2 = arith.constant 0 : index
    %1 = vector.load %arg4[%c0_1, %c0_2] : memref<128x256xf32, #tpu.memory_space<vmem>>, vector<128x256xf32>
    %cst = arith.constant dense<0.000000e+00> : vector<512x256xf32>
    %2 = tpu.matmul %0, %1, %cst {dimension_numbers = #tpu.dot_dimension_numbers<[1], [0], [0], [1], [0, 0, 1, 1], [], []>} : vector<512x128xf32>, vector<128x256xf32>, vector<512x256xf32> -> vector<512x256xf32>
    %c0_3 = arith.constant 0 : index
    %c0_4 = arith.constant 0 : index
    %3 = vector.load %arg3[%c0_3, %c0_4] : memref<512x128xf32, #tpu.memory_space<vmem>>, vector<512x128xf32>
    %c0_5 = arith.constant 0 : index
    %c0_6 = arith.constant 0 : index
    %4 = vector.load %arg5[%c0_5, %c0_6] : memref<128x256xf32, #tpu.memory_space<vmem>>, vector<128x256xf32>
    %cst_7 = arith.constant dense<0.000000e+00> : vector<512x256xf32>
    %5 = tpu.matmul %3, %4, %cst_7 {dimension_numbers = #tpu.dot_dimension_numbers<[1], [0], [0], [1], [0, 0, 1, 1], [], []>} : vector<512x128xf32>, vector<128x256xf32>, vector<512x256xf32> -> vector<512x256xf32>
    %6 = vector.extract_strided_slice %2 {offsets = [0, 0], sizes = [512, 128], strides = [1, 1]} : vector<512x256xf32> to vector<512x128xf32>
    %c0_8 = arith.constant 0 : index
    %c0_9 = arith.constant 0 : index
    %7 = vector.load %arg7[%c0_8, %c0_9] : memref<1x128xf32, #tpu.memory_space<vmem>>, vector<1x128xf32>
    %8 = vector.broadcast %7 : vector<1x128xf32> to vector<512x128xf32>
    %9 = arith.addf %6, %8 : vector<512x128xf32>
    %10 = vector.extract_strided_slice %5 {offsets = [0, 0], sizes = [512, 128], strides = [1, 1]} : vector<512x256xf32> to vector<512x128xf32>
    %c0_10 = arith.constant 0 : index
    %c0_11 = arith.constant 0 : index
    %11 = vector.load %arg8[%c0_10, %c0_11] : memref<1x128xf32, #tpu.memory_space<vmem>>, vector<1x128xf32>
    %12 = vector.broadcast %11 : vector<1x128xf32> to vector<512x128xf32>
    %13 = arith.addf %10, %12 : vector<512x128xf32>
    %c0_12 = arith.constant 0 : index
    %c0_13 = arith.constant 0 : index
    %14 = vector.load %arg1[%c0_12, %c0_13] : memref<512x128xf32, #tpu.memory_space<vmem>>, vector<512x128xf32>
    %c0_14 = arith.constant 0 : index
    %c0_15 = arith.constant 0 : index
    %15 = vector.load %arg6[%c0_14, %c0_15] : memref<128x128xf32, #tpu.memory_space<vmem>>, vector<128x128xf32>
    %cst_16 = arith.constant dense<0.000000e+00> : vector<512x128xf32>
    %16 = tpu.matmul %14, %15, %cst_16 {dimension_numbers = #tpu.dot_dimension_numbers<[1], [0], [0], [1], [0, 0, 1, 1], [], []>} : vector<512x128xf32>, vector<128x128xf32>, vector<512x128xf32> -> vector<512x128xf32>
    %17 = vector.extract_strided_slice %2 {offsets = [0, 128], sizes = [512, 128], strides = [1, 1]} : vector<512x256xf32> to vector<512x128xf32>
    %18 = arith.addf %16, %17 : vector<512x128xf32>
    %19 = vector.extract_strided_slice %5 {offsets = [0, 128], sizes = [512, 128], strides = [1, 1]} : vector<512x256xf32> to vector<512x128xf32>
    %20 = arith.addf %18, %19 : vector<512x128xf32>
    %c0_17 = arith.constant 0 : index
    %c0_18 = arith.constant 0 : index
    %21 = vector.load %arg9[%c0_17, %c0_18] : memref<1x128xf32, #tpu.memory_space<vmem>>, vector<1x128xf32>
    %22 = vector.broadcast %21 : vector<1x128xf32> to vector<512x128xf32>
    %23 = arith.addf %20, %22 : vector<512x128xf32>
    %24 = tpu.transpose %9, [1, 0] : vector<512x128xf32> -> vector<128x512xf32>
    %25 = arith.truncf %24 : vector<128x512xf32> to vector<128x512xbf16>
    %c0_19 = arith.constant 0 : index
    %c0_20 = arith.constant 0 : index
    %26 = vector.load %arg10[%c0_19, %c0_20] : memref<128x512xbf16, #tpu.memory_space<vmem>>, vector<128x512xbf16>
    tpu.vector_store %arg10[%c0_19, %c0_20], %25 {strides = array<i32>} : memref<128x512xbf16, #tpu.memory_space<vmem>>, vector<128x512xbf16>,
    %27 = tpu.transpose %13, [1, 0] : vector<512x128xf32> -> vector<128x512xf32>
    %28 = arith.truncf %27 : vector<128x512xf32> to vector<128x512xbf16>
    %c0_21 = arith.constant 0 : index
    %c0_22 = arith.constant 0 : index
    %29 = vector.load %arg11[%c0_21, %c0_22] : memref<128x512xbf16, #tpu.memory_space<vmem>>, vector<128x512xbf16>
    tpu.vector_store %arg11[%c0_21, %c0_22], %28 {strides = array<i32>} : memref<128x512xbf16, #tpu.memory_space<vmem>>, vector<128x512xbf16>,
    %30 = arith.truncf %23 : vector<512x128xf32> to vector<512x128xbf16>
    %c0_23 = arith.constant 0 : index
    %c0_24 = arith.constant 0 : index
    %31 = vector.load %arg12[%c0_23, %c0_24] : memref<512x128xbf16, #tpu.memory_space<vmem>>, vector<512x128xbf16>
    tpu.vector_store %arg12[%c0_23, %c0_24], %30 {strides = array<i32>} : memref<512x128xbf16, #tpu.memory_space<vmem>>, vector<512x128xbf16>,
    return
  }
  func.func @transform_0(%arg0: i32) -> (i32, i32) {
    %c0_i32 = arith.constant 0 : i32
    %c0_i32_0 = arith.constant 0 : i32
    return %arg0, %c0_i32 : i32, i32
  }
  func.func @transform_1(%arg0: i32) -> (i32, i32) {
    %c0_i32 = arith.constant 0 : i32
    %c0_i32_0 = arith.constant 0 : i32
    return %arg0, %c0_i32 : i32, i32
  }
  func.func @transform_2(%arg0: i32) -> (i32, i32) {
    %c0_i32 = arith.constant 0 : i32
    %c0_i32_0 = arith.constant 0 : i32
    return %arg0, %c0_i32 : i32, i32
  }
  func.func @transform_3(%arg0: i32) -> (i32, i32) {
    %c0_i32 = arith.constant 0 : i32
    %c0_i32_0 = arith.constant 0 : i32
    %c0_i32_1 = arith.constant 0 : i32
    return %c0_i32, %c0_i32_0 : i32, i32
  }
  func.func @transform_4(%arg0: i32) -> (i32, i32) {
    %c0_i32 = arith.constant 0 : i32
    %c0_i32_0 = arith.constant 0 : i32
    %c0_i32_1 = arith.constant 0 : i32
    return %c0_i32, %c0_i32_0 : i32, i32
  }
  func.func @transform_5(%arg0: i32) -> (i32, i32) {
    %c0_i32 = arith.constant 0 : i32
    %c0_i32_0 = arith.constant 0 : i32
    %c0_i32_1 = arith.constant 0 : i32
    return %c0_i32, %c0_i32_0 : i32, i32
  }
  func.func @transform_6(%arg0: i32) -> (i32, i32) {
    %c0_i32 = arith.constant 0 : i32
    %c0_i32_0 = arith.constant 0 : i32
    %c0_i32_1 = arith.constant 0 : i32
    return %c0_i32, %c0_i32_0 : i32, i32
  }
  func.func @transform_7(%arg0: i32) -> (i32, i32) {
    %c0_i32 = arith.constant 0 : i32
    %c0_i32_0 = arith.constant 0 : i32
    %c0_i32_1 = arith.constant 0 : i32
    return %c0_i32, %c0_i32_0 : i32, i32
  }
  func.func @transform_8(%arg0: i32) -> (i32, i32) {
    %c0_i32 = arith.constant 0 : i32
    %c0_i32_0 = arith.constant 0 : i32
    %c0_i32_1 = arith.constant 0 : i32
    return %c0_i32, %c0_i32_0 : i32, i32
  }
  func.func @transform_9(%arg0: i32) -> (i32, i32) {
    %c0_i32 = arith.constant 0 : i32
    %c0_i32_0 = arith.constant 0 : i32
    return %c0_i32, %arg0 : i32, i32
  }
  func.func @transform_10(%arg0: i32) -> (i32, i32) {
    %c0_i32 = arith.constant 0 : i32
    %c0_i32_0 = arith.constant 0 : i32
    return %c0_i32, %arg0 : i32, i32
  }
  func.func @transform_11(%arg0: i32) -> (i32, i32) {
    %c0_i32 = arith.constant 0 : i32
    %c0_i32_0 = arith.constant 0 : i32
    return %arg0, %c0_i32 : i32, i32
  }
}

</mosaic_0001>

<llo_original>
// kernel: tpu_custom_call.1
$region0: #{tpu_custom_call.1}
  #allocation0 [shape = 'u32[]', space=smem, size = 0x4, offset = 0x4, fixed_abs, tag = 'smem constant byte address 0x4 - core index']
  #allocation1 [shape = 'u32[144,128]{1,0:T(1,128)}', space=vmem, size = 0x12000, scoped, tag = 'internal scratch']
  %s0 = inlined_call_operand.hbm [shape: f32[512,128], index: 0, kind: input, shape index: {}]
  %s1 = inlined_call_operand.hbm [shape: f32[512,128], index: 1, kind: input, shape index: {}]
  %s2 = inlined_call_operand.hbm [shape: f32[512,128], index: 2, kind: input, shape index: {}]
  %s3 = inlined_call_operand.hbm [shape: f32[128,256], index: 3, kind: input, shape index: {}]
  %s4 = inlined_call_operand.hbm [shape: f32[128,256], index: 4, kind: input, shape index: {}]
  %s5 = inlined_call_operand.hbm [shape: f32[128,128], index: 5, kind: input, shape index: {}]
  %s6 = inlined_call_operand.vmem [shape: f32[1,128], index: 6, kind: input, shape index: {}]
  %s7 = inlined_call_operand.vmem [shape: f32[1,128], index: 7, kind: input, shape index: {}]
  %s8 = inlined_call_operand.vmem [shape: f32[1,128], index: 8, kind: input, shape index: {}]
  %s9 = inlined_call_operand.hbm [shape: bf16[128,512], index: 9, kind: output, shape index: {0}]
  %s10 = inlined_call_operand.hbm [shape: bf16[128,512], index: 10, kind: output, shape index: {1}]
  %s11 = inlined_call_operand.hbm [shape: bf16[512,128], index: 11, kind: output, shape index: {2}]
  %12 = xla_tuple %s9, %s10, %s11
  %s13 = sld [smem:[#allocation0]]
  $region86: #{tpu_custom_call.1} parent=0
    _
  %s15 = ssub.s32 1, %s13
  %s16 = scalar_select 0, %s15, %s13
  $region1: #{tpu_custom_call.1} parent=0
    #allocation2 [shape = 'u8[262144]{0}', space=vmem, size = 0x40000, scoped, tag = 'input window, operand 0, single buffered']
    #allocation3 [shape = 's32[1]{0}', space=sflag, size = 0x4, scoped, tag = 'scoped memory for tpu_custom_call.1']
    #allocation4 [shape = 's32[1]{0}', space=sflag, size = 0x4, scoped, tag = 'scoped memory for tpu_custom_call.1']
    #allocation5 [shape = 'u8[262144]{0}', space=vmem, size = 0x40000, scoped, tag = 'input window, operand 1, single buffered']
    #allocation6 [shape = 's32[1]{0}', space=sflag, size = 0x4, scoped, tag = 'scoped memory for tpu_custom_call.1']
    #allocation7 [shape = 'u8[262144]{0}', space=vmem, size = 0x40000, scoped, tag = 'input window, operand 2, single buffered']
    #allocation8 [shape = 'u8[131072]{0}', space=vmem, size = 0x20000, scoped, tag = 'input window, operand 3, single buffered']
    #allocation9 [shape = 's32[1]{0}', space=sflag, size = 0x4, scoped, tag = 'scoped memory for tpu_custom_call.1']
    #allocation10 [shape = 'u8[131072]{0}', space=vmem, size = 0x20000, scoped, tag = 'input window, operand 4, single buffered']
    #allocation11 [shape = 'u8[65536]{0}', space=vmem, size = 0x10000, scoped, tag = 'input window, operand 5, single buffered']
    #allocation12 [shape = 's32[1]{0}', space=sflag, size = 0x4, scoped, tag = 'scoped memory for tpu_custom_call.1']
    #allocation13 [shape = 'u8[131072]{0}', space=vmem, size = 0x20000, scoped, tag = 'output window, operand 0, single buffered']
    #allocation14 [shape = 'u8[131072]{0}', space=vmem, size = 0x20000, scoped, tag = 'output window, operand 1, single buffered']
    #allocation15 [shape = 's32[1]{0}', space=sflag, size = 0x4, scoped, tag = 'scoped memory for tpu_custom_call.1']
    #allocation16 [shape = 'u8[131072]{0}', space=vmem, size = 0x20000, scoped, tag = 'output window, operand 2, single buffered']
    %17 = vsyncpa [#allocation3], 0
    %18 = vsyncpa [#allocation6], 0
    %19 = vsyncpa [#allocation9], 0
    %20 = vsyncpa [#allocation12], 0
    %21 = vsyncpa [#allocation4], 0
    %22 = vsyncpa [#allocation15], 0
    // Predicated region
    $region2: #{tpu_custom_call.1} parent=1 // pred_check
      _
    $region3: #{tpu_custom_call.1} parent=1 // pred_check_branch
      %24 = sbr.rel (0) target = $region5
    $region4: #{tpu_custom_call.1} parent=1 // pred_region
      %s26 = ssub.s32 8192, 8192
      %27 = vsyncadd [#allocation3], %s26
      %s28 = sshll.u32 [#allocation2], 4
      %s29 = int_to_ptr.vmem [resolvable:$true] %s28
      %34 = dma.hbm_to_vmem [thread:$0]  %s0, 8192, %s29, [#allocation3], 128, 128, 8
    $region5: #{tpu_custom_call.1} parent=1 // pred_fallthru
      _
    // Predicated region
    $region6: #{tpu_custom_call.1} parent=1 // pred_check
      _
    $region7: #{tpu_custom_call.1} parent=1 // pred_check_branch
      %36 = sbr.rel (0) target = $region9
    $region8: #{tpu_custom_call.1} parent=1 // pred_region
      %s38 = ssub.s32 8192, 8192
      %39 = vsyncadd [#allocation6], %s38
      %s40 = sshll.u32 [#allocation5], 4
      %s41 = int_to_ptr.vmem [resolvable:$true] %s40
      %46 = dma.hbm_to_vmem [thread:$0]  %s1, 8192, %s41, [#allocation6], 128, 128, 8
    $region9: #{tpu_custom_call.1} parent=1 // pred_fallthru
      _
    // Predicated region
    $region10: #{tpu_custom_call.1} parent=1 // pred_check
      _
    $region11: #{tpu_custom_call.1} parent=1 // pred_check_branch
      %48 = sbr.rel (0) target = $region13
    $region12: #{tpu_custom_call.1} parent=1 // pred_region
      %s50 = ssub.s32 8192, 8192
      %51 = vsyncadd [#allocation6], %s50
      %s52 = sshll.u32 [#allocation7], 4
      %s53 = int_to_ptr.vmem [resolvable:$true] %s52
      %58 = dma.hbm_to_vmem [thread:$0]  %s2, 8192, %s53, [#allocation6], 128, 128, 8
    $region13: #{tpu_custom_call.1} parent=1 // pred_fallthru
      _
    // Predicated region
    $region14: #{tpu_custom_call.1} parent=1 // pred_check
      _
    $region15: #{tpu_custom_call.1} parent=1 // pred_check_branch
      %60 = sbr.rel (0) target = $region17
    $region16: #{tpu_custom_call.1} parent=1 // pred_region
      %s62 = ssub.s32 4096, 4096
      %63 = vsyncadd [#allocation9], %s62
      %s64 = sshll.u32 [#allocation8], 4
      %s65 = int_to_ptr.vmem [resolvable:$true] %s64
      %70 = dma.hbm_to_vmem [thread:$0]  %s3, 4096, %s65, [#allocation9], 256, 256, 16
    $region17: #{tpu_custom_call.1} parent=1 // pred_fallthru
      _
    // Predicated region
    $region18: #{tpu_custom_call.1} parent=1 // pred_check
      _
    $region19: #{tpu_custom_call.1} parent=1 // pred_check_branch
      %72 = sbr.rel (0) target = $region21
    $region20: #{tpu_custom_call.1} parent=1 // pred_region
      %s74 = ssub.s32 4096, 4096
      %75 = vsyncadd [#allocation9], %s74
      %s76 = sshll.u32 [#allocation10], 4
      %s77 = int_to_ptr.vmem [resolvable:$true] %s76
      %82 = dma.hbm_to_vmem [thread:$0]  %s4, 4096, %s77, [#allocation9], 256, 256, 16
    $region21: #{tpu_custom_call.1} parent=1 // pred_fallthru
      _
    // Predicated region
    $region22: #{tpu_custom_call.1} parent=1 // pred_check
      _
    $region23: #{tpu_custom_call.1} parent=1 // pred_check_branch
      %84 = sbr.rel (0) target = $region25
    $region24: #{tpu_custom_call.1} parent=1 // pred_region
      %s86 = ssub.s32 2048, 2048
      %87 = vsyncadd [#allocation12], %s86
      %s88 = sshll.u32 [#allocation11], 4
      %s89 = int_to_ptr.vmem [resolvable:$true] %s88
      %94 = dma.hbm_to_vmem [thread:$0]  %s5, 2048, %s89, [#allocation12], 128, 128, 8
    $region25: #{tpu_custom_call.1} parent=1 // pred_fallthru
      _
    // Predicated region
    $region26: #{tpu_custom_call.1} parent=1 // pred_check
      _
    $region27: #{tpu_custom_call.1} parent=1 // pred_check_branch
      %96 = sbr.rel (0) target = $region29
    $region28: #{tpu_custom_call.1} parent=1 // pred_region
      _
    $region29: #{tpu_custom_call.1} parent=1 // pred_fallthru
      _
    // Predicated region
    $region30: #{tpu_custom_call.1} parent=1 // pred_check
      _
    $region31: #{tpu_custom_call.1} parent=1 // pred_check_branch
      %98 = sbr.rel (0) target = $region33
    $region32: #{tpu_custom_call.1} parent=1 // pred_region
      _
    $region33: #{tpu_custom_call.1} parent=1 // pred_fallthru
      _
    // Predicated region
    $region34: #{tpu_custom_call.1} parent=1 // pred_check
      _
    $region35: #{tpu_custom_call.1} parent=1 // pred_check_branch
      %100 = sbr.rel (0) target = $region37
    $region36: #{tpu_custom_call.1} parent=1 // pred_region
      _
    $region37: #{tpu_custom_call.1} parent=1 // pred_fallthru
      _
    // Predicated region
    $region38: #{tpu_custom_call.1} parent=1 // pred_check
      _
    $region39: #{tpu_custom_call.1} parent=1 // pred_check_branch
      %102 = sbr.rel (0) target = $region41
    $region40: #{tpu_custom_call.1} parent=1 // pred_region
      %103 = dma.done [#allocation3], 8192
    $region41: #{tpu_custom_call.1} parent=1 // pred_fallthru
      _
    // Predicated region
    $region42: #{tpu_custom_call.1} parent=1 // pred_check
      _
    $region43: #{tpu_custom_call.1} parent=1 // pred_check_branch
      %105 = sbr.rel (0) target = $region45
    $region44: #{tpu_custom_call.1} parent=1 // pred_region
      %106 = dma.done [#allocation6], 8192
    $region45: #{tpu_custom_call.1} parent=1 // pred_fallthru
      _
    // Predicated region
    $region46: #{tpu_custom_call.1} parent=1 // pred_check
      _
    $region47: #{tpu_custom_call.1} parent=1 // pred_check_branch
      %108 = sbr.rel (0) target = $region49
    $region48: #{tpu_custom_call.1} parent=1 // pred_region
      %109 = dma.done [#allocation6], 8192
    $region49: #{tpu_custom_call.1} parent=1 // pred_fallthru
      _
    // Predicated region
    $region50: #{tpu_custom_call.1} parent=1 // pred_check
      _
    $region51: #{tpu_custom_call.1} parent=1 // pred_check_branch
      %111 = sbr.rel (0) target = $region53
    $region52: #{tpu_custom_call.1} parent=1 // pred_region
      %112 = dma.done [#allocation9], 4096
    $region53: #{tpu_custom_call.1} parent=1 // pred_fallthru
      _
    // Predicated region
    $region54: #{tpu_custom_call.1} parent=1 // pred_check
      _
    $region55: #{tpu_custom_call.1} parent=1 // pred_check_branch
      %114 = sbr.rel (0) target = $region57
    $region56: #{tpu_custom_call.1} parent=1 // pred_region
      %115 = dma.done [#allocation9], 4096
    $region57: #{tpu_custom_call.1} parent=1 // pred_fallthru
      _
    // Predicated region
    $region58: #{tpu_custom_call.1} parent=1 // pred_check
      _
    $region59: #{tpu_custom_call.1} parent=1 // pred_check_branch
      %117 = sbr.rel (0) target = $region61
    $region60: #{tpu_custom_call.1} parent=1 // pred_region
      %118 = dma.done [#allocation12], 2048
    $region61: #{tpu_custom_call.1} parent=1 // pred_fallthru
      _
    %v119 = vld [vmem:[#allocation5] sm:$0xff]
    %v120 = vld [vmem:[#allocation5 + $0x8] sm:$0xff]
    %v121 = vld [vmem:[#allocation5 + $0x10] sm:$0xff]
    %v122 = vld [vmem:[#allocation5 + $0x18] sm:$0xff]
    %v123 = vld [vmem:[#allocation5 + $0x20] sm:$0xff]
    %v124 = vld [vmem:[#allocation5 + $0x28] sm:$0xff]
    %v125 = vld [vmem:[#allocation5 + $0x30] sm:$0xff]
    %v126 = vld [vmem:[#allocation5 + $0x38] sm:$0xff]
    %v127 = vld [vmem:[#allocation5 + $0x40] sm:$0xff]
    %v128 = vld [vmem:[#allocation5 + $0x48] sm:$0xff]
    %v129 = vld [vmem:[#allocation5 + $0x50] sm:$0xff]
    %v130 = vld [vmem:[#allocation5 + $0x58] sm:$0xff]
    %v131 = vld [vmem:[#allocation5 + $0x60] sm:$0xff]
    %v132 = vld [vmem:[#allocation5 + $0x68] sm:$0xff]
    %v133 = vld [vmem:[#allocation5 + $0x70] sm:$0xff]
    %v134 = vld [vmem:[#allocation5 + $0x78] sm:$0xff]
    %v135 = vld [vmem:[#allocation5 + $0x80] sm:$0xff]
    %v136 = vld [vmem:[#allocation5 + $0x88] sm:$0xff]
    %v137 = vld [vmem:[#allocation5 + $0x90] sm:$0xff]
    %v138 = vld [vmem:[#allocation5 + $0x98] sm:$0xff]
    %v139 = vld [vmem:[#allocation5 + $0xa0] sm:$0xff]
    %v140 = vld [vmem:[#allocation5 + $0xa8] sm:$0xff]
    %v141 = vld [vmem:[#allocation5 + $0xb0] sm:$0xff]
    %v142 = vld [vmem:[#allocation5 + $0xb8] sm:$0xff]
    %v143 = vld [vmem:[#allocation5 + $0xc0] sm:$0xff]
    %v144 = vld [vmem:[#allocation5 + $0xc8] sm:$0xff]
    %v145 = vld [vmem:[#allocation5 + $0xd0] sm:$0xff]
    %v146 = vld [vmem:[#allocation5 + $0xd8] sm:$0xff]
    %v147 = vld [vmem:[#allocation5 + $0xe0] sm:$0xff]
    %v148 = vld [vmem:[#allocation5 + $0xe8] sm:$0xff]
    %v149 = vld [vmem:[#allocation5 + $0xf0] sm:$0xff]
    %v150 = vld [vmem:[#allocation5 + $0xf8] sm:$0xff]
    %v151 = vld [vmem:[#allocation5 + $0x100] sm:$0xff]
    %v152 = vld [vmem:[#allocation5 + $0x108] sm:$0xff]
    %v153 = vld [vmem:[#allocation5 + $0x110] sm:$0xff]
    %v154 = vld [vmem:[#allocation5 + $0x118] sm:$0xff]
    %v155 = vld [vmem:[#allocation5 + $0x120] sm:$0xff]
    %v156 = vld [vmem:[#allocation5 + $0x128] sm:$0xff]
    %v157 = vld [vmem:[#allocation5 + $0x130] sm:$0xff]
    %v158 = vld [vmem:[#allocation5 + $0x138] sm:$0xff]
    %v159 = vld [vmem:[#allocation5 + $0x140] sm:$0xff]
    %v160 = vld [vmem:[#allocation5 + $0x148] sm:$0xff]
    %v161 = vld [vmem:[#allocation5 + $0x150] sm:$0xff]
    %v162 = vld [vmem:[#allocation5 + $0x158] sm:$0xff]
    %v163 = vld [vmem:[#allocation5 + $0x160] sm:$0xff]
    %v164 = vld [vmem:[#allocation5 + $0x168] sm:$0xff]
    %v165 = vld [vmem:[#allocation5 + $0x170] sm:$0xff]
    %v166 = vld [vmem:[#allocation5 + $0x178] sm:$0xff]
    %v167 = vld [vmem:[#allocation5 + $0x180] sm:$0xff]
    %v168 = vld [vmem:[#allocation5 + $0x188] sm:$0xff]
    %v169 = vld [vmem:[#allocation5 + $0x190] sm:$0xff]
    %v170 = vld [vmem:[#allocation5 + $0x198] sm:$0xff]
    %v171 = vld [vmem:[#allocation5 + $0x1a0] sm:$0xff]
    %v172 = vld [vmem:[#allocation5 + $0x1a8] sm:$0xff]
    %v173 = vld [vmem:[#allocation5 + $0x1b0] sm:$0xff]
    %v174 = vld [vmem:[#allocation5 + $0x1b8] sm:$0xff]
    %v175 = vld [vmem:[#allocation5 + $0x1c0] sm:$0xff]
    %v176 = vld [vmem:[#allocation5 + $0x1c8] sm:$0xff]
    %v177 = vld [vmem:[#allocation5 + $0x1d0] sm:$0xff]
    %v178 = vld [vmem:[#allocation5 + $0x1d8] sm:$0xff]
    %v179 = vld [vmem:[#allocation5 + $0x1e0] sm:$0xff]
    %v180 = vld [vmem:[#allocation5 + $0x1e8] sm:$0xff]
    %v181 = vld [vmem:[#allocation5 + $0x1f0] sm:$0xff]
    %v182 = vld [vmem:[#allocation5 + $0x1f8] sm:$0xff]
    %v183 = vld [vmem:[#allocation8] sm:$0xff]
    %v184 = vld [vmem:[#allocation8 + $0x8] sm:$0xff]
    %v185 = vld [vmem:[#allocation8 + $0x10] sm:$0xff]
    %v186 = vld [vmem:[#allocation8 + $0x18] sm:$0xff]
    %v187 = vld [vmem:[#allocation8 + $0x20] sm:$0xff]
    %v188 = vld [vmem:[#allocation8 + $0x28] sm:$0xff]
    %v189 = vld [vmem:[#allocation8 + $0x30] sm:$0xff]
    %v190 = vld [vmem:[#allocation8 + $0x38] sm:$0xff]
    %v191 = vld [vmem:[#allocation8 + $0x40] sm:$0xff]
    %v192 = vld [vmem:[#allocation8 + $0x48] sm:$0xff]
    %v193 = vld [vmem:[#allocation8 + $0x50] sm:$0xff]
    %v194 = vld [vmem:[#allocation8 + $0x58] sm:$0xff]
    %v195 = vld [vmem:[#allocation8 + $0x60] sm:$0xff]
    %v196 = vld [vmem:[#allocation8 + $0x68] sm:$0xff]
    %v197 = vld [vmem:[#allocation8 + $0x70] sm:$0xff]
    %v198 = vld [vmem:[#allocation8 + $0x78] sm:$0xff]
    %v199 = vld [vmem:[#allocation8 + $0x80] sm:$0xff]
    %v200 = vld [vmem:[#allocation8 + $0x88] sm:$0xff]
    %v201 = vld [vmem:[#allocation8 + $0x90] sm:$0xff]
    %v202 = vld [vmem:[#allocation8 + $0x98] sm:$0xff]
    %v203 = vld [vmem:[#allocation8 + $0xa0] sm:$0xff]
    %v204 = vld [vmem:[#allocation8 + $0xa8] sm:$0xff]
    %v205 = vld [vmem:[#allocation8 + $0xb0] sm:$0xff]
    %v206 = vld [vmem:[#allocation8 + $0xb8] sm:$0xff]
    %v207 = vld [vmem:[#allocation8 + $0xc0] sm:$0xff]
    %v208 = vld [vmem:[#allocation8 + $0xc8] sm:$0xff]
    %v209 = vld [vmem:[#allocation8 + $0xd0] sm:$0xff]
    %v210 = vld [vmem:[#allocation8 + $0xd8] sm:$0xff]
    %v211 = vld [vmem:[#allocation8 + $0xe0] sm:$0xff]
    %v212 = vld [vmem:[#allocation8 + $0xe8] sm:$0xff]
    %v213 = vld [vmem:[#allocation8 + $0xf0] sm:$0xff]
    %v214 = vld [vmem:[#allocation8 + $0xf8] sm:$0xff]
    %215 = vmatprep.subr.mxu0 %v184
    %216 = vmatpush1.msra.mxu0 %v183
    %217 = vmatprep.subr.mxu0 %v186
    %218 = vmatpush1.msra.mxu0 %v185
    %219 = vmatprep.subr.mxu0 %v188
    %220 = vmatpush1.msra.mxu0 %v187
    %221 = vmatprep.subr.mxu0 %v190
    %222 = vmatpush1.msra.mxu0 %v189
    %223 = vmatprep.subr.mxu0 %v192
    %224 = vmatpush1.msra.mxu0 %v191
    %225 = vmatprep.subr.mxu0 %v194
    %226 = vmatpush1.msra.mxu0 %v193
    %227 = vmatprep.subr.mxu0 %v196
    %228 = vmatpush1.msra.mxu0 %v195
    %229 = vmatprep.subr.mxu0 %v198
    %230 = vmatpush1.msra.mxu0 %v197
    %231 = vmatprep.subr.mxu0 %v200
    %232 = vmatpush1.msra.mxu0 %v199
    %233 = vmatprep.subr.mxu0 %v202
    %234 = vmatpush1.msra.mxu0 %v201
    %235 = vmatprep.subr.mxu0 %v204
    %236 = vmatpush1.msra.mxu0 %v203
    %237 = vmatprep.subr.mxu0 %v206
    %238 = vmatpush1.msra.mxu0 %v205
    %239 = vmatprep.subr.mxu0 %v208
    %240 = vmatpush1.msra.mxu0 %v207
    %241 = vmatprep.subr.mxu0 %v210
    %242 = vmatpush1.msra.mxu0 %v209
    %243 = vmatprep.subr.mxu0 %v212
    %244 = vmatpush1.msra.mxu0 %v211
    %245 = vmatprep.subr.mxu0 %v214
    %246 = vmatpush1.msra.mxu0 %v213
    %247 = vmatprep.subr.mxu0 0.0
    %248 = vmatpush1.msra.mxu0 0.0
    %249 = vmatprep.subr.mxu0 0.0
    %250 = vmatpush1.msra.mxu0 0.0
    %251 = vmatprep.subr.mxu0 0.0
    %252 = vmatpush1.msra.mxu0 0.0
    %253 = vmatprep.subr.mxu0 0.0
    %254 = vmatpush1.msra.mxu0 0.0
    %255 = vmatprep.subr.mxu0 0.0
    %256 = vmatpush1.msra.mxu0 0.0
    %257 = vmatprep.subr.mxu0 0.0
    %258 = vmatpush1.msra.mxu0 0.0
    %259 = vmatprep.subr.mxu0 0.0
    %260 = vmatpush1.msra.mxu0 0.0
    %261 = vmatprep.subr.mxu0 0.0
    %262 = vmatpush1.msra.mxu0 0.0
    %263 = vmatprep.subr.mxu0 0.0
    %264 = vmatpush1.msra.mxu0 0.0
    %265 = vmatprep.subr.mxu0 0.0
    %266 = vmatpush1.msra.mxu0 0.0
    %267 = vmatprep.subr.mxu0 0.0
    %268 = vmatpush1.msra.mxu0 0.0
    %269 = vmatprep.subr.mxu0 0.0
    %270 = vmatpush1.msra.mxu0 0.0
    %271 = vmatprep.subr.mxu0 0.0
    %272 = vmatpush1.msra.mxu0 0.0
    %273 = vmatprep.subr.mxu0 0.0
    %274 = vmatpush1.msra.mxu0 0.0
    %275 = vmatprep.subr.mxu0 0.0
    %276 = vmatpush1.msra.mxu0 0.0
    %277 = vmatprep.subr.mxu0 0.0
    %278 = vmatpush1.msra.mxu0 0.0
    %279 = vmatprep.mubr.f32.mxu0 0.0
    %280 = vmatmul.mubr.f32.gmra.mrb[0].mxu0 %v119
    %v281 = vpop.f32.mrb[0].mxu0
    %v282 = vadd.f32 0.0, %v281
    %v283 = vpop.f32.mrb[0].mxu0
    %v284 = vadd.f32 0.0, %v283
    %285 = vmatprep.mubr.f32.mxu0 0.0
    %286 = vmatmul.mubr.f32.gmra.mrb[0].mxu0 %v120
    %v287 = vpop.f32.mrb[0].mxu0
    %v288 = vadd.f32 0.0, %v287
    %v289 = vpop.f32.mrb[0].mxu0
    %v290 = vadd.f32 0.0, %v289
    %291 = vmatprep.mubr.f32.mxu0 0.0
    %292 = vmatmul.mubr.f32.gmra.mrb[0].mxu0 %v121
    %v293 = vpop.f32.mrb[0].mxu0
    %v294 = vadd.f32 0.0, %v293
    %v295 = vpop.f32.mrb[0].mxu0
    %v296 = vadd.f32 0.0, %v295
    %297 = vmatprep.mubr.f32.mxu0 0.0
    %298 = vmatmul.mubr.f32.gmra.mrb[0].mxu0 %v122
    %v299 = vpop.f32.mrb[0].mxu0
    %v300 = vadd.f32 0.0, %v299
    %v301 = vpop.f32.mrb[0].mxu0
    %v302 = vadd.f32 0.0, %v301
    %303 = vmatprep.mubr.f32.mxu0 0.0
    %304 = vmatmul.mubr.f32.gmra.mrb[0].mxu0 %v123
    %v305 = vpop.f32.mrb[0].mxu0
    %v306 = vadd.f32 0.0, %v305
    %v307 = vpop.f32.mrb[0].mxu0
    %v308 = vadd.f32 0.0, %v307
    %309 = vmatprep.mubr.f32.mxu0 0.0
    %310 = vmatmul.mubr.f32.gmra.mrb[0].mxu0 %v124
    %v311 = vpop.f32.mrb[0].mxu0
    %v312 = vadd.f32 0.0, %v311
    %v313 = vpop.f32.mrb[0].mxu0
    %v314 = vadd.f32 0.0, %v313
    %315 = vmatprep.mubr.f32.mxu0 0.0
    %316 = vmatmul.mubr.f32.gmra.mrb[0].mxu0 %v125
    %v317 = vpop.f32.mrb[0].mxu0
    %v318 = vadd.f32 0.0, %v317
    %v319 = vpop.f32.mrb[0].mxu0
    %v320 = vadd.f32 0.0, %v319
    %321 = vmatprep.mubr.f32.mxu0 0.0
    %322 = vmatmul.mubr.f32.gmra.mrb[0].mxu0 %v126
    %v323 = vpop.f32.mrb[0].mxu0
    %v324 = vadd.f32 0.0, %v323
    %v325 = vpop.f32.mrb[0].mxu0
    %v326 = vadd.f32 0.0, %v325
    %327 = vmatprep.mubr.f32.mxu0 0.0
    %328 = vmatmul.mubr.f32.gmra.mrb[0].mxu0 %v127
    %v329 = vpop.f32.mrb[0].mxu0
    %v330 = vadd.f32 0.0, %v329
    %v331 = vpop.f32.mrb[0].mxu0
    %v332 = vadd.f32 0.0, %v331
    %333 = vmatprep.mubr.f32.mxu0 0.0
    %334 = vmatmul.mubr.f32.gmra.mrb[0].mxu0 %v128
    %v335 = vpop.f32.mrb[0].mxu0
    %v336 = vadd.f32 0.0, %v335
    %v337 = vpop.f32.mrb[0].mxu0
    %v338 = vadd.f32 0.0, %v337
    %339 = vmatprep.mubr.f32.mxu0 0.0
    %340 = vmatmul.mubr.f32.gmra.mrb[0].mxu0 %v129
    %v341 = vpop.f32.mrb[0].mxu0
    %v342 = vadd.f32 0.0, %v341
    %v343 = vpop.f32.mrb[0].mxu0
    %v344 = vadd.f32 0.0, %v343
    %345 = vmatprep.mubr.f32.mxu0 0.0
    %346 = vmatmul.mubr.f32.gmra.mrb[0].mxu0 %v130
    %v347 = vpop.f32.mrb[0].mxu0
    %v348 = vadd.f32 0.0, %v347
    %v349 = vpop.f32.mrb[0].mxu0
    %v350 = vadd.f32 0.0, %v349
    %351 = vmatprep.mubr.f32.mxu0 0.0
    %352 = vmatmul.mubr.f32.gmra.mrb[0].mxu0 %v131
    %v353 = vpop.f32.mrb[0].mxu0
    %v354 = vadd.f32 0.0, %v353
    %v355 = vpop.f32.mrb[0].mxu0
    %v356 = vadd.f32 0.0, %v355
    %357 = vmatprep.mubr.f32.mxu0 0.0
    %358 = vmatmul.mubr.f32.gmra.mrb[0].mxu0 %v132
    %v359 = vpop.f32.mrb[0].mxu0
    %v360 = vadd.f32 0.0, %v359
    %v361 = vpop.f32.mrb[0].mxu0
    %v362 = vadd.f32 0.0, %v361
    %363 = vmatprep.mubr.f32.mxu0 0.0
    %364 = vmatmul.mubr.f32.gmra.mrb[0].mxu0 %v133
    %v365 = vpop.f32.mrb[0].mxu0
    %v366 = vadd.f32 0.0, %v365
    %v367 = vpop.f32.mrb[0].mxu0
    %v368 = vadd.f32 0.0, %v367
    %369 = vmatprep.mubr.f32.mxu0 0.0
    %370 = vmatmul.mubr.f32.gmra.mrb[0].mxu0 %v134
    %v371 = vpop.f32.mrb[0].mxu0
    %v372 = vadd.f32 0.0, %v371
    %v373 = vpop.f32.mrb[0].mxu0
    %v374 = vadd.f32 0.0, %v373
    %375 = vmatprep.mubr.f32.mxu0 0.0
    %376 = vmatmul.mubr.f32.gmra.mrb[0].mxu0 %v135
    %v377 = vpop.f32.mrb[0].mxu0
    %v378 = vadd.f32 0.0, %v377
    %v379 = vpop.f32.mrb[0].mxu0
    %v380 = vadd.f32 0.0, %v379
    %381 = vmatprep.mubr.f32.mxu0 0.0
    %382 = vmatmul.mubr.f32.gmra.mrb[0].mxu0 %v136
    %v383 = vpop.f32.mrb[0].mxu0
    %v384 = vadd.f32 0.0, %v383
    %v385 = vpop.f32.mrb[0].mxu0
    %v386 = vadd.f32 0.0, %v385
    %387 = vmatprep.mubr.f32.mxu0 0.0
    %388 = vmatmul.mubr.f32.gmra.mrb[0].mxu0 %v137
    %v389 = vpop.f32.mrb[0].mxu0
    %v390 = vadd.f32 0.0, %v389
    %v391 = vpop.f32.mrb[0].mxu0
    %v392 = vadd.f32 0.0, %v391
    %393 = vmatprep.mubr.f32.mxu0 0.0
    %394 = vmatmul.mubr.f32.gmra.mrb[0].mxu0 %v138
    %v395 = vpop.f32.mrb[0].mxu0
    %v396 = vadd.f32 0.0, %v395
    %v397 = vpop.f32.mrb[0].mxu0
    %v398 = vadd.f32 0.0, %v397
    %399 = vmatprep.mubr.f32.mxu0 0.0
    %400 = vmatmul.mubr.f32.gmra.mrb[0].mxu0 %v139
    %v401 = vpop.f32.mrb[0].mxu0
    %v402 = vadd.f32 0.0, %v401
    %v403 = vpop.f32.mrb[0].mxu0
    %v404 = vadd.f32 0.0, %v403
    %405 = vmatprep.mubr.f32.mxu0 0.0
    %406 = vmatmul.mubr.f32.gmra.mrb[0].mxu0 %v140
    %v407 = vpop.f32.mrb[0].mxu0
    %v408 = vadd.f32 0.0, %v407
    %v409 = vpop.f32.mrb[0].mxu0
    %v410 = vadd.f32 0.0, %v409
    %411 = vmatprep.mubr.f32.mxu0 0.0
    %412 = vmatmul.mubr.f32.gmra.mrb[0].mxu0 %v141
    %v413 = vpop.f32.mrb[0].mxu0
    %v414 = vadd.f32 0.0, %v413
    %v415 = vpop.f32.mrb[0].mxu0
    %v416 = vadd.f32 0.0, %v415
    %417 = vmatprep.mubr.f32.mxu0 0.0
    %418 = vmatmul.mubr.f32.gmra.mrb[0].mxu0 %v142
    %v419 = vpop.f32.mrb[0].mxu0
    %v420 = vadd.f32 0.0, %v419
    %v421 = vpop.f32.mrb[0].mxu0
    %v422 = vadd.f32 0.0, %v421
    %423 = vmatprep.mubr.f32.mxu0 0.0
    %424 = vmatmul.mubr.f32.gmra.mrb[0].mxu0 %v143
    %v425 = vpop.f32.mrb[0].mxu0
    %v426 = vadd.f32 0.0, %v425
    %v427 = vpop.f32.mrb[0].mxu0
    %v428 = vadd.f32 0.0, %v427
    %429 = vmatprep.mubr.f32.mxu0 0.0
    %430 = vmatmul.mubr.f32.gmra.mrb[0].mxu0 %v144
    %v431 = vpop.f32.mrb[0].mxu0
    %v432 = vadd.f32 0.0, %v431
    %v433 = vpop.f32.mrb[0].mxu0
    %v434 = vadd.f32 0.0, %v433
    %435 = vmatprep.mubr.f32.mxu0 0.0
    %436 = vmatmul.mubr.f32.gmra.mrb[0].mxu0 %v145
    %v437 = vpop.f32.mrb[0].mxu0
    %v438 = vadd.f32 0.0, %v437
    %v439 = vpop.f32.mrb[0].mxu0
    %v440 = vadd.f32 0.0, %v439
    %441 = vmatprep.mubr.f32.mxu0 0.0
    %442 = vmatmul.mubr.f32.gmra.mrb[0].mxu0 %v146
    %v443 = vpop.f32.mrb[0].mxu0
    %v444 = vadd.f32 0.0, %v443
    %v445 = vpop.f32.mrb[0].mxu0
    %v446 = vadd.f32 0.0, %v445
    %447 = vmatprep.mubr.f32.mxu0 0.0
    %448 = vmatmul.mubr.f32.gmra.mrb[0].mxu0 %v147
    %v449 = vpop.f32.mrb[0].mxu0
    %v450 = vadd.f32 0.0, %v449
    %v451 = vpop.f32.mrb[0].mxu0
    %v452 = vadd.f32 0.0, %v451
    %453 = vmatprep.mubr.f32.mxu0 0.0
    %454 = vmatmul.mubr.f32.gmra.mrb[0].mxu0 %v148
    %v455 = vpop.f32.mrb[0].mxu0
    %v456 = vadd.f32 0.0, %v455
    %v457 = vpop.f32.mrb[0].mxu0
    %v458 = vadd.f32 0.0, %v457
    %459 = vmatprep.mubr.f32.mxu0 0.0
    %460 = vmatmul.mubr.f32.gmra.mrb[0].mxu0 %v149
    %v461 = vpop.f32.mrb[0].mxu0
    %v462 = vadd.f32 0.0, %v461
    %v463 = vpop.f32.mrb[0].mxu0
    %v464 = vadd.f32 0.0, %v463
    %465 = vmatprep.mubr.f32.mxu0 0.0
    %466 = vmatmul.mubr.f32.gmra.mrb[0].mxu0 %v150
    %v467 = vpop.f32.mrb[0].mxu0
    %v468 = vadd.f32 0.0, %v467
    %v469 = vpop.f32.mrb[0].mxu0
    %v470 = vadd.f32 0.0, %v469
    %471 = vmatprep.mubr.f32.mxu0 0.0
    %472 = vmatmul.mubr.f32.gmra.mrb[0].mxu0 %v151
    %v473 = vpop.f32.mrb[0].mxu0
    %v474 = vadd.f32 0.0, %v473
    %v475 = vpop.f32.mrb[0].mxu0
    %v476 = vadd.f32 0.0, %v475
    %477 = vmatprep.mubr.f32.mxu0 0.0
    %478 = vmatmul.mubr.f32.gmra.mrb[0].mxu0 %v152
    %v479 = vpop.f32.mrb[0].mxu0
    %v480 = vadd.f32 0.0, %v479
    %v481 = vpop.f32.mrb[0].mxu0
    %v482 = vadd.f32 0.0, %v481
    %483 = vmatprep.mubr.f32.mxu0 0.0
    %484 = vmatmul.mubr.f32.gmra.mrb[0].mxu0 %v153
    %v485 = vpop.f32.mrb[0].mxu0
    %v486 = vadd.f32 0.0, %v485
    %v487 = vpop.f32.mrb[0].mxu0
    %v488 = vadd.f32 0.0, %v487
    %489 = vmatprep.mubr.f32.mxu0 0.0
    %490 = vmatmul.mubr.f32.gmra.mrb[0].mxu0 %v154
    %v491 = vpop.f32.mrb[0].mxu0
    %v492 = vadd.f32 0.0, %v491
    %v493 = vpop.f32.mrb[0].mxu0
    %v494 = vadd.f32 0.0, %v493
    %495 = vmatprep.mubr.f32.mxu0 0.0
    %496 = vmatmul.mubr.f32.gmra.mrb[0].mxu0 %v155
    %v497 = vpop.f32.mrb[0].mxu0
    %v498 = vadd.f32 0.0, %v497
    %v499 = vpop.f32.mrb[0].mxu0
    %v500 = vadd.f32 0.0, %v499
    %501 = vmatprep.mubr.f32.mxu0 0.0
    %502 = vmatmul.mubr.f32.gmra.mrb[0].mxu0 %v156
    %v503 = vpop.f32.mrb[0].mxu0
    %v504 = vadd.f32 0.0, %v503
    %v505 = vpop.f32.mrb[0].mxu0
    %v506 = vadd.f32 0.0, %v505
    %507 = vmatprep.mubr.f32.mxu0 0.0
    %508 = vmatmul.mubr.f32.gmra.mrb[0].mxu0 %v157
    %v509 = vpop.f32.mrb[0].mxu0
    %v510 = vadd.f32 0.0, %v509
    %v511 = vpop.f32.mrb[0].mxu0
    %v512 = vadd.f32 0.0, %v511
    %513 = vmatprep.mubr.f32.mxu0 0.0
    %514 = vmatmul.mubr.f32.gmra.mrb[0].mxu0 %v158
    %v515 = vpop.f32.mrb[0].mxu0
    %v516 = vadd.f32 0.0, %v515
    %v517 = vpop.f32.mrb[0].mxu0
    %v518 = vadd.f32 0.0, %v517
    %519 = vmatprep.mubr.f32.mxu0 0.0
    %520 = vmatmul.mubr.f32.gmra.mrb[0].mxu0 %v159
    %v521 = vpop.f32.mrb[0].mxu0
    %v522 = vadd.f32 0.0, %v521
    %v523 = vpop.f32.mrb[0].mxu0
    %v524 = vadd.f32 0.0, %v523
    %525 = vmatprep.mubr.f32.mxu0 0.0
    %526 = vmatmul.mubr.f32.gmra.mrb[0].mxu0 %v160
    %v527 = vpop.f32.mrb[0].mxu0
    %v528 = vadd.f32 0.0, %v527
    %v529 = vpop.f32.mrb[0].mxu0
    %v530 = vadd.f32 0.0, %v529
    %531 = vmatprep.mubr.f32.mxu0 0.0
    %532 = vmatmul.mubr.f32.gmra.mrb[0].mxu0 %v161
    %v533 = vpop.f32.mrb[0].mxu0
    %v534 = vadd.f32 0.0, %v533
    %v535 = vpop.f32.mrb[0].mxu0
    %v536 = vadd.f32 0.0, %v535
    %537 = vmatprep.mubr.f32.mxu0 0.0
    %538 = vmatmul.mubr.f32.gmra.mrb[0].mxu0 %v162
    %v539 = vpop.f32.mrb[0].mxu0
    %v540 = vadd.f32 0.0, %v539
    %v541 = vpop.f32.mrb[0].mxu0
    %v542 = vadd.f32 0.0, %v541
    %543 = vmatprep.mubr.f32.mxu0 0.0
    %544 = vmatmul.mubr.f32.gmra.mrb[0].mxu0 %v163
    %v545 = vpop.f32.mrb[0].mxu0
    %v546 = vadd.f32 0.0, %v545
    %v547 = vpop.f32.mrb[0].mxu0
    %v548 = vadd.f32 0.0, %v547
    %549 = vmatprep.mubr.f32.mxu0 0.0
    %550 = vmatmul.mubr.f32.gmra.mrb[0].mxu0 %v164
    %v551 = vpop.f32.mrb[0].mxu0
    %v552 = vadd.f32 0.0, %v551
    %v553 = vpop.f32.mrb[0].mxu0
    %v554 = vadd.f32 0.0, %v553
    %555 = vmatprep.mubr.f32.mxu0 0.0
    %556 = vmatmul.mubr.f32.gmra.mrb[0].mxu0 %v165
    %v557 = vpop.f32.mrb[0].mxu0
    %v558 = vadd.f32 0.0, %v557
    %v559 = vpop.f32.mrb[0].mxu0
    %v560 = vadd.f32 0.0, %v559
    %561 = vmatprep.mubr.f32.mxu0 0.0
    %562 = vmatmul.mubr.f32.gmra.mrb[0].mxu0 %v166
    %v563 = vpop.f32.mrb[0].mxu0
    %v564 = vadd.f32 0.0, %v563
    %v565 = vpop.f32.mrb[0].mxu0
    %v566 = vadd.f32 0.0, %v565
    %567 = vmatprep.mubr.f32.mxu0 0.0
    %568 = vmatmul.mubr.f32.gmra.mrb[0].mxu0 %v167
    %v569 = vpop.f32.mrb[0].mxu0
    %v570 = vadd.f32 0.0, %v569
    %v571 = vpop.f32.mrb[0].mxu0
    %v572 = vadd.f32 0.0, %v571
    %573 = vmatprep.mubr.f32.mxu0 0.0
    %574 = vmatmul.mubr.f32.gmra.mrb[0].mxu0 %v168
    %v575 = vpop.f32.mrb[0].mxu0
    %v576 = vadd.f32 0.0, %v575
    %v577 = vpop.f32.mrb[0].mxu0
    %v578 = vadd.f32 0.0, %v577
    %579 = vmatprep.mubr.f32.mxu0 0.0
    %580 = vmatmul.mubr.f32.gmra.mrb[0].mxu0 %v169
    %v581 = vpop.f32.mrb[0].mxu0
    %v582 = vadd.f32 0.0, %v581
    %v583 = vpop.f32.mrb[0].mxu0
    %v584 = vadd.f32 0.0, %v583
    %585 = vmatprep.mubr.f32.mxu0 0.0
    %586 = vmatmul.mubr.f32.gmra.mrb[0].mxu0 %v170
    %v587 = vpop.f32.mrb[0].mxu0
    %v588 = vadd.f32 0.0, %v587
    %v589 = vpop.f32.mrb[0].mxu0
    %v590 = vadd.f32 0.0, %v589
    %591 = vmatprep.mubr.f32.mxu0 0.0
    %592 = vmatmul.mubr.f32.gmra.mrb[0].mxu0 %v171
    %v593 = vpop.f32.mrb[0].mxu0
    %v594 = vadd.f32 0.0, %v593
    %v595 = vpop.f32.mrb[0].mxu0
    %v596 = vadd.f32 0.0, %v595
    %597 = vmatprep.mubr.f32.mxu0 0.0
    %598 = vmatmul.mubr.f32.gmra.mrb[0].mxu0 %v172
    %v599 = vpop.f32.mrb[0].mxu0
    %v600 = vadd.f32 0.0, %v599
    %v601 = vpop.f32.mrb[0].mxu0
    %v602 = vadd.f32 0.0, %v601
    %603 = vmatprep.mubr.f32.mxu0 0.0
    %604 = vmatmul.mubr.f32.gmra.mrb[0].mxu0 %v173
    %v605 = vpop.f32.mrb[0].mxu0
    %v606 = vadd.f32 0.0, %v605
    %v607 = vpop.f32.mrb[0].mxu0
    %v608 = vadd.f32 0.0, %v607
    %609 = vmatprep.mubr.f32.mxu0 0.0
    %610 = vmatmul.mubr.f32.gmra.mrb[0].mxu0 %v174
    %v611 = vpop.f32.mrb[0].mxu0
    %v612 = vadd.f32 0.0, %v611
    %v613 = vpop.f32.mrb[0].mxu0
    %v614 = vadd.f32 0.0, %v613
    %615 = vmatprep.mubr.f32.mxu0 0.0
    %616 = vmatmul.mubr.f32.gmra.mrb[0].mxu0 %v175
    %v617 = vpop.f32.mrb[0].mxu0
    %v618 = vadd.f32 0.0, %v617
    %v619 = vpop.f32.mrb[0].mxu0
    %v620 = vadd.f32 0.0, %v619
    %621 = vmatprep.mubr.f32.mxu0 0.0
    %622 = vmatmul.mubr.f32.gmra.mrb[0].mxu0 %v176
    %v623 = vpop.f32.mrb[0].mxu0
    %v624 = vadd.f32 0.0, %v623
    %v625 = vpop.f32.mrb[0].mxu0
    %v626 = vadd.f32 0.0, %v625
    %627 = vmatprep.mubr.f32.mxu0 0.0
    %628 = vmatmul.mubr.f32.gmra.mrb[0].mxu0 %v177
    %v629 = vpop.f32.mrb[0].mxu0
    %v630 = vadd.f32 0.0, %v629
    %v631 = vpop.f32.mrb[0].mxu0
    %v632 = vadd.f32 0.0, %v631
    %633 = vmatprep.mubr.f32.mxu0 0.0
    %634 = vmatmul.mubr.f32.gmra.mrb[0].mxu0 %v178
    %v635 = vpop.f32.mrb[0].mxu0
    %v636 = vadd.f32 0.0, %v635
    %v637 = vpop.f32.mrb[0].mxu0
    %v638 = vadd.f32 0.0, %v637
    %639 = vmatprep.mubr.f32.mxu0 0.0
    %640 = vmatmul.mubr.f32.gmra.mrb[0].mxu0 %v179
    %v641 = vpop.f32.mrb[0].mxu0
    %v642 = vadd.f32 0.0, %v641
    %v643 = vpop.f32.mrb[0].mxu0
    %v644 = vadd.f32 0.0, %v643
    %645 = vmatprep.mubr.f32.mxu0 0.0
    %646 = vmatmul.mubr.f32.gmra.mrb[0].mxu0 %v180
    %v647 = vpop.f32.mrb[0].mxu0
    %v648 = vadd.f32 0.0, %v647
    %v649 = vpop.f32.mrb[0].mxu0
    %v650 = vadd.f32 0.0, %v649
    %651 = vmatprep.mubr.f32.mxu0 0.0
    %652 = vmatmul.mubr.f32.gmra.mrb[0].mxu0 %v181
    %v653 = vpop.f32.mrb[0].mxu0
    %v654 = vadd.f32 0.0, %v653
    %v655 = vpop.f32.mrb[0].mxu0
    %v656 = vadd.f32 0.0, %v655
    %657 = vmatprep.mubr.f32.mxu0 0.0
    %658 = vmatmul.mubr.f32.gmra.mrb[0].mxu0 %v182
    %v659 = vpop.f32.mrb[0].mxu0
    %v660 = vadd.f32 0.0, %v659
    %v661 = vpop.f32.mrb[0].mxu0
    %v662 = vadd.f32 0.0, %v661
    %663 = vdwg.mxu0
    %v664 = vld [vmem:[#allocation7] sm:$0xff]
    %v665 = vld [vmem:[#allocation7 + $0x8] sm:$0xff]
    %v666 = vld [vmem:[#allocation7 + $0x10] sm:$0xff]
    %v667 = vld [vmem:[#allocation7 + $0x18] sm:$0xff]
    %v668 = vld [vmem:[#allocation7 + $0x20] sm:$0xff]
    %v669 = vld [vmem:[#allocation7 + $0x28] sm:$0xff]
    %v670 = vld [vmem:[#allocation7 + $0x30] sm:$0xff]
    %v671 = vld [vmem:[#allocation7 + $0x38] sm:$0xff]
    %v672 = vld [vmem:[#allocation7 + $0x40] sm:$0xff]
    %v673 = vld [vmem:[#allocation7 + $0x48] sm:$0xff]
    %v674 = vld [vmem:[#allocation7 + $0x50] sm:$0xff]
    %v675 = vld [vmem:[#allocation7 + $0x58] sm:$0xff]
    %v676 = vld [vmem:[#allocation7 + $0x60] sm:$0xff]
    %v677 = vld [vmem:[#allocation7 + $0x68] sm:$0xff]
    %v678 = vld [vmem:[#allocation7 + $0x70] sm:$0xff]
    %v679 = vld [vmem:[#allocation7 + $0x78] sm:$0xff]
    %v680 = vld [vmem:[#allocation7 + $0x80] sm:$0xff]
    %v681 = vld [vmem:[#allocation7 + $0x88] sm:$0xff]
    %v682 = vld [vmem:[#allocation7 + $0x90] sm:$0xff]
    %v683 = vld [vmem:[#allocation7 + $0x98] sm:$0xff]
    %v684 = vld [vmem:[#allocation7 + $0xa0] sm:$0xff]
    %v685 = vld [vmem:[#allocation7 + $0xa8] sm:$0xff]
    %v686 = vld [vmem:[#allocation7 + $0xb0] sm:$0xff]
    %v687 = vld [vmem:[#allocation7 + $0xb8] sm:$0xff]
    %v688 = vld [vmem:[#allocation7 + $0xc0] sm:$0xff]
    %v689 = vld [vmem:[#allocation7 + $0xc8] sm:$0xff]
    %v690 = vld [vmem:[#allocation7 + $0xd0] sm:$0xff]
    %v691 = vld [vmem:[#allocation7 + $0xd8] sm:$0xff]
    %v692 = vld [vmem:[#allocation7 + $0xe0] sm:$0xff]
    %v693 = vld [vmem:[#allocation7 + $0xe8] sm:$0xff]
    %v694 = vld [vmem:[#allocation7 + $0xf0] sm:$0xff]
    %v695 = vld [vmem:[#allocation7 + $0xf8] sm:$0xff]
    %v696 = vld [vmem:[#allocation7 + $0x100] sm:$0xff]
    %v697 = vld [vmem:[#allocation7 + $0x108] sm:$0xff]
    %v698 = vld [vmem:[#allocation7 + $0x110] sm:$0xff]
    %v699 = vld [vmem:[#allocation7 + $0x118] sm:$0xff]
    %v700 = vld [vmem:[#allocation7 + $0x120] sm:$0xff]
    %v701 = vld [vmem:[#allocation7 + $0x128] sm:$0xff]
    %v702 = vld [vmem:[#allocation7 + $0x130] sm:$0xff]
    %v703 = vld [vmem:[#allocation7 + $0x138] sm:$0xff]
    %v704 = vld [vmem:[#allocation7 + $0x140] sm:$0xff]
    %v705 = vld [vmem:[#allocation7 + $0x148] sm:$0xff]
    %v706 = vld [vmem:[#allocation7 + $0x150] sm:$0xff]
    %v707 = vld [vmem:[#allocation7 + $0x158] sm:$0xff]
    %v708 = vld [vmem:[#allocation7 + $0x160] sm:$0xff]
    %v709 = vld [vmem:[#allocation7 + $0x168] sm:$0xff]
    %v710 = vld [vmem:[#allocation7 + $0x170] sm:$0xff]
    %v711 = vld [vmem:[#allocation7 + $0x178] sm:$0xff]
    %v712 = vld [vmem:[#allocation7 + $0x180] sm:$0xff]
    %v713 = vld [vmem:[#allocation7 + $0x188] sm:$0xff]
    %v714 = vld [vmem:[#allocation7 + $0x190] sm:$0xff]
    %v715 = vld [vmem:[#allocation7 + $0x198] sm:$0xff]
    %v716 = vld [vmem:[#allocation7 + $0x1a0] sm:$0xff]
    %v717 = vld [vmem:[#allocation7 + $0x1a8] sm:$0xff]
    %v718 = vld [vmem:[#allocation7 + $0x1b0] sm:$0xff]
    %v719 = vld [vmem:[#allocation7 + $0x1b8] sm:$0xff]
    %v720 = vld [vmem:[#allocation7 + $0x1c0] sm:$0xff]
    %v721 = vld [vmem:[#allocation7 + $0x1c8] sm:$0xff]
    %v722 = vld [vmem:[#allocation7 + $0x1d0] sm:$0xff]
    %v723 = vld [vmem:[#allocation7 + $0x1d8] sm:$0xff]
    %v724 = vld [vmem:[#allocation7 + $0x1e0] sm:$0xff]
    %v725 = vld [vmem:[#allocation7 + $0x1e8] sm:$0xff]
    %v726 = vld [vmem:[#allocation7 + $0x1f0] sm:$0xff]
    %v727 = vld [vmem:[#allocation7 + $0x1f8] sm:$0xff]
    %v728 = vld [vmem:[#allocation10] sm:$0xff]
    %v729 = vld [vmem:[#allocation10 + $0x8] sm:$0xff]
    %v730 = vld [vmem:[#allocation10 + $0x10] sm:$0xff]
    %v731 = vld [vmem:[#allocation10 + $0x18] sm:$0xff]
    %v732 = vld [vmem:[#allocation10 + $0x20] sm:$0xff]
    %v733 = vld [vmem:[#allocation10 + $0x28] sm:$0xff]
    %v734 = vld [vmem:[#allocation10 + $0x30] sm:$0xff]
    %v735 = vld [vmem:[#allocation10 + $0x38] sm:$0xff]
    %v736 = vld [vmem:[#allocation10 + $0x40] sm:$0xff]
    %v737 = vld [vmem:[#allocation10 + $0x48] sm:$0xff]
    %v738 = vld [vmem:[#allocation10 + $0x50] sm:$0xff]
    %v739 = vld [vmem:[#allocation10 + $0x58] sm:$0xff]
    %v740 = vld [vmem:[#allocation10 + $0x60] sm:$0xff]
    %v741 = vld [vmem:[#allocation10 + $0x68] sm:$0xff]
    %v742 = vld [vmem:[#allocation10 + $0x70] sm:$0xff]
    %v743 = vld [vmem:[#allocation10 + $0x78] sm:$0xff]
    %v744 = vld [vmem:[#allocation10 + $0x80] sm:$0xff]
    %v745 = vld [vmem:[#allocation10 + $0x88] sm:$0xff]
    %v746 = vld [vmem:[#allocation10 + $0x90] sm:$0xff]
    %v747 = vld [vmem:[#allocation10 + $0x98] sm:$0xff]
    %v748 = vld [vmem:[#allocation10 + $0xa0] sm:$0xff]
    %v749 = vld [vmem:[#allocation10 + $0xa8] sm:$0xff]
    %v750 = vld [vmem:[#allocation10 + $0xb0] sm:$0xff]
    %v751 = vld [vmem:[#allocation10 + $0xb8] sm:$0xff]
    %v752 = vld [vmem:[#allocation10 + $0xc0] sm:$0xff]
    %v753 = vld [vmem:[#allocation10 + $0xc8] sm:$0xff]
    %v754 = vld [vmem:[#allocation10 + $0xd0] sm:$0xff]
    %v755 = vld [vmem:[#allocation10 + $0xd8] sm:$0xff]
    %v756 = vld [vmem:[#allocation10 + $0xe0] sm:$0xff]
    %v757 = vld [vmem:[#allocation10 + $0xe8] sm:$0xff]
    %v758 = vld [vmem:[#allocation10 + $0xf0] sm:$0xff]
    %v759 = vld [vmem:[#allocation10 + $0xf8] sm:$0xff]
    %760 = vmatprep.subr.mxu0 %v729
    %761 = vmatpush1.msra.mxu0 %v728
    %762 = vmatprep.subr.mxu0 %v731
    %763 = vmatpush1.msra.mxu0 %v730
    %764 = vmatprep.subr.mxu0 %v733
    %765 = vmatpush1.msra.mxu0 %v732
    %766 = vmatprep.subr.mxu0 %v735
    %767 = vmatpush1.msra.mxu0 %v734
    %768 = vmatprep.subr.mxu0 %v737
    %769 = vmatpush1.msra.mxu0 %v736
    %770 = vmatprep.subr.mxu0 %v739
    %771 = vmatpush1.msra.mxu0 %v738
    %772 = vmatprep.subr.mxu0 %v741
    %773 = vmatpush1.msra.mxu0 %v740
    %774 = vmatprep.subr.mxu0 %v743
    %775 = vmatpush1.msra.mxu0 %v742
    %776 = vmatprep.subr.mxu0 %v745
    %777 = vmatpush1.msra.mxu0 %v744
    %778 = vmatprep.subr.mxu0 %v747
    %779 = vmatpush1.msra.mxu0 %v746
    %780 = vmatprep.subr.mxu0 %v749
    %781 = vmatpush1.msra.mxu0 %v748
    %782 = vmatprep.subr.mxu0 %v751
    %783 = vmatpush1.msra.mxu0 %v750
    %784 = vmatprep.subr.mxu0 %v753
    %785 = vmatpush1.msra.mxu0 %v752
    %786 = vmatprep.subr.mxu0 %v755
    %787 = vmatpush1.msra.mxu0 %v754
    %788 = vmatprep.subr.mxu0 %v757
    %789 = vmatpush1.msra.mxu0 %v756
    %790 = vmatprep.subr.mxu0 %v759
    %791 = vmatpush1.msra.mxu0 %v758
    %792 = vmatprep.subr.mxu0 0.0
    %793 = vmatpush1.msra.mxu0 0.0
    %794 = vmatprep.subr.mxu0 0.0
    %795 = vmatpush1.msra.mxu0 0.0
    %796 = vmatprep.subr.mxu0 0.0
    %797 = vmatpush1.msra.mxu0 0.0
    %798 = vmatprep.subr.mxu0 0.0
    %799 = vmatpush1.msra.mxu0 0.0
    %800 = vmatprep.subr.mxu0 0.0
    %801 = vmatpush1.msra.mxu0 0.0
    %802 = vmatprep.subr.mxu0 0.0
    %803 = vmatpush1.msra.mxu0 0.0
    %804 = vmatprep.subr.mxu0 0.0
    %805 = vmatpush1.msra.mxu0 0.0
    %806 = vmatprep.subr.mxu0 0.0
    %807 = vmatpush1.msra.mxu0 0.0
    %808 = vmatprep.subr.mxu0 0.0
    %809 = vmatpush1.msra.mxu0 0.0
    %810 = vmatprep.subr.mxu0 0.0
    %811 = vmatpush1.msra.mxu0 0.0
    %812 = vmatprep.subr.mxu0 0.0
    %813 = vmatpush1.msra.mxu0 0.0
    %814 = vmatprep.subr.mxu0 0.0
    %815 = vmatpush1.msra.mxu0 0.0
    %816 = vmatprep.subr.mxu0 0.0
    %817 = vmatpush1.msra.mxu0 0.0
    %818 = vmatprep.subr.mxu0 0.0
    %819 = vmatpush1.msra.mxu0 0.0
    %820 = vmatprep.subr.mxu0 0.0
    %821 = vmatpush1.msra.mxu0 0.0
    %822 = vmatprep.subr.mxu0 0.0
    %823 = vmatpush1.msra.mxu0 0.0
    %824 = vmatprep.mubr.f32.mxu0 0.0
    %825 = vmatmul.mubr.f32.gmra.mrb[0].mxu0 %v664
    %v826 = vpop.f32.mrb[0].mxu0
    %v827 = vadd.f32 0.0, %v826
    %v828 = vpop.f32.mrb[0].mxu0
    %v829 = vadd.f32 0.0, %v828
    %830 = vmatprep.mubr.f32.mxu0 0.0
    %831 = vmatmul.mubr.f32.gmra.mrb[0].mxu0 %v665
    %v832 = vpop.f32.mrb[0].mxu0
    %v833 = vadd.f32 0.0, %v832
    %v834 = vpop.f32.mrb[0].mxu0
    %v835 = vadd.f32 0.0, %v834
    %836 = vmatprep.mubr.f32.mxu0 0.0
    %837 = vmatmul.mubr.f32.gmra.mrb[0].mxu0 %v666
    %v838 = vpop.f32.mrb[0].mxu0
    %v839 = vadd.f32 0.0, %v838
    %v840 = vpop.f32.mrb[0].mxu0
    %v841 = vadd.f32 0.0, %v840
    %842 = vmatprep.mubr.f32.mxu0 0.0
    %843 = vmatmul.mubr.f32.gmra.mrb[0].mxu0 %v667
    %v844 = vpop.f32.mrb[0].mxu0
    %v845 = vadd.f32 0.0, %v844
    %v846 = vpop.f32.mrb[0].mxu0
    %v847 = vadd.f32 0.0, %v846
    %848 = vmatprep.mubr.f32.mxu0 0.0
    %849 = vmatmul.mubr.f32.gmra.mrb[0].mxu0 %v668
    %v850 = vpop.f32.mrb[0].mxu0
    %v851 = vadd.f32 0.0, %v850
    %v852 = vpop.f32.mrb[0].mxu0
    %v853 = vadd.f32 0.0, %v852
    %854 = vmatprep.mubr.f32.mxu0 0.0
    %855 = vmatmul.mubr.f32.gmra.mrb[0].mxu0 %v669
    %v856 = vpop.f32.mrb[0].mxu0
    %v857 = vadd.f32 0.0, %v856
    %v858 = vpop.f32.mrb[0].mxu0
    %v859 = vadd.f32 0.0, %v858
    %860 = vmatprep.mubr.f32.mxu0 0.0
    %861 = vmatmul.mubr.f32.gmra.mrb[0].mxu0 %v670
    %v862 = vpop.f32.mrb[0].mxu0
    %v863 = vadd.f32 0.0, %v862
    %v864 = vpop.f32.mrb[0].mxu0
    %v865 = vadd.f32 0.0, %v864
    %866 = vmatprep.mubr.f32.mxu0 0.0
    %867 = vmatmul.mubr.f32.gmra.mrb[0].mxu0 %v671
    %v868 = vpop.f32.mrb[0].mxu0
    %v869 = vadd.f32 0.0, %v868
    %v870 = vpop.f32.mrb[0].mxu0
    %v871 = vadd.f32 0.0, %v870
    %872 = vmatprep.mubr.f32.mxu0 0.0
    %873 = vmatmul.mubr.f32.gmra.mrb[0].mxu0 %v672
    %v874 = vpop.f32.mrb[0].mxu0
    %v875 = vadd.f32 0.0, %v874
    %v876 = vpop.f32.mrb[0].mxu0
    %v877 = vadd.f32 0.0, %v876
    %878 = vmatprep.mubr.f32.mxu0 0.0
    %879 = vmatmul.mubr.f32.gmra.mrb[0].mxu0 %v673
    %v880 = vpop.f32.mrb[0].mxu0
    %v881 = vadd.f32 0.0, %v880
    %v882 = vpop.f32.mrb[0].mxu0
    %v883 = vadd.f32 0.0, %v882
    %884 = vmatprep.mubr.f32.mxu0 0.0
    %885 = vmatmul.mubr.f32.gmra.mrb[0].mxu0 %v674
    %v886 = vpop.f32.mrb[0].mxu0
    %v887 = vadd.f32 0.0, %v886
    %v888 = vpop.f32.mrb[0].mxu0
    %v889 = vadd.f32 0.0, %v888
    %890 = vmatprep.mubr.f32.mxu0 0.0
    %891 = vmatmul.mubr.f32.gmra.mrb[0].mxu0 %v675
    %v892 = vpop.f32.mrb[0].mxu0
    %v893 = vadd.f32 0.0, %v892
    %v894 = vpop.f32.mrb[0].mxu0
    %v895 = vadd.f32 0.0, %v894
    %896 = vmatprep.mubr.f32.mxu0 0.0
    %897 = vmatmul.mubr.f32.gmra.mrb[0].mxu0 %v676
    %v898 = vpop.f32.mrb[0].mxu0
    %v899 = vadd.f32 0.0, %v898
    %v900 = vpop.f32.mrb[0].mxu0
    %v901 = vadd.f32 0.0, %v900
    %902 = vmatprep.mubr.f32.mxu0 0.0
    %903 = vmatmul.mubr.f32.gmra.mrb[0].mxu0 %v677
    %v904 = vpop.f32.mrb[0].mxu0
    %v905 = vadd.f32 0.0, %v904
    %v906 = vpop.f32.mrb[0].mxu0
    %v907 = vadd.f32 0.0, %v906
    %908 = vmatprep.mubr.f32.mxu0 0.0
    %909 = vmatmul.mubr.f32.gmra.mrb[0].mxu0 %v678
    %v910 = vpop.f32.mrb[0].mxu0
    %v911 = vadd.f32 0.0, %v910
    %v912 = vpop.f32.mrb[0].mxu0
    %v913 = vadd.f32 0.0, %v912
    %914 = vmatprep.mubr.f32.mxu0 0.0
    %915 = vmatmul.mubr.f32.gmra.mrb[0].mxu0 %v679
    %v916 = vpop.f32.mrb[0].mxu0
    %v917 = vadd.f32 0.0, %v916
    %v918 = vpop.f32.mrb[0].mxu0
    %v919 = vadd.f32 0.0, %v918
    %920 = vmatprep.mubr.f32.mxu0 0.0
    %921 = vmatmul.mubr.f32.gmra.mrb[0].mxu0 %v680
    %v922 = vpop.f32.mrb[0].mxu0
    %v923 = vadd.f32 0.0, %v922
    %v924 = vpop.f32.mrb[0].mxu0
    %v925 = vadd.f32 0.0, %v924
    %926 = vmatprep.mubr.f32.mxu0 0.0
    %927 = vmatmul.mubr.f32.gmra.mrb[0].mxu0 %v681
    %v928 = vpop.f32.mrb[0].mxu0
    %v929 = vadd.f32 0.0, %v928
    %v930 = vpop.f32.mrb[0].mxu0
    %v931 = vadd.f32 0.0, %v930
    %932 = vmatprep.mubr.f32.mxu0 0.0
    %933 = vmatmul.mubr.f32.gmra.mrb[0].mxu0 %v682
    %v934 = vpop.f32.mrb[0].mxu0
    %v935 = vadd.f32 0.0, %v934
    %v936 = vpop.f32.mrb[0].mxu0
    %v937 = vadd.f32 0.0, %v936
    %938 = vmatprep.mubr.f32.mxu0 0.0
    %939 = vmatmul.mubr.f32.gmra.mrb[0].mxu0 %v683
    %v940 = vpop.f32.mrb[0].mxu0
    %v941 = vadd.f32 0.0, %v940
    %v942 = vpop.f32.mrb[0].mxu0
    %v943 = vadd.f32 0.0, %v942
    %944 = vmatprep.mubr.f32.mxu0 0.0
    %945 = vmatmul.mubr.f32.gmra.mrb[0].mxu0 %v684
    %v946 = vpop.f32.mrb[0].mxu0
    %v947 = vadd.f32 0.0, %v946
    %v948 = vpop.f32.mrb[0].mxu0
    %v949 = vadd.f32 0.0, %v948
    %950 = vmatprep.mubr.f32.mxu0 0.0
    %951 = vmatmul.mubr.f32.gmra.mrb[0].mxu0 %v685
    %v952 = vpop.f32.mrb[0].mxu0
    %v953 = vadd.f32 0.0, %v952
    %v954 = vpop.f32.mrb[0].mxu0
    %v955 = vadd.f32 0.0, %v954
    %956 = vmatprep.mubr.f32.mxu0 0.0
    %957 = vmatmul.mubr.f32.gmra.mrb[0].mxu0 %v686
    %v958 = vpop.f32.mrb[0].mxu0
    %v959 = vadd.f32 0.0, %v958
    %v960 = vpop.f32.mrb[0].mxu0
    %v961 = vadd.f32 0.0, %v960
    %962 = vmatprep.mubr.f32.mxu0 0.0
    %963 = vmatmul.mubr.f32.gmra.mrb[0].mxu0 %v687
    %v964 = vpop.f32.mrb[0].mxu0
    %v965 = vadd.f32 0.0, %v964
    %v966 = vpop.f32.mrb[0].mxu0
    %v967 = vadd.f32 0.0, %v966
    %968 = vmatprep.mubr.f32.mxu0 0.0
    %969 = vmatmul.mubr.f32.gmra.mrb[0].mxu0 %v688
    %v970 = vpop.f32.mrb[0].mxu0
    %v971 = vadd.f32 0.0, %v970
    %v972 = vpop.f32.mrb[0].mxu0
    %v973 = vadd.f32 0.0, %v972
    %974 = vmatprep.mubr.f32.mxu0 0.0
    %975 = vmatmul.mubr.f32.gmra.mrb[0].mxu0 %v689
    %v976 = vpop.f32.mrb[0].mxu0
    %v977 = vadd.f32 0.0, %v976
    %v978 = vpop.f32.mrb[0].mxu0
    %v979 = vadd.f32 0.0, %v978
    %980 = vmatprep.mubr.f32.mxu0 0.0
    %981 = vmatmul.mubr.f32.gmra.mrb[0].mxu0 %v690
    %v982 = vpop.f32.mrb[0].mxu0
    %v983 = vadd.f32 0.0, %v982
    %v984 = vpop.f32.mrb[0].mxu0
    %v985 = vadd.f32 0.0, %v984
    %986 = vmatprep.mubr.f32.mxu0 0.0
    %987 = vmatmul.mubr.f32.gmra.mrb[0].mxu0 %v691
    %v988 = vpop.f32.mrb[0].mxu0
    %v989 = vadd.f32 0.0, %v988
    %v990 = vpop.f32.mrb[0].mxu0
    %v991 = vadd.f32 0.0, %v990
    %992 = vmatprep.mubr.f32.mxu0 0.0
    %993 = vmatmul.mubr.f32.gmra.mrb[0].mxu0 %v692
    %v994 = vpop.f32.mrb[0].mxu0
    %v995 = vadd.f32 0.0, %v994
    %v996 = vpop.f32.mrb[0].mxu0
    %v997 = vadd.f32 0.0, %v996
    %998 = vmatprep.mubr.f32.mxu0 0.0
    %999 = vmatmul.mubr.f32.gmra.mrb[0].mxu0 %v693
    %v1000 = vpop.f32.mrb[0].mxu0
    %v1001 = vadd.f32 0.0, %v1000
    %v1002 = vpop.f32.mrb[0].mxu0
    %v1003 = vadd.f32 0.0, %v1002
    %1004 = vmatprep.mubr.f32.mxu0 0.0
    %1005 = vmatmul.mubr.f32.gmra.mrb[0].mxu0 %v694
    %v1006 = vpop.f32.mrb[0].mxu0
    %v1007 = vadd.f32 0.0, %v1006
    %v1008 = vpop.f32.mrb[0].mxu0
    %v1009 = vadd.f32 0.0, %v1008
    %1010 = vmatprep.mubr.f32.mxu0 0.0
    %1011 = vmatmul.mubr.f32.gmra.mrb[0].mxu0 %v695
    %v1012 = vpop.f32.mrb[0].mxu0
    %v1013 = vadd.f32 0.0, %v1012
    %v1014 = vpop.f32.mrb[0].mxu0
    %v1015 = vadd.f32 0.0, %v1014
    %1016 = vmatprep.mubr.f32.mxu0 0.0
    %1017 = vmatmul.mubr.f32.gmra.mrb[0].mxu0 %v696
    %v1018 = vpop.f32.mrb[0].mxu0
    %v1019 = vadd.f32 0.0, %v1018
    %v1020 = vpop.f32.mrb[0].mxu0
    %v1021 = vadd.f32 0.0, %v1020
    %1022 = vmatprep.mubr.f32.mxu0 0.0
    %1023 = vmatmul.mubr.f32.gmra.mrb[0].mxu0 %v697
    %v1024 = vpop.f32.mrb[0].mxu0
    %v1025 = vadd.f32 0.0, %v1024
    %v1026 = vpop.f32.mrb[0].mxu0
    %v1027 = vadd.f32 0.0, %v1026
    %1028 = vmatprep.mubr.f32.mxu0 0.0
    %1029 = vmatmul.mubr.f32.gmra.mrb[0].mxu0 %v698
    %v1030 = vpop.f32.mrb[0].mxu0
    %v1031 = vadd.f32 0.0, %v1030
    %v1032 = vpop.f32.mrb[0].mxu0
    %v1033 = vadd.f32 0.0, %v1032
    %1034 = vmatprep.mubr.f32.mxu0 0.0
    %1035 = vmatmul.mubr.f32.gmra.mrb[0].mxu0 %v699
    %v1036 = vpop.f32.mrb[0].mxu0
    %v1037 = vadd.f32 0.0, %v1036
    %v1038 = vpop.f32.mrb[0].mxu0
    %v1039 = vadd.f32 0.0, %v1038
    %1040 = vmatprep.mubr.f32.mxu0 0.0
    %1041 = vmatmul.mubr.f32.gmra.mrb[0].mxu0 %v700
    %v1042 = vpop.f32.mrb[0].mxu0
    %v1043 = vadd.f32 0.0, %v1042
    %v1044 = vpop.f32.mrb[0].mxu0
    %v1045 = vadd.f32 0.0, %v1044
    %1046 = vmatprep.mubr.f32.mxu0 0.0
    %1047 = vmatmul.mubr.f32.gmra.mrb[0].mxu0 %v701
    %v1048 = vpop.f32.mrb[0].mxu0
    %v1049 = vadd.f32 0.0, %v1048
    %v1050 = vpop.f32.mrb[0].mxu0
    %v1051 = vadd.f32 0.0, %v1050
    %1052 = vmatprep.mubr.f32.mxu0 0.0
    %1053 = vmatmul.mubr.f32.gmra.mrb[0].mxu0 %v702
    %v1054 = vpop.f32.mrb[0].mxu0
    %v1055 = vadd.f32 0.0, %v1054
    %v1056 = vpop.f32.mrb[0].mxu0
    %v1057 = vadd.f32 0.0, %v1056
    %1058 = vmatprep.mubr.f32.mxu0 0.0
    %1059 = vmatmul.mubr.f32.gmra.mrb[0].mxu0 %v703
    %v1060 = vpop.f32.mrb[0].mxu0
    %v1061 = vadd.f32 0.0, %v1060
    %v1062 = vpop.f32.mrb[0].mxu0
    %v1063 = vadd.f32 0.0, %v1062
    %1064 = vmatprep.mubr.f32.mxu0 0.0
    %1065 = vmatmul.mubr.f32.gmra.mrb[0].mxu0 %v704
    %v1066 = vpop.f32.mrb[0].mxu0
    %v1067 = vadd.f32 0.0, %v1066
    %v1068 = vpop.f32.mrb[0].mxu0
    %v1069 = vadd.f32 0.0, %v1068
    %1070 = vmatprep.mubr.f32.mxu0 0.0
    %1071 = vmatmul.mubr.f32.gmra.mrb[0].mxu0 %v705
    %v1072 = vpop.f32.mrb[0].mxu0
    %v1073 = vadd.f32 0.0, %v1072
    %v1074 = vpop.f32.mrb[0].mxu0
    %v1075 = vadd.f32 0.0, %v1074
    %1076 = vmatprep.mubr.f32.mxu0 0.0
    %1077 = vmatmul.mubr.f32.gmra.mrb[0].mxu0 %v706
    %v1078 = vpop.f32.mrb[0].mxu0
    %v1079 = vadd.f32 0.0, %v1078
    %v1080 = vpop.f32.mrb[0].mxu0
    %v1081 = vadd.f32 0.0, %v1080
    %1082 = vmatprep.mubr.f32.mxu0 0.0
    %1083 = vmatmul.mubr.f32.gmra.mrb[0].mxu0 %v707
    %v1084 = vpop.f32.mrb[0].mxu0
    %v1085 = vadd.f32 0.0, %v1084
    %v1086 = vpop.f32.mrb[0].mxu0
    %v1087 = vadd.f32 0.0, %v1086
    %1088 = vmatprep.mubr.f32.mxu0 0.0
    %1089 = vmatmul.mubr.f32.gmra.mrb[0].mxu0 %v708
    %v1090 = vpop.f32.mrb[0].mxu0
    %v1091 = vadd.f32 0.0, %v1090
    %v1092 = vpop.f32.mrb[0].mxu0
    %v1093 = vadd.f32 0.0, %v1092
    %1094 = vmatprep.mubr.f32.mxu0 0.0
    %1095 = vmatmul.mubr.f32.gmra.mrb[0].mxu0 %v709
    %v1096 = vpop.f32.mrb[0].mxu0
    %v1097 = vadd.f32 0.0, %v1096
    %v1098 = vpop.f32.mrb[0].mxu0
    %v1099 = vadd.f32 0.0, %v1098
    %1100 = vmatprep.mubr.f32.mxu0 0.0
    %1101 = vmatmul.mubr.f32.gmra.mrb[0].mxu0 %v710
    %v1102 = vpop.f32.mrb[0].mxu0
    %v1103 = vadd.f32 0.0, %v1102
    %v1104 = vpop.f32.mrb[0].mxu0
    %v1105 = vadd.f32 0.0, %v1104
    %1106 = vmatprep.mubr.f32.mxu0 0.0
    %1107 = vmatmul.mubr.f32.gmra.mrb[0].mxu0 %v711
    %v1108 = vpop.f32.mrb[0].mxu0
    %v1109 = vadd.f32 0.0, %v1108
    %v1110 = vpop.f32.mrb[0].mxu0
    %v1111 = vadd.f32 0.0, %v1110
    %1112 = vmatprep.mubr.f32.mxu0 0.0
    %1113 = vmatmul.mubr.f32.gmra.mrb[0].mxu0 %v712
    %v1114 = vpop.f32.mrb[0].mxu0
    %v1115 = vadd.f32 0.0, %v1114
    %v1116 = vpop.f32.mrb[0].mxu0
    %v1117 = vadd.f32 0.0, %v1116
    %1118 = vmatprep.mubr.f32.mxu0 0.0
    %1119 = vmatmul.mubr.f32.gmra.mrb[0].mxu0 %v713
    %v1120 = vpop.f32.mrb[0].mxu0
    %v1121 = vadd.f32 0.0, %v1120
    %v1122 = vpop.f32.mrb[0].mxu0
    %v1123 = vadd.f32 0.0, %v1122
    %1124 = vmatprep.mubr.f32.mxu0 0.0
    %1125 = vmatmul.mubr.f32.gmra.mrb[0].mxu0 %v714
    %v1126 = vpop.f32.mrb[0].mxu0
    %v1127 = vadd.f32 0.0, %v1126
    %v1128 = vpop.f32.mrb[0].mxu0
    %v1129 = vadd.f32 0.0, %v1128
    %1130 = vmatprep.mubr.f32.mxu0 0.0
    %1131 = vmatmul.mubr.f32.gmra.mrb[0].mxu0 %v715
    %v1132 = vpop.f32.mrb[0].mxu0
    %v1133 = vadd.f32 0.0, %v1132
    %v1134 = vpop.f32.mrb[0].mxu0
    %v1135 = vadd.f32 0.0, %v1134
    %1136 = vmatprep.mubr.f32.mxu0 0.0
    %1137 = vmatmul.mubr.f32.gmra.mrb[0].mxu0 %v716
    %v1138 = vpop.f32.mrb[0].mxu0
    %v1139 = vadd.f32 0.0, %v1138
    %v1140 = vpop.f32.mrb[0].mxu0
    %v1141 = vadd.f32 0.0, %v1140
    %1142 = vmatprep.mubr.f32.mxu0 0.0
    %1143 = vmatmul.mubr.f32.gmra.mrb[0].mxu0 %v717
    %v1144 = vpop.f32.mrb[0].mxu0
    %v1145 = vadd.f32 0.0, %v1144
    %v1146 = vpop.f32.mrb[0].mxu0
    %v1147 = vadd.f32 0.0, %v1146
    %1148 = vmatprep.mubr.f32.mxu0 0.0
    %1149 = vmatmul.mubr.f32.gmra.mrb[0].mxu0 %v718
    %v1150 = vpop.f32.mrb[0].mxu0
    %v1151 = vadd.f32 0.0, %v1150
    %v1152 = vpop.f32.mrb[0].mxu0
    %v1153 = vadd.f32 0.0, %v1152
    %1154 = vmatprep.mubr.f32.mxu0 0.0
    %1155 = vmatmul.mubr.f32.gmra.mrb[0].mxu0 %v719
    %v1156 = vpop.f32.mrb[0].mxu0
    %v1157 = vadd.f32 0.0, %v1156
    %v1158 = vpop.f32.mrb[0].mxu0
    %v1159 = vadd.f32 0.0, %v1158
    %1160 = vmatprep.mubr.f32.mxu0 0.0
    %1161 = vmatmul.mubr.f32.gmra.mrb[0].mxu0 %v720
    %v1162 = vpop.f32.mrb[0].mxu0
    %v1163 = vadd.f32 0.0, %v1162
    %v1164 = vpop.f32.mrb[0].mxu0
    %v1165 = vadd.f32 0.0, %v1164
    %1166 = vmatprep.mubr.f32.mxu0 0.0
    %1167 = vmatmul.mubr.f32.gmra.mrb[0].mxu0 %v721
    %v1168 = vpop.f32.mrb[0].mxu0
    %v1169 = vadd.f32 0.0, %v1168
    %v1170 = vpop.f32.mrb[0].mxu0
    %v1171 = vadd.f32 0.0, %v1170
    %1172 = vmatprep.mubr.f32.mxu0 0.0
    %1173 = vmatmul.mubr.f32.gmra.mrb[0].mxu0 %v722
    %v1174 = vpop.f32.mrb[0].mxu0
    %v1175 = vadd.f32 0.0, %v1174
    %v1176 = vpop.f32.mrb[0].mxu0
    %v1177 = vadd.f32 0.0, %v1176
    %1178 = vmatprep.mubr.f32.mxu0 0.0
    %1179 = vmatmul.mubr.f32.gmra.mrb[0].mxu0 %v723
    %v1180 = vpop.f32.mrb[0].mxu0
    %v1181 = vadd.f32 0.0, %v1180
    %v1182 = vpop.f32.mrb[0].mxu0
    %v1183 = vadd.f32 0.0, %v1182
    %1184 = vmatprep.mubr.f32.mxu0 0.0
    %1185 = vmatmul.mubr.f32.gmra.mrb[0].mxu0 %v724
    %v1186 = vpop.f32.mrb[0].mxu0
    %v1187 = vadd.f32 0.0, %v1186
    %v1188 = vpop.f32.mrb[0].mxu0
    %v1189 = vadd.f32 0.0, %v1188
    %1190 = vmatprep.mubr.f32.mxu0 0.0
    %1191 = vmatmul.mubr.f32.gmra.mrb[0].mxu0 %v725
    %v1192 = vpop.f32.mrb[0].mxu0
    %v1193 = vadd.f32 0.0, %v1192
    %v1194 = vpop.f32.mrb[0].mxu0
    %v1195 = vadd.f32 0.0, %v1194
    %1196 = vmatprep.mubr.f32.mxu0 0.0
    %1197 = vmatmul.mubr.f32.gmra.mrb[0].mxu0 %v726
    %v1198 = vpop.f32.mrb[0].mxu0
    %v1199 = vadd.f32 0.0, %v1198
    %v1200 = vpop.f32.mrb[0].mxu0
    %v1201 = vadd.f32 0.0, %v1200
    %1202 = vmatprep.mubr.f32.mxu0 0.0
    %1203 = vmatmul.mubr.f32.gmra.mrb[0].mxu0 %v727
    %v1204 = vpop.f32.mrb[0].mxu0
    %v1205 = vadd.f32 0.0, %v1204
    %v1206 = vpop.f32.mrb[0].mxu0
    %v1207 = vadd.f32 0.0, %v1206
    %1208 = vdwg.mxu0
    %v1209 = vld [vmem:[%s6] sm:$0x1]
    %v1211 = vlaneseq
    %v1212 = vshrl.u32 %v1211, 7
    %v1213 = vsub.s32 0, %v1212
    %v1214 = vrot.slane %v1209, %v1213
    %v1216 = vadd.f32 %v282, %v1214
    %v1217 = vadd.f32 %v288, %v1214
    %v1218 = vadd.f32 %v294, %v1214
    %v1219 = vadd.f32 %v300, %v1214
    %v1220 = vadd.f32 %v306, %v1214
    %v1221 = vadd.f32 %v312, %v1214
    %v1222 = vadd.f32 %v318, %v1214
    %v1223 = vadd.f32 %v324, %v1214
    %v1224 = vadd.f32 %v330, %v1214
    %v1225 = vadd.f32 %v336, %v1214
    %v1226 = vadd.f32 %v342, %v1214
    %v1227 = vadd.f32 %v348, %v1214
    %v1228 = vadd.f32 %v354, %v1214
    %v1229 = vadd.f32 %v360, %v1214
    %v1230 = vadd.f32 %v366, %v1214
    %v1231 = vadd.f32 %v372, %v1214
    %v1232 = vadd.f32 %v378, %v1214
    %v1233 = vadd.f32 %v384, %v1214
    %v1234 = vadd.f32 %v390, %v1214
    %v1235 = vadd.f32 %v396, %v1214
    %v1236 = vadd.f32 %v402, %v1214
    %v1237 = vadd.f32 %v408, %v1214
    %v1238 = vadd.f32 %v414, %v1214
    %v1239 = vadd.f32 %v420, %v1214
    %v1240 = vadd.f32 %v426, %v1214
    %v1241 = vadd.f32 %v432, %v1214
    %v1242 = vadd.f32 %v438, %v1214
    %v1243 = vadd.f32 %v444, %v1214
    %v1244 = vadd.f32 %v450, %v1214
    %v1245 = vadd.f32 %v456, %v1214
    %v1246 = vadd.f32 %v462, %v1214
    %v1247 = vadd.f32 %v468, %v1214
    %v1248 = vadd.f32 %v474, %v1214
    %v1249 = vadd.f32 %v480, %v1214
    %v1250 = vadd.f32 %v486, %v1214
    %v1251 = vadd.f32 %v492, %v1214
    %v1252 = vadd.f32 %v498, %v1214
    %v1253 = vadd.f32 %v504, %v1214
    %v1254 = vadd.f32 %v510, %v1214
    %v1255 = vadd.f32 %v516, %v1214
    %v1256 = vadd.f32 %v522, %v1214
    %v1257 = vadd.f32 %v528, %v1214
    %v1258 = vadd.f32 %v534, %v1214
    %v1259 = vadd.f32 %v540, %v1214
    %v1260 = vadd.f32 %v546, %v1214
    %v1261 = vadd.f32 %v552, %v1214
    %v1262 = vadd.f32 %v558, %v1214
    %v1263 = vadd.f32 %v564, %v1214
    %v1264 = vadd.f32 %v570, %v1214
    %v1265 = vadd.f32 %v576, %v1214
    %v1266 = vadd.f32 %v582, %v1214
    %v1267 = vadd.f32 %v588, %v1214
    %v1268 = vadd.f32 %v594, %v1214
    %v1269 = vadd.f32 %v600, %v1214
    %v1270 = vadd.f32 %v606, %v1214
    %v1271 = vadd.f32 %v612, %v1214
    %v1272 = vadd.f32 %v618, %v1214
    %v1273 = vadd.f32 %v624, %v1214
    %v1274 = vadd.f32 %v630, %v1214
    %v1275 = vadd.f32 %v636, %v1214
    %v1276 = vadd.f32 %v642, %v1214
    %v1277 = vadd.f32 %v648, %v1214
    %v1278 = vadd.f32 %v654, %v1214
    %v1279 = vadd.f32 %v660, %v1214
    %v1280 = vld [vmem:[%s7] sm:$0x1]
    %v1282 = vlaneseq
    %v1283 = vshrl.u32 %v1282, 7
    %v1284 = vsub.s32 0, %v1283
    %v1285 = vrot.slane %v1280, %v1284
    %v1287 = vadd.f32 %v827, %v1285
    %v1288 = vadd.f32 %v833, %v1285
    %v1289 = vadd.f32 %v839, %v1285
    %v1290 = vadd.f32 %v845, %v1285
    %v1291 = vadd.f32 %v851, %v1285
    %v1292 = vadd.f32 %v857, %v1285
    %v1293 = vadd.f32 %v863, %v1285
    %v1294 = vadd.f32 %v869, %v1285
    %v1295 = vadd.f32 %v875, %v1285
    %v1296 = vadd.f32 %v881, %v1285
    %v1297 = vadd.f32 %v887, %v1285
    %v1298 = vadd.f32 %v893, %v1285
    %v1299 = vadd.f32 %v899, %v1285
    %v1300 = vadd.f32 %v905, %v1285
    %v1301 = vadd.f32 %v911, %v1285
    %v1302 = vadd.f32 %v917, %v1285
    %v1303 = vadd.f32 %v923, %v1285
    %v1304 = vadd.f32 %v929, %v1285
    %v1305 = vadd.f32 %v935, %v1285
    %v1306 = vadd.f32 %v941, %v1285
    %v1307 = vadd.f32 %v947, %v1285
    %v1308 = vadd.f32 %v953, %v1285
    %v1309 = vadd.f32 %v959, %v1285
    %v1310 = vadd.f32 %v965, %v1285
    %v1311 = vadd.f32 %v971, %v1285
    %v1312 = vadd.f32 %v977, %v1285
    %v1313 = vadd.f32 %v983, %v1285
    %v1314 = vadd.f32 %v989, %v1285
    %v1315 = vadd.f32 %v995, %v1285
    %v1316 = vadd.f32 %v1001, %v1285
    %v1317 = vadd.f32 %v1007, %v1285
    %v1318 = vadd.f32 %v1013, %v1285
    %v1319 = vadd.f32 %v1019, %v1285
    %v1320 = vadd.f32 %v1025, %v1285
    %v1321 = vadd.f32 %v1031, %v1285
    %v1322 = vadd.f32 %v1037, %v1285
    %v1323 = vadd.f32 %v1043, %v1285
    %v1324 = vadd.f32 %v1049, %v1285
    %v1325 = vadd.f32 %v1055, %v1285
    %v1326 = vadd.f32 %v1061, %v1285
    %v1327 = vadd.f32 %v1067, %v1285
    %v1328 = vadd.f32 %v1073, %v1285
    %v1329 = vadd.f32 %v1079, %v1285
    %v1330 = vadd.f32 %v1085, %v1285
    %v1331 = vadd.f32 %v1091, %v1285
    %v1332 = vadd.f32 %v1097, %v1285
    %v1333 = vadd.f32 %v1103, %v1285
    %v1334 = vadd.f32 %v1109, %v1285
    %v1335 = vadd.f32 %v1115, %v1285
    %v1336 = vadd.f32 %v1121, %v1285
    %v1337 = vadd.f32 %v1127, %v1285
    %v1338 = vadd.f32 %v1133, %v1285
    %v1339 = vadd.f32 %v1139, %v1285
    %v1340 = vadd.f32 %v1145, %v1285
    %v1341 = vadd.f32 %v1151, %v1285
    %v1342 = vadd.f32 %v1157, %v1285
    %v1343 = vadd.f32 %v1163, %v1285
    %v1344 = vadd.f32 %v1169, %v1285
    %v1345 = vadd.f32 %v1175, %v1285
    %v1346 = vadd.f32 %v1181, %v1285
    %v1347 = vadd.f32 %v1187, %v1285
    %v1348 = vadd.f32 %v1193, %v1285
    %v1349 = vadd.f32 %v1199, %v1285
    %v1350 = vadd.f32 %v1205, %v1285
    %v1351 = vld [vmem:[#allocation2] sm:$0xff]
    %v1352 = vld [vmem:[#allocation2 + $0x8] sm:$0xff]
    %v1353 = vld [vmem:[#allocation2 + $0x10] sm:$0xff]
    %v1354 = vld [vmem:[#allocation2 + $0x18] sm:$0xff]
    %v1355 = vld [vmem:[#allocation2 + $0x20] sm:$0xff]
    %v1356 = vld [vmem:[#allocation2 + $0x28] sm:$0xff]
    %v1357 = vld [vmem:[#allocation2 + $0x30] sm:$0xff]
    %v1358 = vld [vmem:[#allocation2 + $0x38] sm:$0xff]
    %v1359 = vld [vmem:[#allocation2 + $0x40] sm:$0xff]
    %v1360 = vld [vmem:[#allocation2 + $0x48] sm:$0xff]
    %v1361 = vld [vmem:[#allocation2 + $0x50] sm:$0xff]
    %v1362 = vld [vmem:[#allocation2 + $0x58] sm:$0xff]
    %v1363 = vld [vmem:[#allocation2 + $0x60] sm:$0xff]
    %v1364 = vld [vmem:[#allocation2 + $0x68] sm:$0xff]
    %v1365 = vld [vmem:[#allocation2 + $0x70] sm:$0xff]
    %v1366 = vld [vmem:[#allocation2 + $0x78] sm:$0xff]
    %v1367 = vld [vmem:[#allocation2 + $0x80] sm:$0xff]
    %v1368 = vld [vmem:[#allocation2 + $0x88] sm:$0xff]
    %v1369 = vld [vmem:[#allocation2 + $0x90] sm:$0xff]
    %v1370 = vld [vmem:[#allocation2 + $0x98] sm:$0xff]
    %v1371 = vld [vmem:[#allocation2 + $0xa0] sm:$0xff]
    %v1372 = vld [vmem:[#allocation2 + $0xa8] sm:$0xff]
    %v1373 = vld [vmem:[#allocation2 + $0xb0] sm:$0xff]
    %v1374 = vld [vmem:[#allocation2 + $0xb8] sm:$0xff]
    %v1375 = vld [vmem:[#allocation2 + $0xc0] sm:$0xff]
    %v1376 = vld [vmem:[#allocation2 + $0xc8] sm:$0xff]
    %v1377 = vld [vmem:[#allocation2 + $0xd0] sm:$0xff]
    %v1378 = vld [vmem:[#allocation2 + $0xd8] sm:$0xff]
    %v1379 = vld [vmem:[#allocation2 + $0xe0] sm:$0xff]
    %v1380 = vld [vmem:[#allocation2 + $0xe8] sm:$0xff]
    %v1381 = vld [vmem:[#allocation2 + $0xf0] sm:$0xff]
    %v1382 = vld [vmem:[#allocation2 + $0xf8] sm:$0xff]
    %v1383 = vld [vmem:[#allocation2 + $0x100] sm:$0xff]
    %v1384 = vld [vmem:[#allocation2 + $0x108] sm:$0xff]
    %v1385 = vld [vmem:[#allocation2 + $0x110] sm:$0xff]
    %v1386 = vld [vmem:[#allocation2 + $0x118] sm:$0xff]
    %v1387 = vld [vmem:[#allocation2 + $0x120] sm:$0xff]
    %v1388 = vld [vmem:[#allocation2 + $0x128] sm:$0xff]
    %v1389 = vld [vmem:[#allocation2 + $0x130] sm:$0xff]
    %v1390 = vld [vmem:[#allocation2 + $0x138] sm:$0xff]
    %v1391 = vld [vmem:[#allocation2 + $0x140] sm:$0xff]
    %v1392 = vld [vmem:[#allocation2 + $0x148] sm:$0xff]
    %v1393 = vld [vmem:[#allocation2 + $0x150] sm:$0xff]
    %v1394 = vld [vmem:[#allocation2 + $0x158] sm:$0xff]
    %v1395 = vld [vmem:[#allocation2 + $0x160] sm:$0xff]
    %v1396 = vld [vmem:[#allocation2 + $0x168] sm:$0xff]
    %v1397 = vld [vmem:[#allocation2 + $0x170] sm:$0xff]
    %v1398 = vld [vmem:[#allocation2 + $0x178] sm:$0xff]
    %v1399 = vld [vmem:[#allocation2 + $0x180] sm:$0xff]
    %v1400 = vld [vmem:[#allocation2 + $0x188] sm:$0xff]
    %v1401 = vld [vmem:[#allocation2 + $0x190] sm:$0xff]
    %v1402 = vld [vmem:[#allocation2 + $0x198] sm:$0xff]
    %v1403 = vld [vmem:[#allocation2 + $0x1a0] sm:$0xff]
    %v1404 = vld [vmem:[#allocation2 + $0x1a8] sm:$0xff]
    %v1405 = vld [vmem:[#allocation2 + $0x1b0] sm:$0xff]
    %v1406 = vld [vmem:[#allocation2 + $0x1b8] sm:$0xff]
    %v1407 = vld [vmem:[#allocation2 + $0x1c0] sm:$0xff]
    %v1408 = vld [vmem:[#allocation2 + $0x1c8] sm:$0xff]
    %v1409 = vld [vmem:[#allocation2 + $0x1d0] sm:$0xff]
    %v1410 = vld [vmem:[#allocation2 + $0x1d8] sm:$0xff]
    %v1411 = vld [vmem:[#allocation2 + $0x1e0] sm:$0xff]
    %v1412 = vld [vmem:[#allocation2 + $0x1e8] sm:$0xff]
    %v1413 = vld [vmem:[#allocation2 + $0x1f0] sm:$0xff]
    %v1414 = vld [vmem:[#allocation2 + $0x1f8] sm:$0xff]
    %v1415 = vld [vmem:[#allocation11] sm:$0xff]
    %v1416 = vld [vmem:[#allocation11 + $0x8] sm:$0xff]
    %v1417 = vld [vmem:[#allocation11 + $0x10] sm:$0xff]
    %v1418 = vld [vmem:[#allocation11 + $0x18] sm:$0xff]
    %v1419 = vld [vmem:[#allocation11 + $0x20] sm:$0xff]
    %v1420 = vld [vmem:[#allocation11 + $0x28] sm:$0xff]
    %v1421 = vld [vmem:[#allocation11 + $0x30] sm:$0xff]
    %v1422 = vld [vmem:[#allocation11 + $0x38] sm:$0xff]
    %v1423 = vld [vmem:[#allocation11 + $0x40] sm:$0xff]
    %v1424 = vld [vmem:[#allocation11 + $0x48] sm:$0xff]
    %v1425 = vld [vmem:[#allocation11 + $0x50] sm:$0xff]
    %v1426 = vld [vmem:[#allocation11 + $0x58] sm:$0xff]
    %v1427 = vld [vmem:[#allocation11 + $0x60] sm:$0xff]
    %v1428 = vld [vmem:[#allocation11 + $0x68] sm:$0xff]
    %v1429 = vld [vmem:[#allocation11 + $0x70] sm:$0xff]
    %v1430 = vld [vmem:[#allocation11 + $0x78] sm:$0xff]
    %1431 = vmatprep.subr.mxu0 0.0
    %1432 = vmatpush1.msra.mxu0 %v1415
    %1433 = vmatprep.subr.mxu0 0.0
    %1434 = vmatpush1.msra.mxu0 %v1416
    %1435 = vmatprep.subr.mxu0 0.0
    %1436 = vmatpush1.msra.mxu0 %v1417
    %1437 = vmatprep.subr.mxu0 0.0
    %1438 = vmatpush1.msra.mxu0 %v1418
    %1439 = vmatprep.subr.mxu0 0.0
    %1440 = vmatpush1.msra.mxu0 %v1419
    %1441 = vmatprep.subr.mxu0 0.0
    %1442 = vmatpush1.msra.mxu0 %v1420
    %1443 = vmatprep.subr.mxu0 0.0
    %1444 = vmatpush1.msra.mxu0 %v1421
    %1445 = vmatprep.subr.mxu0 0.0
    %1446 = vmatpush1.msra.mxu0 %v1422
    %1447 = vmatprep.subr.mxu0 0.0
    %1448 = vmatpush1.msra.mxu0 %v1423
    %1449 = vmatprep.subr.mxu0 0.0
    %1450 = vmatpush1.msra.mxu0 %v1424
    %1451 = vmatprep.subr.mxu0 0.0
    %1452 = vmatpush1.msra.mxu0 %v1425
    %1453 = vmatprep.subr.mxu0 0.0
    %1454 = vmatpush1.msra.mxu0 %v1426
    %1455 = vmatprep.subr.mxu0 0.0
    %1456 = vmatpush1.msra.mxu0 %v1427
    %1457 = vmatprep.subr.mxu0 0.0
    %1458 = vmatpush1.msra.mxu0 %v1428
    %1459 = vmatprep.subr.mxu0 0.0
    %1460 = vmatpush1.msra.mxu0 %v1429
    %1461 = vmatprep.subr.mxu0 0.0
    %1462 = vmatpush1.msra.mxu0 %v1430
    %1463 = vmatprep.subr.mxu0 0.0
    %1464 = vmatpush1.msra.mxu0 0.0
    %1465 = vmatprep.subr.mxu0 0.0
    %1466 = vmatpush1.msra.mxu0 0.0
    %1467 = vmatprep.subr.mxu0 0.0
    %1468 = vmatpush1.msra.mxu0 0.0
    %1469 = vmatprep.subr.mxu0 0.0
    %1470 = vmatpush1.msra.mxu0 0.0
    %1471 = vmatprep.subr.mxu0 0.0
    %1472 = vmatpush1.msra.mxu0 0.0
    %1473 = vmatprep.subr.mxu0 0.0
    %1474 = vmatpush1.msra.mxu0 0.0
    %1475 = vmatprep.subr.mxu0 0.0
    %1476 = vmatpush1.msra.mxu0 0.0
    %1477 = vmatprep.subr.mxu0 0.0
    %1478 = vmatpush1.msra.mxu0 0.0
    %1479 = vmatprep.subr.mxu0 0.0
    %1480 = vmatpush1.msra.mxu0 0.0
    %1481 = vmatprep.subr.mxu0 0.0
    %1482 = vmatpush1.msra.mxu0 0.0
    %1483 = vmatprep.subr.mxu0 0.0
    %1484 = vmatpush1.msra.mxu0 0.0
    %1485 = vmatprep.subr.mxu0 0.0
    %1486 = vmatpush1.msra.mxu0 0.0
    %1487 = vmatprep.subr.mxu0 0.0
    %1488 = vmatpush1.msra.mxu0 0.0
    %1489 = vmatprep.subr.mxu0 0.0
    %1490 = vmatpush1.msra.mxu0 0.0
    %1491 = vmatprep.subr.mxu0 0.0
    %1492 = vmatpush1.msra.mxu0 0.0
    %1493 = vmatprep.subr.mxu0 0.0
    %1494 = vmatpush1.msra.mxu0 0.0
    %1495 = vmatprep.mubr.f32.mxu0 0.0
    %1496 = vmatmul.mubr.f32.gmra.mrb[0].mxu0 %v1351
    %v1497 = vpop.f32.mrb[0].mxu0
    %v1498 = vadd.f32 %v284, %v1497
    %v1499 = vpop.f32.mrb[0].mxu0
    %1500 = vmatprep.mubr.f32.mxu0 0.0
    %1501 = vmatmul.mubr.f32.gmra.mrb[0].mxu0 %v1352
    %v1502 = vpop.f32.mrb[0].mxu0
    %v1503 = vadd.f32 %v290, %v1502
    %v1504 = vpop.f32.mrb[0].mxu0
    %1505 = vmatprep.mubr.f32.mxu0 0.0
    %1506 = vmatmul.mubr.f32.gmra.mrb[0].mxu0 %v1353
    %v1507 = vpop.f32.mrb[0].mxu0
    %v1508 = vadd.f32 %v296, %v1507
    %v1509 = vpop.f32.mrb[0].mxu0
    %1510 = vmatprep.mubr.f32.mxu0 0.0
    %1511 = vmatmul.mubr.f32.gmra.mrb[0].mxu0 %v1354
    %v1512 = vpop.f32.mrb[0].mxu0
    %v1513 = vadd.f32 %v302, %v1512
    %v1514 = vpop.f32.mrb[0].mxu0
    %1515 = vmatprep.mubr.f32.mxu0 0.0
    %1516 = vmatmul.mubr.f32.gmra.mrb[0].mxu0 %v1355
    %v1517 = vpop.f32.mrb[0].mxu0
    %v1518 = vadd.f32 %v308, %v1517
    %v1519 = vpop.f32.mrb[0].mxu0
    %1520 = vmatprep.mubr.f32.mxu0 0.0
    %1521 = vmatmul.mubr.f32.gmra.mrb[0].mxu0 %v1356
    %v1522 = vpop.f32.mrb[0].mxu0
    %v1523 = vadd.f32 %v314, %v1522
    %v1524 = vpop.f32.mrb[0].mxu0
    %1525 = vmatprep.mubr.f32.mxu0 0.0
    %1526 = vmatmul.mubr.f32.gmra.mrb[0].mxu0 %v1357
    %v1527 = vpop.f32.mrb[0].mxu0
    %v1528 = vadd.f32 %v320, %v1527
    %v1529 = vpop.f32.mrb[0].mxu0
    %1530 = vmatprep.mubr.f32.mxu0 0.0
    %1531 = vmatmul.mubr.f32.gmra.mrb[0].mxu0 %v1358
    %v1532 = vpop.f32.mrb[0].mxu0
    %v1533 = vadd.f32 %v326, %v1532
    %v1534 = vpop.f32.mrb[0].mxu0
    %1535 = vmatprep.mubr.f32.mxu0 0.0
    %1536 = vmatmul.mubr.f32.gmra.mrb[0].mxu0 %v1359
    %v1537 = vpop.f32.mrb[0].mxu0
    %v1538 = vadd.f32 %v332, %v1537
    %v1539 = vpop.f32.mrb[0].mxu0
    %1540 = vmatprep.mubr.f32.mxu0 0.0
    %1541 = vmatmul.mubr.f32.gmra.mrb[0].mxu0 %v1360
    %v1542 = vpop.f32.mrb[0].mxu0
    %v1543 = vadd.f32 %v338, %v1542
    %v1544 = vpop.f32.mrb[0].mxu0
    %1545 = vmatprep.mubr.f32.mxu0 0.0
    %1546 = vmatmul.mubr.f32.gmra.mrb[0].mxu0 %v1361
    %v1547 = vpop.f32.mrb[0].mxu0
    %v1548 = vadd.f32 %v344, %v1547
    %v1549 = vpop.f32.mrb[0].mxu0
    %1550 = vmatprep.mubr.f32.mxu0 0.0
    %1551 = vmatmul.mubr.f32.gmra.mrb[0].mxu0 %v1362
    %v1552 = vpop.f32.mrb[0].mxu0
    %v1553 = vadd.f32 %v350, %v1552
    %v1554 = vpop.f32.mrb[0].mxu0
    %1555 = vmatprep.mubr.f32.mxu0 0.0
    %1556 = vmatmul.mubr.f32.gmra.mrb[0].mxu0 %v1363
    %v1557 = vpop.f32.mrb[0].mxu0
    %v1558 = vadd.f32 %v356, %v1557
    %v1559 = vpop.f32.mrb[0].mxu0
    %1560 = vmatprep.mubr.f32.mxu0 0.0
    %1561 = vmatmul.mubr.f32.gmra.mrb[0].mxu0 %v1364
    %v1562 = vpop.f32.mrb[0].mxu0
    %v1563 = vadd.f32 %v362, %v1562
    %v1564 = vpop.f32.mrb[0].mxu0
    %1565 = vmatprep.mubr.f32.mxu0 0.0
    %1566 = vmatmul.mubr.f32.gmra.mrb[0].mxu0 %v1365
    %v1567 = vpop.f32.mrb[0].mxu0
    %v1568 = vadd.f32 %v368, %v1567
    %v1569 = vpop.f32.mrb[0].mxu0
    %1570 = vmatprep.mubr.f32.mxu0 0.0
    %1571 = vmatmul.mubr.f32.gmra.mrb[0].mxu0 %v1366
    %v1572 = vpop.f32.mrb[0].mxu0
    %v1573 = vadd.f32 %v374, %v1572
    %v1574 = vpop.f32.mrb[0].mxu0
    %1575 = vmatprep.mubr.f32.mxu0 0.0
    %1576 = vmatmul.mubr.f32.gmra.mrb[0].mxu0 %v1367
    %v1577 = vpop.f32.mrb[0].mxu0
    %v1578 = vadd.f32 %v380, %v1577
    %v1579 = vpop.f32.mrb[0].mxu0
    %1580 = vmatprep.mubr.f32.mxu0 0.0
    %1581 = vmatmul.mubr.f32.gmra.mrb[0].mxu0 %v1368
    %v1582 = vpop.f32.mrb[0].mxu0
    %v1583 = vadd.f32 %v386, %v1582
    %v1584 = vpop.f32.mrb[0].mxu0
    %1585 = vmatprep.mubr.f32.mxu0 0.0
    %1586 = vmatmul.mubr.f32.gmra.mrb[0].mxu0 %v1369
    %v1587 = vpop.f32.mrb[0].mxu0
    %v1588 = vadd.f32 %v392, %v1587
    %v1589 = vpop.f32.mrb[0].mxu0
    %1590 = vmatprep.mubr.f32.mxu0 0.0
    %1591 = vmatmul.mubr.f32.gmra.mrb[0].mxu0 %v1370
    %v1592 = vpop.f32.mrb[0].mxu0
    %v1593 = vadd.f32 %v398, %v1592
    %v1594 = vpop.f32.mrb[0].mxu0
    %1595 = vmatprep.mubr.f32.mxu0 0.0
    %1596 = vmatmul.mubr.f32.gmra.mrb[0].mxu0 %v1371
    %v1597 = vpop.f32.mrb[0].mxu0
    %v1598 = vadd.f32 %v404, %v1597
    %v1599 = vpop.f32.mrb[0].mxu0
    %1600 = vmatprep.mubr.f32.mxu0 0.0
    %1601 = vmatmul.mubr.f32.gmra.mrb[0].mxu0 %v1372
    %v1602 = vpop.f32.mrb[0].mxu0
    %v1603 = vadd.f32 %v410, %v1602
    %v1604 = vpop.f32.mrb[0].mxu0
    %1605 = vmatprep.mubr.f32.mxu0 0.0
    %1606 = vmatmul.mubr.f32.gmra.mrb[0].mxu0 %v1373
    %v1607 = vpop.f32.mrb[0].mxu0
    %v1608 = vadd.f32 %v416, %v1607
    %v1609 = vpop.f32.mrb[0].mxu0
    %1610 = vmatprep.mubr.f32.mxu0 0.0
    %1611 = vmatmul.mubr.f32.gmra.mrb[0].mxu0 %v1374
    %v1612 = vpop.f32.mrb[0].mxu0
    %v1613 = vadd.f32 %v422, %v1612
    %v1614 = vpop.f32.mrb[0].mxu0
    %1615 = vmatprep.mubr.f32.mxu0 0.0
    %1616 = vmatmul.mubr.f32.gmra.mrb[0].mxu0 %v1375
    %v1617 = vpop.f32.mrb[0].mxu0
    %v1618 = vadd.f32 %v428, %v1617
    %v1619 = vpop.f32.mrb[0].mxu0
    %1620 = vmatprep.mubr.f32.mxu0 0.0
    %1621 = vmatmul.mubr.f32.gmra.mrb[0].mxu0 %v1376
    %v1622 = vpop.f32.mrb[0].mxu0
    %v1623 = vadd.f32 %v434, %v1622
    %v1624 = vpop.f32.mrb[0].mxu0
    %1625 = vmatprep.mubr.f32.mxu0 0.0
    %1626 = vmatmul.mubr.f32.gmra.mrb[0].mxu0 %v1377
    %v1627 = vpop.f32.mrb[0].mxu0
    %v1628 = vadd.f32 %v440, %v1627
    %v1629 = vpop.f32.mrb[0].mxu0
    %1630 = vmatprep.mubr.f32.mxu0 0.0
    %1631 = vmatmul.mubr.f32.gmra.mrb[0].mxu0 %v1378
    %v1632 = vpop.f32.mrb[0].mxu0
    %v1633 = vadd.f32 %v446, %v1632
    %v1634 = vpop.f32.mrb[0].mxu0
    %1635 = vmatprep.mubr.f32.mxu0 0.0
    %1636 = vmatmul.mubr.f32.gmra.mrb[0].mxu0 %v1379
    %v1637 = vpop.f32.mrb[0].mxu0
    %v1638 = vadd.f32 %v452, %v1637
    %v1639 = vpop.f32.mrb[0].mxu0
    %1640 = vmatprep.mubr.f32.mxu0 0.0
    %1641 = vmatmul.mubr.f32.gmra.mrb[0].mxu0 %v1380
    %v1642 = vpop.f32.mrb[0].mxu0
    %v1643 = vadd.f32 %v458, %v1642
    %v1644 = vpop.f32.mrb[0].mxu0
    %1645 = vmatprep.mubr.f32.mxu0 0.0
    %1646 = vmatmul.mubr.f32.gmra.mrb[0].mxu0 %v1381
    %v1647 = vpop.f32.mrb[0].mxu0
    %v1648 = vadd.f32 %v464, %v1647
    %v1649 = vpop.f32.mrb[0].mxu0
    %1650 = vmatprep.mubr.f32.mxu0 0.0
    %1651 = vmatmul.mubr.f32.gmra.mrb[0].mxu0 %v1382
    %v1652 = vpop.f32.mrb[0].mxu0
    %v1653 = vadd.f32 %v470, %v1652
    %v1654 = vpop.f32.mrb[0].mxu0
    %1655 = vmatprep.mubr.f32.mxu0 0.0
    %1656 = vmatmul.mubr.f32.gmra.mrb[0].mxu0 %v1383
    %v1657 = vpop.f32.mrb[0].mxu0
    %v1658 = vadd.f32 %v476, %v1657
    %v1659 = vpop.f32.mrb[0].mxu0
    %1660 = vmatprep.mubr.f32.mxu0 0.0
    %1661 = vmatmul.mubr.f32.gmra.mrb[0].mxu0 %v1384
    %v1662 = vpop.f32.mrb[0].mxu0
    %v1663 = vadd.f32 %v482, %v1662
    %v1664 = vpop.f32.mrb[0].mxu0
    %1665 = vmatprep.mubr.f32.mxu0 0.0
    %1666 = vmatmul.mubr.f32.gmra.mrb[0].mxu0 %v1385
    %v1667 = vpop.f32.mrb[0].mxu0
    %v1668 = vadd.f32 %v488, %v1667
    %v1669 = vpop.f32.mrb[0].mxu0
    %1670 = vmatprep.mubr.f32.mxu0 0.0
    %1671 = vmatmul.mubr.f32.gmra.mrb[0].mxu0 %v1386
    %v1672 = vpop.f32.mrb[0].mxu0
    %v1673 = vadd.f32 %v494, %v1672
    %v1674 = vpop.f32.mrb[0].mxu0
    %1675 = vmatprep.mubr.f32.mxu0 0.0
    %1676 = vmatmul.mubr.f32.gmra.mrb[0].mxu0 %v1387
    %v1677 = vpop.f32.mrb[0].mxu0
    %v1678 = vadd.f32 %v500, %v1677
    %v1679 = vpop.f32.mrb[0].mxu0
    %1680 = vmatprep.mubr.f32.mxu0 0.0
    %1681 = vmatmul.mubr.f32.gmra.mrb[0].mxu0 %v1388
    %v1682 = vpop.f32.mrb[0].mxu0
    %v1683 = vadd.f32 %v506, %v1682
    %v1684 = vpop.f32.mrb[0].mxu0
    %1685 = vmatprep.mubr.f32.mxu0 0.0
    %1686 = vmatmul.mubr.f32.gmra.mrb[0].mxu0 %v1389
    %v1687 = vpop.f32.mrb[0].mxu0
    %v1688 = vadd.f32 %v512, %v1687
    %v1689 = vpop.f32.mrb[0].mxu0
    %1690 = vmatprep.mubr.f32.mxu0 0.0
    %1691 = vmatmul.mubr.f32.gmra.mrb[0].mxu0 %v1390
    %v1692 = vpop.f32.mrb[0].mxu0
    %v1693 = vadd.f32 %v518, %v1692
    %v1694 = vpop.f32.mrb[0].mxu0
    %1695 = vmatprep.mubr.f32.mxu0 0.0
    %1696 = vmatmul.mubr.f32.gmra.mrb[0].mxu0 %v1391
    %v1697 = vpop.f32.mrb[0].mxu0
    %v1698 = vadd.f32 %v524, %v1697
    %v1699 = vpop.f32.mrb[0].mxu0
    %1700 = vmatprep.mubr.f32.mxu0 0.0
    %1701 = vmatmul.mubr.f32.gmra.mrb[0].mxu0 %v1392
    %v1702 = vpop.f32.mrb[0].mxu0
    %v1703 = vadd.f32 %v530, %v1702
    %v1704 = vpop.f32.mrb[0].mxu0
    %1705 = vmatprep.mubr.f32.mxu0 0.0
    %1706 = vmatmul.mubr.f32.gmra.mrb[0].mxu0 %v1393
    %v1707 = vpop.f32.mrb[0].mxu0
    %v1708 = vadd.f32 %v536, %v1707
    %v1709 = vpop.f32.mrb[0].mxu0
    %1710 = vmatprep.mubr.f32.mxu0 0.0
    %1711 = vmatmul.mubr.f32.gmra.mrb[0].mxu0 %v1394
    %v1712 = vpop.f32.mrb[0].mxu0
    %v1713 = vadd.f32 %v542, %v1712
    %v1714 = vpop.f32.mrb[0].mxu0
    %1715 = vmatprep.mubr.f32.mxu0 0.0
    %1716 = vmatmul.mubr.f32.gmra.mrb[0].mxu0 %v1395
    %v1717 = vpop.f32.mrb[0].mxu0
    %v1718 = vadd.f32 %v548, %v1717
    %v1719 = vpop.f32.mrb[0].mxu0
    %1720 = vmatprep.mubr.f32.mxu0 0.0
    %1721 = vmatmul.mubr.f32.gmra.mrb[0].mxu0 %v1396
    %v1722 = vpop.f32.mrb[0].mxu0
    %v1723 = vadd.f32 %v554, %v1722
    %v1724 = vpop.f32.mrb[0].mxu0
    %1725 = vmatprep.mubr.f32.mxu0 0.0
    %1726 = vmatmul.mubr.f32.gmra.mrb[0].mxu0 %v1397
    %v1727 = vpop.f32.mrb[0].mxu0
    %v1728 = vadd.f32 %v560, %v1727
    %v1729 = vpop.f32.mrb[0].mxu0
    %1730 = vmatprep.mubr.f32.mxu0 0.0
    %1731 = vmatmul.mubr.f32.gmra.mrb[0].mxu0 %v1398
    %v1732 = vpop.f32.mrb[0].mxu0
    %v1733 = vadd.f32 %v566, %v1732
    %v1734 = vpop.f32.mrb[0].mxu0
    %1735 = vmatprep.mubr.f32.mxu0 0.0
    %1736 = vmatmul.mubr.f32.gmra.mrb[0].mxu0 %v1399
    %v1737 = vpop.f32.mrb[0].mxu0
    %v1738 = vadd.f32 %v572, %v1737
    %v1739 = vpop.f32.mrb[0].mxu0
    %1740 = vmatprep.mubr.f32.mxu0 0.0
    %1741 = vmatmul.mubr.f32.gmra.mrb[0].mxu0 %v1400
    %v1742 = vpop.f32.mrb[0].mxu0
    %v1743 = vadd.f32 %v578, %v1742
    %v1744 = vpop.f32.mrb[0].mxu0
    %1745 = vmatprep.mubr.f32.mxu0 0.0
    %1746 = vmatmul.mubr.f32.gmra.mrb[0].mxu0 %v1401
    %v1747 = vpop.f32.mrb[0].mxu0
    %v1748 = vadd.f32 %v584, %v1747
    %v1749 = vpop.f32.mrb[0].mxu0
    %1750 = vmatprep.mubr.f32.mxu0 0.0
    %1751 = vmatmul.mubr.f32.gmra.mrb[0].mxu0 %v1402
    %v1752 = vpop.f32.mrb[0].mxu0
    %v1753 = vadd.f32 %v590, %v1752
    %v1754 = vpop.f32.mrb[0].mxu0
    %1755 = vmatprep.mubr.f32.mxu0 0.0
    %1756 = vmatmul.mubr.f32.gmra.mrb[0].mxu0 %v1403
    %v1757 = vpop.f32.mrb[0].mxu0
    %v1758 = vadd.f32 %v596, %v1757
    %v1759 = vpop.f32.mrb[0].mxu0
    %1760 = vmatprep.mubr.f32.mxu0 0.0
    %1761 = vmatmul.mubr.f32.gmra.mrb[0].mxu0 %v1404
    %v1762 = vpop.f32.mrb[0].mxu0
    %v1763 = vadd.f32 %v602, %v1762
    %v1764 = vpop.f32.mrb[0].mxu0
    %1765 = vmatprep.mubr.f32.mxu0 0.0
    %1766 = vmatmul.mubr.f32.gmra.mrb[0].mxu0 %v1405
    %v1767 = vpop.f32.mrb[0].mxu0
    %v1768 = vadd.f32 %v608, %v1767
    %v1769 = vpop.f32.mrb[0].mxu0
    %1770 = vmatprep.mubr.f32.mxu0 0.0
    %1771 = vmatmul.mubr.f32.gmra.mrb[0].mxu0 %v1406
    %v1772 = vpop.f32.mrb[0].mxu0
    %v1773 = vadd.f32 %v614, %v1772
    %v1774 = vpop.f32.mrb[0].mxu0
    %1775 = vmatprep.mubr.f32.mxu0 0.0
    %1776 = vmatmul.mubr.f32.gmra.mrb[0].mxu0 %v1407
    %v1777 = vpop.f32.mrb[0].mxu0
    %v1778 = vadd.f32 %v620, %v1777
    %v1779 = vpop.f32.mrb[0].mxu0
    %1780 = vmatprep.mubr.f32.mxu0 0.0
    %1781 = vmatmul.mubr.f32.gmra.mrb[0].mxu0 %v1408
    %v1782 = vpop.f32.mrb[0].mxu0
    %v1783 = vadd.f32 %v626, %v1782
    %v1784 = vpop.f32.mrb[0].mxu0
    %1785 = vmatprep.mubr.f32.mxu0 0.0
    %1786 = vmatmul.mubr.f32.gmra.mrb[0].mxu0 %v1409
    %v1787 = vpop.f32.mrb[0].mxu0
    %v1788 = vadd.f32 %v632, %v1787
    %v1789 = vpop.f32.mrb[0].mxu0
    %1790 = vmatprep.mubr.f32.mxu0 0.0
    %1791 = vmatmul.mubr.f32.gmra.mrb[0].mxu0 %v1410
    %v1792 = vpop.f32.mrb[0].mxu0
    %v1793 = vadd.f32 %v638, %v1792
    %v1794 = vpop.f32.mrb[0].mxu0
    %1795 = vmatprep.mubr.f32.mxu0 0.0
    %1796 = vmatmul.mubr.f32.gmra.mrb[0].mxu0 %v1411
    %v1797 = vpop.f32.mrb[0].mxu0
    %v1798 = vadd.f32 %v644, %v1797
    %v1799 = vpop.f32.mrb[0].mxu0
    %1800 = vmatprep.mubr.f32.mxu0 0.0
    %1801 = vmatmul.mubr.f32.gmra.mrb[0].mxu0 %v1412
    %v1802 = vpop.f32.mrb[0].mxu0
    %v1803 = vadd.f32 %v650, %v1802
    %v1804 = vpop.f32.mrb[0].mxu0
    %1805 = vmatprep.mubr.f32.mxu0 0.0
    %1806 = vmatmul.mubr.f32.gmra.mrb[0].mxu0 %v1413
    %v1807 = vpop.f32.mrb[0].mxu0
    %v1808 = vadd.f32 %v656, %v1807
    %v1809 = vpop.f32.mrb[0].mxu0
    %1810 = vmatprep.mubr.f32.mxu0 0.0
    %1811 = vmatmul.mubr.f32.gmra.mrb[0].mxu0 %v1414
    %v1812 = vpop.f32.mrb[0].mxu0
    %v1813 = vadd.f32 %v662, %v1812
    %v1814 = vpop.f32.mrb[0].mxu0
    %1815 = vdwg.mxu0
    %v1816 = vadd.f32 %v1498, %v829
    %v1817 = vadd.f32 %v1503, %v835
    %v1818 = vadd.f32 %v1508, %v841
    %v1819 = vadd.f32 %v1513, %v847
    %v1820 = vadd.f32 %v1518, %v853
    %v1821 = vadd.f32 %v1523, %v859
    %v1822 = vadd.f32 %v1528, %v865
    %v1823 = vadd.f32 %v1533, %v871
    %v1824 = vadd.f32 %v1538, %v877
    %v1825 = vadd.f32 %v1543, %v883
    %v1826 = vadd.f32 %v1548, %v889
    %v1827 = vadd.f32 %v1553, %v895
    %v1828 = vadd.f32 %v1558, %v901
    %v1829 = vadd.f32 %v1563, %v907
    %v1830 = vadd.f32 %v1568, %v913
    %v1831 = vadd.f32 %v1573, %v919
    %v1832 = vadd.f32 %v1578, %v925
    %v1833 = vadd.f32 %v1583, %v931
    %v1834 = vadd.f32 %v1588, %v937
    %v1835 = vadd.f32 %v1593, %v943
    %v1836 = vadd.f32 %v1598, %v949
    %v1837 = vadd.f32 %v1603, %v955
    %v1838 = vadd.f32 %v1608, %v961
    %v1839 = vadd.f32 %v1613, %v967
    %v1840 = vadd.f32 %v1618, %v973
    %v1841 = vadd.f32 %v1623, %v979
    %v1842 = vadd.f32 %v1628, %v985
    %v1843 = vadd.f32 %v1633, %v991
    %v1844 = vadd.f32 %v1638, %v997
    %v1845 = vadd.f32 %v1643, %v1003
    %v1846 = vadd.f32 %v1648, %v1009
    %v1847 = vadd.f32 %v1653, %v1015
    %v1848 = vadd.f32 %v1658, %v1021
    %v1849 = vadd.f32 %v1663, %v1027
    %v1850 = vadd.f32 %v1668, %v1033
    %v1851 = vadd.f32 %v1673, %v1039
    %v1852 = vadd.f32 %v1678, %v1045
    %v1853 = vadd.f32 %v1683, %v1051
    %v1854 = vadd.f32 %v1688, %v1057
    %v1855 = vadd.f32 %v1693, %v1063
    %v1856 = vadd.f32 %v1698, %v1069
    %v1857 = vadd.f32 %v1703, %v1075
    %v1858 = vadd.f32 %v1708, %v1081
    %v1859 = vadd.f32 %v1713, %v1087
    %v1860 = vadd.f32 %v1718, %v1093
    %v1861 = vadd.f32 %v1723, %v1099
    %v1862 = vadd.f32 %v1728, %v1105
    %v1863 = vadd.f32 %v1733, %v1111
    %v1864 = vadd.f32 %v1738, %v1117
    %v1865 = vadd.f32 %v1743, %v1123
    %v1866 = vadd.f32 %v1748, %v1129
    %v1867 = vadd.f32 %v1753, %v1135
    %v1868 = vadd.f32 %v1758, %v1141
    %v1869 = vadd.f32 %v1763, %v1147
    %v1870 = vadd.f32 %v1768, %v1153
    %v1871 = vadd.f32 %v1773, %v1159
    %v1872 = vadd.f32 %v1778, %v1165
    %v1873 = vadd.f32 %v1783, %v1171
    %v1874 = vadd.f32 %v1788, %v1177
    %v1875 = vadd.f32 %v1793, %v1183
    %v1876 = vadd.f32 %v1798, %v1189
    %v1877 = vadd.f32 %v1803, %v1195
    %v1878 = vadd.f32 %v1808, %v1201
    %v1879 = vadd.f32 %v1813, %v1207
    %v1880 = vld [vmem:[%s8] sm:$0x1]
    %v1882 = vlaneseq
    %v1883 = vshrl.u32 %v1882, 7
    %v1884 = vsub.s32 0, %v1883
    %v1885 = vrot.slane %v1880, %v1884
    %v1887 = vadd.f32 %v1816, %v1885
    %v1888 = vadd.f32 %v1817, %v1885
    %v1889 = vadd.f32 %v1818, %v1885
    %v1890 = vadd.f32 %v1819, %v1885
    %v1891 = vadd.f32 %v1820, %v1885
    %v1892 = vadd.f32 %v1821, %v1885
    %v1893 = vadd.f32 %v1822, %v1885
    %v1894 = vadd.f32 %v1823, %v1885
    %v1895 = vadd.f32 %v1824, %v1885
    %v1896 = vadd.f32 %v1825, %v1885
    %v1897 = vadd.f32 %v1826, %v1885
    %v1898 = vadd.f32 %v1827, %v1885
    %v1899 = vadd.f32 %v1828, %v1885
    %v1900 = vadd.f32 %v1829, %v1885
    %v1901 = vadd.f32 %v1830, %v1885
    %v1902 = vadd.f32 %v1831, %v1885
    %v1903 = vadd.f32 %v1832, %v1885
    %v1904 = vadd.f32 %v1833, %v1885
    %v1905 = vadd.f32 %v1834, %v1885
    %v1906 = vadd.f32 %v1835, %v1885
    %v1907 = vadd.f32 %v1836, %v1885
    %v1908 = vadd.f32 %v1837, %v1885
    %v1909 = vadd.f32 %v1838, %v1885
    %v1910 = vadd.f32 %v1839, %v1885
    %v1911 = vadd.f32 %v1840, %v1885
    %v1912 = vadd.f32 %v1841, %v1885
    %v1913 = vadd.f32 %v1842, %v1885
    %v1914 = vadd.f32 %v1843, %v1885
    %v1915 = vadd.f32 %v1844, %v1885
    %v1916 = vadd.f32 %v1845, %v1885
    %v1917 = vadd.f32 %v1846, %v1885
    %v1918 = vadd.f32 %v1847, %v1885
    %v1919 = vadd.f32 %v1848, %v1885
    %v1920 = vadd.f32 %v1849, %v1885
    %v1921 = vadd.f32 %v1850, %v1885
    %v1922 = vadd.f32 %v1851, %v1885
    %v1923 = vadd.f32 %v1852, %v1885
    %v1924 = vadd.f32 %v1853, %v1885
    %v1925 = vadd.f32 %v1854, %v1885
    %v1926 = vadd.f32 %v1855, %v1885
    %v1927 = vadd.f32 %v1856, %v1885
    %v1928 = vadd.f32 %v1857, %v1885
    %v1929 = vadd.f32 %v1858, %v1885
    %v1930 = vadd.f32 %v1859, %v1885
    %v1931 = vadd.f32 %v1860, %v1885
    %v1932 = vadd.f32 %v1861, %v1885
    %v1933 = vadd.f32 %v1862, %v1885
    %v1934 = vadd.f32 %v1863, %v1885
    %v1935 = vadd.f32 %v1864, %v1885
    %v1936 = vadd.f32 %v1865, %v1885
    %v1937 = vadd.f32 %v1866, %v1885
    %v1938 = vadd.f32 %v1867, %v1885
    %v1939 = vadd.f32 %v1868, %v1885
    %v1940 = vadd.f32 %v1869, %v1885
    %v1941 = vadd.f32 %v1870, %v1885
    %v1942 = vadd.f32 %v1871, %v1885
    %v1943 = vadd.f32 %v1872, %v1885
    %v1944 = vadd.f32 %v1873, %v1885
    %v1945 = vadd.f32 %v1874, %v1885
    %v1946 = vadd.f32 %v1875, %v1885
    %v1947 = vadd.f32 %v1876, %v1885
    %v1948 = vadd.f32 %v1877, %v1885
    %v1949 = vadd.f32 %v1878, %v1885
    %v1950 = vadd.f32 %v1879, %v1885
    %1951 = vxpose.xlu0.b32.start [1/16] %v1216, 128
    %1952 = vxpose.xlu0.b32.cont [2/16] %v1217, 128
    %1953 = vxpose.xlu0.b32.cont [3/16] %v1218, 128
    %1954 = vxpose.xlu0.b32.cont [4/16] %v1219, 128
    %1955 = vxpose.xlu0.b32.cont [5/16] %v1220, 128
    %1956 = vxpose.xlu0.b32.cont [6/16] %v1221, 128
    %1957 = vxpose.xlu0.b32.cont [7/16] %v1222, 128
    %1958 = vxpose.xlu0.b32.cont [8/16] %v1223, 128
    %1959 = vxpose.xlu0.b32.cont [9/16] %v1224, 128
    %1960 = vxpose.xlu0.b32.cont [10/16] %v1225, 128
    %1961 = vxpose.xlu0.b32.cont [11/16] %v1226, 128
    %1962 = vxpose.xlu0.b32.cont [12/16] %v1227, 128
    %1963 = vxpose.xlu0.b32.cont [13/16] %v1228, 128
    %1964 = vxpose.xlu0.b32.cont [14/16] %v1229, 128
    %1965 = vxpose.xlu0.b32.cont [15/16] %v1230, 128
    %1966 = vxpose.xlu0.b32.end [16/16] %v1231, 128
    %v1967 = vpop.trf.xlu0
    %v1968 = vpop.trf.xlu0
    %v1969 = vpop.trf.xlu0
    %v1970 = vpop.trf.xlu0
    %v1971 = vpop.trf.xlu0
    %v1972 = vpop.trf.xlu0
    %v1973 = vpop.trf.xlu0
    %v1974 = vpop.trf.xlu0
    %v1975 = vpop.trf.xlu0
    %v1976 = vpop.trf.xlu0
    %v1977 = vpop.trf.xlu0
    %v1978 = vpop.trf.xlu0
    %v1979 = vpop.trf.xlu0
    %v1980 = vpop.trf.xlu0
    %v1981 = vpop.trf.xlu0
    %v1982 = vpop.trf.xlu0
    %1983 = vxpose.xlu0.b32.start [1/16] %v1232, 128
    %1984 = vxpose.xlu0.b32.cont [2/16] %v1233, 128
    %1985 = vxpose.xlu0.b32.cont [3/16] %v1234, 128
    %1986 = vxpose.xlu0.b32.cont [4/16] %v1235, 128
    %1987 = vxpose.xlu0.b32.cont [5/16] %v1236, 128
    %1988 = vxpose.xlu0.b32.cont [6/16] %v1237, 128
    %1989 = vxpose.xlu0.b32.cont [7/16] %v1238, 128
    %1990 = vxpose.xlu0.b32.cont [8/16] %v1239, 128
    %1991 = vxpose.xlu0.b32.cont [9/16] %v1240, 128
    %1992 = vxpose.xlu0.b32.cont [10/16] %v1241, 128
    %1993 = vxpose.xlu0.b32.cont [11/16] %v1242, 128
    %1994 = vxpose.xlu0.b32.cont [12/16] %v1243, 128
    %1995 = vxpose.xlu0.b32.cont [13/16] %v1244, 128
    %1996 = vxpose.xlu0.b32.cont [14/16] %v1245, 128
    %1997 = vxpose.xlu0.b32.cont [15/16] %v1246, 128
    %1998 = vxpose.xlu0.b32.end [16/16] %v1247, 128
    %v1999 = vpop.trf.xlu0
    %v2000 = vpop.trf.xlu0
    %v2001 = vpop.trf.xlu0
    %v2002 = vpop.trf.xlu0
    %v2003 = vpop.trf.xlu0
    %v2004 = vpop.trf.xlu0
    %v2005 = vpop.trf.xlu0
    %v2006 = vpop.trf.xlu0
    %v2007 = vpop.trf.xlu0
    %v2008 = vpop.trf.xlu0
    %v2009 = vpop.trf.xlu0
    %v2010 = vpop.trf.xlu0
    %v2011 = vpop.trf.xlu0
    %v2012 = vpop.trf.xlu0
    %v2013 = vpop.trf.xlu0
    %v2014 = vpop.trf.xlu0
    %2015 = vxpose.xlu0.b32.start [1/16] %v1248, 128
    %2016 = vxpose.xlu0.b32.cont [2/16] %v1249, 128
    %2017 = vxpose.xlu0.b32.cont [3/16] %v1250, 128
    %2018 = vxpose.xlu0.b32.cont [4/16] %v1251, 128
    %2019 = vxpose.xlu0.b32.cont [5/16] %v1252, 128
    %2020 = vxpose.xlu0.b32.cont [6/16] %v1253, 128
    %2021 = vxpose.xlu0.b32.cont [7/16] %v1254, 128
    %2022 = vxpose.xlu0.b32.cont [8/16] %v1255, 128
    %2023 = vxpose.xlu0.b32.cont [9/16] %v1256, 128
    %2024 = vxpose.xlu0.b32.cont [10/16] %v1257, 128
    %2025 = vxpose.xlu0.b32.cont [11/16] %v1258, 128
    %2026 = vxpose.xlu0.b32.cont [12/16] %v1259, 128
    %2027 = vxpose.xlu0.b32.cont [13/16] %v1260, 128
    %2028 = vxpose.xlu0.b32.cont [14/16] %v1261, 128
    %2029 = vxpose.xlu0.b32.cont [15/16] %v1262, 128
    %2030 = vxpose.xlu0.b32.end [16/16] %v1263, 128
    %v2031 = vpop.trf.xlu0
    %v2032 = vpop.trf.xlu0
    %v2033 = vpop.trf.xlu0
    %v2034 = vpop.trf.xlu0
    %v2035 = vpop.trf.xlu0
    %v2036 = vpop.trf.xlu0
    %v2037 = vpop.trf.xlu0
    %v2038 = vpop.trf.xlu0
    %v2039 = vpop.trf.xlu0
    %v2040 = vpop.trf.xlu0
    %v2041 = vpop.trf.xlu0
    %v2042 = vpop.trf.xlu0
    %v2043 = vpop.trf.xlu0
    %v2044 = vpop.trf.xlu0
    %v2045 = vpop.trf.xlu0
    %v2046 = vpop.trf.xlu0
    %2047 = vxpose.xlu0.b32.start [1/16] %v1264, 128
    %2048 = vxpose.xlu0.b32.cont [2/16] %v1265, 128
    %2049 = vxpose.xlu0.b32.cont [3/16] %v1266, 128
    %2050 = vxpose.xlu0.b32.cont [4/16] %v1267, 128
    %2051 = vxpose.xlu0.b32.cont [5/16] %v1268, 128
    %2052 = vxpose.xlu0.b32.cont [6/16] %v1269, 128
    %2053 = vxpose.xlu0.b32.cont [7/16] %v1270, 128
    %2054 = vxpose.xlu0.b32.cont [8/16] %v1271, 128
    %2055 = vxpose.xlu0.b32.cont [9/16] %v1272, 128
    %2056 = vxpose.xlu0.b32.cont [10/16] %v1273, 128
    %2057 = vxpose.xlu0.b32.cont [11/16] %v1274, 128
    %2058 = vxpose.xlu0.b32.cont [12/16] %v1275, 128
    %2059 = vxpose.xlu0.b32.cont [13/16] %v1276, 128
    %2060 = vxpose.xlu0.b32.cont [14/16] %v1277, 128
    %2061 = vxpose.xlu0.b32.cont [15/16] %v1278, 128
    %2062 = vxpose.xlu0.b32.end [16/16] %v1279, 128
    %v2063 = vpop.trf.xlu0
    %v2064 = vpop.trf.xlu0
    %v2065 = vpop.trf.xlu0
    %v2066 = vpop.trf.xlu0
    %v2067 = vpop.trf.xlu0
    %v2068 = vpop.trf.xlu0
    %v2069 = vpop.trf.xlu0
    %v2070 = vpop.trf.xlu0
    %v2071 = vpop.trf.xlu0
    %v2072 = vpop.trf.xlu0
    %v2073 = vpop.trf.xlu0
    %v2074 = vpop.trf.xlu0
    %v2075 = vpop.trf.xlu0
    %v2076 = vpop.trf.xlu0
    %v2077 = vpop.trf.xlu0
    %v2078 = vpop.trf.xlu0
    %v2079 = vpack.c.bf16 %v1968, %v1967
    %v2080 = vpack.c.bf16 %v2000, %v1999
    %v2081 = vpack.c.bf16 %v2032, %v2031
    %v2082 = vpack.c.bf16 %v2064, %v2063
    %v2083 = vpack.c.bf16 %v1970, %v1969
    %v2084 = vpack.c.bf16 %v2002, %v2001
    %v2085 = vpack.c.bf16 %v2034, %v2033
    %v2086 = vpack.c.bf16 %v2066, %v2065
    %v2087 = vpack.c.bf16 %v1972, %v1971
    %v2088 = vpack.c.bf16 %v2004, %v2003
    %v2089 = vpack.c.bf16 %v2036, %v2035
    %v2090 = vpack.c.bf16 %v2068, %v2067
    %v2091 = vpack.c.bf16 %v1974, %v1973
    %v2092 = vpack.c.bf16 %v2006, %v2005
    %v2093 = vpack.c.bf16 %v2038, %v2037
    %v2094 = vpack.c.bf16 %v2070, %v2069
    %v2095 = vpack.c.bf16 %v1976, %v1975
    %v2096 = vpack.c.bf16 %v2008, %v2007
    %v2097 = vpack.c.bf16 %v2040, %v2039
    %v2098 = vpack.c.bf16 %v2072, %v2071
    %v2099 = vpack.c.bf16 %v1978, %v1977
    %v2100 = vpack.c.bf16 %v2010, %v2009
    %v2101 = vpack.c.bf16 %v2042, %v2041
    %v2102 = vpack.c.bf16 %v2074, %v2073
    %v2103 = vpack.c.bf16 %v1980, %v1979
    %v2104 = vpack.c.bf16 %v2012, %v2011
    %v2105 = vpack.c.bf16 %v2044, %v2043
    %v2106 = vpack.c.bf16 %v2076, %v2075
    %v2107 = vpack.c.bf16 %v1982, %v1981
    %v2108 = vpack.c.bf16 %v2014, %v2013
    %v2109 = vpack.c.bf16 %v2046, %v2045
    %v2110 = vpack.c.bf16 %v2078, %v2077
    %v2143 = vunpack.c.l.b16 %v2079
    %v2144 = vunpack.c.l.b16 %v2080
    %v2145 = vunpack.c.l.b16 %v2081
    %v2146 = vunpack.c.l.b16 %v2082
    %v2147 = vunpack.c.h.b16 %v2079
    %v2148 = vunpack.c.h.b16 %v2080
    %v2149 = vunpack.c.h.b16 %v2081
    %v2150 = vunpack.c.h.b16 %v2082
    %v2151 = vunpack.c.l.b16 %v2083
    %v2152 = vunpack.c.l.b16 %v2084
    %v2153 = vunpack.c.l.b16 %v2085
    %v2154 = vunpack.c.l.b16 %v2086
    %v2155 = vunpack.c.h.b16 %v2083
    %v2156 = vunpack.c.h.b16 %v2084
    %v2157 = vunpack.c.h.b16 %v2085
    %v2158 = vunpack.c.h.b16 %v2086
    %v2159 = vunpack.c.l.b16 %v2087
    %v2160 = vunpack.c.l.b16 %v2088
    %v2161 = vunpack.c.l.b16 %v2089
    %v2162 = vunpack.c.l.b16 %v2090
    %v2163 = vunpack.c.h.b16 %v2087
    %v2164 = vunpack.c.h.b16 %v2088
    %v2165 = vunpack.c.h.b16 %v2089
    %v2166 = vunpack.c.h.b16 %v2090
    %v2167 = vunpack.c.l.b16 %v2091
    %v2168 = vunpack.c.l.b16 %v2092
    %v2169 = vunpack.c.l.b16 %v2093
    %v2170 = vunpack.c.l.b16 %v2094
    %v2171 = vunpack.c.h.b16 %v2091
    %v2172 = vunpack.c.h.b16 %v2092
    %v2173 = vunpack.c.h.b16 %v2093
    %v2174 = vunpack.c.h.b16 %v2094
    %v2175 = vunpack.c.l.b16 %v2095
    %v2176 = vunpack.c.l.b16 %v2096
    %v2177 = vunpack.c.l.b16 %v2097
    %v2178 = vunpack.c.l.b16 %v2098
    %v2179 = vunpack.c.h.b16 %v2095
    %v2180 = vunpack.c.h.b16 %v2096
    %v2181 = vunpack.c.h.b16 %v2097
    %v2182 = vunpack.c.h.b16 %v2098
    %v2183 = vunpack.c.l.b16 %v2099
    %v2184 = vunpack.c.l.b16 %v2100
    %v2185 = vunpack.c.l.b16 %v2101
    %v2186 = vunpack.c.l.b16 %v2102
    %v2187 = vunpack.c.h.b16 %v2099
    %v2188 = vunpack.c.h.b16 %v2100
    %v2189 = vunpack.c.h.b16 %v2101
    %v2190 = vunpack.c.h.b16 %v2102
    %v2191 = vunpack.c.l.b16 %v2103
    %v2192 = vunpack.c.l.b16 %v2104
    %v2193 = vunpack.c.l.b16 %v2105
    %v2194 = vunpack.c.l.b16 %v2106
    %v2195 = vunpack.c.h.b16 %v2103
    %v2196 = vunpack.c.h.b16 %v2104
    %v2197 = vunpack.c.h.b16 %v2105
    %v2198 = vunpack.c.h.b16 %v2106
    %v2199 = vunpack.c.l.b16 %v2107
    %v2200 = vunpack.c.l.b16 %v2108
    %v2201 = vunpack.c.l.b16 %v2109
    %v2202 = vunpack.c.l.b16 %v2110
    %v2203 = vunpack.c.h.b16 %v2107
    %v2204 = vunpack.c.h.b16 %v2108
    %v2205 = vunpack.c.h.b16 %v2109
    %v2206 = vunpack.c.h.b16 %v2110
    %v2207 = vpack.c.b16 %v2144, %v2143
    %v2208 = vpack.c.b16 %v2146, %v2145
    %v2209 = vpack.c.b16 %v2148, %v2147
    %v2210 = vpack.c.b16 %v2150, %v2149
    %v2211 = vpack.c.b16 %v2152, %v2151
    %v2212 = vpack.c.b16 %v2154, %v2153
    %v2213 = vpack.c.b16 %v2156, %v2155
    %v2214 = vpack.c.b16 %v2158, %v2157
    %v2215 = vpack.c.b16 %v2160, %v2159
    %v2216 = vpack.c.b16 %v2162, %v2161
    %v2217 = vpack.c.b16 %v2164, %v2163
    %v2218 = vpack.c.b16 %v2166, %v2165
    %v2219 = vpack.c.b16 %v2168, %v2167
    %v2220 = vpack.c.b16 %v2170, %v2169
    %v2221 = vpack.c.b16 %v2172, %v2171
    %v2222 = vpack.c.b16 %v2174, %v2173
    %v2223 = vpack.c.b16 %v2176, %v2175
    %v2224 = vpack.c.b16 %v2178, %v2177
    %v2225 = vpack.c.b16 %v2180, %v2179
    %v2226 = vpack.c.b16 %v2182, %v2181
    %v2227 = vpack.c.b16 %v2184, %v2183
    %v2228 = vpack.c.b16 %v2186, %v2185
    %v2229 = vpack.c.b16 %v2188, %v2187
    %v2230 = vpack.c.b16 %v2190, %v2189
    %v2231 = vpack.c.b16 %v2192, %v2191
    %v2232 = vpack.c.b16 %v2194, %v2193
    %v2233 = vpack.c.b16 %v2196, %v2195
    %v2234 = vpack.c.b16 %v2198, %v2197
    %v2235 = vpack.c.b16 %v2200, %v2199
    %v2236 = vpack.c.b16 %v2202, %v2201
    %v2237 = vpack.c.b16 %v2204, %v2203
    %v2238 = vpack.c.b16 %v2206, %v2205
    %2271 = vst [vmem:[#allocation13] sm:$0xff] %v2207
    %2272 = vst [vmem:[#allocation13 + $0x8] sm:$0xff] %v2208
    %2273 = vst [vmem:[#allocation13 + $0x10] sm:$0xff] %v2209
    %2274 = vst [vmem:[#allocation13 + $0x18] sm:$0xff] %v2210
    %2275 = vst [vmem:[#allocation13 + $0x20] sm:$0xff] %v2211
    %2276 = vst [vmem:[#allocation13 + $0x28] sm:$0xff] %v2212
    %2277 = vst [vmem:[#allocation13 + $0x30] sm:$0xff] %v2213
    %2278 = vst [vmem:[#allocation13 + $0x38] sm:$0xff] %v2214
    %2279 = vst [vmem:[#allocation13 + $0x40] sm:$0xff] %v2215
    %2280 = vst [vmem:[#allocation13 + $0x48] sm:$0xff] %v2216
    %2281 = vst [vmem:[#allocation13 + $0x50] sm:$0xff] %v2217
    %2282 = vst [vmem:[#allocation13 + $0x58] sm:$0xff] %v2218
    %2283 = vst [vmem:[#allocation13 + $0x60] sm:$0xff] %v2219
    %2284 = vst [vmem:[#allocation13 + $0x68] sm:$0xff] %v2220
    %2285 = vst [vmem:[#allocation13 + $0x70] sm:$0xff] %v2221
    %2286 = vst [vmem:[#allocation13 + $0x78] sm:$0xff] %v2222
    %2287 = vst [vmem:[#allocation13 + $0x80] sm:$0xff] %v2223
    %2288 = vst [vmem:[#allocation13 + $0x88] sm:$0xff] %v2224
    %2289 = vst [vmem:[#allocation13 + $0x90] sm:$0xff] %v2225
    %2290 = vst [vmem:[#allocation13 + $0x98] sm:$0xff] %v2226
    %2291 = vst [vmem:[#allocation13 + $0xa0] sm:$0xff] %v2227
    %2292 = vst [vmem:[#allocation13 + $0xa8] sm:$0xff] %v2228
    %2293 = vst [vmem:[#allocation13 + $0xb0] sm:$0xff] %v2229
    %2294 = vst [vmem:[#allocation13 + $0xb8] sm:$0xff] %v2230
    %2295 = vst [vmem:[#allocation13 + $0xc0] sm:$0xff] %v2231
    %2296 = vst [vmem:[#allocation13 + $0xc8] sm:$0xff] %v2232
    %2297 = vst [vmem:[#allocation13 + $0xd0] sm:$0xff] %v2233
    %2298 = vst [vmem:[#allocation13 + $0xd8] sm:$0xff] %v2234
    %2299 = vst [vmem:[#allocation13 + $0xe0] sm:$0xff] %v2235
    %2300 = vst [vmem:[#allocation13 + $0xe8] sm:$0xff] %v2236
    %2301 = vst [vmem:[#allocation13 + $0xf0] sm:$0xff] %v2237
    %2302 = vst [vmem:[#allocation13 + $0xf8] sm:$0xff] %v2238
    %2303 = vxpose.xlu0.b32.start [1/16] %v1287, 128
    %2304 = vxpose.xlu0.b32.cont [2/16] %v1288, 128
    %2305 = vxpose.xlu0.b32.cont [3/16] %v1289, 128
    %2306 = vxpose.xlu0.b32.cont [4/16] %v1290, 128
    %2307 = vxpose.xlu0.b32.cont [5/16] %v1291, 128
    %2308 = vxpose.xlu0.b32.cont [6/16] %v1292, 128
    %2309 = vxpose.xlu0.b32.cont [7/16] %v1293, 128
    %2310 = vxpose.xlu0.b32.cont [8/16] %v1294, 128
    %2311 = vxpose.xlu0.b32.cont [9/16] %v1295, 128
    %2312 = vxpose.xlu0.b32.cont [10/16] %v1296, 128
    %2313 = vxpose.xlu0.b32.cont [11/16] %v1297, 128
    %2314 = vxpose.xlu0.b32.cont [12/16] %v1298, 128
    %2315 = vxpose.xlu0.b32.cont [13/16] %v1299, 128
    %2316 = vxpose.xlu0.b32.cont [14/16] %v1300, 128
    %2317 = vxpose.xlu0.b32.cont [15/16] %v1301, 128
    %2318 = vxpose.xlu0.b32.end [16/16] %v1302, 128
    %v2319 = vpop.trf.xlu0
    %v2320 = vpop.trf.xlu0
    %v2321 = vpop.trf.xlu0
    %v2322 = vpop.trf.xlu0
    %v2323 = vpop.trf.xlu0
    %v2324 = vpop.trf.xlu0
    %v2325 = vpop.trf.xlu0
    %v2326 = vpop.trf.xlu0
    %v2327 = vpop.trf.xlu0
    %v2328 = vpop.trf.xlu0
    %v2329 = vpop.trf.xlu0
    %v2330 = vpop.trf.xlu0
    %v2331 = vpop.trf.xlu0
    %v2332 = vpop.trf.xlu0
    %v2333 = vpop.trf.xlu0
    %v2334 = vpop.trf.xlu0
    %2335 = vxpose.xlu0.b32.start [1/16] %v1303, 128
    %2336 = vxpose.xlu0.b32.cont [2/16] %v1304, 128
    %2337 = vxpose.xlu0.b32.cont [3/16] %v1305, 128
    %2338 = vxpose.xlu0.b32.cont [4/16] %v1306, 128
    %2339 = vxpose.xlu0.b32.cont [5/16] %v1307, 128
    %2340 = vxpose.xlu0.b32.cont [6/16] %v1308, 128
    %2341 = vxpose.xlu0.b32.cont [7/16] %v1309, 128
    %2342 = vxpose.xlu0.b32.cont [8/16] %v1310, 128
    %2343 = vxpose.xlu0.b32.cont [9/16] %v1311, 128
    %2344 = vxpose.xlu0.b32.cont [10/16] %v1312, 128
    %2345 = vxpose.xlu0.b32.cont [11/16] %v1313, 128
    %2346 = vxpose.xlu0.b32.cont [12/16] %v1314, 128
    %2347 = vxpose.xlu0.b32.cont [13/16] %v1315, 128
    %2348 = vxpose.xlu0.b32.cont [14/16] %v1316, 128
    %2349 = vxpose.xlu0.b32.cont [15/16] %v1317, 128
    %2350 = vxpose.xlu0.b32.end [16/16] %v1318, 128
    %v2351 = vpop.trf.xlu0
    %v2352 = vpop.trf.xlu0
    %v2353 = vpop.trf.xlu0
    %v2354 = vpop.trf.xlu0
    %v2355 = vpop.trf.xlu0
    %v2356 = vpop.trf.xlu0
    %v2357 = vpop.trf.xlu0
    %v2358 = vpop.trf.xlu0
    %v2359 = vpop.trf.xlu0
    %v2360 = vpop.trf.xlu0
    %v2361 = vpop.trf.xlu0
    %v2362 = vpop.trf.xlu0
    %v2363 = vpop.trf.xlu0
    %v2364 = vpop.trf.xlu0
    %v2365 = vpop.trf.xlu0
    %v2366 = vpop.trf.xlu0
    %2367 = vxpose.xlu0.b32.start [1/16] %v1319, 128
    %2368 = vxpose.xlu0.b32.cont [2/16] %v1320, 128
    %2369 = vxpose.xlu0.b32.cont [3/16] %v1321, 128
    %2370 = vxpose.xlu0.b32.cont [4/16] %v1322, 128
    %2371 = vxpose.xlu0.b32.cont [5/16] %v1323, 128
    %2372 = vxpose.xlu0.b32.cont [6/16] %v1324, 128
    %2373 = vxpose.xlu0.b32.cont [7/16] %v1325, 128
    %2374 = vxpose.xlu0.b32.cont [8/16] %v1326, 128
    %2375 = vxpose.xlu0.b32.cont [9/16] %v1327, 128
    %2376 = vxpose.xlu0.b32.cont [10/16] %v1328, 128
    %2377 = vxpose.xlu0.b32.cont [11/16] %v1329, 128
    %2378 = vxpose.xlu0.b32.cont [12/16] %v1330, 128
    %2379 = vxpose.xlu0.b32.cont [13/16] %v1331, 128
    %2380 = vxpose.xlu0.b32.cont [14/16] %v1332, 128
    %2381 = vxpose.xlu0.b32.cont [15/16] %v1333, 128
    %2382 = vxpose.xlu0.b32.end [16/16] %v1334, 128
    %v2383 = vpop.trf.xlu0
    %v2384 = vpop.trf.xlu0
    %v2385 = vpop.trf.xlu0
    %v2386 = vpop.trf.xlu0
    %v2387 = vpop.trf.xlu0
    %v2388 = vpop.trf.xlu0
    %v2389 = vpop.trf.xlu0
    %v2390 = vpop.trf.xlu0
    %v2391 = vpop.trf.xlu0
    %v2392 = vpop.trf.xlu0
    %v2393 = vpop.trf.xlu0
    %v2394 = vpop.trf.xlu0
    %v2395 = vpop.trf.xlu0
    %v2396 = vpop.trf.xlu0
    %v2397 = vpop.trf.xlu0
    %v2398 = vpop.trf.xlu0
    %2399 = vxpose.xlu0.b32.start [1/16] %v1335, 128
    %2400 = vxpose.xlu0.b32.cont [2/16] %v1336, 128
    %2401 = vxpose.xlu0.b32.cont [3/16] %v1337, 128
    %2402 = vxpose.xlu0.b32.cont [4/16] %v1338, 128
    %2403 = vxpose.xlu0.b32.cont [5/16] %v1339, 128
    %2404 = vxpose.xlu0.b32.cont [6/16] %v1340, 128
    %2405 = vxpose.xlu0.b32.cont [7/16] %v1341, 128
    %2406 = vxpose.xlu0.b32.cont [8/16] %v1342, 128
    %2407 = vxpose.xlu0.b32.cont [9/16] %v1343, 128
    %2408 = vxpose.xlu0.b32.cont [10/16] %v1344, 128
    %2409 = vxpose.xlu0.b32.cont [11/16] %v1345, 128
    %2410 = vxpose.xlu0.b32.cont [12/16] %v1346, 128
    %2411 = vxpose.xlu0.b32.cont [13/16] %v1347, 128
    %2412 = vxpose.xlu0.b32.cont [14/16] %v1348, 128
    %2413 = vxpose.xlu0.b32.cont [15/16] %v1349, 128
    %2414 = vxpose.xlu0.b32.end [16/16] %v1350, 128
    %v2415 = vpop.trf.xlu0
    %v2416 = vpop.trf.xlu0
    %v2417 = vpop.trf.xlu0
    %v2418 = vpop.trf.xlu0
    %v2419 = vpop.trf.xlu0
    %v2420 = vpop.trf.xlu0
    %v2421 = vpop.trf.xlu0
    %v2422 = vpop.trf.xlu0
    %v2423 = vpop.trf.xlu0
    %v2424 = vpop.trf.xlu0
    %v2425 = vpop.trf.xlu0
    %v2426 = vpop.trf.xlu0
    %v2427 = vpop.trf.xlu0
    %v2428 = vpop.trf.xlu0
    %v2429 = vpop.trf.xlu0
    %v2430 = vpop.trf.xlu0
    %v2431 = vpack.c.bf16 %v2320, %v2319
    %v2432 = vpack.c.bf16 %v2352, %v2351
    %v2433 = vpack.c.bf16 %v2384, %v2383
    %v2434 = vpack.c.bf16 %v2416, %v2415
    %v2435 = vpack.c.bf16 %v2322, %v2321
    %v2436 = vpack.c.bf16 %v2354, %v2353
    %v2437 = vpack.c.bf16 %v2386, %v2385
    %v2438 = vpack.c.bf16 %v2418, %v2417
    %v2439 = vpack.c.bf16 %v2324, %v2323
    %v2440 = vpack.c.bf16 %v2356, %v2355
    %v2441 = vpack.c.bf16 %v2388, %v2387
    %v2442 = vpack.c.bf16 %v2420, %v2419
    %v2443 = vpack.c.bf16 %v2326, %v2325
    %v2444 = vpack.c.bf16 %v2358, %v2357
    %v2445 = vpack.c.bf16 %v2390, %v2389
    %v2446 = vpack.c.bf16 %v2422, %v2421
    %v2447 = vpack.c.bf16 %v2328, %v2327
    %v2448 = vpack.c.bf16 %v2360, %v2359
    %v2449 = vpack.c.bf16 %v2392, %v2391
    %v2450 = vpack.c.bf16 %v2424, %v2423
    %v2451 = vpack.c.bf16 %v2330, %v2329
    %v2452 = vpack.c.bf16 %v2362, %v2361
    %v2453 = vpack.c.bf16 %v2394, %v2393
    %v2454 = vpack.c.bf16 %v2426, %v2425
    %v2455 = vpack.c.bf16 %v2332, %v2331
    %v2456 = vpack.c.bf16 %v2364, %v2363
    %v2457 = vpack.c.bf16 %v2396, %v2395
    %v2458 = vpack.c.bf16 %v2428, %v2427
    %v2459 = vpack.c.bf16 %v2334, %v2333
    %v2460 = vpack.c.bf16 %v2366, %v2365
    %v2461 = vpack.c.bf16 %v2398, %v2397
    %v2462 = vpack.c.bf16 %v2430, %v2429
    %v2495 = vunpack.c.l.b16 %v2431
    %v2496 = vunpack.c.l.b16 %v2432
    %v2497 = vunpack.c.l.b16 %v2433
    %v2498 = vunpack.c.l.b16 %v2434
    %v2499 = vunpack.c.h.b16 %v2431
    %v2500 = vunpack.c.h.b16 %v2432
    %v2501 = vunpack.c.h.b16 %v2433
    %v2502 = vunpack.c.h.b16 %v2434
    %v2503 = vunpack.c.l.b16 %v2435
    %v2504 = vunpack.c.l.b16 %v2436
    %v2505 = vunpack.c.l.b16 %v2437
    %v2506 = vunpack.c.l.b16 %v2438
    %v2507 = vunpack.c.h.b16 %v2435
    %v2508 = vunpack.c.h.b16 %v2436
    %v2509 = vunpack.c.h.b16 %v2437
    %v2510 = vunpack.c.h.b16 %v2438
    %v2511 = vunpack.c.l.b16 %v2439
    %v2512 = vunpack.c.l.b16 %v2440
    %v2513 = vunpack.c.l.b16 %v2441
    %v2514 = vunpack.c.l.b16 %v2442
    %v2515 = vunpack.c.h.b16 %v2439
    %v2516 = vunpack.c.h.b16 %v2440
    %v2517 = vunpack.c.h.b16 %v2441
    %v2518 = vunpack.c.h.b16 %v2442
    %v2519 = vunpack.c.l.b16 %v2443
    %v2520 = vunpack.c.l.b16 %v2444
    %v2521 = vunpack.c.l.b16 %v2445
    %v2522 = vunpack.c.l.b16 %v2446
    %v2523 = vunpack.c.h.b16 %v2443
    %v2524 = vunpack.c.h.b16 %v2444
    %v2525 = vunpack.c.h.b16 %v2445
    %v2526 = vunpack.c.h.b16 %v2446
    %v2527 = vunpack.c.l.b16 %v2447
    %v2528 = vunpack.c.l.b16 %v2448
    %v2529 = vunpack.c.l.b16 %v2449
    %v2530 = vunpack.c.l.b16 %v2450
    %v2531 = vunpack.c.h.b16 %v2447
    %v2532 = vunpack.c.h.b16 %v2448
    %v2533 = vunpack.c.h.b16 %v2449
    %v2534 = vunpack.c.h.b16 %v2450
    %v2535 = vunpack.c.l.b16 %v2451
    %v2536 = vunpack.c.l.b16 %v2452
    %v2537 = vunpack.c.l.b16 %v2453
    %v2538 = vunpack.c.l.b16 %v2454
    %v2539 = vunpack.c.h.b16 %v2451
    %v2540 = vunpack.c.h.b16 %v2452
    %v2541 = vunpack.c.h.b16 %v2453
    %v2542 = vunpack.c.h.b16 %v2454
    %v2543 = vunpack.c.l.b16 %v2455
    %v2544 = vunpack.c.l.b16 %v2456
    %v2545 = vunpack.c.l.b16 %v2457
    %v2546 = vunpack.c.l.b16 %v2458
    %v2547 = vunpack.c.h.b16 %v2455
    %v2548 = vunpack.c.h.b16 %v2456
    %v2549 = vunpack.c.h.b16 %v2457
    %v2550 = vunpack.c.h.b16 %v2458
    %v2551 = vunpack.c.l.b16 %v2459
    %v2552 = vunpack.c.l.b16 %v2460
    %v2553 = vunpack.c.l.b16 %v2461
    %v2554 = vunpack.c.l.b16 %v2462
    %v2555 = vunpack.c.h.b16 %v2459
    %v2556 = vunpack.c.h.b16 %v2460
    %v2557 = vunpack.c.h.b16 %v2461
    %v2558 = vunpack.c.h.b16 %v2462
    %v2559 = vpack.c.b16 %v2496, %v2495
    %v2560 = vpack.c.b16 %v2498, %v2497
    %v2561 = vpack.c.b16 %v2500, %v2499
    %v2562 = vpack.c.b16 %v2502, %v2501
    %v2563 = vpack.c.b16 %v2504, %v2503
    %v2564 = vpack.c.b16 %v2506, %v2505
    %v2565 = vpack.c.b16 %v2508, %v2507
    %v2566 = vpack.c.b16 %v2510, %v2509
    %v2567 = vpack.c.b16 %v2512, %v2511
    %v2568 = vpack.c.b16 %v2514, %v2513
    %v2569 = vpack.c.b16 %v2516, %v2515
    %v2570 = vpack.c.b16 %v2518, %v2517
    %v2571 = vpack.c.b16 %v2520, %v2519
    %v2572 = vpack.c.b16 %v2522, %v2521
    %v2573 = vpack.c.b16 %v2524, %v2523
    %v2574 = vpack.c.b16 %v2526, %v2525
    %v2575 = vpack.c.b16 %v2528, %v2527
    %v2576 = vpack.c.b16 %v2530, %v2529
    %v2577 = vpack.c.b16 %v2532, %v2531
    %v2578 = vpack.c.b16 %v2534, %v2533
    %v2579 = vpack.c.b16 %v2536, %v2535
    %v2580 = vpack.c.b16 %v2538, %v2537
    %v2581 = vpack.c.b16 %v2540, %v2539
    %v2582 = vpack.c.b16 %v2542, %v2541
    %v2583 = vpack.c.b16 %v2544, %v2543
    %v2584 = vpack.c.b16 %v2546, %v2545
    %v2585 = vpack.c.b16 %v2548, %v2547
    %v2586 = vpack.c.b16 %v2550, %v2549
    %v2587 = vpack.c.b16 %v2552, %v2551
    %v2588 = vpack.c.b16 %v2554, %v2553
    %v2589 = vpack.c.b16 %v2556, %v2555
    %v2590 = vpack.c.b16 %v2558, %v2557
    %2623 = vst [vmem:[#allocation14] sm:$0xff] %v2559
    %2624 = vst [vmem:[#allocation14 + $0x8] sm:$0xff] %v2560
    %2625 = vst [vmem:[#allocation14 + $0x10] sm:$0xff] %v2561
    %2626 = vst [vmem:[#allocation14 + $0x18] sm:$0xff] %v2562
    %2627 = vst [vmem:[#allocation14 + $0x20] sm:$0xff] %v2563
    %2628 = vst [vmem:[#allocation14 + $0x28] sm:$0xff] %v2564
    %2629 = vst [vmem:[#allocation14 + $0x30] sm:$0xff] %v2565
    %2630 = vst [vmem:[#allocation14 + $0x38] sm:$0xff] %v2566
    %2631 = vst [vmem:[#allocation14 + $0x40] sm:$0xff] %v2567
    %2632 = vst [vmem:[#allocation14 + $0x48] sm:$0xff] %v2568
    %2633 = vst [vmem:[#allocation14 + $0x50] sm:$0xff] %v2569
    %2634 = vst [vmem:[#allocation14 + $0x58] sm:$0xff] %v2570
    %2635 = vst [vmem:[#allocation14 + $0x60] sm:$0xff] %v2571
    %2636 = vst [vmem:[#allocation14 + $0x68] sm:$0xff] %v2572
    %2637 = vst [vmem:[#allocation14 + $0x70] sm:$0xff] %v2573
    %2638 = vst [vmem:[#allocation14 + $0x78] sm:$0xff] %v2574
    %2639 = vst [vmem:[#allocation14 + $0x80] sm:$0xff] %v2575
    %2640 = vst [vmem:[#allocation14 + $0x88] sm:$0xff] %v2576
    %2641 = vst [vmem:[#allocation14 + $0x90] sm:$0xff] %v2577
    %2642 = vst [vmem:[#allocation14 + $0x98] sm:$0xff] %v2578
    %2643 = vst [vmem:[#allocation14 + $0xa0] sm:$0xff] %v2579
    %2644 = vst [vmem:[#allocation14 + $0xa8] sm:$0xff] %v2580
    %2645 = vst [vmem:[#allocation14 + $0xb0] sm:$0xff] %v2581
    %2646 = vst [vmem:[#allocation14 + $0xb8] sm:$0xff] %v2582
    %2647 = vst [vmem:[#allocation14 + $0xc0] sm:$0xff] %v2583
    %2648 = vst [vmem:[#allocation14 + $0xc8] sm:$0xff] %v2584
    %2649 = vst [vmem:[#allocation14 + $0xd0] sm:$0xff] %v2585
    %2650 = vst [vmem:[#allocation14 + $0xd8] sm:$0xff] %v2586
    %2651 = vst [vmem:[#allocation14 + $0xe0] sm:$0xff] %v2587
    %2652 = vst [vmem:[#allocation14 + $0xe8] sm:$0xff] %v2588
    %2653 = vst [vmem:[#allocation14 + $0xf0] sm:$0xff] %v2589
    %2654 = vst [vmem:[#allocation14 + $0xf8] sm:$0xff] %v2590
    %v2655 = vpack.c.bf16 %v1888, %v1887
    %v2656 = vpack.c.bf16 %v1890, %v1889
    %v2657 = vpack.c.bf16 %v1892, %v1891
    %v2658 = vpack.c.bf16 %v1894, %v1893
    %v2659 = vpack.c.bf16 %v1896, %v1895
    %v2660 = vpack.c.bf16 %v1898, %v1897
    %v2661 = vpack.c.bf16 %v1900, %v1899
    %v2662 = vpack.c.bf16 %v1902, %v1901
    %v2663 = vpack.c.bf16 %v1904, %v1903
    %v2664 = vpack.c.bf16 %v1906, %v1905
    %v2665 = vpack.c.bf16 %v1908, %v1907
    %v2666 = vpack.c.bf16 %v1910, %v1909
    %v2667 = vpack.c.bf16 %v1912, %v1911
    %v2668 = vpack.c.bf16 %v1914, %v1913
    %v2669 = vpack.c.bf16 %v1916, %v1915
    %v2670 = vpack.c.bf16 %v1918, %v1917
    %v2671 = vpack.c.bf16 %v1920, %v1919
    %v2672 = vpack.c.bf16 %v1922, %v1921
    %v2673 = vpack.c.bf16 %v1924, %v1923
    %v2674 = vpack.c.bf16 %v1926, %v1925
    %v2675 = vpack.c.bf16 %v1928, %v1927
    %v2676 = vpack.c.bf16 %v1930, %v1929
    %v2677 = vpack.c.bf16 %v1932, %v1931
    %v2678 = vpack.c.bf16 %v1934, %v1933
    %v2679 = vpack.c.bf16 %v1936, %v1935
    %v2680 = vpack.c.bf16 %v1938, %v1937
    %v2681 = vpack.c.bf16 %v1940, %v1939
    %v2682 = vpack.c.bf16 %v1942, %v1941
    %v2683 = vpack.c.bf16 %v1944, %v1943
    %v2684 = vpack.c.bf16 %v1946, %v1945
    %v2685 = vpack.c.bf16 %v1948, %v1947
    %v2686 = vpack.c.bf16 %v1950, %v1949
    %v2719 = vunpack.c.l.b16 %v2655
    %v2720 = vunpack.c.h.b16 %v2655
    %v2721 = vunpack.c.l.b16 %v2656
    %v2722 = vunpack.c.h.b16 %v2656
    %v2723 = vunpack.c.l.b16 %v2657
    %v2724 = vunpack.c.h.b16 %v2657
    %v2725 = vunpack.c.l.b16 %v2658
    %v2726 = vunpack.c.h.b16 %v2658
    %v2727 = vunpack.c.l.b16 %v2659
    %v2728 = vunpack.c.h.b16 %v2659
    %v2729 = vunpack.c.l.b16 %v2660
    %v2730 = vunpack.c.h.b16 %v2660
    %v2731 = vunpack.c.l.b16 %v2661
    %v2732 = vunpack.c.h.b16 %v2661
    %v2733 = vunpack.c.l.b16 %v2662
    %v2734 = vunpack.c.h.b16 %v2662
    %v2735 = vunpack.c.l.b16 %v2663
    %v2736 = vunpack.c.h.b16 %v2663
    %v2737 = vunpack.c.l.b16 %v2664
    %v2738 = vunpack.c.h.b16 %v2664
    %v2739 = vunpack.c.l.b16 %v2665
    %v2740 = vunpack.c.h.b16 %v2665
    %v2741 = vunpack.c.l.b16 %v2666
    %v2742 = vunpack.c.h.b16 %v2666
    %v2743 = vunpack.c.l.b16 %v2667
    %v2744 = vunpack.c.h.b16 %v2667
    %v2745 = vunpack.c.l.b16 %v2668
    %v2746 = vunpack.c.h.b16 %v2668
    %v2747 = vunpack.c.l.b16 %v2669
    %v2748 = vunpack.c.h.b16 %v2669
    %v2749 = vunpack.c.l.b16 %v2670
    %v2750 = vunpack.c.h.b16 %v2670
    %v2751 = vunpack.c.l.b16 %v2671
    %v2752 = vunpack.c.h.b16 %v2671
    %v2753 = vunpack.c.l.b16 %v2672
    %v2754 = vunpack.c.h.b16 %v2672
    %v2755 = vunpack.c.l.b16 %v2673
    %v2756 = vunpack.c.h.b16 %v2673
    %v2757 = vunpack.c.l.b16 %v2674
    %v2758 = vunpack.c.h.b16 %v2674
    %v2759 = vunpack.c.l.b16 %v2675
    %v2760 = vunpack.c.h.b16 %v2675
    %v2761 = vunpack.c.l.b16 %v2676
    %v2762 = vunpack.c.h.b16 %v2676
    %v2763 = vunpack.c.l.b16 %v2677
    %v2764 = vunpack.c.h.b16 %v2677
    %v2765 = vunpack.c.l.b16 %v2678
    %v2766 = vunpack.c.h.b16 %v2678
    %v2767 = vunpack.c.l.b16 %v2679
    %v2768 = vunpack.c.h.b16 %v2679
    %v2769 = vunpack.c.l.b16 %v2680
    %v2770 = vunpack.c.h.b16 %v2680
    %v2771 = vunpack.c.l.b16 %v2681
    %v2772 = vunpack.c.h.b16 %v2681
    %v2773 = vunpack.c.l.b16 %v2682
    %v2774 = vunpack.c.h.b16 %v2682
    %v2775 = vunpack.c.l.b16 %v2683
    %v2776 = vunpack.c.h.b16 %v2683
    %v2777 = vunpack.c.l.b16 %v2684
    %v2778 = vunpack.c.h.b16 %v2684
    %v2779 = vunpack.c.l.b16 %v2685
    %v2780 = vunpack.c.h.b16 %v2685
    %v2781 = vunpack.c.l.b16 %v2686
    %v2782 = vunpack.c.h.b16 %v2686
    %v2783 = vpack.c.b16 %v2719, %v2719
    %v2784 = vpack.c.b16 %v2720, %v2720
    %v2785 = vpack.c.b16 %v2721, %v2721
    %v2786 = vpack.c.b16 %v2722, %v2722
    %v2787 = vpack.c.b16 %v2723, %v2723
    %v2788 = vpack.c.b16 %v2724, %v2724
    %v2789 = vpack.c.b16 %v2725, %v2725
    %v2790 = vpack.c.b16 %v2726, %v2726
    %v2791 = vpack.c.b16 %v2727, %v2727
    %v2792 = vpack.c.b16 %v2728, %v2728
    %v2793 = vpack.c.b16 %v2729, %v2729
    %v2794 = vpack.c.b16 %v2730, %v2730
    %v2795 = vpack.c.b16 %v2731, %v2731
    %v2796 = vpack.c.b16 %v2732, %v2732
    %v2797 = vpack.c.b16 %v2733, %v2733
    %v2798 = vpack.c.b16 %v2734, %v2734
    %v2799 = vpack.c.b16 %v2735, %v2735
    %v2800 = vpack.c.b16 %v2736, %v2736
    %v2801 = vpack.c.b16 %v2737, %v2737
    %v2802 = vpack.c.b16 %v2738, %v2738
    %v2803 = vpack.c.b16 %v2739, %v2739
    %v2804 = vpack.c.b16 %v2740, %v2740
    %v2805 = vpack.c.b16 %v2741, %v2741
    %v2806 = vpack.c.b16 %v2742, %v2742
    %v2807 = vpack.c.b16 %v2743, %v2743
    %v2808 = vpack.c.b16 %v2744, %v2744
    %v2809 = vpack.c.b16 %v2745, %v2745
    %v2810 = vpack.c.b16 %v2746, %v2746
    %v2811 = vpack.c.b16 %v2747, %v2747
    %v2812 = vpack.c.b16 %v2748, %v2748
    %v2813 = vpack.c.b16 %v2749, %v2749
    %v2814 = vpack.c.b16 %v2750, %v2750
    %v2815 = vpack.c.b16 %v2751, %v2751
    %v2816 = vpack.c.b16 %v2752, %v2752
    %v2817 = vpack.c.b16 %v2753, %v2753
    %v2818 = vpack.c.b16 %v2754, %v2754
    %v2819 = vpack.c.b16 %v2755, %v2755
    %v2820 = vpack.c.b16 %v2756, %v2756
    %v2821 = vpack.c.b16 %v2757, %v2757
    %v2822 = vpack.c.b16 %v2758, %v2758
    %v2823 = vpack.c.b16 %v2759, %v2759
    %v2824 = vpack.c.b16 %v2760, %v2760
    %v2825 = vpack.c.b16 %v2761, %v2761
    %v2826 = vpack.c.b16 %v2762, %v2762
    %v2827 = vpack.c.b16 %v2763, %v2763
    %v2828 = vpack.c.b16 %v2764, %v2764
    %v2829 = vpack.c.b16 %v2765, %v2765
    %v2830 = vpack.c.b16 %v2766, %v2766
    %v2831 = vpack.c.b16 %v2767, %v2767
    %v2832 = vpack.c.b16 %v2768, %v2768
    %v2833 = vpack.c.b16 %v2769, %v2769
    %v2834 = vpack.c.b16 %v2770, %v2770
    %v2835 = vpack.c.b16 %v2771, %v2771
    %v2836 = vpack.c.b16 %v2772, %v2772
    %v2837 = vpack.c.b16 %v2773, %v2773
    %v2838 = vpack.c.b16 %v2774, %v2774
    %v2839 = vpack.c.b16 %v2775, %v2775
    %v2840 = vpack.c.b16 %v2776, %v2776
    %v2841 = vpack.c.b16 %v2777, %v2777
    %v2842 = vpack.c.b16 %v2778, %v2778
    %v2843 = vpack.c.b16 %v2779, %v2779
    %v2844 = vpack.c.b16 %v2780, %v2780
    %v2845 = vpack.c.b16 %v2781, %v2781
    %v2846 = vpack.c.b16 %v2782, %v2782
    %2911 = vst [vmem:[#allocation16] sm:$0xf] %v2783
    %2912 = vst [vmem:[#allocation16 + $0x4] sm:$0xf] %v2784
    %2913 = vst [vmem:[#allocation16 + $0x8] sm:$0xf] %v2785
    %2914 = vst [vmem:[#allocation16 + $0xc] sm:$0xf] %v2786
    %2915 = vst [vmem:[#allocation16 + $0x10] sm:$0xf] %v2787
    %2916 = vst [vmem:[#allocation16 + $0x14] sm:$0xf] %v2788
    %2917 = vst [vmem:[#allocation16 + $0x18] sm:$0xf] %v2789
    %2918 = vst [vmem:[#allocation16 + $0x1c] sm:$0xf] %v2790
    %2919 = vst [vmem:[#allocation16 + $0x20] sm:$0xf] %v2791
    %2920 = vst [vmem:[#allocation16 + $0x24] sm:$0xf] %v2792
    %2921 = vst [vmem:[#allocation16 + $0x28] sm:$0xf] %v2793
    %2922 = vst [vmem:[#allocation16 + $0x2c] sm:$0xf] %v2794
    %2923 = vst [vmem:[#allocation16 + $0x30] sm:$0xf] %v2795
    %2924 = vst [vmem:[#allocation16 + $0x34] sm:$0xf] %v2796
    %2925 = vst [vmem:[#allocation16 + $0x38] sm:$0xf] %v2797
    %2926 = vst [vmem:[#allocation16 + $0x3c] sm:$0xf] %v2798
    %2927 = vst [vmem:[#allocation16 + $0x40] sm:$0xf] %v2799
    %2928 = vst [vmem:[#allocation16 + $0x44] sm:$0xf] %v2800
    %2929 = vst [vmem:[#allocation16 + $0x48] sm:$0xf] %v2801
    %2930 = vst [vmem:[#allocation16 + $0x4c] sm:$0xf] %v2802
    %2931 = vst [vmem:[#allocation16 + $0x50] sm:$0xf] %v2803
    %2932 = vst [vmem:[#allocation16 + $0x54] sm:$0xf] %v2804
    %2933 = vst [vmem:[#allocation16 + $0x58] sm:$0xf] %v2805
    %2934 = vst [vmem:[#allocation16 + $0x5c] sm:$0xf] %v2806
    %2935 = vst [vmem:[#allocation16 + $0x60] sm:$0xf] %v2807
    %2936 = vst [vmem:[#allocation16 + $0x64] sm:$0xf] %v2808
    %2937 = vst [vmem:[#allocation16 + $0x68] sm:$0xf] %v2809
    %2938 = vst [vmem:[#allocation16 + $0x6c] sm:$0xf] %v2810
    %2939 = vst [vmem:[#allocation16 + $0x70] sm:$0xf] %v2811
    %2940 = vst [vmem:[#allocation16 + $0x74] sm:$0xf] %v2812
    %2941 = vst [vmem:[#allocation16 + $0x78] sm:$0xf] %v2813
    %2942 = vst [vmem:[#allocation16 + $0x7c] sm:$0xf] %v2814
    %2943 = vst [vmem:[#allocation16 + $0x80] sm:$0xf] %v2815
    %2944 = vst [vmem:[#allocation16 + $0x84] sm:$0xf] %v2816
    %2945 = vst [vmem:[#allocation16 + $0x88] sm:$0xf] %v2817
    %2946 = vst [vmem:[#allocation16 + $0x8c] sm:$0xf] %v2818
    %2947 = vst [vmem:[#allocation16 + $0x90] sm:$0xf] %v2819
    %2948 = vst [vmem:[#allocation16 + $0x94] sm:$0xf] %v2820
    %2949 = vst [vmem:[#allocation16 + $0x98] sm:$0xf] %v2821
    %2950 = vst [vmem:[#allocation16 + $0x9c] sm:$0xf] %v2822
    %2951 = vst [vmem:[#allocation16 + $0xa0] sm:$0xf] %v2823
    %2952 = vst [vmem:[#allocation16 + $0xa4] sm:$0xf] %v2824
    %2953 = vst [vmem:[#allocation16 + $0xa8] sm:$0xf] %v2825
    %2954 = vst [vmem:[#allocation16 + $0xac] sm:$0xf] %v2826
    %2955 = vst [vmem:[#allocation16 + $0xb0] sm:$0xf] %v2827
    %2956 = vst [vmem:[#allocation16 + $0xb4] sm:$0xf] %v2828
    %2957 = vst [vmem:[#allocation16 + $0xb8] sm:$0xf] %v2829
    %2958 = vst [vmem:[#allocation16 + $0xbc] sm:$0xf] %v2830
    %2959 = vst [vmem:[#allocation16 + $0xc0] sm:$0xf] %v2831
    %2960 = vst [vmem:[#allocation16 + $0xc4] sm:$0xf] %v2832
    %2961 = vst [vmem:[#allocation16 + $0xc8] sm:$0xf] %v2833
    %2962 = vst [vmem:[#allocation16 + $0xcc] sm:$0xf] %v2834
    %2963 = vst [vmem:[#allocation16 + $0xd0] sm:$0xf] %v2835
    %2964 = vst [vmem:[#allocation16 + $0xd4] sm:$0xf] %v2836
    %2965 = vst [vmem:[#allocation16 + $0xd8] sm:$0xf] %v2837
    %2966 = vst [vmem:[#allocation16 + $0xdc] sm:$0xf] %v2838
    %2967 = vst [vmem:[#allocation16 + $0xe0] sm:$0xf] %v2839
    %2968 = vst [vmem:[#allocation16 + $0xe4] sm:$0xf] %v2840
    %2969 = vst [vmem:[#allocation16 + $0xe8] sm:$0xf] %v2841
    %2970 = vst [vmem:[#allocation16 + $0xec] sm:$0xf] %v2842
    %2971 = vst [vmem:[#allocation16 + $0xf0] sm:$0xf] %v2843
    %2972 = vst [vmem:[#allocation16 + $0xf4] sm:$0xf] %v2844
    %2973 = vst [vmem:[#allocation16 + $0xf8] sm:$0xf] %v2845
    %2974 = vst [vmem:[#allocation16 + $0xfc] sm:$0xf] %v2846
    // Predicated region
    $region62: #{tpu_custom_call.1} parent=1 // pred_check
      _
    $region63: #{tpu_custom_call.1} parent=1 // pred_check_branch
      %2976 = sbr.rel (0) target = $region65
    $region64: #{tpu_custom_call.1} parent=1 // pred_region
      %s2978 = ssub.s32 4096, 4096
      %2979 = vsyncadd [#allocation4], %s2978
      %s2980 = sshll.u32 [#allocation13], 4
      %s2981 = int_to_ptr.vmem [resolvable:$true] %s2980
      %2986 = dma.vmem_to_hbm [thread:$0]  %s2981, 4096, %s9, [#allocation4], 256, 256, 16
    $region65: #{tpu_custom_call.1} parent=1 // pred_fallthru
      _
    // Predicated region
    $region66: #{tpu_custom_call.1} parent=1 // pred_check
      _
    $region67: #{tpu_custom_call.1} parent=1 // pred_check_branch
      %2988 = sbr.rel (0) target = $region69
    $region68: #{tpu_custom_call.1} parent=1 // pred_region
      %s2990 = ssub.s32 4096, 4096
      %2991 = vsyncadd [#allocation15], %s2990
      %s2992 = sshll.u32 [#allocation14], 4
      %s2993 = int_to_ptr.vmem [resolvable:$true] %s2992
      %2998 = dma.vmem_to_hbm [thread:$0]  %s2993, 4096, %s10, [#allocation15], 256, 256, 16
    $region69: #{tpu_custom_call.1} parent=1 // pred_fallthru
      _
    // Predicated region
    $region70: #{tpu_custom_call.1} parent=1 // pred_check
      _
    $region71: #{tpu_custom_call.1} parent=1 // pred_check_branch
      %3000 = sbr.rel (0) target = $region73
    $region72: #{tpu_custom_call.1} parent=1 // pred_region
      %s3002 = ssub.s32 4096, 4096
      %3003 = vsyncadd [#allocation15], %s3002
      %s3004 = sshll.u32 [#allocation16], 4
      %s3005 = int_to_ptr.vmem [resolvable:$true] %s3004
      %3010 = dma.vmem_to_hbm [thread:$0]  %s3005, 4096, %s11, [#allocation15], 64, 64, 4
    $region73: #{tpu_custom_call.1} parent=1 // pred_fallthru
      _
    // Predicated region
    $region74: #{tpu_custom_call.1} parent=1 // pred_check
      _
    $region75: #{tpu_custom_call.1} parent=1 // pred_check_branch
      %3012 = sbr.rel (0) target = $region77
    $region76: #{tpu_custom_call.1} parent=1 // pred_region
      %3013 = dma.done [#allocation4], 4096
    $region77: #{tpu_custom_call.1} parent=1 // pred_fallthru
      _
    // Predicated region
    $region78: #{tpu_custom_call.1} parent=1 // pred_check
      _
    $region79: #{tpu_custom_call.1} parent=1 // pred_check_branch
      %3015 = sbr.rel (0) target = $region81
    $region80: #{tpu_custom_call.1} parent=1 // pred_region
      %3016 = dma.done [#allocation15], 4096
    $region81: #{tpu_custom_call.1} parent=1 // pred_fallthru
      _
    // Predicated region
    $region82: #{tpu_custom_call.1} parent=1 // pred_check
      _
    $region83: #{tpu_custom_call.1} parent=1 // pred_check_branch
      %3018 = sbr.rel (0) target = $region85
    $region84: #{tpu_custom_call.1} parent=1 // pred_region
      %3019 = dma.done [#allocation15], 4096
    $region85: #{tpu_custom_call.1} parent=1 // pred_fallthru
      _
    %3020 = vsyncpa [#allocation3], 1
    %3021 = vsyncpa [#allocation6], 1
    %3022 = vsyncpa [#allocation9], 1
    %3023 = vsyncpa [#allocation12], 1
    %3024 = vsyncpa [#allocation4], 1
    %3025 = vsyncpa [#allocation15], 1

// kernel: tpu_custom_call.1
$region0: #{tpu_custom_call.1}
  #allocation0 [shape = 'u32[]', space=smem, size = 0x4, offset = 0x4, fixed_abs, tag = 'smem constant byte address 0x4 - core index']
  #allocation1 [shape = 'u32[144,128]{1,0:T(1,128)}', space=vmem, size = 0x12000, scoped, tag = 'internal scratch']
  %s0 = inlined_call_operand.hbm [shape: f32[512,128], index: 0, kind: input, shape index: {}]
  %s1 = inlined_call_operand.hbm [shape: f32[512,128], index: 1, kind: input, shape index: {}]
  %s2 = inlined_call_operand.hbm [shape: f32[512,128], index: 2, kind: input, shape index: {}]
  %s3 = inlined_call_operand.hbm [shape: f32[128,256], index: 3, kind: input, shape index: {}]
  %s4 = inlined_call_operand.hbm [shape: f32[128,256], index: 4, kind: input, shape index: {}]
  %s5 = inlined_call_operand.hbm [shape: f32[128,128], index: 5, kind: input, shape index: {}]
  %s6 = inlined_call_operand.vmem [shape: f32[1,128], index: 6, kind: input, shape index: {}]
  %s7 = inlined_call_operand.vmem [shape: f32[1,128], index: 7, kind: input, shape index: {}]
  %s8 = inlined_call_operand.vmem [shape: f32[1,128], index: 8, kind: input, shape index: {}]
  %s9 = inlined_call_operand.hbm [shape: bf16[128,512], index: 9, kind: output, shape index: {0}]
  %s10 = inlined_call_operand.hbm [shape: bf16[128,512], index: 10, kind: output, shape index: {1}]
  %s11 = inlined_call_operand.hbm [shape: bf16[512,128], index: 11, kind: output, shape index: {2}]
  %12 = xla_tuple %s9, %s10, %s11
  %s13 = sld [smem:[#allocation0]]
  $region86: #{tpu_custom_call.1} parent=0
    _
  %s15 = ssub.s32 1, %s13
  %s16 = scalar_select 0, %s15, %s13
  $region1: #{tpu_custom_call.1} parent=0
    #allocation2 [shape = 'u8[262144]{0}', space=vmem, size = 0x40000, scoped, tag = 'input window, operand 0, single buffered']
    #allocation3 [shape = 's32[1]{0}', space=sflag, size = 0x4, scoped, tag = 'scoped memory for tpu_custom_call.1']
    #allocation4 [shape = 's32[1]{0}', space=sflag, size = 0x4, scoped, tag = 'scoped memory for tpu_custom_call.1']
    #allocation5 [shape = 'u8[262144]{0}', space=vmem, size = 0x40000, scoped, tag = 'input window, operand 1, single buffered']
    #allocation6 [shape = 's32[1]{0}', space=sflag, size = 0x4, scoped, tag = 'scoped memory for tpu_custom_call.1']
    #allocation7 [shape = 'u8[262144]{0}', space=vmem, size = 0x40000, scoped, tag = 'input window, operand 2, single buffered']
    #allocation8 [shape = 'u8[131072]{0}', space=vmem, size = 0x20000, scoped, tag = 'input window, operand 3, single buffered']
    #allocation9 [shape = 's32[1]{0}', space=sflag, size = 0x4, scoped, tag = 'scoped memory for tpu_custom_call.1']
    #allocation10 [shape = 'u8[131072]{0}', space=vmem, size = 0x20000, scoped, tag = 'input window, operand 4, single buffered']
    #allocation11 [shape = 'u8[65536]{0}', space=vmem, size = 0x10000, scoped, tag = 'input window, operand 5, single buffered']
    #allocation12 [shape = 's32[1]{0}', space=sflag, size = 0x4, scoped, tag = 'scoped memory for tpu_custom_call.1']
    #allocation13 [shape = 'u8[131072]{0}', space=vmem, size = 0x20000, scoped, tag = 'output window, operand 0, single buffered']
    #allocation14 [shape = 'u8[131072]{0}', space=vmem, size = 0x20000, scoped, tag = 'output window, operand 1, single buffered']
    #allocation15 [shape = 's32[1]{0}', space=sflag, size = 0x4, scoped, tag = 'scoped memory for tpu_custom_call.1']
    #allocation16 [shape = 'u8[131072]{0}', space=vmem, size = 0x20000, scoped, tag = 'output window, operand 2, single buffered']
    %17 = vsyncpa [#allocation3], 0
    %18 = vsyncpa [#allocation6], 0
    %19 = vsyncpa [#allocation9], 0
    %20 = vsyncpa [#allocation12], 0
    %21 = vsyncpa [#allocation4], 0
    %22 = vsyncpa [#allocation15], 0
    // Predicated region
    $region2: #{tpu_custom_call.1} parent=1 // pred_check
      _
    $region3: #{tpu_custom_call.1} parent=1 // pred_check_branch
      %24 = sbr.rel (0) target = $region5
    $region4: #{tpu_custom_call.1} parent=1 // pred_region
      %s26 = ssub.s32 8192, 8192
      %27 = vsyncadd [#allocation3], %s26
      %s28 = sshll.u32 [#allocation2], 4
      %s29 = int_to_ptr.vmem [resolvable:$true] %s28
      %34 = dma.hbm_to_vmem [thread:$0]  %s0, 8192, %s29, [#allocation3], 128, 128, 8
    $region5: #{tpu_custom_call.1} parent=1 // pred_fallthru
      _
    // Predicated region
    $region6: #{tpu_custom_call.1} parent=1 // pred_check
      _
    $region7: #{tpu_custom_call.1} parent=1 // pred_check_branch
      %36 = sbr.rel (0) target = $region9
    $region8: #{tpu_custom_call.1} parent=1 // pred_region
      %s38 = ssub.s32 8192, 8192
      %39 = vsyncadd [#allocation6], %s38
      %s40 = sshll.u32 [#allocation5], 4
      %s41 = int_to_ptr.vmem [resolvable:$true] %s40
      %46 = dma.hbm_to_vmem [thread:$0]  %s1, 8192, %s41, [#allocation6], 128, 128, 8
    $region9: #{tpu_custom_call.1} parent=1 // pred_fallthru
      _
    // Predicated region
    $region10: #{tpu_custom_call.1} parent=1 // pred_check
      _
    $region11: #{tpu_custom_call.1} parent=1 // pred_check_branch
      %48 = sbr.rel (0) target = $region13
    $region12: #{tpu_custom_call.1} parent=1 // pred_region
      %s50 = ssub.s32 8192, 8192
      %51 = vsyncadd [#allocation6], %s50
      %s52 = sshll.u32 [#allocation7], 4
      %s53 = int_to_ptr.vmem [resolvable:$true] %s52
      %58 = dma.hbm_to_vmem [thread:$0]  %s2, 8192, %s53, [#allocation6], 128, 128, 8
    $region13: #{tpu_custom_call.1} parent=1 // pred_fallthru
      _
    // Predicated region
    $region14: #{tpu_custom_call.1} parent=1 // pred_check
      _
    $region15: #{tpu_custom_call.1} parent=1 // pred_check_branch
      %60 = sbr.rel (0) target = $region17
    $region16: #{tpu_custom_call.1} parent=1 // pred_region
      %s62 = ssub.s32 4096, 4096
      %63 = vsyncadd [#allocation9], %s62
      %s64 = sshll.u32 [#allocation8], 4
      %s65 = int_to_ptr.vmem [resolvable:$true] %s64
      %70 = dma.hbm_to_vmem [thread:$0]  %s3, 4096, %s65, [#allocation9], 256, 256, 16
    $region17: #{tpu_custom_call.1} parent=1 // pred_fallthru
      _
    // Predicated region
    $region18: #{tpu_custom_call.1} parent=1 // pred_check
      _
    $region19: #{tpu_custom_call.1} parent=1 // pred_check_branch
      %72 = sbr.rel (0) target = $region21
    $region20: #{tpu_custom_call.1} parent=1 // pred_region
      %s74 = ssub.s32 4096, 4096
      %75 = vsyncadd [#allocation9], %s74
      %s76 = sshll.u32 [#allocation10], 4
      %s77 = int_to_ptr.vmem [resolvable:$true] %s76
      %82 = dma.hbm_to_vmem [thread:$0]  %s4, 4096, %s77, [#allocation9], 256, 256, 16
    $region21: #{tpu_custom_call.1} parent=1 // pred_fallthru
      _
    // Predicated region
    $region22: #{tpu_custom_call.1} parent=1 // pred_check
      _
    $region23: #{tpu_custom_call.1} parent=1 // pred_check_branch
      %84 = sbr.rel (0) target = $region25
    $region24: #{tpu_custom_call.1} parent=1 // pred_region
      %s86 = ssub.s32 2048, 2048
      %87 = vsyncadd [#allocation12], %s86
      %s88 = sshll.u32 [#allocation11], 4
      %s89 = int_to_ptr.vmem [resolvable:$true] %s88
      %94 = dma.hbm_to_vmem [thread:$0]  %s5, 2048, %s89, [#allocation12], 128, 128, 8
    $region25: #{tpu_custom_call.1} parent=1 // pred_fallthru
      _
    // Predicated region
    $region26: #{tpu_custom_call.1} parent=1 // pred_check
      _
    $region27: #{tpu_custom_call.1} parent=1 // pred_check_branch
      %96 = sbr.rel (0) target = $region29
    $region28: #{tpu_custom_call.1} parent=1 // pred_region
      _
    $region29: #{tpu_custom_call.1} parent=1 // pred_fallthru
      _
    // Predicated region
    $region30: #{tpu_custom_call.1} parent=1 // pred_check
      _
    $region31: #{tpu_custom_call.1} parent=1 // pred_check_branch
      %98 = sbr.rel (0) target = $region33
    $region32: #{tpu_custom_call.1} parent=1 // pred_region
      _
    $region33: #{tpu_custom_call.1} parent=1 // pred_fallthru
      _
    // Predicated region
    $region34: #{tpu_custom_call.1} parent=1 // pred_check
      _
    $region35: #{tpu_custom_call.1} parent=1 // pred_check_branch
      %100 = sbr.rel (0) target = $region37
    $region36: #{tpu_custom_call.1} parent=1 // pred_region
      _
    $region37: #{tpu_custom_call.1} parent=1 // pred_fallthru
      _
    // Predicated region
    $region38: #{tpu_custom_call.1} parent=1 // pred_check
      _
    $region39: #{tpu_custom_call.1} parent=1 // pred_check_branch
      %102 = sbr.rel (0) target = $region41
    $region40: #{tpu_custom_call.1} parent=1 // pred_region
      %103 = dma.done [#allocation3], 8192
    $region41: #{tpu_custom_call.1} parent=1 // pred_fallthru
      _
    // Predicated region
    $region42: #{tpu_custom_call.1} parent=1 // pred_check
      _
    $region43: #{tpu_custom_call.1} parent=1 // pred_check_branch
      %105 = sbr.rel (0) target = $region45
    $region44: #{tpu_custom_call.1} parent=1 // pred_region
      %106 = dma.done [#allocation6], 8192
    $region45: #{tpu_custom_call.1} parent=1 // pred_fallthru
      _
    // Predicated region
    $region46: #{tpu_custom_call.1} parent=1 // pred_check
      _
    $region47: #{tpu_custom_call.1} parent=1 // pred_check_branch
      %108 = sbr.rel (0) target = $region49
    $region48: #{tpu_custom_call.1} parent=1 // pred_region
      %109 = dma.done [#allocation6], 8192
    $region49: #{tpu_custom_call.1} parent=1 // pred_fallthru
      _
    // Predicated region
    $region50: #{tpu_custom_call.1} parent=1 // pred_check
      _
    $region51: #{tpu_custom_call.1} parent=1 // pred_check_branch
      %111 = sbr.rel (0) target = $region53
    $region52: #{tpu_custom_call.1} parent=1 // pred_region
      %112 = dma.done [#allocation9], 4096
    $region53: #{tpu_custom_call.1} parent=1 // pred_fallthru
      _
    // Predicated region
    $region54: #{tpu_custom_call.1} parent=1 // pred_check
      _
    $region55: #{tpu_custom_call.1} parent=1 // pred_check_branch
      %114 = sbr.rel (0) target = $region57
    $region56: #{tpu_custom_call.1} parent=1 // pred_region
      %115 = dma.done [#allocation9], 4096
    $region57: #{tpu_custom_call.1} parent=1 // pred_fallthru
      _
    // Predicated region
    $region58: #{tpu_custom_call.1} parent=1 // pred_check
      _
    $region59: #{tpu_custom_call.1} parent=1 // pred_check_branch
      %117 = sbr.rel (0) target = $region61
    $region60: #{tpu_custom_call.1} parent=1 // pred_region
      %118 = dma.done [#allocation12], 2048
    $region61: #{tpu_custom_call.1} parent=1 // pred_fallthru
      _
    %v119 = vld [vmem:[#allocation5] sm:$0xff]
    %v120 = vld [vmem:[#allocation5 + $0x8] sm:$0xff]
    %v121 = vld [vmem:[#allocation5 + $0x10] sm:$0xff]
    %v122 = vld [vmem:[#allocation5 + $0x18] sm:$0xff]
    %v123 = vld [vmem:[#allocation5 + $0x20] sm:$0xff]
    %v124 = vld [vmem:[#allocation5 + $0x28] sm:$0xff]
    %v125 = vld [vmem:[#allocation5 + $0x30] sm:$0xff]
    %v126 = vld [vmem:[#allocation5 + $0x38] sm:$0xff]
    %v127 = vld [vmem:[#allocation5 + $0x40] sm:$0xff]
    %v128 = vld [vmem:[#allocation5 + $0x48] sm:$0xff]
    %v129 = vld [vmem:[#allocation5 + $0x50] sm:$0xff]
    %v130 = vld [vmem:[#allocation5 + $0x58] sm:$0xff]
    %v131 = vld [vmem:[#allocation5 + $0x60] sm:$0xff]
    %v132 = vld [vmem:[#allocation5 + $0x68] sm:$0xff]
    %v133 = vld [vmem:[#allocation5 + $0x70] sm:$0xff]
    %v134 = vld [vmem:[#allocation5 + $0x78] sm:$0xff]
    %v135 = vld [vmem:[#allocation5 + $0x80] sm:$0xff]
    %v136 = vld [vmem:[#allocation5 + $0x88] sm:$0xff]
    %v137 = vld [vmem:[#allocation5 + $0x90] sm:$0xff]
    %v138 = vld [vmem:[#allocation5 + $0x98] sm:$0xff]
    %v139 = vld [vmem:[#allocation5 + $0xa0] sm:$0xff]
    %v140 = vld [vmem:[#allocation5 + $0xa8] sm:$0xff]
    %v141 = vld [vmem:[#allocation5 + $0xb0] sm:$0xff]
    %v142 = vld [vmem:[#allocation5 + $0xb8] sm:$0xff]
    %v143 = vld [vmem:[#allocation5 + $0xc0] sm:$0xff]
    %v144 = vld [vmem:[#allocation5 + $0xc8] sm:$0xff]
    %v145 = vld [vmem:[#allocation5 + $0xd0] sm:$0xff]
    %v146 = vld [vmem:[#allocation5 + $0xd8] sm:$0xff]
    %v147 = vld [vmem:[#allocation5 + $0xe0] sm:$0xff]
    %v148 = vld [vmem:[#allocation5 + $0xe8] sm:$0xff]
    %v149 = vld [vmem:[#allocation5 + $0xf0] sm:$0xff]
    %v150 = vld [vmem:[#allocation5 + $0xf8] sm:$0xff]
    %v151 = vld [vmem:[#allocation5 + $0x100] sm:$0xff]
    %v152 = vld [vmem:[#allocation5 + $0x108] sm:$0xff]
    %v153 = vld [vmem:[#allocation5 + $0x110] sm:$0xff]
    %v154 = vld [vmem:[#allocation5 + $0x118] sm:$0xff]
    %v155 = vld [vmem:[#allocation5 + $0x120] sm:$0xff]
    %v156 = vld [vmem:[#allocation5 + $0x128] sm:$0xff]
    %v157 = vld [vmem:[#allocation5 + $0x130] sm:$0xff]
    %v158 = vld [vmem:[#allocation5 + $0x138] sm:$0xff]
    %v159 = vld [vmem:[#allocation5 + $0x140] sm:$0xff]
    %v160 = vld [vmem:[#allocation5 + $0x148] sm:$0xff]
    %v161 = vld [vmem:[#allocation5 + $0x150] sm:$0xff]
    %v162 = vld [vmem:[#allocation5 + $0x158] sm:$0xff]
    %v163 = vld [vmem:[#allocation5 + $0x160] sm:$0xff]
    %v164 = vld [vmem:[#allocation5 + $0x168] sm:$0xff]
    %v165 = vld [vmem:[#allocation5 + $0x170] sm:$0xff]
    %v166 = vld [vmem:[#allocation5 + $0x178] sm:$0xff]
    %v167 = vld [vmem:[#allocation5 + $0x180] sm:$0xff]
    %v168 = vld [vmem:[#allocation5 + $0x188] sm:$0xff]
    %v169 = vld [vmem:[#allocation5 + $0x190] sm:$0xff]
    %v170 = vld [vmem:[#allocation5 + $0x198] sm:$0xff]
    %v171 = vld [vmem:[#allocation5 + $0x1a0] sm:$0xff]
    %v172 = vld [vmem:[#allocation5 + $0x1a8] sm:$0xff]
    %v173 = vld [vmem:[#allocation5 + $0x1b0] sm:$0xff]
    %v174 = vld [vmem:[#allocation5 + $0x1b8] sm:$0xff]
    %v175 = vld [vmem:[#allocation5 + $0x1c0] sm:$0xff]
    %v176 = vld [vmem:[#allocation5 + $0x1c8] sm:$0xff]
    %v177 = vld [vmem:[#allocation5 + $0x1d0] sm:$0xff]
    %v178 = vld [vmem:[#allocation5 + $0x1d8] sm:$0xff]
    %v179 = vld [vmem:[#allocation5 + $0x1e0] sm:$0xff]
    %v180 = vld [vmem:[#allocation5 + $0x1e8] sm:$0xff]
    %v181 = vld [vmem:[#allocation5 + $0x1f0] sm:$0xff]
    %v182 = vld [vmem:[#allocation5 + $0x1f8] sm:$0xff]
    %v183 = vld [vmem:[#allocation8] sm:$0xff]
    %v184 = vld [vmem:[#allocation8 + $0x8] sm:$0xff]
    %v185 = vld [vmem:[#allocation8 + $0x10] sm:$0xff]
    %v186 = vld [vmem:[#allocation8 + $0x18] sm:$0xff]
    %v187 = vld [vmem:[#allocation8 + $0x20] sm:$0xff]
    %v188 = vld [vmem:[#allocation8 + $0x28] sm:$0xff]
    %v189 = vld [vmem:[#allocation8 + $0x30] sm:$0xff]
    %v190 = vld [vmem:[#allocation8 + $0x38] sm:$0xff]
    %v191 = vld [vmem:[#allocation8 + $0x40] sm:$0xff]
    %v192 = vld [vmem:[#allocation8 + $0x48] sm:$0xff]
    %v193 = vld [vmem:[#allocation8 + $0x50] sm:$0xff]
    %v194 = vld [vmem:[#allocation8 + $0x58] sm:$0xff]
    %v195 = vld [vmem:[#allocation8 + $0x60] sm:$0xff]
    %v196 = vld [vmem:[#allocation8 + $0x68] sm:$0xff]
    %v197 = vld [vmem:[#allocation8 + $0x70] sm:$0xff]
    %v198 = vld [vmem:[#allocation8 + $0x78] sm:$0xff]
    %v199 = vld [vmem:[#allocation8 + $0x80] sm:$0xff]
    %v200 = vld [vmem:[#allocation8 + $0x88] sm:$0xff]
    %v201 = vld [vmem:[#allocation8 + $0x90] sm:$0xff]
    %v202 = vld [vmem:[#allocation8 + $0x98] sm:$0xff]
    %v203 = vld [vmem:[#allocation8 + $0xa0] sm:$0xff]
    %v204 = vld [vmem:[#allocation8 + $0xa8] sm:$0xff]
    %v205 = vld [vmem:[#allocation8 + $0xb0] sm:$0xff]
    %v206 = vld [vmem:[#allocation8 + $0xb8] sm:$0xff]
    %v207 = vld [vmem:[#allocation8 + $0xc0] sm:$0xff]
    %v208 = vld [vmem:[#allocation8 + $0xc8] sm:$0xff]
    %v209 = vld [vmem:[#allocation8 + $0xd0] sm:$0xff]
    %v210 = vld [vmem:[#allocation8 + $0xd8] sm:$0xff]
    %v211 = vld [vmem:[#allocation8 + $0xe0] sm:$0xff]
    %v212 = vld [vmem:[#allocation8 + $0xe8] sm:$0xff]
    %v213 = vld [vmem:[#allocation8 + $0xf0] sm:$0xff]
    %v214 = vld [vmem:[#allocation8 + $0xf8] sm:$0xff]
    %215 = vmatprep.subr.mxu0 %v184
    %216 = vmatpush1.msra.mxu0 %v183
    %217 = vmatprep.subr.mxu0 %v186
    %218 = vmatpush1.msra.mxu0 %v185
    %219 = vmatprep.subr.mxu0 %v188
    %220 = vmatpush1.msra.mxu0 %v187
    %221 = vmatprep.subr.mxu0 %v190
    %222 = vmatpush1.msra.mxu0 %v189
    %223 = vmatprep.subr.mxu0 %v192
    %224 = vmatpush1.msra.mxu0 %v191
    %225 = vmatprep.subr.mxu0 %v194
    %226 = vmatpush1.msra.mxu0 %v193
    %227 = vmatprep.subr.mxu0 %v196
    %228 = vmatpush1.msra.mxu0 %v195
    %229 = vmatprep.subr.mxu0 %v198
    %230 = vmatpush1.msra.mxu0 %v197
    %231 = vmatprep.subr.mxu0 %v200
    %232 = vmatpush1.msra.mxu0 %v199
    %233 = vmatprep.subr.mxu0 %v202
    %234 = vmatpush1.msra.mxu0 %v201
    %235 = vmatprep.subr.mxu0 %v204
    %236 = vmatpush1.msra.mxu0 %v203
    %237 = vmatprep.subr.mxu0 %v206
    %238 = vmatpush1.msra.mxu0 %v205
    %239 = vmatprep.subr.mxu0 %v208
    %240 = vmatpush1.msra.mxu0 %v207
    %241 = vmatprep.subr.mxu0 %v210
    %242 = vmatpush1.msra.mxu0 %v209
    %243 = vmatprep.subr.mxu0 %v212
    %244 = vmatpush1.msra.mxu0 %v211
    %245 = vmatprep.subr.mxu0 %v214
    %246 = vmatpush1.msra.mxu0 %v213
    %247 = vmatprep.subr.mxu0 0.0
    %248 = vmatpush1.msra.mxu0 0.0
    %249 = vmatprep.subr.mxu0 0.0
    %250 = vmatpush1.msra.mxu0 0.0
    %251 = vmatprep.subr.mxu0 0.0
    %252 = vmatpush1.msra.mxu0 0.0
    %253 = vmatprep.subr.mxu0 0.0
    %254 = vmatpush1.msra.mxu0 0.0
    %255 = vmatprep.subr.mxu0 0.0
    %256 = vmatpush1.msra.mxu0 0.0
    %257 = vmatprep.subr.mxu0 0.0
    %258 = vmatpush1.msra.mxu0 0.0
    %259 = vmatprep.subr.mxu0 0.0
    %260 = vmatpush1.msra.mxu0 0.0
    %261 = vmatprep.subr.mxu0 0.0
    %262 = vmatpush1.msra.mxu0 0.0
    %263 = vmatprep.subr.mxu0 0.0
    %264 = vmatpush1.msra.mxu0 0.0
    %265 = vmatprep.subr.mxu0 0.0
    %266 = vmatpush1.msra.mxu0 0.0
    %267 = vmatprep.subr.mxu0 0.0
    %268 = vmatpush1.msra.mxu0 0.0
    %269 = vmatprep.subr.mxu0 0.0
    %270 = vmatpush1.msra.mxu0 0.0
    %271 = vmatprep.subr.mxu0 0.0
    %272 = vmatpush1.msra.mxu0 0.0
    %273 = vmatprep.subr.mxu0 0.0
    %274 = vmatpush1.msra.mxu0 0.0
    %275 = vmatprep.subr.mxu0 0.0
    %276 = vmatpush1.msra.mxu0 0.0
    %277 = vmatprep.subr.mxu0 0.0
    %278 = vmatpush1.msra.mxu0 0.0
    %279 = vmatprep.mubr.f32.mxu0 0.0
    %280 = vmatmul.mubr.f32.gmra.mrb[0].mxu0 %v119
    %v281 = vpop.f32.mrb[0].mxu0
    %v282 = vadd.f32 0.0, %v281
    %v283 = vpop.f32.mrb[0].mxu0
    %v284 = vadd.f32 0.0, %v283
    %285 = vmatprep.mubr.f32.mxu0 0.0
    %286 = vmatmul.mubr.f32.gmra.mrb[0].mxu0 %v120
    %v287 = vpop.f32.mrb[0].mxu0
    %v288 = vadd.f32 0.0, %v287
    %v289 = vpop.f32.mrb[0].mxu0
    %v290 = vadd.f32 0.0, %v289
    %291 = vmatprep.mubr.f32.mxu0 0.0
    %292 = vmatmul.mubr.f32.gmra.mrb[0].mxu0 %v121
    %v293 = vpop.f32.mrb[0].mxu0
    %v294 = vadd.f32 0.0, %v293
    %v295 = vpop.f32.mrb[0].mxu0
    %v296 = vadd.f32 0.0, %v295
    %297 = vmatprep.mubr.f32.mxu0 0.0
    %298 = vmatmul.mubr.f32.gmra.mrb[0].mxu0 %v122
    %v299 = vpop.f32.mrb[0].mxu0
    %v300 = vadd.f32 0.0, %v299
    %v301 = vpop.f32.mrb[0].mxu0
    %v302 = vadd.f32 0.0, %v301
    %303 = vmatprep.mubr.f32.mxu0 0.0
    %304 = vmatmul.mubr.f32.gmra.mrb[0].mxu0 %v123
    %v305 = vpop.f32.mrb[0].mxu0
    %v306 = vadd.f32 0.0, %v305
    %v307 = vpop.f32.mrb[0].mxu0
    %v308 = vadd.f32 0.0, %v307
    %309 = vmatprep.mubr.f32.mxu0 0.0
    %310 = vmatmul.mubr.f32.gmra.mrb[0].mxu0 %v124
    %v311 = vpop.f32.mrb[0].mxu0
    %v312 = vadd.f32 0.0, %v311
    %v313 = vpop.f32.mrb[0].mxu0
    %v314 = vadd.f32 0.0, %v313
    %315 = vmatprep.mubr.f32.mxu0 0.0
    %316 = vmatmul.mubr.f32.gmra.mrb[0].mxu0 %v125
    %v317 = vpop.f32.mrb[0].mxu0
    %v318 = vadd.f32 0.0, %v317
    %v319 = vpop.f32.mrb[0].mxu0
    %v320 = vadd.f32 0.0, %v319
    %321 = vmatprep.mubr.f32.mxu0 0.0
    %322 = vmatmul.mubr.f32.gmra.mrb[0].mxu0 %v126
    %v323 = vpop.f32.mrb[0].mxu0
    %v324 = vadd.f32 0.0, %v323
    %v325 = vpop.f32.mrb[0].mxu0
    %v326 = vadd.f32 0.0, %v325
    %327 = vmatprep.mubr.f32.mxu0 0.0
    %328 = vmatmul.mubr.f32.gmra.mrb[0].mxu0 %v127
    %v329 = vpop.f32.mrb[0].mxu0
    %v330 = vadd.f32 0.0, %v329
    %v331 = vpop.f32.mrb[0].mxu0
    %v332 = vadd.f32 0.0, %v331
    %333 = vmatprep.mubr.f32.mxu0 0.0
    %334 = vmatmul.mubr.f32.gmra.mrb[0].mxu0 %v128
    %v335 = vpop.f32.mrb[0].mxu0
    %v336 = vadd.f32 0.0, %v335
    %v337 = vpop.f32.mrb[0].mxu0
    %v338 = vadd.f32 0.0, %v337
    %339 = vmatprep.mubr.f32.mxu0 0.0
    %340 = vmatmul.mubr.f32.gmra.mrb[0].mxu0 %v129
    %v341 = vpop.f32.mrb[0].mxu0
    %v342 = vadd.f32 0.0, %v341
    %v343 = vpop.f32.mrb[0].mxu0
    %v344 = vadd.f32 0.0, %v343
    %345 = vmatprep.mubr.f32.mxu0 0.0
    %346 = vmatmul.mubr.f32.gmra.mrb[0].mxu0 %v130
    %v347 = vpop.f32.mrb[0].mxu0
    %v348 = vadd.f32 0.0, %v347
    %v349 = vpop.f32.mrb[0].mxu0
    %v350 = vadd.f32 0.0, %v349
    %351 = vmatprep.mubr.f32.mxu0 0.0
    %352 = vmatmul.mubr.f32.gmra.mrb[0].mxu0 %v131
    %v353 = vpop.f32.mrb[0].mxu0
    %v354 = vadd.f32 0.0, %v353
    %v355 = vpop.f32.mrb[0].mxu0
    %v356 = vadd.f32 0.0, %v355
    %357 = vmatprep.mubr.f32.mxu0 0.0
    %358 = vmatmul.mubr.f32.gmra.mrb[0].mxu0 %v132
    %v359 = vpop.f32.mrb[0].mxu0
    %v360 = vadd.f32 0.0, %v359
    %v361 = vpop.f32.mrb[0].mxu0
    %v362 = vadd.f32 0.0, %v361
    %363 = vmatprep.mubr.f32.mxu0 0.0
    %364 = vmatmul.mubr.f32.gmra.mrb[0].mxu0 %v133
    %v365 = vpop.f32.mrb[0].mxu0
    %v366 = vadd.f32 0.0, %v365
    %v367 = vpop.f32.mrb[0].mxu0
    %v368 = vadd.f32 0.0, %v367
    %369 = vmatprep.mubr.f32.mxu0 0.0
    %370 = vmatmul.mubr.f32.gmra.mrb[0].mxu0 %v134
    %v371 = vpop.f32.mrb[0].mxu0
    %v372 = vadd.f32 0.0, %v371
    %v373 = vpop.f32.mrb[0].mxu0
    %v374 = vadd.f32 0.0, %v373
    %375 = vmatprep.mubr.f32.mxu0 0.0
    %376 = vmatmul.mubr.f32.gmra.mrb[0].mxu0 %v135
    %v377 = vpop.f32.mrb[0].mxu0
    %v378 = vadd.f32 0.0, %v377
    %v379 = vpop.f32.mrb[0].mxu0
    %v380 = vadd.f32 0.0, %v379
    %381 = vmatprep.mubr.f32.mxu0 0.0
    %382 = vmatmul.mubr.f32.gmra.mrb[0].mxu0 %v136
    %v383 = vpop.f32.mrb[0].mxu0
    %v384 = vadd.f32 0.0, %v383
    %v385 = vpop.f32.mrb[0].mxu0
    %v386 = vadd.f32 0.0, %v385
    %387 = vmatprep.mubr.f32.mxu0 0.0
    %388 = vmatmul.mubr.f32.gmra.mrb[0].mxu0 %v137
    %v389 = vpop.f32.mrb[0].mxu0
    %v390 = vadd.f32 0.0, %v389
    %v391 = vpop.f32.mrb[0].mxu0
    %v392 = vadd.f32 0.0, %v391
    %393 = vmatprep.mubr.f32.mxu0 0.0
    %394 = vmatmul.mubr.f32.gmra.mrb[0].mxu0 %v138
    %v395 = vpop.f32.mrb[0].mxu0
    %v396 = vadd.f32 0.0, %v395
    %v397 = vpop.f32.mrb[0].mxu0
    %v398 = vadd.f32 0.0, %v397
    %399 = vmatprep.mubr.f32.mxu0 0.0
    %400 = vmatmul.mubr.f32.gmra.mrb[0].mxu0 %v139
    %v401 = vpop.f32.mrb[0].mxu0
    %v402 = vadd.f32 0.0, %v401
    %v403 = vpop.f32.mrb[0].mxu0
    %v404 = vadd.f32 0.0, %v403
    %405 = vmatprep.mubr.f32.mxu0 0.0
    %406 = vmatmul.mubr.f32.gmra.mrb[0].mxu0 %v140
    %v407 = vpop.f32.mrb[0].mxu0
    %v408 = vadd.f32 0.0, %v407
    %v409 = vpop.f32.mrb[0].mxu0
    %v410 = vadd.f32 0.0, %v409
    %411 = vmatprep.mubr.f32.mxu0 0.0
    %412 = vmatmul.mubr.f32.gmra.mrb[0].mxu0 %v141
    %v413 = vpop.f32.mrb[0].mxu0
    %v414 = vadd.f32 0.0, %v413
    %v415 = vpop.f32.mrb[0].mxu0
    %v416 = vadd.f32 0.0, %v415
    %417 = vmatprep.mubr.f32.mxu0 0.0
    %418 = vmatmul.mubr.f32.gmra.mrb[0].mxu0 %v142
    %v419 = vpop.f32.mrb[0].mxu0
    %v420 = vadd.f32 0.0, %v419
    %v421 = vpop.f32.mrb[0].mxu0
    %v422 = vadd.f32 0.0, %v421
    %423 = vmatprep.mubr.f32.mxu0 0.0
    %424 = vmatmul.mubr.f32.gmra.mrb[0].mxu0 %v143
    %v425 = vpop.f32.mrb[0].mxu0
    %v426 = vadd.f32 0.0, %v425
    %v427 = vpop.f32.mrb[0].mxu0
    %v428 = vadd.f32 0.0, %v427
    %429 = vmatprep.mubr.f32.mxu0 0.0
    %430 = vmatmul.mubr.f32.gmra.mrb[0].mxu0 %v144
    %v431 = vpop.f32.mrb[0].mxu0
    %v432 = vadd.f32 0.0, %v431
    %v433 = vpop.f32.mrb[0].mxu0
    %v434 = vadd.f32 0.0, %v433
    %435 = vmatprep.mubr.f32.mxu0 0.0
    %436 = vmatmul.mubr.f32.gmra.mrb[0].mxu0 %v145
    %v437 = vpop.f32.mrb[0].mxu0
    %v438 = vadd.f32 0.0, %v437
    %v439 = vpop.f32.mrb[0].mxu0
    %v440 = vadd.f32 0.0, %v439
    %441 = vmatprep.mubr.f32.mxu0 0.0
    %442 = vmatmul.mubr.f32.gmra.mrb[0].mxu0 %v146
    %v443 = vpop.f32.mrb[0].mxu0
    %v444 = vadd.f32 0.0, %v443
    %v445 = vpop.f32.mrb[0].mxu0
    %v446 = vadd.f32 0.0, %v445
    %447 = vmatprep.mubr.f32.mxu0 0.0
    %448 = vmatmul.mubr.f32.gmra.mrb[0].mxu0 %v147
    %v449 = vpop.f32.mrb[0].mxu0
    %v450 = vadd.f32 0.0, %v449
    %v451 = vpop.f32.mrb[0].mxu0
    %v452 = vadd.f32 0.0, %v451
    %453 = vmatprep.mubr.f32.mxu0 0.0
    %454 = vmatmul.mubr.f32.gmra.mrb[0].mxu0 %v148
    %v455 = vpop.f32.mrb[0].mxu0
    %v456 = vadd.f32 0.0, %v455
    %v457 = vpop.f32.mrb[0].mxu0
    %v458 = vadd.f32 0.0, %v457
    %459 = vmatprep.mubr.f32.mxu0 0.0
    %460 = vmatmul.mubr.f32.gmra.mrb[0].mxu0 %v149
    %v461 = vpop.f32.mrb[0].mxu0
    %v462 = vadd.f32 0.0, %v461
    %v463 = vpop.f32.mrb[0].mxu0
    %v464 = vadd.f32 0.0, %v463
    %465 = vmatprep.mubr.f32.mxu0 0.0
    %466 = vmatmul.mubr.f32.gmra.mrb[0].mxu0 %v150
    %v467 = vpop.f32.mrb[0].mxu0
    %v468 = vadd.f32 0.0, %v467
    %v469 = vpop.f32.mrb[0].mxu0
    %v470 = vadd.f32 0.0, %v469
    %471 = vmatprep.mubr.f32.mxu0 0.0
    %472 = vmatmul.mubr.f32.gmra.mrb[0].mxu0 %v151
    %v473 = vpop.f32.mrb[0].mxu0
    %v474 = vadd.f32 0.0, %v473
    %v475 = vpop.f32.mrb[0].mxu0
    %v476 = vadd.f32 0.0, %v475
    %477 = vmatprep.mubr.f32.mxu0 0.0
    %478 = vmatmul.mubr.f32.gmra.mrb[0].mxu0 %v152
    %v479 = vpop.f32.mrb[0].mxu0
    %v480 = vadd.f32 0.0, %v479
    %v481 = vpop.f32.mrb[0].mxu0
    %v482 = vadd.f32 0.0, %v481
    %483 = vmatprep.mubr.f32.mxu0 0.0
    %484 = vmatmul.mubr.f32.gmra.mrb[0].mxu0 %v153
    %v485 = vpop.f32.mrb[0].mxu0
    %v486 = vadd.f32 0.0, %v485
    %v487 = vpop.f32.mrb[0].mxu0
    %v488 = vadd.f32 0.0, %v487
    %489 = vmatprep.mubr.f32.mxu0 0.0
    %490 = vmatmul.mubr.f32.gmra.mrb[0].mxu0 %v154
    %v491 = vpop.f32.mrb[0].mxu0
    %v492 = vadd.f32 0.0, %v491
    %v493 = vpop.f32.mrb[0].mxu0
    %v494 = vadd.f32 0.0, %v493
    %495 = vmatprep.mubr.f32.mxu0 0.0
    %496 = vmatmul.mubr.f32.gmra.mrb[0].mxu0 %v155
    %v497 = vpop.f32.mrb[0].mxu0
    %v498 = vadd.f32 0.0, %v497
    %v499 = vpop.f32.mrb[0].mxu0
    %v500 = vadd.f32 0.0, %v499
    %501 = vmatprep.mubr.f32.mxu0 0.0
    %502 = vmatmul.mubr.f32.gmra.mrb[0].mxu0 %v156
    %v503 = vpop.f32.mrb[0].mxu0
    %v504 = vadd.f32 0.0, %v503
    %v505 = vpop.f32.mrb[0].mxu0
    %v506 = vadd.f32 0.0, %v505
    %507 = vmatprep.mubr.f32.mxu0 0.0
    %508 = vmatmul.mubr.f32.gmra.mrb[0].mxu0 %v157
    %v509 = vpop.f32.mrb[0].mxu0
    %v510 = vadd.f32 0.0, %v509
    %v511 = vpop.f32.mrb[0].mxu0
    %v512 = vadd.f32 0.0, %v511
    %513 = vmatprep.mubr.f32.mxu0 0.0
    %514 = vmatmul.mubr.f32.gmra.mrb[0].mxu0 %v158
    %v515 = vpop.f32.mrb[0].mxu0
    %v516 = vadd.f32 0.0, %v515
    %v517 = vpop.f32.mrb[0].mxu0
    %v518 = vadd.f32 0.0, %v517
    %519 = vmatprep.mubr.f32.mxu0 0.0
    %520 = vmatmul.mubr.f32.gmra.mrb[0].mxu0 %v159
    %v521 = vpop.f32.mrb[0].mxu0
    %v522 = vadd.f32 0.0, %v521
    %v523 = vpop.f32.mrb[0].mxu0
    %v524 = vadd.f32 0.0, %v523
    %525 = vmatprep.mubr.f32.mxu0 0.0
    %526 = vmatmul.mubr.f32.gmra.mrb[0].mxu0 %v160
    %v527 = vpop.f32.mrb[0].mxu0
    %v528 = vadd.f32 0.0, %v527
    %v529 = vpop.f32.mrb[0].mxu0
    %v530 = vadd.f32 0.0, %v529
    %531 = vmatprep.mubr.f32.mxu0 0.0
    %532 = vmatmul.mubr.f32.gmra.mrb[0].mxu0 %v161
    %v533 = vpop.f32.mrb[0].mxu0
    %v534 = vadd.f32 0.0, %v533
    %v535 = vpop.f32.mrb[0].mxu0
    %v536 = vadd.f32 0.0, %v535
    %537 = vmatprep.mubr.f32.mxu0 0.0
    %538 = vmatmul.mubr.f32.gmra.mrb[0].mxu0 %v162
    %v539 = vpop.f32.mrb[0].mxu0
    %v540 = vadd.f32 0.0, %v539
    %v541 = vpop.f32.mrb[0].mxu0
    %v542 = vadd.f32 0.0, %v541
    %543 = vmatprep.mubr.f32.mxu0 0.0
    %544 = vmatmul.mubr.f32.gmra.mrb[0].mxu0 %v163
    %v545 = vpop.f32.mrb[0].mxu0
    %v546 = vadd.f32 0.0, %v545
    %v547 = vpop.f32.mrb[0].mxu0
    %v548 = vadd.f32 0.0, %v547
    %549 = vmatprep.mubr.f32.mxu0 0.0
    %550 = vmatmul.mubr.f32.gmra.mrb[0].mxu0 %v164
    %v551 = vpop.f32.mrb[0].mxu0
    %v552 = vadd.f32 0.0, %v551
    %v553 = vpop.f32.mrb[0].mxu0
    %v554 = vadd.f32 0.0, %v553
    %555 = vmatprep.mubr.f32.mxu0 0.0
    %556 = vmatmul.mubr.f32.gmra.mrb[0].mxu0 %v165
    %v557 = vpop.f32.mrb[0].mxu0
    %v558 = vadd.f32 0.0, %v557
    %v559 = vpop.f32.mrb[0].mxu0
    %v560 = vadd.f32 0.0, %v559
    %561 = vmatprep.mubr.f32.mxu0 0.0
    %562 = vmatmul.mubr.f32.gmra.mrb[0].mxu0 %v166
    %v563 = vpop.f32.mrb[0].mxu0
    %v564 = vadd.f32 0.0, %v563
    %v565 = vpop.f32.mrb[0].mxu0
    %v566 = vadd.f32 0.0, %v565
    %567 = vmatprep.mubr.f32.mxu0 0.0
    %568 = vmatmul.mubr.f32.gmra.mrb[0].mxu0 %v167
    %v569 = vpop.f32.mrb[0].mxu0
    %v570 = vadd.f32 0.0, %v569
    %v571 = vpop.f32.mrb[0].mxu0
    %v572 = vadd.f32 0.0, %v571
    %573 = vmatprep.mubr.f32.mxu0 0.0
    %574 = vmatmul.mubr.f32.gmra.mrb[0].mxu0 %v168
    %v575 = vpop.f32.mrb[0].mxu0
    %v576 = vadd.f32 0.0, %v575
    %v577 = vpop.f32.mrb[0].mxu0
    %v578 = vadd.f32 0.0, %v577
    %579 = vmatprep.mubr.f32.mxu0 0.0
    %580 = vmatmul.mubr.f32.gmra.mrb[0].mxu0 %v169
    %v581 = vpop.f32.mrb[0].mxu0
    %v582 = vadd.f32 0.0, %v581
    %v583 = vpop.f32.mrb[0].mxu0
    %v584 = vadd.f32 0.0, %v583
    %585 = vmatprep.mubr.f32.mxu0 0.0
    %586 = vmatmul.mubr.f32.gmra.mrb[0].mxu0 %v170
    %v587 = vpop.f32.mrb[0].mxu0
    %v588 = vadd.f32 0.0, %v587
    %v589 = vpop.f32.mrb[0].mxu0
    %v590 = vadd.f32 0.0, %v589
    %591 = vmatprep.mubr.f32.mxu0 0.0
    %592 = vmatmul.mubr.f32.gmra.mrb[0].mxu0 %v171
    %v593 = vpop.f32.mrb[0].mxu0
    %v594 = vadd.f32 0.0, %v593
    %v595 = vpop.f32.mrb[0].mxu0
    %v596 = vadd.f32 0.0, %v595
    %597 = vmatprep.mubr.f32.mxu0 0.0
    %598 = vmatmul.mubr.f32.gmra.mrb[0].mxu0 %v172
    %v599 = vpop.f32.mrb[0].mxu0
    %v600 = vadd.f32 0.0, %v599
    %v601 = vpop.f32.mrb[0].mxu0
    %v602 = vadd.f32 0.0, %v601
    %603 = vmatprep.mubr.f32.mxu0 0.0
    %604 = vmatmul.mubr.f32.gmra.mrb[0].mxu0 %v173
    %v605 = vpop.f32.mrb[0].mxu0
    %v606 = vadd.f32 0.0, %v605
    %v607 = vpop.f32.mrb[0].mxu0
    %v608 = vadd.f32 0.0, %v607
    %609 = vmatprep.mubr.f32.mxu0 0.0
    %610 = vmatmul.mubr.f32.gmra.mrb[0].mxu0 %v174
    %v611 = vpop.f32.mrb[0].mxu0
    %v612 = vadd.f32 0.0, %v611
    %v613 = vpop.f32.mrb[0].mxu0
    %v614 = vadd.f32 0.0, %v613
    %615 = vmatprep.mubr.f32.mxu0 0.0
    %616 = vmatmul.mubr.f32.gmra.mrb[0].mxu0 %v175
    %v617 = vpop.f32.mrb[0].mxu0
    %v618 = vadd.f32 0.0, %v617
    %v619 = vpop.f32.mrb[0].mxu0
    %v620 = vadd.f32 0.0, %v619
    %621 = vmatprep.mubr.f32.mxu0 0.0
    %622 = vmatmul.mubr.f32.gmra.mrb[0].mxu0 %v176
    %v623 = vpop.f32.mrb[0].mxu0
    %v624 = vadd.f32 0.0, %v623
    %v625 = vpop.f32.mrb[0].mxu0
    %v626 = vadd.f32 0.0, %v625
    %627 = vmatprep.mubr.f32.mxu0 0.0
    %628 = vmatmul.mubr.f32.gmra.mrb[0].mxu0 %v177
    %v629 = vpop.f32.mrb[0].mxu0
    %v630 = vadd.f32 0.0, %v629
    %v631 = vpop.f32.mrb[0].mxu0
    %v632 = vadd.f32 0.0, %v631
    %633 = vmatprep.mubr.f32.mxu0 0.0
    %634 = vmatmul.mubr.f32.gmra.mrb[0].mxu0 %v178
    %v635 = vpop.f32.mrb[0].mxu0
    %v636 = vadd.f32 0.0, %v635
    %v637 = vpop.f32.mrb[0].mxu0
    %v638 = vadd.f32 0.0, %v637
    %639 = vmatprep.mubr.f32.mxu0 0.0
    %640 = vmatmul.mubr.f32.gmra.mrb[0].mxu0 %v179
    %v641 = vpop.f32.mrb[0].mxu0
    %v642 = vadd.f32 0.0, %v641
    %v643 = vpop.f32.mrb[0].mxu0
    %v644 = vadd.f32 0.0, %v643
    %645 = vmatprep.mubr.f32.mxu0 0.0
    %646 = vmatmul.mubr.f32.gmra.mrb[0].mxu0 %v180
    %v647 = vpop.f32.mrb[0].mxu0
    %v648 = vadd.f32 0.0, %v647
    %v649 = vpop.f32.mrb[0].mxu0
    %v650 = vadd.f32 0.0, %v649
    %651 = vmatprep.mubr.f32.mxu0 0.0
    %652 = vmatmul.mubr.f32.gmra.mrb[0].mxu0 %v181
    %v653 = vpop.f32.mrb[0].mxu0
    %v654 = vadd.f32 0.0, %v653
    %v655 = vpop.f32.mrb[0].mxu0
    %v656 = vadd.f32 0.0, %v655
    %657 = vmatprep.mubr.f32.mxu0 0.0
    %658 = vmatmul.mubr.f32.gmra.mrb[0].mxu0 %v182
    %v659 = vpop.f32.mrb[0].mxu0
    %v660 = vadd.f32 0.0, %v659
    %v661 = vpop.f32.mrb[0].mxu0
    %v662 = vadd.f32 0.0, %v661
    %663 = vdwg.mxu0
    %v664 = vld [vmem:[#allocation7] sm:$0xff]
    %v665 = vld [vmem:[#allocation7 + $0x8] sm:$0xff]
    %v666 = vld [vmem:[#allocation7 + $0x10] sm:$0xff]
    %v667 = vld [vmem:[#allocation7 + $0x18] sm:$0xff]
    %v668 = vld [vmem:[#allocation7 + $0x20] sm:$0xff]
    %v669 = vld [vmem:[#allocation7 + $0x28] sm:$0xff]
    %v670 = vld [vmem:[#allocation7 + $0x30] sm:$0xff]
    %v671 = vld [vmem:[#allocation7 + $0x38] sm:$0xff]
    %v672 = vld [vmem:[#allocation7 + $0x40] sm:$0xff]
    %v673 = vld [vmem:[#allocation7 + $0x48] sm:$0xff]
    %v674 = vld [vmem:[#allocation7 + $0x50] sm:$0xff]
    %v675 = vld [vmem:[#allocation7 + $0x58] sm:$0xff]
    %v676 = vld [vmem:[#allocation7 + $0x60] sm:$0xff]
    %v677 = vld [vmem:[#allocation7 + $0x68] sm:$0xff]
    %v678 = vld [vmem:[#allocation7 + $0x70] sm:$0xff]
    %v679 = vld [vmem:[#allocation7 + $0x78] sm:$0xff]
    %v680 = vld [vmem:[#allocation7 + $0x80] sm:$0xff]
    %v681 = vld [vmem:[#allocation7 + $0x88] sm:$0xff]
    %v682 = vld [vmem:[#allocation7 + $0x90] sm:$0xff]
    %v683 = vld [vmem:[#allocation7 + $0x98] sm:$0xff]
    %v684 = vld [vmem:[#allocation7 + $0xa0] sm:$0xff]
    %v685 = vld [vmem:[#allocation7 + $0xa8] sm:$0xff]
    %v686 = vld [vmem:[#allocation7 + $0xb0] sm:$0xff]
    %v687 = vld [vmem:[#allocation7 + $0xb8] sm:$0xff]
    %v688 = vld [vmem:[#allocation7 + $0xc0] sm:$0xff]
    %v689 = vld [vmem:[#allocation7 + $0xc8] sm:$0xff]
    %v690 = vld [vmem:[#allocation7 + $0xd0] sm:$0xff]
    %v691 = vld [vmem:[#allocation7 + $0xd8] sm:$0xff]
    %v692 = vld [vmem:[#allocation7 + $0xe0] sm:$0xff]
    %v693 = vld [vmem:[#allocation7 + $0xe8] sm:$0xff]
    %v694 = vld [vmem:[#allocation7 + $0xf0] sm:$0xff]
    %v695 = vld [vmem:[#allocation7 + $0xf8] sm:$0xff]
    %v696 = vld [vmem:[#allocation7 + $0x100] sm:$0xff]
    %v697 = vld [vmem:[#allocation7 + $0x108] sm:$0xff]
    %v698 = vld [vmem:[#allocation7 + $0x110] sm:$0xff]
    %v699 = vld [vmem:[#allocation7 + $0x118] sm:$0xff]
    %v700 = vld [vmem:[#allocation7 + $0x120] sm:$0xff]
    %v701 = vld [vmem:[#allocation7 + $0x128] sm:$0xff]
    %v702 = vld [vmem:[#allocation7 + $0x130] sm:$0xff]
    %v703 = vld [vmem:[#allocation7 + $0x138] sm:$0xff]
    %v704 = vld [vmem:[#allocation7 + $0x140] sm:$0xff]
    %v705 = vld [vmem:[#allocation7 + $0x148] sm:$0xff]
    %v706 = vld [vmem:[#allocation7 + $0x150] sm:$0xff]
    %v707 = vld [vmem:[#allocation7 + $0x158] sm:$0xff]
    %v708 = vld [vmem:[#allocation7 + $0x160] sm:$0xff]
    %v709 = vld [vmem:[#allocation7 + $0x168] sm:$0xff]
    %v710 = vld [vmem:[#allocation7 + $0x170] sm:$0xff]
    %v711 = vld [vmem:[#allocation7 + $0x178] sm:$0xff]
    %v712 = vld [vmem:[#allocation7 + $0x180] sm:$0xff]
    %v713 = vld [vmem:[#allocation7 + $0x188] sm:$0xff]
    %v714 = vld [vmem:[#allocation7 + $0x190] sm:$0xff]
    %v715 = vld [vmem:[#allocation7 + $0x198] sm:$0xff]
    %v716 = vld [vmem:[#allocation7 + $0x1a0] sm:$0xff]
    %v717 = vld [vmem:[#allocation7 + $0x1a8] sm:$0xff]
    %v718 = vld [vmem:[#allocation7 + $0x1b0] sm:$0xff]
    %v719 = vld [vmem:[#allocation7 + $0x1b8] sm:$0xff]
    %v720 = vld [vmem:[#allocation7 + $0x1c0] sm:$0xff]
    %v721 = vld [vmem:[#allocation7 + $0x1c8] sm:$0xff]
    %v722 = vld [vmem:[#allocation7 + $0x1d0] sm:$0xff]
    %v723 = vld [vmem:[#allocation7 + $0x1d8] sm:$0xff]
    %v724 = vld [vmem:[#allocation7 + $0x1e0] sm:$0xff]
    %v725 = vld [vmem:[#allocation7 + $0x1e8] sm:$0xff]
    %v726 = vld [vmem:[#allocation7 + $0x1f0] sm:$0xff]
    %v727 = vld [vmem:[#allocation7 + $0x1f8] sm:$0xff]
    %v728 = vld [vmem:[#allocation10] sm:$0xff]
    %v729 = vld [vmem:[#allocation10 + $0x8] sm:$0xff]
    %v730 = vld [vmem:[#allocation10 + $0x10] sm:$0xff]
    %v731 = vld [vmem:[#allocation10 + $0x18] sm:$0xff]
    %v732 = vld [vmem:[#allocation10 + $0x20] sm:$0xff]
    %v733 = vld [vmem:[#allocation10 + $0x28] sm:$0xff]
    %v734 = vld [vmem:[#allocation10 + $0x30] sm:$0xff]
    %v735 = vld [vmem:[#allocation10 + $0x38] sm:$0xff]
    %v736 = vld [vmem:[#allocation10 + $0x40] sm:$0xff]
    %v737 = vld [vmem:[#allocation10 + $0x48] sm:$0xff]
    %v738 = vld [vmem:[#allocation10 + $0x50] sm:$0xff]
    %v739 = vld [vmem:[#allocation10 + $0x58] sm:$0xff]
    %v740 = vld [vmem:[#allocation10 + $0x60] sm:$0xff]
    %v741 = vld [vmem:[#allocation10 + $0x68] sm:$0xff]
    %v742 = vld [vmem:[#allocation10 + $0x70] sm:$0xff]
    %v743 = vld [vmem:[#allocation10 + $0x78] sm:$0xff]
    %v744 = vld [vmem:[#allocation10 + $0x80] sm:$0xff]
    %v745 = vld [vmem:[#allocation10 + $0x88] sm:$0xff]
    %v746 = vld [vmem:[#allocation10 + $0x90] sm:$0xff]
    %v747 = vld [vmem:[#allocation10 + $0x98] sm:$0xff]
    %v748 = vld [vmem:[#allocation10 + $0xa0] sm:$0xff]
    %v749 = vld [vmem:[#allocation10 + $0xa8] sm:$0xff]
    %v750 = vld [vmem:[#allocation10 + $0xb0] sm:$0xff]
    %v751 = vld [vmem:[#allocation10 + $0xb8] sm:$0xff]
    %v752 = vld [vmem:[#allocation10 + $0xc0] sm:$0xff]
    %v753 = vld [vmem:[#allocation10 + $0xc8] sm:$0xff]
    %v754 = vld [vmem:[#allocation10 + $0xd0] sm:$0xff]
    %v755 = vld [vmem:[#allocation10 + $0xd8] sm:$0xff]
    %v756 = vld [vmem:[#allocation10 + $0xe0] sm:$0xff]
    %v757 = vld [vmem:[#allocation10 + $0xe8] sm:$0xff]
    %v758 = vld [vmem:[#allocation10 + $0xf0] sm:$0xff]
    %v759 = vld [vmem:[#allocation10 + $0xf8] sm:$0xff]
    %760 = vmatprep.subr.mxu0 %v729
    %761 = vmatpush1.msra.mxu0 %v728
    %762 = vmatprep.subr.mxu0 %v731
    %763 = vmatpush1.msra.mxu0 %v730
    %764 = vmatprep.subr.mxu0 %v733
    %765 = vmatpush1.msra.mxu0 %v732
    %766 = vmatprep.subr.mxu0 %v735
    %767 = vmatpush1.msra.mxu0 %v734
    %768 = vmatprep.subr.mxu0 %v737
    %769 = vmatpush1.msra.mxu0 %v736
    %770 = vmatprep.subr.mxu0 %v739
    %771 = vmatpush1.msra.mxu0 %v738
    %772 = vmatprep.subr.mxu0 %v741
    %773 = vmatpush1.msra.mxu0 %v740
    %774 = vmatprep.subr.mxu0 %v743
    %775 = vmatpush1.msra.mxu0 %v742
    %776 = vmatprep.subr.mxu0 %v745
    %777 = vmatpush1.msra.mxu0 %v744
    %778 = vmatprep.subr.mxu0 %v747
    %779 = vmatpush1.msra.mxu0 %v746
    %780 = vmatprep.subr.mxu0 %v749
    %781 = vmatpush1.msra.mxu0 %v748
    %782 = vmatprep.subr.mxu0 %v751
    %783 = vmatpush1.msra.mxu0 %v750
    %784 = vmatprep.subr.mxu0 %v753
    %785 = vmatpush1.msra.mxu0 %v752
    %786 = vmatprep.subr.mxu0 %v755
    %787 = vmatpush1.msra.mxu0 %v754
    %788 = vmatprep.subr.mxu0 %v757
    %789 = vmatpush1.msra.mxu0 %v756
    %790 = vmatprep.subr.mxu0 %v759
    %791 = vmatpush1.msra.mxu0 %v758
    %792 = vmatprep.subr.mxu0 0.0
    %793 = vmatpush1.msra.mxu0 0.0
    %794 = vmatprep.subr.mxu0 0.0
    %795 = vmatpush1.msra.mxu0 0.0
    %796 = vmatprep.subr.mxu0 0.0
    %797 = vmatpush1.msra.mxu0 0.0
    %798 = vmatprep.subr.mxu0 0.0
    %799 = vmatpush1.msra.mxu0 0.0
    %800 = vmatprep.subr.mxu0 0.0
    %801 = vmatpush1.msra.mxu0 0.0
    %802 = vmatprep.subr.mxu0 0.0
    %803 = vmatpush1.msra.mxu0 0.0
    %804 = vmatprep.subr.mxu0 0.0
    %805 = vmatpush1.msra.mxu0 0.0
    %806 = vmatprep.subr.mxu0 0.0
    %807 = vmatpush1.msra.mxu0 0.0
    %808 = vmatprep.subr.mxu0 0.0
    %809 = vmatpush1.msra.mxu0 0.0
    %810 = vmatprep.subr.mxu0 0.0
    %811 = vmatpush1.msra.mxu0 0.0
    %812 = vmatprep.subr.mxu0 0.0
    %813 = vmatpush1.msra.mxu0 0.0
    %814 = vmatprep.subr.mxu0 0.0
    %815 = vmatpush1.msra.mxu0 0.0
    %816 = vmatprep.subr.mxu0 0.0
    %817 = vmatpush1.msra.mxu0 0.0
    %818 = vmatprep.subr.mxu0 0.0
    %819 = vmatpush1.msra.mxu0 0.0
    %820 = vmatprep.subr.mxu0 0.0
    %821 = vmatpush1.msra.mxu0 0.0
    %822 = vmatprep.subr.mxu0 0.0
    %823 = vmatpush1.msra.mxu0 0.0
    %824 = vmatprep.mubr.f32.mxu0 0.0
    %825 = vmatmul.mubr.f32.gmra.mrb[0].mxu0 %v664
    %v826 = vpop.f32.mrb[0].mxu0
    %v827 = vadd.f32 0.0, %v826
    %v828 = vpop.f32.mrb[0].mxu0
    %v829 = vadd.f32 0.0, %v828
    %830 = vmatprep.mubr.f32.mxu0 0.0
    %831 = vmatmul.mubr.f32.gmra.mrb[0].mxu0 %v665
    %v832 = vpop.f32.mrb[0].mxu0
    %v833 = vadd.f32 0.0, %v832
    %v834 = vpop.f32.mrb[0].mxu0
    %v835 = vadd.f32 0.0, %v834
    %836 = vmatprep.mubr.f32.mxu0 0.0
    %837 = vmatmul.mubr.f32.gmra.mrb[0].mxu0 %v666
    %v838 = vpop.f32.mrb[0].mxu0
    %v839 = vadd.f32 0.0, %v838
    %v840 = vpop.f32.mrb[0].mxu0
    %v841 = vadd.f32 0.0, %v840
    %842 = vmatprep.mubr.f32.mxu0 0.0
    %843 = vmatmul.mubr.f32.gmra.mrb[0].mxu0 %v667
    %v844 = vpop.f32.mrb[0].mxu0
    %v845 = vadd.f32 0.0, %v844
    %v846 = vpop.f32.mrb[0].mxu0
    %v847 = vadd.f32 0.0, %v846
    %848 = vmatprep.mubr.f32.mxu0 0.0
    %849 = vmatmul.mubr.f32.gmra.mrb[0].mxu0 %v668
    %v850 = vpop.f32.mrb[0].mxu0
    %v851 = vadd.f32 0.0, %v850
    %v852 = vpop.f32.mrb[0].mxu0
    %v853 = vadd.f32 0.0, %v852
    %854 = vmatprep.mubr.f32.mxu0 0.0
    %855 = vmatmul.mubr.f32.gmra.mrb[0].mxu0 %v669
    %v856 = vpop.f32.mrb[0].mxu0
    %v857 = vadd.f32 0.0, %v856
    %v858 = vpop.f32.mrb[0].mxu0
    %v859 = vadd.f32 0.0, %v858
    %860 = vmatprep.mubr.f32.mxu0 0.0
    %861 = vmatmul.mubr.f32.gmra.mrb[0].mxu0 %v670
    %v862 = vpop.f32.mrb[0].mxu0
    %v863 = vadd.f32 0.0, %v862
    %v864 = vpop.f32.mrb[0].mxu0
    %v865 = vadd.f32 0.0, %v864
    %866 = vmatprep.mubr.f32.mxu0 0.0
    %867 = vmatmul.mubr.f32.gmra.mrb[0].mxu0 %v671
    %v868 = vpop.f32.mrb[0].mxu0
    %v869 = vadd.f32 0.0, %v868
    %v870 = vpop.f32.mrb[0].mxu0
    %v871 = vadd.f32 0.0, %v870
    %872 = vmatprep.mubr.f32.mxu0 0.0
    %873 = vmatmul.mubr.f32.gmra.mrb[0].mxu0 %v672
    %v874 = vpop.f32.mrb[0].mxu0
    %v875 = vadd.f32 0.0, %v874
    %v876 = vpop.f32.mrb[0].mxu0
    %v877 = vadd.f32 0.0, %v876
    %878 = vmatprep.mubr.f32.mxu0 0.0
    %879 = vmatmul.mubr.f32.gmra.mrb[0].mxu0 %v673
    %v880 = vpop.f32.mrb[0].mxu0
    %v881 = vadd.f32 0.0, %v880
    %v882 = vpop.f32.mrb[0].mxu0
    %v883 = vadd.f32 0.0, %v882
    %884 = vmatprep.mubr.f32.mxu0 0.0
    %885 = vmatmul.mubr.f32.gmra.mrb[0].mxu0 %v674
    %v886 = vpop.f32.mrb[0].mxu0
    %v887 = vadd.f32 0.0, %v886
    %v888 = vpop.f32.mrb[0].mxu0
    %v889 = vadd.f32 0.0, %v888
    %890 = vmatprep.mubr.f32.mxu0 0.0
    %891 = vmatmul.mubr.f32.gmra.mrb[0].mxu0 %v675
    %v892 = vpop.f32.mrb[0].mxu0
    %v893 = vadd.f32 0.0, %v892
    %v894 = vpop.f32.mrb[0].mxu0
    %v895 = vadd.f32 0.0, %v894
    %896 = vmatprep.mubr.f32.mxu0 0.0
    %897 = vmatmul.mubr.f32.gmra.mrb[0].mxu0 %v676
    %v898 = vpop.f32.mrb[0].mxu0
    %v899 = vadd.f32 0.0, %v898
    %v900 = vpop.f32.mrb[0].mxu0
    %v901 = vadd.f32 0.0, %v900
    %902 = vmatprep.mubr.f32.mxu0 0.0
    %903 = vmatmul.mubr.f32.gmra.mrb[0].mxu0 %v677
    %v904 = vpop.f32.mrb[0].mxu0
    %v905 = vadd.f32 0.0, %v904
    %v906 = vpop.f32.mrb[0].mxu0
    %v907 = vadd.f32 0.0, %v906
    %908 = vmatprep.mubr.f32.mxu0 0.0
    %909 = vmatmul.mubr.f32.gmra.mrb[0].mxu0 %v678
    %v910 = vpop.f32.mrb[0].mxu0
    %v911 = vadd.f32 0.0, %v910
    %v912 = vpop.f32.mrb[0].mxu0
    %v913 = vadd.f32 0.0, %v912
    %914 = vmatprep.mubr.f32.mxu0 0.0
    %915 = vmatmul.mubr.f32.gmra.mrb[0].mxu0 %v679
    %v916 = vpop.f32.mrb[0].mxu0
    %v917 = vadd.f32 0.0, %v916
    %v918 = vpop.f32.mrb[0].mxu0
    %v919 = vadd.f32 0.0, %v918
    %920 = vmatprep.mubr.f32.mxu0 0.0
    %921 = vmatmul.mubr.f32.gmra.mrb[0].mxu0 %v680
    %v922 = vpop.f32.mrb[0].mxu0
    %v923 = vadd.f32 0.0, %v922
    %v924 = vpop.f32.mrb[0].mxu0
    %v925 = vadd.f32 0.0, %v924
    %926 = vmatprep.mubr.f32.mxu0 0.0
    %927 = vmatmul.mubr.f32.gmra.mrb[0].mxu0 %v681
    %v928 = vpop.f32.mrb[0].mxu0
    %v929 = vadd.f32 0.0, %v928
    %v930 = vpop.f32.mrb[0].mxu0
    %v931 = vadd.f32 0.0, %v930
    %932 = vmatprep.mubr.f32.mxu0 0.0
    %933 = vmatmul.mubr.f32.gmra.mrb[0].mxu0 %v682
    %v934 = vpop.f32.mrb[0].mxu0
    %v935 = vadd.f32 0.0, %v934
    %v936 = vpop.f32.mrb[0].mxu0
    %v937 = vadd.f32 0.0, %v936
    %938 = vmatprep.mubr.f32.mxu0 0.0
    %939 = vmatmul.mubr.f32.gmra.mrb[0].mxu0 %v683
    %v940 = vpop.f32.mrb[0].mxu0
    %v941 = vadd.f32 0.0, %v940
    %v942 = vpop.f32.mrb[0].mxu0
    %v943 = vadd.f32 0.0, %v942
    %944 = vmatprep.mubr.f32.mxu0 0.0
    %945 = vmatmul.mubr.f32.gmra.mrb[0].mxu0 %v684
    %v946 = vpop.f32.mrb[0].mxu0
    %v947 = vadd.f32 0.0, %v946
    %v948 = vpop.f32.mrb[0].mxu0
    %v949 = vadd.f32 0.0, %v948
    %950 = vmatprep.mubr.f32.mxu0 0.0
    %951 = vmatmul.mubr.f32.gmra.mrb[0].mxu0 %v685
    %v952 = vpop.f32.mrb[0].mxu0
    %v953 = vadd.f32 0.0, %v952
    %v954 = vpop.f32.mrb[0].mxu0
    %v955 = vadd.f32 0.0, %v954
    %956 = vmatprep.mubr.f32.mxu0 0.0
    %957 = vmatmul.mubr.f32.gmra.mrb[0].mxu0 %v686
    %v958 = vpop.f32.mrb[0].mxu0
    %v959 = vadd.f32 0.0, %v958
    %v960 = vpop.f32.mrb[0].mxu0
    %v961 = vadd.f32 0.0, %v960
    %962 = vmatprep.mubr.f32.mxu0 0.0
    %963 = vmatmul.mubr.f32.gmra.mrb[0].mxu0 %v687
    %v964 = vpop.f32.mrb[0].mxu0
    %v965 = vadd.f32 0.0, %v964
    %v966 = vpop.f32.mrb[0].mxu0
    %v967 = vadd.f32 0.0, %v966
    %968 = vmatprep.mubr.f32.mxu0 0.0
    %969 = vmatmul.mubr.f32.gmra.mrb[0].mxu0 %v688
    %v970 = vpop.f32.mrb[0].mxu0
    %v971 = vadd.f32 0.0, %v970
    %v972 = vpop.f32.mrb[0].mxu0
    %v973 = vadd.f32 0.0, %v972
    %974 = vmatprep.mubr.f32.mxu0 0.0
    %975 = vmatmul.mubr.f32.gmra.mrb[0].mxu0 %v689
    %v976 = vpop.f32.mrb[0].mxu0
    %v977 = vadd.f32 0.0, %v976
    %v978 = vpop.f32.mrb[0].mxu0
    %v979 = vadd.f32 0.0, %v978
    %980 = vmatprep.mubr.f32.mxu0 0.0
    %981 = vmatmul.mubr.f32.gmra.mrb[0].mxu0 %v690
    %v982 = vpop.f32.mrb[0].mxu0
    %v983 = vadd.f32 0.0, %v982
    %v984 = vpop.f32.mrb[0].mxu0
    %v985 = vadd.f32 0.0, %v984
    %986 = vmatprep.mubr.f32.mxu0 0.0
    %987 = vmatmul.mubr.f32.gmra.mrb[0].mxu0 %v691
    %v988 = vpop.f32.mrb[0].mxu0
    %v989 = vadd.f32 0.0, %v988
    %v990 = vpop.f32.mrb[0].mxu0
    %v991 = vadd.f32 0.0, %v990
    %992 = vmatprep.mubr.f32.mxu0 0.0
    %993 = vmatmul.mubr.f32.gmra.mrb[0].mxu0 %v692
    %v994 = vpop.f32.mrb[0].mxu0
    %v995 = vadd.f32 0.0, %v994
    %v996 = vpop.f32.mrb[0].mxu0
    %v997 = vadd.f32 0.0, %v996
    %998 = vmatprep.mubr.f32.mxu0 0.0
    %999 = vmatmul.mubr.f32.gmra.mrb[0].mxu0 %v693
    %v1000 = vpop.f32.mrb[0].mxu0
    %v1001 = vadd.f32 0.0, %v1000
    %v1002 = vpop.f32.mrb[0].mxu0
    %v1003 = vadd.f32 0.0, %v1002
    %1004 = vmatprep.mubr.f32.mxu0 0.0
    %1005 = vmatmul.mubr.f32.gmra.mrb[0].mxu0 %v694
    %v1006 = vpop.f32.mrb[0].mxu0
    %v1007 = vadd.f32 0.0, %v1006
    %v1008 = vpop.f32.mrb[0].mxu0
    %v1009 = vadd.f32 0.0, %v1008
    %1010 = vmatprep.mubr.f32.mxu0 0.0
    %1011 = vmatmul.mubr.f32.gmra.mrb[0].mxu0 %v695
    %v1012 = vpop.f32.mrb[0].mxu0
    %v1013 = vadd.f32 0.0, %v1012
    %v1014 = vpop.f32.mrb[0].mxu0
    %v1015 = vadd.f32 0.0, %v1014
    %1016 = vmatprep.mubr.f32.mxu0 0.0
    %1017 = vmatmul.mubr.f32.gmra.mrb[0].mxu0 %v696
    %v1018 = vpop.f32.mrb[0].mxu0
    %v1019 = vadd.f32 0.0, %v1018
    %v1020 = vpop.f32.mrb[0].mxu0
    %v1021 = vadd.f32 0.0, %v1020
    %1022 = vmatprep.mubr.f32.mxu0 0.0
    %1023 = vmatmul.mubr.f32.gmra.mrb[0].mxu0 %v697
    %v1024 = vpop.f32.mrb[0].mxu0
    %v1025 = vadd.f32 0.0, %v1024
    %v1026 = vpop.f32.mrb[0].mxu0
    %v1027 = vadd.f32 0.0, %v1026
    %1028 = vmatprep.mubr.f32.mxu0 0.0
    %1029 = vmatmul.mubr.f32.gmra.mrb[0].mxu0 %v698
    %v1030 = vpop.f32.mrb[0].mxu0
    %v1031 = vadd.f32 0.0, %v1030
    %v1032 = vpop.f32.mrb[0].mxu0
    %v1033 = vadd.f32 0.0, %v1032
    %1034 = vmatprep.mubr.f32.mxu0 0.0
    %1035 = vmatmul.mubr.f32.gmra.mrb[0].mxu0 %v699
    %v1036 = vpop.f32.mrb[0].mxu0
    %v1037 = vadd.f32 0.0, %v1036
    %v1038 = vpop.f32.mrb[0].mxu0
    %v1039 = vadd.f32 0.0, %v1038
    %1040 = vmatprep.mubr.f32.mxu0 0.0
    %1041 = vmatmul.mubr.f32.gmra.mrb[0].mxu0 %v700
    %v1042 = vpop.f32.mrb[0].mxu0
    %v1043 = vadd.f32 0.0, %v1042
    %v1044 = vpop.f32.mrb[0].mxu0
    %v1045 = vadd.f32 0.0, %v1044
    %1046 = vmatprep.mubr.f32.mxu0 0.0
    %1047 = vmatmul.mubr.f32.gmra.mrb[0].mxu0 %v701
    %v1048 = vpop.f32.mrb[0].mxu0
    %v1049 = vadd.f32 0.0, %v1048
    %v1050 = vpop.f32.mrb[0].mxu0
    %v1051 = vadd.f32 0.0, %v1050
    %1052 = vmatprep.mubr.f32.mxu0 0.0
    %1053 = vmatmul.mubr.f32.gmra.mrb[0].mxu0 %v702
    %v1054 = vpop.f32.mrb[0].mxu0
    %v1055 = vadd.f32 0.0, %v1054
    %v1056 = vpop.f32.mrb[0].mxu0
    %v1057 = vadd.f32 0.0, %v1056
    %1058 = vmatprep.mubr.f32.mxu0 0.0
    %1059 = vmatmul.mubr.f32.gmra.mrb[0].mxu0 %v703
    %v1060 = vpop.f32.mrb[0].mxu0
    %v1061 = vadd.f32 0.0, %v1060
    %v1062 = vpop.f32.mrb[0].mxu0
    %v1063 = vadd.f32 0.0, %v1062
    %1064 = vmatprep.mubr.f32.mxu0 0.0
    %1065 = vmatmul.mubr.f32.gmra.mrb[0].mxu0 %v704
    %v1066 = vpop.f32.mrb[0].mxu0
    %v1067 = vadd.f32 0.0, %v1066
    %v1068 = vpop.f32.mrb[0].mxu0
    %v1069 = vadd.f32 0.0, %v1068
    %1070 = vmatprep.mubr.f32.mxu0 0.0
    %1071 = vmatmul.mubr.f32.gmra.mrb[0].mxu0 %v705
    %v1072 = vpop.f32.mrb[0].mxu0
    %v1073 = vadd.f32 0.0, %v1072
    %v1074 = vpop.f32.mrb[0].mxu0
    %v1075 = vadd.f32 0.0, %v1074
    %1076 = vmatprep.mubr.f32.mxu0 0.0
    %1077 = vmatmul.mubr.f32.gmra.mrb[0].mxu0 %v706
    %v1078 = vpop.f32.mrb[0].mxu0
    %v1079 = vadd.f32 0.0, %v1078
    %v1080 = vpop.f32.mrb[0].mxu0
    %v1081 = vadd.f32 0.0, %v1080
    %1082 = vmatprep.mubr.f32.mxu0 0.0
    %1083 = vmatmul.mubr.f32.gmra.mrb[0].mxu0 %v707
    %v1084 = vpop.f32.mrb[0].mxu0
    %v1085 = vadd.f32 0.0, %v1084
    %v1086 = vpop.f32.mrb[0].mxu0
    %v1087 = vadd.f32 0.0, %v1086
    %1088 = vmatprep.mubr.f32.mxu0 0.0
    %1089 = vmatmul.mubr.f32.gmra.mrb[0].mxu0 %v708
    %v1090 = vpop.f32.mrb[0].mxu0
    %v1091 = vadd.f32 0.0, %v1090
    %v1092 = vpop.f32.mrb[0].mxu0
    %v1093 = vadd.f32 0.0, %v1092
    %1094 = vmatprep.mubr.f32.mxu0 0.0
    %1095 = vmatmul.mubr.f32.gmra.mrb[0].mxu0 %v709
    %v1096 = vpop.f32.mrb[0].mxu0
    %v1097 = vadd.f32 0.0, %v1096
    %v1098 = vpop.f32.mrb[0].mxu0
    %v1099 = vadd.f32 0.0, %v1098
    %1100 = vmatprep.mubr.f32.mxu0 0.0
    %1101 = vmatmul.mubr.f32.gmra.mrb[0].mxu0 %v710
    %v1102 = vpop.f32.mrb[0].mxu0
    %v1103 = vadd.f32 0.0, %v1102
    %v1104 = vpop.f32.mrb[0].mxu0
    %v1105 = vadd.f32 0.0, %v1104
    %1106 = vmatprep.mubr.f32.mxu0 0.0
    %1107 = vmatmul.mubr.f32.gmra.mrb[0].mxu0 %v711
    %v1108 = vpop.f32.mrb[0].mxu0
    %v1109 = vadd.f32 0.0, %v1108
    %v1110 = vpop.f32.mrb[0].mxu0
    %v1111 = vadd.f32 0.0, %v1110
    %1112 = vmatprep.mubr.f32.mxu0 0.0
    %1113 = vmatmul.mubr.f32.gmra.mrb[0].mxu0 %v712
    %v1114 = vpop.f32.mrb[0].mxu0
    %v1115 = vadd.f32 0.0, %v1114
    %v1116 = vpop.f32.mrb[0].mxu0
    %v1117 = vadd.f32 0.0, %v1116
    %1118 = vmatprep.mubr.f32.mxu0 0.0
    %1119 = vmatmul.mubr.f32.gmra.mrb[0].mxu0 %v713
    %v1120 = vpop.f32.mrb[0].mxu0
    %v1121 = vadd.f32 0.0, %v1120
    %v1122 = vpop.f32.mrb[0].mxu0
    %v1123 = vadd.f32 0.0, %v1122
    %1124 = vmatprep.mubr.f32.mxu0 0.0
    %1125 = vmatmul.mubr.f32.gmra.mrb[0].mxu0 %v714
    %v1126 = vpop.f32.mrb[0].mxu0
    %v1127 = vadd.f32 0.0, %v1126
    %v1128 = vpop.f32.mrb[0].mxu0
    %v1129 = vadd.f32 0.0, %v1128
    %1130 = vmatprep.mubr.f32.mxu0 0.0
    %1131 = vmatmul.mubr.f32.gmra.mrb[0].mxu0 %v715
    %v1132 = vpop.f32.mrb[0].mxu0
    %v1133 = vadd.f32 0.0, %v1132
    %v1134 = vpop.f32.mrb[0].mxu0
    %v1135 = vadd.f32 0.0, %v1134
    %1136 = vmatprep.mubr.f32.mxu0 0.0
    %1137 = vmatmul.mubr.f32.gmra.mrb[0].mxu0 %v716
    %v1138 = vpop.f32.mrb[0].mxu0
    %v1139 = vadd.f32 0.0, %v1138
    %v1140 = vpop.f32.mrb[0].mxu0
    %v1141 = vadd.f32 0.0, %v1140
    %1142 = vmatprep.mubr.f32.mxu0 0.0
    %1143 = vmatmul.mubr.f32.gmra.mrb[0].mxu0 %v717
    %v1144 = vpop.f32.mrb[0].mxu0
    %v1145 = vadd.f32 0.0, %v1144
    %v1146 = vpop.f32.mrb[0].mxu0
    %v1147 = vadd.f32 0.0, %v1146
    %1148 = vmatprep.mubr.f32.mxu0 0.0
    %1149 = vmatmul.mubr.f32.gmra.mrb[0].mxu0 %v718
    %v1150 = vpop.f32.mrb[0].mxu0
    %v1151 = vadd.f32 0.0, %v1150
    %v1152 = vpop.f32.mrb[0].mxu0
    %v1153 = vadd.f32 0.0, %v1152
    %1154 = vmatprep.mubr.f32.mxu0 0.0
    %1155 = vmatmul.mubr.f32.gmra.mrb[0].mxu0 %v719
    %v1156 = vpop.f32.mrb[0].mxu0
    %v1157 = vadd.f32 0.0, %v1156
    %v1158 = vpop.f32.mrb[0].mxu0
    %v1159 = vadd.f32 0.0, %v1158
    %1160 = vmatprep.mubr.f32.mxu0 0.0
    %1161 = vmatmul.mubr.f32.gmra.mrb[0].mxu0 %v720
    %v1162 = vpop.f32.mrb[0].mxu0
    %v1163 = vadd.f32 0.0, %v1162
    %v1164 = vpop.f32.mrb[0].mxu0
    %v1165 = vadd.f32 0.0, %v1164
    %1166 = vmatprep.mubr.f32.mxu0 0.0
    %1167 = vmatmul.mubr.f32.gmra.mrb[0].mxu0 %v721
    %v1168 = vpop.f32.mrb[0].mxu0
    %v1169 = vadd.f32 0.0, %v1168
    %v1170 = vpop.f32.mrb[0].mxu0
    %v1171 = vadd.f32 0.0, %v1170
    %1172 = vmatprep.mubr.f32.mxu0 0.0
    %1173 = vmatmul.mubr.f32.gmra.mrb[0].mxu0 %v722
    %v1174 = vpop.f32.mrb[0].mxu0
    %v1175 = vadd.f32 0.0, %v1174
    %v1176 = vpop.f32.mrb[0].mxu0
    %v1177 = vadd.f32 0.0, %v1176
    %1178 = vmatprep.mubr.f32.mxu0 0.0
    %1179 = vmatmul.mubr.f32.gmra.mrb[0].mxu0 %v723
    %v1180 = vpop.f32.mrb[0].mxu0
    %v1181 = vadd.f32 0.0, %v1180
    %v1182 = vpop.f32.mrb[0].mxu0
    %v1183 = vadd.f32 0.0, %v1182
    %1184 = vmatprep.mubr.f32.mxu0 0.0
    %1185 = vmatmul.mubr.f32.gmra.mrb[0].mxu0 %v724
    %v1186 = vpop.f32.mrb[0].mxu0
    %v1187 = vadd.f32 0.0, %v1186
    %v1188 = vpop.f32.mrb[0].mxu0
    %v1189 = vadd.f32 0.0, %v1188
    %1190 = vmatprep.mubr.f32.mxu0 0.0
    %1191 = vmatmul.mubr.f32.gmra.mrb[0].mxu0 %v725
    %v1192 = vpop.f32.mrb[0].mxu0
    %v1193 = vadd.f32 0.0, %v1192
    %v1194 = vpop.f32.mrb[0].mxu0
    %v1195 = vadd.f32 0.0, %v1194
    %1196 = vmatprep.mubr.f32.mxu0 0.0
    %1197 = vmatmul.mubr.f32.gmra.mrb[0].mxu0 %v726
    %v1198 = vpop.f32.mrb[0].mxu0
    %v1199 = vadd.f32 0.0, %v1198
    %v1200 = vpop.f32.mrb[0].mxu0
    %v1201 = vadd.f32 0.0, %v1200
    %1202 = vmatprep.mubr.f32.mxu0 0.0
    %1203 = vmatmul.mubr.f32.gmra.mrb[0].mxu0 %v727
    %v1204 = vpop.f32.mrb[0].mxu0
    %v1205 = vadd.f32 0.0, %v1204
    %v1206 = vpop.f32.mrb[0].mxu0
    %v1207 = vadd.f32 0.0, %v1206
    %1208 = vdwg.mxu0
    %v1209 = vld [vmem:[%s6] sm:$0x1]
    %v1211 = vlaneseq
    %v1212 = vshrl.u32 %v1211, 7
    %v1213 = vsub.s32 0, %v1212
    %v1214 = vrot.slane %v1209, %v1213
    %v1216 = vadd.f32 %v282, %v1214
    %v1217 = vadd.f32 %v288, %v1214
    %v1218 = vadd.f32 %v294, %v1214
    %v1219 = vadd.f32 %v300, %v1214
    %v1220 = vadd.f32 %v306, %v1214
    %v1221 = vadd.f32 %v312, %v1214
    %v1222 = vadd.f32 %v318, %v1214
    %v1223 = vadd.f32 %v324, %v1214
    %v1224 = vadd.f32 %v330, %v1214
    %v1225 = vadd.f32 %v336, %v1214
    %v1226 = vadd.f32 %v342, %v1214
    %v1227 = vadd.f32 %v348, %v1214
    %v1228 = vadd.f32 %v354, %v1214
    %v1229 = vadd.f32 %v360, %v1214
    %v1230 = vadd.f32 %v366, %v1214
    %v1231 = vadd.f32 %v372, %v1214
    %v1232 = vadd.f32 %v378, %v1214
    %v1233 = vadd.f32 %v384, %v1214
    %v1234 = vadd.f32 %v390, %v1214
    %v1235 = vadd.f32 %v396, %v1214
    %v1236 = vadd.f32 %v402, %v1214
    %v1237 = vadd.f32 %v408, %v1214
    %v1238 = vadd.f32 %v414, %v1214
    %v1239 = vadd.f32 %v420, %v1214
    %v1240 = vadd.f32 %v426, %v1214
    %v1241 = vadd.f32 %v432, %v1214
    %v1242 = vadd.f32 %v438, %v1214
    %v1243 = vadd.f32 %v444, %v1214
    %v1244 = vadd.f32 %v450, %v1214
    %v1245 = vadd.f32 %v456, %v1214
    %v1246 = vadd.f32 %v462, %v1214
    %v1247 = vadd.f32 %v468, %v1214
    %v1248 = vadd.f32 %v474, %v1214
    %v1249 = vadd.f32 %v480, %v1214
    %v1250 = vadd.f32 %v486, %v1214
    %v1251 = vadd.f32 %v492, %v1214
    %v1252 = vadd.f32 %v498, %v1214
    %v1253 = vadd.f32 %v504, %v1214
    %v1254 = vadd.f32 %v510, %v1214
    %v1255 = vadd.f32 %v516, %v1214
    %v1256 = vadd.f32 %v522, %v1214
    %v1257 = vadd.f32 %v528, %v1214
    %v1258 = vadd.f32 %v534, %v1214
    %v1259 = vadd.f32 %v540, %v1214
    %v1260 = vadd.f32 %v546, %v1214
    %v1261 = vadd.f32 %v552, %v1214
    %v1262 = vadd.f32 %v558, %v1214
    %v1263 = vadd.f32 %v564, %v1214
    %v1264 = vadd.f32 %v570, %v1214
    %v1265 = vadd.f32 %v576, %v1214
    %v1266 = vadd.f32 %v582, %v1214
    %v1267 = vadd.f32 %v588, %v1214
    %v1268 = vadd.f32 %v594, %v1214
    %v1269 = vadd.f32 %v600, %v1214
    %v1270 = vadd.f32 %v606, %v1214
    %v1271 = vadd.f32 %v612, %v1214
    %v1272 = vadd.f32 %v618, %v1214
    %v1273 = vadd.f32 %v624, %v1214
    %v1274 = vadd.f32 %v630, %v1214
    %v1275 = vadd.f32 %v636, %v1214
    %v1276 = vadd.f32 %v642, %v1214
    %v1277 = vadd.f32 %v648, %v1214
    %v1278 = vadd.f32 %v654, %v1214
    %v1279 = vadd.f32 %v660, %v1214
    %v1280 = vld [vmem:[%s7] sm:$0x1]
    %v1282 = vlaneseq
    %v1283 = vshrl.u32 %v1282, 7
    %v1284 = vsub.s32 0, %v1283
    %v1285 = vrot.slane %v1280, %v1284
    %v1287 = vadd.f32 %v827, %v1285
    %v1288 = vadd.f32 %v833, %v1285
    %v1289 = vadd.f32 %v839, %v1285
    %v1290 = vadd.f32 %v845, %v1285
    %v1291 = vadd.f32 %v851, %v1285
    %v1292 = vadd.f32 %v857, %v1285
    %v1293 = vadd.f32 %v863, %v1285
    %v1294 = vadd.f32 %v869, %v1285
    %v1295 = vadd.f32 %v875, %v1285
    %v1296 = vadd.f32 %v881, %v1285
    %v1297 = vadd.f32 %v887, %v1285
    %v1298 = vadd.f32 %v893, %v1285
    %v1299 = vadd.f32 %v899, %v1285
    %v1300 = vadd.f32 %v905, %v1285
    %v1301 = vadd.f32 %v911, %v1285
    %v1302 = vadd.f32 %v917, %v1285
    %v1303 = vadd.f32 %v923, %v1285
    %v1304 = vadd.f32 %v929, %v1285
    %v1305 = vadd.f32 %v935, %v1285
    %v1306 = vadd.f32 %v941, %v1285
    %v1307 = vadd.f32 %v947, %v1285
    %v1308 = vadd.f32 %v953, %v1285
    %v1309 = vadd.f32 %v959, %v1285
    %v1310 = vadd.f32 %v965, %v1285
    %v1311 = vadd.f32 %v971, %v1285
    %v1312 = vadd.f32 %v977, %v1285
    %v1313 = vadd.f32 %v983, %v1285
    %v1314 = vadd.f32 %v989, %v1285
    %v1315 = vadd.f32 %v995, %v1285
    %v1316 = vadd.f32 %v1001, %v1285
    %v1317 = vadd.f32 %v1007, %v1285
    %v1318 = vadd.f32 %v1013, %v1285
    %v1319 = vadd.f32 %v1019, %v1285
    %v1320 = vadd.f32 %v1025, %v1285
    %v1321 = vadd.f32 %v1031, %v1285
    %v1322 = vadd.f32 %v1037, %v1285
    %v1323 = vadd.f32 %v1043, %v1285
    %v1324 = vadd.f32 %v1049, %v1285
    %v1325 = vadd.f32 %v1055, %v1285
    %v1326 = vadd.f32 %v1061, %v1285
    %v1327 = vadd.f32 %v1067, %v1285
    %v1328 = vadd.f32 %v1073, %v1285
    %v1329 = vadd.f32 %v1079, %v1285
    %v1330 = vadd.f32 %v1085, %v1285
    %v1331 = vadd.f32 %v1091, %v1285
    %v1332 = vadd.f32 %v1097, %v1285
    %v1333 = vadd.f32 %v1103, %v1285
    %v1334 = vadd.f32 %v1109, %v1285
    %v1335 = vadd.f32 %v1115, %v1285
    %v1336 = vadd.f32 %v1121, %v1285
    %v1337 = vadd.f32 %v1127, %v1285
    %v1338 = vadd.f32 %v1133, %v1285
    %v1339 = vadd.f32 %v1139, %v1285
    %v1340 = vadd.f32 %v1145, %v1285
    %v1341 = vadd.f32 %v1151, %v1285
    %v1342 = vadd.f32 %v1157, %v1285
    %v1343 = vadd.f32 %v1163, %v1285
    %v1344 = vadd.f32 %v1169, %v1285
    %v1345 = vadd.f32 %v1175, %v1285
    %v1346 = vadd.f32 %v1181, %v1285
    %v1347 = vadd.f32 %v1187, %v1285
    %v1348 = vadd.f32 %v1193, %v1285
    %v1349 = vadd.f32 %v1199, %v1285
    %v1350 = vadd.f32 %v1205, %v1285
    %v1351 = vld [vmem:[#allocation2] sm:$0xff]
    %v1352 = vld [vmem:[#allocation2 + $0x8] sm:$0xff]
    %v1353 = vld [vmem:[#allocation2 + $0x10] sm:$0xff]
    %v1354 = vld [vmem:[#allocation2 + $0x18] sm:$0xff]
    %v1355 = vld [vmem:[#allocation2 + $0x20] sm:$0xff]
    %v1356 = vld [vmem:[#allocation2 + $0x28] sm:$0xff]
    %v1357 = vld [vmem:[#allocation2 + $0x30] sm:$0xff]
    %v1358 = vld [vmem:[#allocation2 + $0x38] sm:$0xff]
    %v1359 = vld [vmem:[#allocation2 + $0x40] sm:$0xff]
    %v1360 = vld [vmem:[#allocation2 + $0x48] sm:$0xff]
    %v1361 = vld [vmem:[#allocation2 + $0x50] sm:$0xff]
    %v1362 = vld [vmem:[#allocation2 + $0x58] sm:$0xff]
    %v1363 = vld [vmem:[#allocation2 + $0x60] sm:$0xff]
    %v1364 = vld [vmem:[#allocation2 + $0x68] sm:$0xff]
    %v1365 = vld [vmem:[#allocation2 + $0x70] sm:$0xff]
    %v1366 = vld [vmem:[#allocation2 + $0x78] sm:$0xff]
    %v1367 = vld [vmem:[#allocation2 + $0x80] sm:$0xff]
    %v1368 = vld [vmem:[#allocation2 + $0x88] sm:$0xff]
    %v1369 = vld [vmem:[#allocation2 + $0x90] sm:$0xff]
    %v1370 = vld [vmem:[#allocation2 + $0x98] sm:$0xff]
    %v1371 = vld [vmem:[#allocation2 + $0xa0] sm:$0xff]
    %v1372 = vld [vmem:[#allocation2 + $0xa8] sm:$0xff]
    %v1373 = vld [vmem:[#allocation2 + $0xb0] sm:$0xff]
    %v1374 = vld [vmem:[#allocation2 + $0xb8] sm:$0xff]
    %v1375 = vld [vmem:[#allocation2 + $0xc0] sm:$0xff]
    %v1376 = vld [vmem:[#allocation2 + $0xc8] sm:$0xff]
    %v1377 = vld [vmem:[#allocation2 + $0xd0] sm:$0xff]
    %v1378 = vld [vmem:[#allocation2 + $0xd8] sm:$0xff]
    %v1379 = vld [vmem:[#allocation2 + $0xe0] sm:$0xff]
    %v1380 = vld [vmem:[#allocation2 + $0xe8] sm:$0xff]
    %v1381 = vld [vmem:[#allocation2 + $0xf0] sm:$0xff]
    %v1382 = vld [vmem:[#allocation2 + $0xf8] sm:$0xff]
    %v1383 = vld [vmem:[#allocation2 + $0x100] sm:$0xff]
    %v1384 = vld [vmem:[#allocation2 + $0x108] sm:$0xff]
    %v1385 = vld [vmem:[#allocation2 + $0x110] sm:$0xff]
    %v1386 = vld [vmem:[#allocation2 + $0x118] sm:$0xff]
    %v1387 = vld [vmem:[#allocation2 + $0x120] sm:$0xff]
    %v1388 = vld [vmem:[#allocation2 + $0x128] sm:$0xff]
    %v1389 = vld [vmem:[#allocation2 + $0x130] sm:$0xff]
    %v1390 = vld [vmem:[#allocation2 + $0x138] sm:$0xff]
    %v1391 = vld [vmem:[#allocation2 + $0x140] sm:$0xff]
    %v1392 = vld [vmem:[#allocation2 + $0x148] sm:$0xff]
    %v1393 = vld [vmem:[#allocation2 + $0x150] sm:$0xff]
    %v1394 = vld [vmem:[#allocation2 + $0x158] sm:$0xff]
    %v1395 = vld [vmem:[#allocation2 + $0x160] sm:$0xff]
    %v1396 = vld [vmem:[#allocation2 + $0x168] sm:$0xff]
    %v1397 = vld [vmem:[#allocation2 + $0x170] sm:$0xff]
    %v1398 = vld [vmem:[#allocation2 + $0x178] sm:$0xff]
    %v1399 = vld [vmem:[#allocation2 + $0x180] sm:$0xff]
    %v1400 = vld [vmem:[#allocation2 + $0x188] sm:$0xff]
    %v1401 = vld [vmem:[#allocation2 + $0x190] sm:$0xff]
    %v1402 = vld [vmem:[#allocation2 + $0x198] sm:$0xff]
    %v1403 = vld [vmem:[#allocation2 + $0x1a0] sm:$0xff]
    %v1404 = vld [vmem:[#allocation2 + $0x1a8] sm:$0xff]
    %v1405 = vld [vmem:[#allocation2 + $0x1b0] sm:$0xff]
    %v1406 = vld [vmem:[#allocation2 + $0x1b8] sm:$0xff]
    %v1407 = vld [vmem:[#allocation2 + $0x1c0] sm:$0xff]
    %v1408 = vld [vmem:[#allocation2 + $0x1c8] sm:$0xff]
    %v1409 = vld [vmem:[#allocation2 + $0x1d0] sm:$0xff]
    %v1410 = vld [vmem:[#allocation2 + $0x1d8] sm:$0xff]
    %v1411 = vld [vmem:[#allocation2 + $0x1e0] sm:$0xff]
    %v1412 = vld [vmem:[#allocation2 + $0x1e8] sm:$0xff]
    %v1413 = vld [vmem:[#allocation2 + $0x1f0] sm:$0xff]
    %v1414 = vld [vmem:[#allocation2 + $0x1f8] sm:$0xff]
    %v1415 = vld [vmem:[#allocation11] sm:$0xff]
    %v1416 = vld [vmem:[#allocation11 + $0x8] sm:$0xff]
    %v1417 = vld [vmem:[#allocation11 + $0x10] sm:$0xff]
    %v1418 = vld [vmem:[#allocation11 + $0x18] sm:$0xff]
    %v1419 = vld [vmem:[#allocation11 + $0x20] sm:$0xff]
    %v1420 = vld [vmem:[#allocation11 + $0x28] sm:$0xff]
    %v1421 = vld [vmem:[#allocation11 + $0x30] sm:$0xff]
    %v1422 = vld [vmem:[#allocation11 + $0x38] sm:$0xff]
    %v1423 = vld [vmem:[#allocation11 + $0x40] sm:$0xff]
    %v1424 = vld [vmem:[#allocation11 + $0x48] sm:$0xff]
    %v1425 = vld [vmem:[#allocation11 + $0x50] sm:$0xff]
    %v1426 = vld [vmem:[#allocation11 + $0x58] sm:$0xff]
    %v1427 = vld [vmem:[#allocation11 + $0x60] sm:$0xff]
    %v1428 = vld [vmem:[#allocation11 + $0x68] sm:$0xff]
    %v1429 = vld [vmem:[#allocation11 + $0x70] sm:$0xff]
    %v1430 = vld [vmem:[#allocation11 + $0x78] sm:$0xff]
    %1431 = vmatprep.subr.mxu0 0.0
    %1432 = vmatpush1.msra.mxu0 %v1415
    %1433 = vmatprep.subr.mxu0 0.0
    %1434 = vmatpush1.msra.mxu0 %v1416
    %1435 = vmatprep.subr.mxu0 0.0
    %1436 = vmatpush1.msra.mxu0 %v1417
    %1437 = vmatprep.subr.mxu0 0.0
    %1438 = vmatpush1.msra.mxu0 %v1418
    %1439 = vmatprep.subr.mxu0 0.0
    %1440 = vmatpush1.msra.mxu0 %v1419
    %1441 = vmatprep.subr.mxu0 0.0
    %1442 = vmatpush1.msra.mxu0 %v1420
    %1443 = vmatprep.subr.mxu0 0.0
    %1444 = vmatpush1.msra.mxu0 %v1421
    %1445 = vmatprep.subr.mxu0 0.0
    %1446 = vmatpush1.msra.mxu0 %v1422
    %1447 = vmatprep.subr.mxu0 0.0
    %1448 = vmatpush1.msra.mxu0 %v1423
    %1449 = vmatprep.subr.mxu0 0.0
    %1450 = vmatpush1.msra.mxu0 %v1424
    %1451 = vmatprep.subr.mxu0 0.0
    %1452 = vmatpush1.msra.mxu0 %v1425
    %1453 = vmatprep.subr.mxu0 0.0
    %1454 = vmatpush1.msra.mxu0 %v1426
    %1455 = vmatprep.subr.mxu0 0.0
    %1456 = vmatpush1.msra.mxu0 %v1427
    %1457 = vmatprep.subr.mxu0 0.0
    %1458 = vmatpush1.msra.mxu0 %v1428
    %1459 = vmatprep.subr.mxu0 0.0
    %1460 = vmatpush1.msra.mxu0 %v1429
    %1461 = vmatprep.subr.mxu0 0.0
    %1462 = vmatpush1.msra.mxu0 %v1430
    %1463 = vmatprep.subr.mxu0 0.0
    %1464 = vmatpush1.msra.mxu0 0.0
    %1465 = vmatprep.subr.mxu0 0.0
    %1466 = vmatpush1.msra.mxu0 0.0
    %1467 = vmatprep.subr.mxu0 0.0
    %1468 = vmatpush1.msra.mxu0 0.0
    %1469 = vmatprep.subr.mxu0 0.0
    %1470 = vmatpush1.msra.mxu0 0.0
    %1471 = vmatprep.subr.mxu0 0.0
    %1472 = vmatpush1.msra.mxu0 0.0
    %1473 = vmatprep.subr.mxu0 0.0
    %1474 = vmatpush1.msra.mxu0 0.0
    %1475 = vmatprep.subr.mxu0 0.0
    %1476 = vmatpush1.msra.mxu0 0.0
    %1477 = vmatprep.subr.mxu0 0.0
    %1478 = vmatpush1.msra.mxu0 0.0
    %1479 = vmatprep.subr.mxu0 0.0
    %1480 = vmatpush1.msra.mxu0 0.0
    %1481 = vmatprep.subr.mxu0 0.0
    %1482 = vmatpush1.msra.mxu0 0.0
    %1483 = vmatprep.subr.mxu0 0.0
    %1484 = vmatpush1.msra.mxu0 0.0
    %1485 = vmatprep.subr.mxu0 0.0
    %1486 = vmatpush1.msra.mxu0 0.0
    %1487 = vmatprep.subr.mxu0 0.0
    %1488 = vmatpush1.msra.mxu0 0.0
    %1489 = vmatprep.subr.mxu0 0.0
    %1490 = vmatpush1.msra.mxu0 0.0
    %1491 = vmatprep.subr.mxu0 0.0
    %1492 = vmatpush1.msra.mxu0 0.0
    %1493 = vmatprep.subr.mxu0 0.0
    %1494 = vmatpush1.msra.mxu0 0.0
    %1495 = vmatprep.mubr.f32.mxu0 0.0
    %1496 = vmatmul.mubr.f32.gmra.mrb[0].mxu0 %v1351
    %v1497 = vpop.f32.mrb[0].mxu0
    %v1498 = vadd.f32 %v284, %v1497
    %v1499 = vpop.f32.mrb[0].mxu0
    %1500 = vmatprep.mubr.f32.mxu0 0.0
    %1501 = vmatmul.mubr.f32.gmra.mrb[0].mxu0 %v1352
    %v1502 = vpop.f32.mrb[0].mxu0
    %v1503 = vadd.f32 %v290, %v1502
    %v1504 = vpop.f32.mrb[0].mxu0
    %1505 = vmatprep.mubr.f32.mxu0 0.0
    %1506 = vmatmul.mubr.f32.gmra.mrb[0].mxu0 %v1353
    %v1507 = vpop.f32.mrb[0].mxu0
    %v1508 = vadd.f32 %v296, %v1507
    %v1509 = vpop.f32.mrb[0].mxu0
    %1510 = vmatprep.mubr.f32.mxu0 0.0
    %1511 = vmatmul.mubr.f32.gmra.mrb[0].mxu0 %v1354
    %v1512 = vpop.f32.mrb[0].mxu0
    %v1513 = vadd.f32 %v302, %v1512
    %v1514 = vpop.f32.mrb[0].mxu0
    %1515 = vmatprep.mubr.f32.mxu0 0.0
    %1516 = vmatmul.mubr.f32.gmra.mrb[0].mxu0 %v1355
    %v1517 = vpop.f32.mrb[0].mxu0
    %v1518 = vadd.f32 %v308, %v1517
    %v1519 = vpop.f32.mrb[0].mxu0
    %1520 = vmatprep.mubr.f32.mxu0 0.0
    %1521 = vmatmul.mubr.f32.gmra.mrb[0].mxu0 %v1356
    %v1522 = vpop.f32.mrb[0].mxu0
    %v1523 = vadd.f32 %v314, %v1522
    %v1524 = vpop.f32.mrb[0].mxu0
    %1525 = vmatprep.mubr.f32.mxu0 0.0
    %1526 = vmatmul.mubr.f32.gmra.mrb[0].mxu0 %v1357
    %v1527 = vpop.f32.mrb[0].mxu0
    %v1528 = vadd.f32 %v320, %v1527
    %v1529 = vpop.f32.mrb[0].mxu0
    %1530 = vmatprep.mubr.f32.mxu0 0.0
    %1531 = vmatmul.mubr.f32.gmra.mrb[0].mxu0 %v1358
    %v1532 = vpop.f32.mrb[0].mxu0
    %v1533 = vadd.f32 %v326, %v1532
    %v1534 = vpop.f32.mrb[0].mxu0
    %1535 = vmatprep.mubr.f32.mxu0 0.0
    %1536 = vmatmul.mubr.f32.gmra.mrb[0].mxu0 %v1359
    %v1537 = vpop.f32.mrb[0].mxu0
    %v1538 = vadd.f32 %v332, %v1537
    %v1539 = vpop.f32.mrb[0].mxu0
    %1540 = vmatprep.mubr.f32.mxu0 0.0
    %1541 = vmatmul.mubr.f32.gmra.mrb[0].mxu0 %v1360
    %v1542 = vpop.f32.mrb[0].mxu0
    %v1543 = vadd.f32 %v338, %v1542
    %v1544 = vpop.f32.mrb[0].mxu0
    %1545 = vmatprep.mubr.f32.mxu0 0.0
    %1546 = vmatmul.mubr.f32.gmra.mrb[0].mxu0 %v1361
    %v1547 = vpop.f32.mrb[0].mxu0
    %v1548 = vadd.f32 %v344, %v1547
    %v1549 = vpop.f32.mrb[0].mxu0
    %1550 = vmatprep.mubr.f32.mxu0 0.0
    %1551 = vmatmul.mubr.f32.gmra.mrb[0].mxu0 %v1362
    %v1552 = vpop.f32.mrb[0].mxu0
    %v1553 = vadd.f32 %v350, %v1552
    %v1554 = vpop.f32.mrb[0].mxu0
    %1555 = vmatprep.mubr.f32.mxu0 0.0
    %1556 = vmatmul.mubr.f32.gmra.mrb[0].mxu0 %v1363
    %v1557 = vpop.f32.mrb[0].mxu0
    %v1558 = vadd.f32 %v356, %v1557
    %v1559 = vpop.f32.mrb[0].mxu0
    %1560 = vmatprep.mubr.f32.mxu0 0.0
    %1561 = vmatmul.mubr.f32.gmra.mrb[0].mxu0 %v1364
    %v1562 = vpop.f32.mrb[0].mxu0
    %v1563 = vadd.f32 %v362, %v1562
    %v1564 = vpop.f32.mrb[0].mxu0
    %1565 = vmatprep.mubr.f32.mxu0 0.0
    %1566 = vmatmul.mubr.f32.gmra.mrb[0].mxu0 %v1365
    %v1567 = vpop.f32.mrb[0].mxu0
    %v1568 = vadd.f32 %v368, %v1567
    %v1569 = vpop.f32.mrb[0].mxu0
    %1570 = vmatprep.mubr.f32.mxu0 0.0
    %1571 = vmatmul.mubr.f32.gmra.mrb[0].mxu0 %v1366
    %v1572 = vpop.f32.mrb[0].mxu0
    %v1573 = vadd.f32 %v374, %v1572
    %v1574 = vpop.f32.mrb[0].mxu0
    %1575 = vmatprep.mubr.f32.mxu0 0.0
    %1576 = vmatmul.mubr.f32.gmra.mrb[0].mxu0 %v1367
    %v1577 = vpop.f32.mrb[0].mxu0
    %v1578 = vadd.f32 %v380, %v1577
    %v1579 = vpop.f32.mrb[0].mxu0
    %1580 = vmatprep.mubr.f32.mxu0 0.0
    %1581 = vmatmul.mubr.f32.gmra.mrb[0].mxu0 %v1368
    %v1582 = vpop.f32.mrb[0].mxu0
    %v1583 = vadd.f32 %v386, %v1582
    %v1584 = vpop.f32.mrb[0].mxu0
    %1585 = vmatprep.mubr.f32.mxu0 0.0
    %1586 = vmatmul.mubr.f32.gmra.mrb[0].mxu0 %v1369
    %v1587 = vpop.f32.mrb[0].mxu0
    %v1588 = vadd.f32 %v392, %v1587
    %v1589 = vpop.f32.mrb[0].mxu0
    %1590 = vmatprep.mubr.f32.mxu0 0.0
    %1591 = vmatmul.mubr.f32.gmra.mrb[0].mxu0 %v1370
    %v1592 = vpop.f32.mrb[0].mxu0
    %v1593 = vadd.f32 %v398, %v1592
    %v1594 = vpop.f32.mrb[0].mxu0
    %1595 = vmatprep.mubr.f32.mxu0 0.0
    %1596 = vmatmul.mubr.f32.gmra.mrb[0].mxu0 %v1371
    %v1597 = vpop.f32.mrb[0].mxu0
    %v1598 = vadd.f32 %v404, %v1597
    %v1599 = vpop.f32.mrb[0].mxu0
    %1600 = vmatprep.mubr.f32.mxu0 0.0
    %1601 = vmatmul.mubr.f32.gmra.mrb[0].mxu0 %v1372
    %v1602 = vpop.f32.mrb[0].mxu0
    %v1603 = vadd.f32 %v410, %v1602
    %v1604 = vpop.f32.mrb[0].mxu0
    %1605 = vmatprep.mubr.f32.mxu0 0.0
    %1606 = vmatmul.mubr.f32.gmra.mrb[0].mxu0 %v1373
    %v1607 = vpop.f32.mrb[0].mxu0
    %v1608 = vadd.f32 %v416, %v1607
    %v1609 = vpop.f32.mrb[0].mxu0
    %1610 = vmatprep.mubr.f32.mxu0 0.0
    %1611 = vmatmul.mubr.f32.gmra.mrb[0].mxu0 %v1374
    %v1612 = vpop.f32.mrb[0].mxu0
    %v1613 = vadd.f32 %v422, %v1612
    %v1614 = vpop.f32.mrb[0].mxu0
    %1615 = vmatprep.mubr.f32.mxu0 0.0
    %1616 = vmatmul.mubr.f32.gmra.mrb[0].mxu0 %v1375
    %v1617 = vpop.f32.mrb[0].mxu0
    %v1618 = vadd.f32 %v428, %v1617
    %v1619 = vpop.f32.mrb[0].mxu0
    %1620 = vmatprep.mubr.f32.mxu0 0.0
    %1621 = vmatmul.mubr.f32.gmra.mrb[0].mxu0 %v1376
    %v1622 = vpop.f32.mrb[0].mxu0
    %v1623 = vadd.f32 %v434, %v1622
    %v1624 = vpop.f32.mrb[0].mxu0
    %1625 = vmatprep.mubr.f32.mxu0 0.0
    %1626 = vmatmul.mubr.f32.gmra.mrb[0].mxu0 %v1377
    %v1627 = vpop.f32.mrb[0].mxu0
    %v1628 = vadd.f32 %v440, %v1627
    %v1629 = vpop.f32.mrb[0].mxu0
    %1630 = vmatprep.mubr.f32.mxu0 0.0
    %1631 = vmatmul.mubr.f32.gmra.mrb[0].mxu0 %v1378
    %v1632 = vpop.f32.mrb[0].mxu0
    %v1633 = vadd.f32 %v446, %v1632
    %v1634 = vpop.f32.mrb[0].mxu0
    %1635 = vmatprep.mubr.f32.mxu0 0.0
    %1636 = vmatmul.mubr.f32.gmra.mrb[0].mxu0 %v1379
    %v1637 = vpop.f32.mrb[0].mxu0
    %v1638 = vadd.f32 %v452, %v1637
    %v1639 = vpop.f32.mrb[0].mxu0
    %1640 = vmatprep.mubr.f32.mxu0 0.0
    %1641 = vmatmul.mubr.f32.gmra.mrb[0].mxu0 %v1380
    %v1642 = vpop.f32.mrb[0].mxu0
    %v1643 = vadd.f32 %v458, %v1642
    %v1644 = vpop.f32.mrb[0].mxu0
    %1645 = vmatprep.mubr.f32.mxu0 0.0
    %1646 = vmatmul.mubr.f32.gmra.mrb[0].mxu0 %v1381
    %v1647 = vpop.f32.mrb[0].mxu0
    %v1648 = vadd.f32 %v464, %v1647
    %v1649 = vpop.f32.mrb[0].mxu0
    %1650 = vmatprep.mubr.f32.mxu0 0.0
    %1651 = vmatmul.mubr.f32.gmra.mrb[0].mxu0 %v1382
    %v1652 = vpop.f32.mrb[0].mxu0
    %v1653 = vadd.f32 %v470, %v1652
    %v1654 = vpop.f32.mrb[0].mxu0
    %1655 = vmatprep.mubr.f32.mxu0 0.0
    %1656 = vmatmul.mubr.f32.gmra.mrb[0].mxu0 %v1383
    %v1657 = vpop.f32.mrb[0].mxu0
    %v1658 = vadd.f32 %v476, %v1657
    %v1659 = vpop.f32.mrb[0].mxu0
    %1660 = vmatprep.mubr.f32.mxu0 0.0
    %1661 = vmatmul.mubr.f32.gmra.mrb[0].mxu0 %v1384
    %v1662 = vpop.f32.mrb[0].mxu0
    %v1663 = vadd.f32 %v482, %v1662
    %v1664 = vpop.f32.mrb[0].mxu0
    %1665 = vmatprep.mubr.f32.mxu0 0.0
    %1666 = vmatmul.mubr.f32.gmra.mrb[0].mxu0 %v1385
    %v1667 = vpop.f32.mrb[0].mxu0
    %v1668 = vadd.f32 %v488, %v1667
    %v1669 = vpop.f32.mrb[0].mxu0
    %1670 = vmatprep.mubr.f32.mxu0 0.0
    %1671 = vmatmul.mubr.f32.gmra.mrb[0].mxu0 %v1386
    %v1672 = vpop.f32.mrb[0].mxu0
    %v1673 = vadd.f32 %v494, %v1672
    %v1674 = vpop.f32.mrb[0].mxu0
    %1675 = vmatprep.mubr.f32.mxu0 0.0
    %1676 = vmatmul.mubr.f32.gmra.mrb[0].mxu0 %v1387
    %v1677 = vpop.f32.mrb[0].mxu0
    %v1678 = vadd.f32 %v500, %v1677
    %v1679 = vpop.f32.mrb[0].mxu0
    %1680 = vmatprep.mubr.f32.mxu0 0.0
    %1681 = vmatmul.mubr.f32.gmra.mrb[0].mxu0 %v1388
    %v1682 = vpop.f32.mrb[0].mxu0
    %v1683 = vadd.f32 %v506, %v1682
    %v1684 = vpop.f32.mrb[0].mxu0
    %1685 = vmatprep.mubr.f32.mxu0 0.0
    %1686 = vmatmul.mubr.f32.gmra.mrb[0].mxu0 %v1389
    %v1687 = vpop.f32.mrb[0].mxu0
    %v1688 = vadd.f32 %v512, %v1687
    %v1689 = vpop.f32.mrb[0].mxu0
    %1690 = vmatprep.mubr.f32.mxu0 0.0
    %1691 = vmatmul.mubr.f32.gmra.mrb[0].mxu0 %v1390
    %v1692 = vpop.f32.mrb[0].mxu0
    %v1693 = vadd.f32 %v518, %v1692
    %v1694 = vpop.f32.mrb[0].mxu0
    %1695 = vmatprep.mubr.f32.mxu0 0.0
    %1696 = vmatmul.mubr.f32.gmra.mrb[0].mxu0 %v1391
    %v1697 = vpop.f32.mrb[0].mxu0
    %v1698 = vadd.f32 %v524, %v1697
    %v1699 = vpop.f32.mrb[0].mxu0
    %1700 = vmatprep.mubr.f32.mxu0 0.0
    %1701 = vmatmul.mubr.f32.gmra.mrb[0].mxu0 %v1392
    %v1702 = vpop.f32.mrb[0].mxu0
    %v1703 = vadd.f32 %v530, %v1702
    %v1704 = vpop.f32.mrb[0].mxu0
    %1705 = vmatprep.mubr.f32.mxu0 0.0
    %1706 = vmatmul.mubr.f32.gmra.mrb[0].mxu0 %v1393
    %v1707 = vpop.f32.mrb[0].mxu0
    %v1708 = vadd.f32 %v536, %v1707
    %v1709 = vpop.f32.mrb[0].mxu0
    %1710 = vmatprep.mubr.f32.mxu0 0.0
    %1711 = vmatmul.mubr.f32.gmra.mrb[0].mxu0 %v1394
    %v1712 = vpop.f32.mrb[0].mxu0
    %v1713 = vadd.f32 %v542, %v1712
    %v1714 = vpop.f32.mrb[0].mxu0
    %1715 = vmatprep.mubr.f32.mxu0 0.0
    %1716 = vmatmul.mubr.f32.gmra.mrb[0].mxu0 %v1395
    %v1717 = vpop.f32.mrb[0].mxu0
    %v1718 = vadd.f32 %v548, %v1717
    %v1719 = vpop.f32.mrb[0].mxu0
    %1720 = vmatprep.mubr.f32.mxu0 0.0
    %1721 = vmatmul.mubr.f32.gmra.mrb[0].mxu0 %v1396
    %v1722 = vpop.f32.mrb[0].mxu0
    %v1723 = vadd.f32 %v554, %v1722
    %v1724 = vpop.f32.mrb[0].mxu0
    %1725 = vmatprep.mubr.f32.mxu0 0.0
    %1726 = vmatmul.mubr.f32.gmra.mrb[0].mxu0 %v1397
    %v1727 = vpop.f32.mrb[0].mxu0
    %v1728 = vadd.f32 %v560, %v1727
    %v1729 = vpop.f32.mrb[0].mxu0
    %1730 = vmatprep.mubr.f32.mxu0 0.0
    %1731 = vmatmul.mubr.f32.gmra.mrb[0].mxu0 %v1398
    %v1732 = vpop.f32.mrb[0].mxu0
    %v1733 = vadd.f32 %v566, %v1732
    %v1734 = vpop.f32.mrb[0].mxu0
    %1735 = vmatprep.mubr.f32.mxu0 0.0
    %1736 = vmatmul.mubr.f32.gmra.mrb[0].mxu0 %v1399
    %v1737 = vpop.f32.mrb[0].mxu0
    %v1738 = vadd.f32 %v572, %v1737
    %v1739 = vpop.f32.mrb[0].mxu0
    %1740 = vmatprep.mubr.f32.mxu0 0.0
    %1741 = vmatmul.mubr.f32.gmra.mrb[0].mxu0 %v1400
    %v1742 = vpop.f32.mrb[0].mxu0
    %v1743 = vadd.f32 %v578, %v1742
    %v1744 = vpop.f32.mrb[0].mxu0
    %1745 = vmatprep.mubr.f32.mxu0 0.0
    %1746 = vmatmul.mubr.f32.gmra.mrb[0].mxu0 %v1401
    %v1747 = vpop.f32.mrb[0].mxu0
    %v1748 = vadd.f32 %v584, %v1747
    %v1749 = vpop.f32.mrb[0].mxu0
    %1750 = vmatprep.mubr.f32.mxu0 0.0
    %1751 = vmatmul.mubr.f32.gmra.mrb[0].mxu0 %v1402
    %v1752 = vpop.f32.mrb[0].mxu0
    %v1753 = vadd.f32 %v590, %v1752
    %v1754 = vpop.f32.mrb[0].mxu0
    %1755 = vmatprep.mubr.f32.mxu0 0.0
    %1756 = vmatmul.mubr.f32.gmra.mrb[0].mxu0 %v1403
    %v1757 = vpop.f32.mrb[0].mxu0
    %v1758 = vadd.f32 %v596, %v1757
    %v1759 = vpop.f32.mrb[0].mxu0
    %1760 = vmatprep.mubr.f32.mxu0 0.0
    %1761 = vmatmul.mubr.f32.gmra.mrb[0].mxu0 %v1404
    %v1762 = vpop.f32.mrb[0].mxu0
    %v1763 = vadd.f32 %v602, %v1762
    %v1764 = vpop.f32.mrb[0].mxu0
    %1765 = vmatprep.mubr.f32.mxu0 0.0
    %1766 = vmatmul.mubr.f32.gmra.mrb[0].mxu0 %v1405
    %v1767 = vpop.f32.mrb[0].mxu0
    %v1768 = vadd.f32 %v608, %v1767
    %v1769 = vpop.f32.mrb[0].mxu0
    %1770 = vmatprep.mubr.f32.mxu0 0.0
    %1771 = vmatmul.mubr.f32.gmra.mrb[0].mxu0 %v1406
    %v1772 = vpop.f32.mrb[0].mxu0
    %v1773 = vadd.f32 %v614, %v1772
    %v1774 = vpop.f32.mrb[0].mxu0
    %1775 = vmatprep.mubr.f32.mxu0 0.0
    %1776 = vmatmul.mubr.f32.gmra.mrb[0].mxu0 %v1407
    %v1777 = vpop.f32.mrb[0].mxu0
    %v1778 = vadd.f32 %v620, %v1777
    %v1779 = vpop.f32.mrb[0].mxu0
    %1780 = vmatprep.mubr.f32.mxu0 0.0
    %1781 = vmatmul.mubr.f32.gmra.mrb[0].mxu0 %v1408
    %v1782 = vpop.f32.mrb[0].mxu0
    %v1783 = vadd.f32 %v626, %v1782
    %v1784 = vpop.f32.mrb[0].mxu0
    %1785 = vmatprep.mubr.f32.mxu0 0.0
    %1786 = vmatmul.mubr.f32.gmra.mrb[0].mxu0 %v1409
    %v1787 = vpop.f32.mrb[0].mxu0
    %v1788 = vadd.f32 %v632, %v1787
    %v1789 = vpop.f32.mrb[0].mxu0
    %1790 = vmatprep.mubr.f32.mxu0 0.0
    %1791 = vmatmul.mubr.f32.gmra.mrb[0].mxu0 %v1410
    %v1792 = vpop.f32.mrb[0].mxu0
    %v1793 = vadd.f32 %v638, %v1792
    %v1794 = vpop.f32.mrb[0].mxu0
    %1795 = vmatprep.mubr.f32.mxu0 0.0
    %1796 = vmatmul.mubr.f32.gmra.mrb[0].mxu0 %v1411
    %v1797 = vpop.f32.mrb[0].mxu0
    %v1798 = vadd.f32 %v644, %v1797
    %v1799 = vpop.f32.mrb[0].mxu0
    %1800 = vmatprep.mubr.f32.mxu0 0.0
    %1801 = vmatmul.mubr.f32.gmra.mrb[0].mxu0 %v1412
    %v1802 = vpop.f32.mrb[0].mxu0
    %v1803 = vadd.f32 %v650, %v1802
    %v1804 = vpop.f32.mrb[0].mxu0
    %1805 = vmatprep.mubr.f32.mxu0 0.0
    %1806 = vmatmul.mubr.f32.gmra.mrb[0].mxu0 %v1413
    %v1807 = vpop.f32.mrb[0].mxu0
    %v1808 = vadd.f32 %v656, %v1807
    %v1809 = vpop.f32.mrb[0].mxu0
    %1810 = vmatprep.mubr.f32.mxu0 0.0
    %1811 = vmatmul.mubr.f32.gmra.mrb[0].mxu0 %v1414
    %v1812 = vpop.f32.mrb[0].mxu0
    %v1813 = vadd.f32 %v662, %v1812
    %v1814 = vpop.f32.mrb[0].mxu0
    %1815 = vdwg.mxu0
    %v1816 = vadd.f32 %v1498, %v829
    %v1817 = vadd.f32 %v1503, %v835
    %v1818 = vadd.f32 %v1508, %v841
    %v1819 = vadd.f32 %v1513, %v847
    %v1820 = vadd.f32 %v1518, %v853
    %v1821 = vadd.f32 %v1523, %v859
    %v1822 = vadd.f32 %v1528, %v865
    %v1823 = vadd.f32 %v1533, %v871
    %v1824 = vadd.f32 %v1538, %v877
    %v1825 = vadd.f32 %v1543, %v883
    %v1826 = vadd.f32 %v1548, %v889
    %v1827 = vadd.f32 %v1553, %v895
    %v1828 = vadd.f32 %v1558, %v901
    %v1829 = vadd.f32 %v1563, %v907
    %v1830 = vadd.f32 %v1568, %v913
    %v1831 = vadd.f32 %v1573, %v919
    %v1832 = vadd.f32 %v1578, %v925
    %v1833 = vadd.f32 %v1583, %v931
    %v1834 = vadd.f32 %v1588, %v937
    %v1835 = vadd.f32 %v1593, %v943
    %v1836 = vadd.f32 %v1598, %v949
    %v1837 = vadd.f32 %v1603, %v955
    %v1838 = vadd.f32 %v1608, %v961
    %v1839 = vadd.f32 %v1613, %v967
    %v1840 = vadd.f32 %v1618, %v973
    %v1841 = vadd.f32 %v1623, %v979
    %v1842 = vadd.f32 %v1628, %v985
    %v1843 = vadd.f32 %v1633, %v991
    %v1844 = vadd.f32 %v1638, %v997
    %v1845 = vadd.f32 %v1643, %v1003
    %v1846 = vadd.f32 %v1648, %v1009
    %v1847 = vadd.f32 %v1653, %v1015
    %v1848 = vadd.f32 %v1658, %v1021
    %v1849 = vadd.f32 %v1663, %v1027
    %v1850 = vadd.f32 %v1668, %v1033
    %v1851 = vadd.f32 %v1673, %v1039
    %v1852 = vadd.f32 %v1678, %v1045
    %v1853 = vadd.f32 %v1683, %v1051
    %v1854 = vadd.f32 %v1688, %v1057
    %v1855 = vadd.f32 %v1693, %v1063
    %v1856 = vadd.f32 %v1698, %v1069
    %v1857 = vadd.f32 %v1703, %v1075
    %v1858 = vadd.f32 %v1708, %v1081
    %v1859 = vadd.f32 %v1713, %v1087
    %v1860 = vadd.f32 %v1718, %v1093
    %v1861 = vadd.f32 %v1723, %v1099
    %v1862 = vadd.f32 %v1728, %v1105
    %v1863 = vadd.f32 %v1733, %v1111
    %v1864 = vadd.f32 %v1738, %v1117
    %v1865 = vadd.f32 %v1743, %v1123
    %v1866 = vadd.f32 %v1748, %v1129
    %v1867 = vadd.f32 %v1753, %v1135
    %v1868 = vadd.f32 %v1758, %v1141
    %v1869 = vadd.f32 %v1763, %v1147
    %v1870 = vadd.f32 %v1768, %v1153
    %v1871 = vadd.f32 %v1773, %v1159
    %v1872 = vadd.f32 %v1778, %v1165
    %v1873 = vadd.f32 %v1783, %v1171
    %v1874 = vadd.f32 %v1788, %v1177
    %v1875 = vadd.f32 %v1793, %v1183
    %v1876 = vadd.f32 %v1798, %v1189
    %v1877 = vadd.f32 %v1803, %v1195
    %v1878 = vadd.f32 %v1808, %v1201
    %v1879 = vadd.f32 %v1813, %v1207
    %v1880 = vld [vmem:[%s8] sm:$0x1]
    %v1882 = vlaneseq
    %v1883 = vshrl.u32 %v1882, 7
    %v1884 = vsub.s32 0, %v1883
    %v1885 = vrot.slane %v1880, %v1884
    %v1887 = vadd.f32 %v1816, %v1885
    %v1888 = vadd.f32 %v1817, %v1885
    %v1889 = vadd.f32 %v1818, %v1885
    %v1890 = vadd.f32 %v1819, %v1885
    %v1891 = vadd.f32 %v1820, %v1885
    %v1892 = vadd.f32 %v1821, %v1885
    %v1893 = vadd.f32 %v1822, %v1885
    %v1894 = vadd.f32 %v1823, %v1885
    %v1895 = vadd.f32 %v1824, %v1885
    %v1896 = vadd.f32 %v1825, %v1885
    %v1897 = vadd.f32 %v1826, %v1885
    %v1898 = vadd.f32 %v1827, %v1885
    %v1899 = vadd.f32 %v1828, %v1885
    %v1900 = vadd.f32 %v1829, %v1885
    %v1901 = vadd.f32 %v1830, %v1885
    %v1902 = vadd.f32 %v1831, %v1885
    %v1903 = vadd.f32 %v1832, %v1885
    %v1904 = vadd.f32 %v1833, %v1885
    %v1905 = vadd.f32 %v1834, %v1885
    %v1906 = vadd.f32 %v1835, %v1885
    %v1907 = vadd.f32 %v1836, %v1885
    %v1908 = vadd.f32 %v1837, %v1885
    %v1909 = vadd.f32 %v1838, %v1885
    %v1910 = vadd.f32 %v1839, %v1885
    %v1911 = vadd.f32 %v1840, %v1885
    %v1912 = vadd.f32 %v1841, %v1885
    %v1913 = vadd.f32 %v1842, %v1885
    %v1914 = vadd.f32 %v1843, %v1885
    %v1915 = vadd.f32 %v1844, %v1885
    %v1916 = vadd.f32 %v1845, %v1885
    %v1917 = vadd.f32 %v1846, %v1885
    %v1918 = vadd.f32 %v1847, %v1885
    %v1919 = vadd.f32 %v1848, %v1885
    %v1920 = vadd.f32 %v1849, %v1885
    %v1921 = vadd.f32 %v1850, %v1885
    %v1922 = vadd.f32 %v1851, %v1885
    %v1923 = vadd.f32 %v1852, %v1885
    %v1924 = vadd.f32 %v1853, %v1885
    %v1925 = vadd.f32 %v1854, %v1885
    %v1926 = vadd.f32 %v1855, %v1885
    %v1927 = vadd.f32 %v1856, %v1885
    %v1928 = vadd.f32 %v1857, %v1885
    %v1929 = vadd.f32 %v1858, %v1885
    %v1930 = vadd.f32 %v1859, %v1885
    %v1931 = vadd.f32 %v1860, %v1885
    %v1932 = vadd.f32 %v1861, %v1885
    %v1933 = vadd.f32 %v1862, %v1885
    %v1934 = vadd.f32 %v1863, %v1885
    %v1935 = vadd.f32 %v1864, %v1885
    %v1936 = vadd.f32 %v1865, %v1885
    %v1937 = vadd.f32 %v1866, %v1885
    %v1938 = vadd.f32 %v1867, %v1885
    %v1939 = vadd.f32 %v1868, %v1885
    %v1940 = vadd.f32 %v1869, %v1885
    %v1941 = vadd.f32 %v1870, %v1885
    %v1942 = vadd.f32 %v1871, %v1885
    %v1943 = vadd.f32 %v1872, %v1885
    %v1944 = vadd.f32 %v1873, %v1885
    %v1945 = vadd.f32 %v1874, %v1885
    %v1946 = vadd.f32 %v1875, %v1885
    %v1947 = vadd.f32 %v1876, %v1885
    %v1948 = vadd.f32 %v1877, %v1885
    %v1949 = vadd.f32 %v1878, %v1885
    %v1950 = vadd.f32 %v1879, %v1885
    %1951 = vxpose.xlu0.b32.start [1/16] %v1216, 128
    %1952 = vxpose.xlu0.b32.cont [2/16] %v1217, 128
    %1953 = vxpose.xlu0.b32.cont [3/16] %v1218, 128
    %1954 = vxpose.xlu0.b32.cont [4/16] %v1219, 128
    %1955 = vxpose.xlu0.b32.cont [5/16] %v1220, 128
    %1956 = vxpose.xlu0.b32.cont [6/16] %v1221, 128
    %1957 = vxpose.xlu0.b32.cont [7/16] %v1222, 128
    %1958 = vxpose.xlu0.b32.cont [8/16] %v1223, 128
    %1959 = vxpose.xlu0.b32.cont [9/16] %v1224, 128
    %1960 = vxpose.xlu0.b32.cont [10/16] %v1225, 128
    %1961 = vxpose.xlu0.b32.cont [11/16] %v1226, 128
    %1962 = vxpose.xlu0.b32.cont [12/16] %v1227, 128
    %1963 = vxpose.xlu0.b32.cont [13/16] %v1228, 128
    %1964 = vxpose.xlu0.b32.cont [14/16] %v1229, 128
    %1965 = vxpose.xlu0.b32.cont [15/16] %v1230, 128
    %1966 = vxpose.xlu0.b32.end [16/16] %v1231, 128
    %v1967 = vpop.trf.xlu0
    %v1968 = vpop.trf.xlu0
    %v1969 = vpop.trf.xlu0
    %v1970 = vpop.trf.xlu0
    %v1971 = vpop.trf.xlu0
    %v1972 = vpop.trf.xlu0
    %v1973 = vpop.trf.xlu0
    %v1974 = vpop.trf.xlu0
    %v1975 = vpop.trf.xlu0
    %v1976 = vpop.trf.xlu0
    %v1977 = vpop.trf.xlu0
    %v1978 = vpop.trf.xlu0
    %v1979 = vpop.trf.xlu0
    %v1980 = vpop.trf.xlu0
    %v1981 = vpop.trf.xlu0
    %v1982 = vpop.trf.xlu0
    %1983 = vxpose.xlu0.b32.start [1/16] %v1232, 128
    %1984 = vxpose.xlu0.b32.cont [2/16] %v1233, 128
    %1985 = vxpose.xlu0.b32.cont [3/16] %v1234, 128
    %1986 = vxpose.xlu0.b32.cont [4/16] %v1235, 128
    %1987 = vxpose.xlu0.b32.cont [5/16] %v1236, 128
    %1988 = vxpose.xlu0.b32.cont [6/16] %v1237, 128
    %1989 = vxpose.xlu0.b32.cont [7/16] %v1238, 128
    %1990 = vxpose.xlu0.b32.cont [8/16] %v1239, 128
    %1991 = vxpose.xlu0.b32.cont [9/16] %v1240, 128
    %1992 = vxpose.xlu0.b32.cont [10/16] %v1241, 128
    %1993 = vxpose.xlu0.b32.cont [11/16] %v1242, 128
    %1994 = vxpose.xlu0.b32.cont [12/16] %v1243, 128
    %1995 = vxpose.xlu0.b32.cont [13/16] %v1244, 128
    %1996 = vxpose.xlu0.b32.cont [14/16] %v1245, 128
    %1997 = vxpose.xlu0.b32.cont [15/16] %v1246, 128
    %1998 = vxpose.xlu0.b32.end [16/16] %v1247, 128
    %v1999 = vpop.trf.xlu0
    %v2000 = vpop.trf.xlu0
    %v2001 = vpop.trf.xlu0
    %v2002 = vpop.trf.xlu0
    %v2003 = vpop.trf.xlu0
    %v2004 = vpop.trf.xlu0
    %v2005 = vpop.trf.xlu0
    %v2006 = vpop.trf.xlu0
    %v2007 = vpop.trf.xlu0
    %v2008 = vpop.trf.xlu0
    %v2009 = vpop.trf.xlu0
    %v2010 = vpop.trf.xlu0
    %v2011 = vpop.trf.xlu0
    %v2012 = vpop.trf.xlu0
    %v2013 = vpop.trf.xlu0
    %v2014 = vpop.trf.xlu0
    %2015 = vxpose.xlu0.b32.start [1/16] %v1248, 128
    %2016 = vxpose.xlu0.b32.cont [2/16] %v1249, 128
    %2017 = vxpose.xlu0.b32.cont [3/16] %v1250, 128
    %2018 = vxpose.xlu0.b32.cont [4/16] %v1251, 128
    %2019 = vxpose.xlu0.b32.cont [5/16] %v1252, 128
    %2020 = vxpose.xlu0.b32.cont [6/16] %v1253, 128
    %2021 = vxpose.xlu0.b32.cont [7/16] %v1254, 128
    %2022 = vxpose.xlu0.b32.cont [8/16] %v1255, 128
    %2023 = vxpose.xlu0.b32.cont [9/16] %v1256, 128
    %2024 = vxpose.xlu0.b32.cont [10/16] %v1257, 128
    %2025 = vxpose.xlu0.b32.cont [11/16] %v1258, 128
    %2026 = vxpose.xlu0.b32.cont [12/16] %v1259, 128
    %2027 = vxpose.xlu0.b32.cont [13/16] %v1260, 128
    %2028 = vxpose.xlu0.b32.cont [14/16] %v1261, 128
    %2029 = vxpose.xlu0.b32.cont [15/16] %v1262, 128
    %2030 = vxpose.xlu0.b32.end [16/16] %v1263, 128
    %v2031 = vpop.trf.xlu0
    %v2032 = vpop.trf.xlu0
    %v2033 = vpop.trf.xlu0
    %v2034 = vpop.trf.xlu0
    %v2035 = vpop.trf.xlu0
    %v2036 = vpop.trf.xlu0
    %v2037 = vpop.trf.xlu0
    %v2038 = vpop.trf.xlu0
    %v2039 = vpop.trf.xlu0
    %v2040 = vpop.trf.xlu0
    %v2041 = vpop.trf.xlu0
    %v2042 = vpop.trf.xlu0
    %v2043 = vpop.trf.xlu0
    %v2044 = vpop.trf.xlu0
    %v2045 = vpop.trf.xlu0
    %v2046 = vpop.trf.xlu0
    %2047 = vxpose.xlu0.b32.start [1/16] %v1264, 128
    %2048 = vxpose.xlu0.b32.cont [2/16] %v1265, 128
    %2049 = vxpose.xlu0.b32.cont [3/16] %v1266, 128
    %2050 = vxpose.xlu0.b32.cont [4/16] %v1267, 128
    %2051 = vxpose.xlu0.b32.cont [5/16] %v1268, 128
    %2052 = vxpose.xlu0.b32.cont [6/16] %v1269, 128
    %2053 = vxpose.xlu0.b32.cont [7/16] %v1270, 128
    %2054 = vxpose.xlu0.b32.cont [8/16] %v1271, 128
    %2055 = vxpose.xlu0.b32.cont [9/16] %v1272, 128
    %2056 = vxpose.xlu0.b32.cont [10/16] %v1273, 128
    %2057 = vxpose.xlu0.b32.cont [11/16] %v1274, 128
    %2058 = vxpose.xlu0.b32.cont [12/16] %v1275, 128
    %2059 = vxpose.xlu0.b32.cont [13/16] %v1276, 128
    %2060 = vxpose.xlu0.b32.cont [14/16] %v1277, 128
    %2061 = vxpose.xlu0.b32.cont [15/16] %v1278, 128
    %2062 = vxpose.xlu0.b32.end [16/16] %v1279, 128
    %v2063 = vpop.trf.xlu0
    %v2064 = vpop.trf.xlu0
    %v2065 = vpop.trf.xlu0
    %v2066 = vpop.trf.xlu0
    %v2067 = vpop.trf.xlu0
    %v2068 = vpop.trf.xlu0
    %v2069 = vpop.trf.xlu0
    %v2070 = vpop.trf.xlu0
    %v2071 = vpop.trf.xlu0
    %v2072 = vpop.trf.xlu0
    %v2073 = vpop.trf.xlu0
    %v2074 = vpop.trf.xlu0
    %v2075 = vpop.trf.xlu0
    %v2076 = vpop.trf.xlu0
    %v2077 = vpop.trf.xlu0
    %v2078 = vpop.trf.xlu0
    %v2079 = vpack.c.bf16 %v1968, %v1967
    %v2080 = vpack.c.bf16 %v2000, %v1999
    %v2081 = vpack.c.bf16 %v2032, %v2031
    %v2082 = vpack.c.bf16 %v2064, %v2063
    %v2083 = vpack.c.bf16 %v1970, %v1969
    %v2084 = vpack.c.bf16 %v2002, %v2001
    %v2085 = vpack.c.bf16 %v2034, %v2033
    %v2086 = vpack.c.bf16 %v2066, %v2065
    %v2087 = vpack.c.bf16 %v1972, %v1971
    %v2088 = vpack.c.bf16 %v2004, %v2003
    %v2089 = vpack.c.bf16 %v2036, %v2035
    %v2090 = vpack.c.bf16 %v2068, %v2067
    %v2091 = vpack.c.bf16 %v1974, %v1973
    %v2092 = vpack.c.bf16 %v2006, %v2005
    %v2093 = vpack.c.bf16 %v2038, %v2037
    %v2094 = vpack.c.bf16 %v2070, %v2069
    %v2095 = vpack.c.bf16 %v1976, %v1975
    %v2096 = vpack.c.bf16 %v2008, %v2007
    %v2097 = vpack.c.bf16 %v2040, %v2039
    %v2098 = vpack.c.bf16 %v2072, %v2071
    %v2099 = vpack.c.bf16 %v1978, %v1977
    %v2100 = vpack.c.bf16 %v2010, %v2009
    %v2101 = vpack.c.bf16 %v2042, %v2041
    %v2102 = vpack.c.bf16 %v2074, %v2073
    %v2103 = vpack.c.bf16 %v1980, %v1979
    %v2104 = vpack.c.bf16 %v2012, %v2011
    %v2105 = vpack.c.bf16 %v2044, %v2043
    %v2106 = vpack.c.bf16 %v2076, %v2075
    %v2107 = vpack.c.bf16 %v1982, %v1981
    %v2108 = vpack.c.bf16 %v2014, %v2013
    %v2109 = vpack.c.bf16 %v2046, %v2045
    %v2110 = vpack.c.bf16 %v2078, %v2077
    %v2143 = vunpack.c.l.b16 %v2079
    %v2144 = vunpack.c.l.b16 %v2080
    %v2145 = vunpack.c.l.b16 %v2081
    %v2146 = vunpack.c.l.b16 %v2082
    %v2147 = vunpack.c.h.b16 %v2079
    %v2148 = vunpack.c.h.b16 %v2080
    %v2149 = vunpack.c.h.b16 %v2081
    %v2150 = vunpack.c.h.b16 %v2082
    %v2151 = vunpack.c.l.b16 %v2083
    %v2152 = vunpack.c.l.b16 %v2084
    %v2153 = vunpack.c.l.b16 %v2085
    %v2154 = vunpack.c.l.b16 %v2086
    %v2155 = vunpack.c.h.b16 %v2083
    %v2156 = vunpack.c.h.b16 %v2084
    %v2157 = vunpack.c.h.b16 %v2085
    %v2158 = vunpack.c.h.b16 %v2086
    %v2159 = vunpack.c.l.b16 %v2087
    %v2160 = vunpack.c.l.b16 %v2088
    %v2161 = vunpack.c.l.b16 %v2089
    %v2162 = vunpack.c.l.b16 %v2090
    %v2163 = vunpack.c.h.b16 %v2087
    %v2164 = vunpack.c.h.b16 %v2088
    %v2165 = vunpack.c.h.b16 %v2089
    %v2166 = vunpack.c.h.b16 %v2090
    %v2167 = vunpack.c.l.b16 %v2091
    %v2168 = vunpack.c.l.b16 %v2092
    %v2169 = vunpack.c.l.b16 %v2093
    %v2170 = vunpack.c.l.b16 %v2094
    %v2171 = vunpack.c.h.b16 %v2091
    %v2172 = vunpack.c.h.b16 %v2092
    %v2173 = vunpack.c.h.b16 %v2093
    %v2174 = vunpack.c.h.b16 %v2094
    %v2175 = vunpack.c.l.b16 %v2095
    %v2176 = vunpack.c.l.b16 %v2096
    %v2177 = vunpack.c.l.b16 %v2097
    %v2178 = vunpack.c.l.b16 %v2098
    %v2179 = vunpack.c.h.b16 %v2095
    %v2180 = vunpack.c.h.b16 %v2096
    %v2181 = vunpack.c.h.b16 %v2097
    %v2182 = vunpack.c.h.b16 %v2098
    %v2183 = vunpack.c.l.b16 %v2099
    %v2184 = vunpack.c.l.b16 %v2100
    %v2185 = vunpack.c.l.b16 %v2101
    %v2186 = vunpack.c.l.b16 %v2102
    %v2187 = vunpack.c.h.b16 %v2099
    %v2188 = vunpack.c.h.b16 %v2100
    %v2189 = vunpack.c.h.b16 %v2101
    %v2190 = vunpack.c.h.b16 %v2102
    %v2191 = vunpack.c.l.b16 %v2103
    %v2192 = vunpack.c.l.b16 %v2104
    %v2193 = vunpack.c.l.b16 %v2105
    %v2194 = vunpack.c.l.b16 %v2106
    %v2195 = vunpack.c.h.b16 %v2103
    %v2196 = vunpack.c.h.b16 %v2104
    %v2197 = vunpack.c.h.b16 %v2105
    %v2198 = vunpack.c.h.b16 %v2106
    %v2199 = vunpack.c.l.b16 %v2107
    %v2200 = vunpack.c.l.b16 %v2108
    %v2201 = vunpack.c.l.b16 %v2109
    %v2202 = vunpack.c.l.b16 %v2110
    %v2203 = vunpack.c.h.b16 %v2107
    %v2204 = vunpack.c.h.b16 %v2108
    %v2205 = vunpack.c.h.b16 %v2109
    %v2206 = vunpack.c.h.b16 %v2110
    %v2207 = vpack.c.b16 %v2144, %v2143
    %v2208 = vpack.c.b16 %v2146, %v2145
    %v2209 = vpack.c.b16 %v2148, %v2147
    %v2210 = vpack.c.b16 %v2150, %v2149
    %v2211 = vpack.c.b16 %v2152, %v2151
    %v2212 = vpack.c.b16 %v2154, %v2153
    %v2213 = vpack.c.b16 %v2156, %v2155
    %v2214 = vpack.c.b16 %v2158, %v2157
    %v2215 = vpack.c.b16 %v2160, %v2159
    %v2216 = vpack.c.b16 %v2162, %v2161
    %v2217 = vpack.c.b16 %v2164, %v2163
    %v2218 = vpack.c.b16 %v2166, %v2165
    %v2219 = vpack.c.b16 %v2168, %v2167
    %v2220 = vpack.c.b16 %v2170, %v2169
    %v2221 = vpack.c.b16 %v2172, %v2171
    %v2222 = vpack.c.b16 %v2174, %v2173
    %v2223 = vpack.c.b16 %v2176, %v2175
    %v2224 = vpack.c.b16 %v2178, %v2177
    %v2225 = vpack.c.b16 %v2180, %v2179
    %v2226 = vpack.c.b16 %v2182, %v2181
    %v2227 = vpack.c.b16 %v2184, %v2183
    %v2228 = vpack.c.b16 %v2186, %v2185
    %v2229 = vpack.c.b16 %v2188, %v2187
    %v2230 = vpack.c.b16 %v2190, %v2189
    %v2231 = vpack.c.b16 %v2192, %v2191
    %v2232 = vpack.c.b16 %v2194, %v2193
    %v2233 = vpack.c.b16 %v2196, %v2195
    %v2234 = vpack.c.b16 %v2198, %v2197
    %v2235 = vpack.c.b16 %v2200, %v2199
    %v2236 = vpack.c.b16 %v2202, %v2201
    %v2237 = vpack.c.b16 %v2204, %v2203
    %v2238 = vpack.c.b16 %v2206, %v2205
    %2271 = vst [vmem:[#allocation13] sm:$0xff] %v2207
    %2272 = vst [vmem:[#allocation13 + $0x8] sm:$0xff] %v2208
    %2273 = vst [vmem:[#allocation13 + $0x10] sm:$0xff] %v2209
    %2274 = vst [vmem:[#allocation13 + $0x18] sm:$0xff] %v2210
    %2275 = vst [vmem:[#allocation13 + $0x20] sm:$0xff] %v2211
    %2276 = vst [vmem:[#allocation13 + $0x28] sm:$0xff] %v2212
    %2277 = vst [vmem:[#allocation13 + $0x30] sm:$0xff] %v2213
    %2278 = vst [vmem:[#allocation13 + $0x38] sm:$0xff] %v2214
    %2279 = vst [vmem:[#allocation13 + $0x40] sm:$0xff] %v2215
    %2280 = vst [vmem:[#allocation13 + $0x48] sm:$0xff] %v2216
    %2281 = vst [vmem:[#allocation13 + $0x50] sm:$0xff] %v2217
    %2282 = vst [vmem:[#allocation13 + $0x58] sm:$0xff] %v2218
    %2283 = vst [vmem:[#allocation13 + $0x60] sm:$0xff] %v2219
    %2284 = vst [vmem:[#allocation13 + $0x68] sm:$0xff] %v2220
    %2285 = vst [vmem:[#allocation13 + $0x70] sm:$0xff] %v2221
    %2286 = vst [vmem:[#allocation13 + $0x78] sm:$0xff] %v2222
    %2287 = vst [vmem:[#allocation13 + $0x80] sm:$0xff] %v2223
    %2288 = vst [vmem:[#allocation13 + $0x88] sm:$0xff] %v2224
    %2289 = vst [vmem:[#allocation13 + $0x90] sm:$0xff] %v2225
    %2290 = vst [vmem:[#allocation13 + $0x98] sm:$0xff] %v2226
    %2291 = vst [vmem:[#allocation13 + $0xa0] sm:$0xff] %v2227
    %2292 = vst [vmem:[#allocation13 + $0xa8] sm:$0xff] %v2228
    %2293 = vst [vmem:[#allocation13 + $0xb0] sm:$0xff] %v2229
    %2294 = vst [vmem:[#allocation13 + $0xb8] sm:$0xff] %v2230
    %2295 = vst [vmem:[#allocation13 + $0xc0] sm:$0xff] %v2231
    %2296 = vst [vmem:[#allocation13 + $0xc8] sm:$0xff] %v2232
    %2297 = vst [vmem:[#allocation13 + $0xd0] sm:$0xff] %v2233
    %2298 = vst [vmem:[#allocation13 + $0xd8] sm:$0xff] %v2234
    %2299 = vst [vmem:[#allocation13 + $0xe0] sm:$0xff] %v2235
    %2300 = vst [vmem:[#allocation13 + $0xe8] sm:$0xff] %v2236
    %2301 = vst [vmem:[#allocation13 + $0xf0] sm:$0xff] %v2237
    %2302 = vst [vmem:[#allocation13 + $0xf8] sm:$0xff] %v2238
    %2303 = vxpose.xlu0.b32.start [1/16] %v1287, 128
    %2304 = vxpose.xlu0.b32.cont [2/16] %v1288, 128
    %2305 = vxpose.xlu0.b32.cont [3/16] %v1289, 128
    %2306 = vxpose.xlu0.b32.cont [4/16] %v1290, 128
    %2307 = vxpose.xlu0.b32.cont [5/16] %v1291, 128
    %2308 = vxpose.xlu0.b32.cont [6/16] %v1292, 128
    %2309 = vxpose.xlu0.b32.cont [7/16] %v1293, 128
    %2310 = vxpose.xlu0.b32.cont [8/16] %v1294, 128
    %2311 = vxpose.xlu0.b32.cont [9/16] %v1295, 128
    %2312 = vxpose.xlu0.b32.cont [10/16] %v1296, 128
    %2313 = vxpose.xlu0.b32.cont [11/16] %v1297, 128
    %2314 = vxpose.xlu0.b32.cont [12/16] %v1298, 128
    %2315 = vxpose.xlu0.b32.cont [13/16] %v1299, 128
    %2316 = vxpose.xlu0.b32.cont [14/16] %v1300, 128
    %2317 = vxpose.xlu0.b32.cont [15/16] %v1301, 128
    %2318 = vxpose.xlu0.b32.end [16/16] %v1302, 128
    %v2319 = vpop.trf.xlu0
    %v2320 = vpop.trf.xlu0
    %v2321 = vpop.trf.xlu0
    %v2322 = vpop.trf.xlu0
    %v2323 = vpop.trf.xlu0
    %v2324 = vpop.trf.xlu0
    %v2325 = vpop.trf.xlu0
    %v2326 = vpop.trf.xlu0
    %v2327 = vpop.trf.xlu0
    %v2328 = vpop.trf.xlu0
    %v2329 = vpop.trf.xlu0
    %v2330 = vpop.trf.xlu0
    %v2331 = vpop.trf.xlu0
    %v2332 = vpop.trf.xlu0
    %v2333 = vpop.trf.xlu0
    %v2334 = vpop.trf.xlu0
    %2335 = vxpose.xlu0.b32.start [1/16] %v1303, 128
    %2336 = vxpose.xlu0.b32.cont [2/16] %v1304, 128
    %2337 = vxpose.xlu0.b32.cont [3/16] %v1305, 128
    %2338 = vxpose.xlu0.b32.cont [4/16] %v1306, 128
    %2339 = vxpose.xlu0.b32.cont [5/16] %v1307, 128
    %2340 = vxpose.xlu0.b32.cont [6/16] %v1308, 128
    %2341 = vxpose.xlu0.b32.cont [7/16] %v1309, 128
    %2342 = vxpose.xlu0.b32.cont [8/16] %v1310, 128
    %2343 = vxpose.xlu0.b32.cont [9/16] %v1311, 128
    %2344 = vxpose.xlu0.b32.cont [10/16] %v1312, 128
    %2345 = vxpose.xlu0.b32.cont [11/16] %v1313, 128
    %2346 = vxpose.xlu0.b32.cont [12/16] %v1314, 128
    %2347 = vxpose.xlu0.b32.cont [13/16] %v1315, 128
    %2348 = vxpose.xlu0.b32.cont [14/16] %v1316, 128
    %2349 = vxpose.xlu0.b32.cont [15/16] %v1317, 128
    %2350 = vxpose.xlu0.b32.end [16/16] %v1318, 128
    %v2351 = vpop.trf.xlu0
    %v2352 = vpop.trf.xlu0
    %v2353 = vpop.trf.xlu0
    %v2354 = vpop.trf.xlu0
    %v2355 = vpop.trf.xlu0
    %v2356 = vpop.trf.xlu0
    %v2357 = vpop.trf.xlu0
    %v2358 = vpop.trf.xlu0
    %v2359 = vpop.trf.xlu0
    %v2360 = vpop.trf.xlu0
    %v2361 = vpop.trf.xlu0
    %v2362 = vpop.trf.xlu0
    %v2363 = vpop.trf.xlu0
    %v2364 = vpop.trf.xlu0
    %v2365 = vpop.trf.xlu0
    %v2366 = vpop.trf.xlu0
    %2367 = vxpose.xlu0.b32.start [1/16] %v1319, 128
    %2368 = vxpose.xlu0.b32.cont [2/16] %v1320, 128
    %2369 = vxpose.xlu0.b32.cont [3/16] %v1321, 128
    %2370 = vxpose.xlu0.b32.cont [4/16] %v1322, 128
    %2371 = vxpose.xlu0.b32.cont [5/16] %v1323, 128
    %2372 = vxpose.xlu0.b32.cont [6/16] %v1324, 128
    %2373 = vxpose.xlu0.b32.cont [7/16] %v1325, 128
    %2374 = vxpose.xlu0.b32.cont [8/16] %v1326, 128
    %2375 = vxpose.xlu0.b32.cont [9/16] %v1327, 128
    %2376 = vxpose.xlu0.b32.cont [10/16] %v1328, 128
    %2377 = vxpose.xlu0.b32.cont [11/16] %v1329, 128
    %2378 = vxpose.xlu0.b32.cont [12/16] %v1330, 128
    %2379 = vxpose.xlu0.b32.cont [13/16] %v1331, 128
    %2380 = vxpose.xlu0.b32.cont [14/16] %v1332, 128
    %2381 = vxpose.xlu0.b32.cont [15/16] %v1333, 128
    %2382 = vxpose.xlu0.b32.end [16/16] %v1334, 128
    %v2383 = vpop.trf.xlu0
    %v2384 = vpop.trf.xlu0
    %v2385 = vpop.trf.xlu0
    %v2386 = vpop.trf.xlu0
    %v2387 = vpop.trf.xlu0
    %v2388 = vpop.trf.xlu0
    %v2389 = vpop.trf.xlu0
    %v2390 = vpop.trf.xlu0
    %v2391 = vpop.trf.xlu0
    %v2392 = vpop.trf.xlu0
    %v2393 = vpop.trf.xlu0
    %v2394 = vpop.trf.xlu0
    %v2395 = vpop.trf.xlu0
    %v2396 = vpop.trf.xlu0
    %v2397 = vpop.trf.xlu0
    %v2398 = vpop.trf.xlu0
    %2399 = vxpose.xlu0.b32.start [1/16] %v1335, 128
    %2400 = vxpose.xlu0.b32.cont [2/16] %v1336, 128
    %2401 = vxpose.xlu0.b32.cont [3/16] %v1337, 128
    %2402 = vxpose.xlu0.b32.cont [4/16] %v1338, 128
    %2403 = vxpose.xlu0.b32.cont [5/16] %v1339, 128
    %2404 = vxpose.xlu0.b32.cont [6/16] %v1340, 128
    %2405 = vxpose.xlu0.b32.cont [7/16] %v1341, 128
    %2406 = vxpose.xlu0.b32.cont [8/16] %v1342, 128
    %2407 = vxpose.xlu0.b32.cont [9/16] %v1343, 128
    %2408 = vxpose.xlu0.b32.cont [10/16] %v1344, 128
    %2409 = vxpose.xlu0.b32.cont [11/16] %v1345, 128
    %2410 = vxpose.xlu0.b32.cont [12/16] %v1346, 128
    %2411 = vxpose.xlu0.b32.cont [13/16] %v1347, 128
    %2412 = vxpose.xlu0.b32.cont [14/16] %v1348, 128
    %2413 = vxpose.xlu0.b32.cont [15/16] %v1349, 128
    %2414 = vxpose.xlu0.b32.end [16/16] %v1350, 128
    %v2415 = vpop.trf.xlu0
    %v2416 = vpop.trf.xlu0
    %v2417 = vpop.trf.xlu0
    %v2418 = vpop.trf.xlu0
    %v2419 = vpop.trf.xlu0
    %v2420 = vpop.trf.xlu0
    %v2421 = vpop.trf.xlu0
    %v2422 = vpop.trf.xlu0
    %v2423 = vpop.trf.xlu0
    %v2424 = vpop.trf.xlu0
    %v2425 = vpop.trf.xlu0
    %v2426 = vpop.trf.xlu0
    %v2427 = vpop.trf.xlu0
    %v2428 = vpop.trf.xlu0
    %v2429 = vpop.trf.xlu0
    %v2430 = vpop.trf.xlu0
    %v2431 = vpack.c.bf16 %v2320, %v2319
    %v2432 = vpack.c.bf16 %v2352, %v2351
    %v2433 = vpack.c.bf16 %v2384, %v2383
    %v2434 = vpack.c.bf16 %v2416, %v2415
    %v2435 = vpack.c.bf16 %v2322, %v2321
    %v2436 = vpack.c.bf16 %v2354, %v2353
    %v2437 = vpack.c.bf16 %v2386, %v2385
    %v2438 = vpack.c.bf16 %v2418, %v2417
    %v2439 = vpack.c.bf16 %v2324, %v2323
    %v2440 = vpack.c.bf16 %v2356, %v2355
    %v2441 = vpack.c.bf16 %v2388, %v2387
    %v2442 = vpack.c.bf16 %v2420, %v2419
    %v2443 = vpack.c.bf16 %v2326, %v2325
    %v2444 = vpack.c.bf16 %v2358, %v2357
    %v2445 = vpack.c.bf16 %v2390, %v2389
    %v2446 = vpack.c.bf16 %v2422, %v2421
    %v2447 = vpack.c.bf16 %v2328, %v2327
    %v2448 = vpack.c.bf16 %v2360, %v2359
    %v2449 = vpack.c.bf16 %v2392, %v2391
    %v2450 = vpack.c.bf16 %v2424, %v2423
    %v2451 = vpack.c.bf16 %v2330, %v2329
    %v2452 = vpack.c.bf16 %v2362, %v2361
    %v2453 = vpack.c.bf16 %v2394, %v2393
    %v2454 = vpack.c.bf16 %v2426, %v2425
    %v2455 = vpack.c.bf16 %v2332, %v2331
    %v2456 = vpack.c.bf16 %v2364, %v2363
    %v2457 = vpack.c.bf16 %v2396, %v2395
    %v2458 = vpack.c.bf16 %v2428, %v2427
    %v2459 = vpack.c.bf16 %v2334, %v2333
    %v2460 = vpack.c.bf16 %v2366, %v2365
    %v2461 = vpack.c.bf16 %v2398, %v2397
    %v2462 = vpack.c.bf16 %v2430, %v2429
    %v2495 = vunpack.c.l.b16 %v2431
    %v2496 = vunpack.c.l.b16 %v2432
    %v2497 = vunpack.c.l.b16 %v2433
    %v2498 = vunpack.c.l.b16 %v2434
    %v2499 = vunpack.c.h.b16 %v2431
    %v2500 = vunpack.c.h.b16 %v2432
    %v2501 = vunpack.c.h.b16 %v2433
    %v2502 = vunpack.c.h.b16 %v2434
    %v2503 = vunpack.c.l.b16 %v2435
    %v2504 = vunpack.c.l.b16 %v2436
    %v2505 = vunpack.c.l.b16 %v2437
    %v2506 = vunpack.c.l.b16 %v2438
    %v2507 = vunpack.c.h.b16 %v2435
    %v2508 = vunpack.c.h.b16 %v2436
    %v2509 = vunpack.c.h.b16 %v2437
    %v2510 = vunpack.c.h.b16 %v2438
    %v2511 = vunpack.c.l.b16 %v2439
    %v2512 = vunpack.c.l.b16 %v2440
    %v2513 = vunpack.c.l.b16 %v2441
    %v2514 = vunpack.c.l.b16 %v2442
    %v2515 = vunpack.c.h.b16 %v2439
    %v2516 = vunpack.c.h.b16 %v2440
    %v2517 = vunpack.c.h.b16 %v2441
    %v2518 = vunpack.c.h.b16 %v2442
    %v2519 = vunpack.c.l.b16 %v2443
    %v2520 = vunpack.c.l.b16 %v2444
    %v2521 = vunpack.c.l.b16 %v2445
    %v2522 = vunpack.c.l.b16 %v2446
    %v2523 = vunpack.c.h.b16 %v2443
    %v2524 = vunpack.c.h.b16 %v2444
    %v2525 = vunpack.c.h.b16 %v2445
    %v2526 = vunpack.c.h.b16 %v2446
    %v2527 = vunpack.c.l.b16 %v2447
    %v2528 = vunpack.c.l.b16 %v2448
    %v2529 = vunpack.c.l.b16 %v2449
    %v2530 = vunpack.c.l.b16 %v2450
    %v2531 = vunpack.c.h.b16 %v2447
    %v2532 = vunpack.c.h.b16 %v2448
    %v2533 = vunpack.c.h.b16 %v2449
    %v2534 = vunpack.c.h.b16 %v2450
    %v2535 = vunpack.c.l.b16 %v2451
    %v2536 = vunpack.c.l.b16 %v2452
    %v2537 = vunpack.c.l.b16 %v2453
    %v2538 = vunpack.c.l.b16 %v2454
    %v2539 = vunpack.c.h.b16 %v2451
    %v2540 = vunpack.c.h.b16 %v2452
    %v2541 = vunpack.c.h.b16 %v2453
    %v2542 = vunpack.c.h.b16 %v2454
    %v2543 = vunpack.c.l.b16 %v2455
    %v2544 = vunpack.c.l.b16 %v2456
    %v2545 = vunpack.c.l.b16 %v2457
    %v2546 = vunpack.c.l.b16 %v2458
    %v2547 = vunpack.c.h.b16 %v2455
    %v2548 = vunpack.c.h.b16 %v2456
    %v2549 = vunpack.c.h.b16 %v2457
    %v2550 = vunpack.c.h.b16 %v2458
    %v2551 = vunpack.c.l.b16 %v2459
    %v2552 = vunpack.c.l.b16 %v2460
    %v2553 = vunpack.c.l.b16 %v2461
    %v2554 = vunpack.c.l.b16 %v2462
    %v2555 = vunpack.c.h.b16 %v2459
    %v2556 = vunpack.c.h.b16 %v2460
    %v2557 = vunpack.c.h.b16 %v2461
    %v2558 = vunpack.c.h.b16 %v2462
    %v2559 = vpack.c.b16 %v2496, %v2495
    %v2560 = vpack.c.b16 %v2498, %v2497
    %v2561 = vpack.c.b16 %v2500, %v2499
    %v2562 = vpack.c.b16 %v2502, %v2501
    %v2563 = vpack.c.b16 %v2504, %v2503
    %v2564 = vpack.c.b16 %v2506, %v2505
    %v2565 = vpack.c.b16 %v2508, %v2507
    %v2566 = vpack.c.b16 %v2510, %v2509
    %v2567 = vpack.c.b16 %v2512, %v2511
    %v2568 = vpack.c.b16 %v2514, %v2513
    %v2569 = vpack.c.b16 %v2516, %v2515
    %v2570 = vpack.c.b16 %v2518, %v2517
    %v2571 = vpack.c.b16 %v2520, %v2519
    %v2572 = vpack.c.b16 %v2522, %v2521
    %v2573 = vpack.c.b16 %v2524, %v2523
    %v2574 = vpack.c.b16 %v2526, %v2525
    %v2575 = vpack.c.b16 %v2528, %v2527
    %v2576 = vpack.c.b16 %v2530, %v2529
    %v2577 = vpack.c.b16 %v2532, %v2531
    %v2578 = vpack.c.b16 %v2534, %v2533
    %v2579 = vpack.c.b16 %v2536, %v2535
    %v2580 = vpack.c.b16 %v2538, %v2537
    %v2581 = vpack.c.b16 %v2540, %v2539
    %v2582 = vpack.c.b16 %v2542, %v2541
    %v2583 = vpack.c.b16 %v2544, %v2543
    %v2584 = vpack.c.b16 %v2546, %v2545
    %v2585 = vpack.c.b16 %v2548, %v2547
    %v2586 = vpack.c.b16 %v2550, %v2549
    %v2587 = vpack.c.b16 %v2552, %v2551
    %v2588 = vpack.c.b16 %v2554, %v2553
    %v2589 = vpack.c.b16 %v2556, %v2555
    %v2590 = vpack.c.b16 %v2558, %v2557
    %2623 = vst [vmem:[#allocation14] sm:$0xff] %v2559
    %2624 = vst [vmem:[#allocation14 + $0x8] sm:$0xff] %v2560
    %2625 = vst [vmem:[#allocation14 + $0x10] sm:$0xff] %v2561
    %2626 = vst [vmem:[#allocation14 + $0x18] sm:$0xff] %v2562
    %2627 = vst [vmem:[#allocation14 + $0x20] sm:$0xff] %v2563
    %2628 = vst [vmem:[#allocation14 + $0x28] sm:$0xff] %v2564
    %2629 = vst [vmem:[#allocation14 + $0x30] sm:$0xff] %v2565
    %2630 = vst [vmem:[#allocation14 + $0x38] sm:$0xff] %v2566
    %2631 = vst [vmem:[#allocation14 + $0x40] sm:$0xff] %v2567
    %2632 = vst [vmem:[#allocation14 + $0x48] sm:$0xff] %v2568
    %2633 = vst [vmem:[#allocation14 + $0x50] sm:$0xff] %v2569
    %2634 = vst [vmem:[#allocation14 + $0x58] sm:$0xff] %v2570
    %2635 = vst [vmem:[#allocation14 + $0x60] sm:$0xff] %v2571
    %2636 = vst [vmem:[#allocation14 + $0x68] sm:$0xff] %v2572
    %2637 = vst [vmem:[#allocation14 + $0x70] sm:$0xff] %v2573
    %2638 = vst [vmem:[#allocation14 + $0x78] sm:$0xff] %v2574
    %2639 = vst [vmem:[#allocation14 + $0x80] sm:$0xff] %v2575
    %2640 = vst [vmem:[#allocation14 + $0x88] sm:$0xff] %v2576
    %2641 = vst [vmem:[#allocation14 + $0x90] sm:$0xff] %v2577
    %2642 = vst [vmem:[#allocation14 + $0x98] sm:$0xff] %v2578
    %2643 = vst [vmem:[#allocation14 + $0xa0] sm:$0xff] %v2579
    %2644 = vst [vmem:[#allocation14 + $0xa8] sm:$0xff] %v2580
    %2645 = vst [vmem:[#allocation14 + $0xb0] sm:$0xff] %v2581
    %2646 = vst [vmem:[#allocation14 + $0xb8] sm:$0xff] %v2582
    %2647 = vst [vmem:[#allocation14 + $0xc0] sm:$0xff] %v2583
    %2648 = vst [vmem:[#allocation14 + $0xc8] sm:$0xff] %v2584
    %2649 = vst [vmem:[#allocation14 + $0xd0] sm:$0xff] %v2585
    %2650 = vst [vmem:[#allocation14 + $0xd8] sm:$0xff] %v2586
    %2651 = vst [vmem:[#allocation14 + $0xe0] sm:$0xff] %v2587
    %2652 = vst [vmem:[#allocation14 + $0xe8] sm:$0xff] %v2588
    %2653 = vst [vmem:[#allocation14 + $0xf0] sm:$0xff] %v2589
    %2654 = vst [vmem:[#allocation14 + $0xf8] sm:$0xff] %v2590
    %v2655 = vpack.c.bf16 %v1888, %v1887
    %v2656 = vpack.c.bf16 %v1890, %v1889
    %v2657 = vpack.c.bf16 %v1892, %v1891
    %v2658 = vpack.c.bf16 %v1894, %v1893
    %v2659 = vpack.c.bf16 %v1896, %v1895
    %v2660 = vpack.c.bf16 %v1898, %v1897
    %v2661 = vpack.c.bf16 %v1900, %v1899
    %v2662 = vpack.c.bf16 %v1902, %v1901
    %v2663 = vpack.c.bf16 %v1904, %v1903
    %v2664 = vpack.c.bf16 %v1906, %v1905
    %v2665 = vpack.c.bf16 %v1908, %v1907
    %v2666 = vpack.c.bf16 %v1910, %v1909
    %v2667 = vpack.c.bf16 %v1912, %v1911
    %v2668 = vpack.c.bf16 %v1914, %v1913
    %v2669 = vpack.c.bf16 %v1916, %v1915
    %v2670 = vpack.c.bf16 %v1918, %v1917
    %v2671 = vpack.c.bf16 %v1920, %v1919
    %v2672 = vpack.c.bf16 %v1922, %v1921
    %v2673 = vpack.c.bf16 %v1924, %v1923
    %v2674 = vpack.c.bf16 %v1926, %v1925
    %v2675 = vpack.c.bf16 %v1928, %v1927
    %v2676 = vpack.c.bf16 %v1930, %v1929
    %v2677 = vpack.c.bf16 %v1932, %v1931
    %v2678 = vpack.c.bf16 %v1934, %v1933
    %v2679 = vpack.c.bf16 %v1936, %v1935
    %v2680 = vpack.c.bf16 %v1938, %v1937
    %v2681 = vpack.c.bf16 %v1940, %v1939
    %v2682 = vpack.c.bf16 %v1942, %v1941
    %v2683 = vpack.c.bf16 %v1944, %v1943
    %v2684 = vpack.c.bf16 %v1946, %v1945
    %v2685 = vpack.c.bf16 %v1948, %v1947
    %v2686 = vpack.c.bf16 %v1950, %v1949
    %v2719 = vunpack.c.l.b16 %v2655
    %v2720 = vunpack.c.h.b16 %v2655
    %v2721 = vunpack.c.l.b16 %v2656
    %v2722 = vunpack.c.h.b16 %v2656
    %v2723 = vunpack.c.l.b16 %v2657
    %v2724 = vunpack.c.h.b16 %v2657
    %v2725 = vunpack.c.l.b16 %v2658
    %v2726 = vunpack.c.h.b16 %v2658
    %v2727 = vunpack.c.l.b16 %v2659
    %v2728 = vunpack.c.h.b16 %v2659
    %v2729 = vunpack.c.l.b16 %v2660
    %v2730 = vunpack.c.h.b16 %v2660
    %v2731 = vunpack.c.l.b16 %v2661
    %v2732 = vunpack.c.h.b16 %v2661
    %v2733 = vunpack.c.l.b16 %v2662
    %v2734 = vunpack.c.h.b16 %v2662
    %v2735 = vunpack.c.l.b16 %v2663
    %v2736 = vunpack.c.h.b16 %v2663
    %v2737 = vunpack.c.l.b16 %v2664
    %v2738 = vunpack.c.h.b16 %v2664
    %v2739 = vunpack.c.l.b16 %v2665
    %v2740 = vunpack.c.h.b16 %v2665
    %v2741 = vunpack.c.l.b16 %v2666
    %v2742 = vunpack.c.h.b16 %v2666
    %v2743 = vunpack.c.l.b16 %v2667
    %v2744 = vunpack.c.h.b16 %v2667
    %v2745 = vunpack.c.l.b16 %v2668
    %v2746 = vunpack.c.h.b16 %v2668
    %v2747 = vunpack.c.l.b16 %v2669
    %v2748 = vunpack.c.h.b16 %v2669
    %v2749 = vunpack.c.l.b16 %v2670
    %v2750 = vunpack.c.h.b16 %v2670
    %v2751 = vunpack.c.l.b16 %v2671
    %v2752 = vunpack.c.h.b16 %v2671
    %v2753 = vunpack.c.l.b16 %v2672
    %v2754 = vunpack.c.h.b16 %v2672
    %v2755 = vunpack.c.l.b16 %v2673
    %v2756 = vunpack.c.h.b16 %v2673
    %v2757 = vunpack.c.l.b16 %v2674
    %v2758 = vunpack.c.h.b16 %v2674
    %v2759 = vunpack.c.l.b16 %v2675
    %v2760 = vunpack.c.h.b16 %v2675
    %v2761 = vunpack.c.l.b16 %v2676
    %v2762 = vunpack.c.h.b16 %v2676
    %v2763 = vunpack.c.l.b16 %v2677
    %v2764 = vunpack.c.h.b16 %v2677
    %v2765 = vunpack.c.l.b16 %v2678
    %v2766 = vunpack.c.h.b16 %v2678
    %v2767 = vunpack.c.l.b16 %v2679
    %v2768 = vunpack.c.h.b16 %v2679
    %v2769 = vunpack.c.l.b16 %v2680
    %v2770 = vunpack.c.h.b16 %v2680
    %v2771 = vunpack.c.l.b16 %v2681
    %v2772 = vunpack.c.h.b16 %v2681
    %v2773 = vunpack.c.l.b16 %v2682
    %v2774 = vunpack.c.h.b16 %v2682
    %v2775 = vunpack.c.l.b16 %v2683
    %v2776 = vunpack.c.h.b16 %v2683
    %v2777 = vunpack.c.l.b16 %v2684
    %v2778 = vunpack.c.h.b16 %v2684
    %v2779 = vunpack.c.l.b16 %v2685
    %v2780 = vunpack.c.h.b16 %v2685
    %v2781 = vunpack.c.l.b16 %v2686
    %v2782 = vunpack.c.h.b16 %v2686
    %v2783 = vpack.c.b16 %v2719, %v2719
    %v2784 = vpack.c.b16 %v2720, %v2720
    %v2785 = vpack.c.b16 %v2721, %v2721
    %v2786 = vpack.c.b16 %v2722, %v2722
    %v2787 = vpack.c.b16 %v2723, %v2723
    %v2788 = vpack.c.b16 %v2724, %v2724
    %v2789 = vpack.c.b16 %v2725, %v2725
    %v2790 = vpack.c.b16 %v2726, %v2726
    %v2791 = vpack.c.b16 %v2727, %v2727
    %v2792 = vpack.c.b16 %v2728, %v2728
    %v2793 = vpack.c.b16 %v2729, %v2729
    %v2794 = vpack.c.b16 %v2730, %v2730
    %v2795 = vpack.c.b16 %v2731, %v2731
    %v2796 = vpack.c.b16 %v2732, %v2732
    %v2797 = vpack.c.b16 %v2733, %v2733
    %v2798 = vpack.c.b16 %v2734, %v2734
    %v2799 = vpack.c.b16 %v2735, %v2735
    %v2800 = vpack.c.b16 %v2736, %v2736
    %v2801 = vpack.c.b16 %v2737, %v2737
    %v2802 = vpack.c.b16 %v2738, %v2738
    %v2803 = vpack.c.b16 %v2739, %v2739
    %v2804 = vpack.c.b16 %v2740, %v2740
    %v2805 = vpack.c.b16 %v2741, %v2741
    %v2806 = vpack.c.b16 %v2742, %v2742
    %v2807 = vpack.c.b16 %v2743, %v2743
    %v2808 = vpack.c.b16 %v2744, %v2744
    %v2809 = vpack.c.b16 %v2745, %v2745
    %v2810 = vpack.c.b16 %v2746, %v2746
    %v2811 = vpack.c.b16 %v2747, %v2747
    %v2812 = vpack.c.b16 %v2748, %v2748
    %v2813 = vpack.c.b16 %v2749, %v2749
    %v2814 = vpack.c.b16 %v2750, %v2750
    %v2815 = vpack.c.b16 %v2751, %v2751
    %v2816 = vpack.c.b16 %v2752, %v2752
    %v2817 = vpack.c.b16 %v2753, %v2753
    %v2818 = vpack.c.b16 %v2754, %v2754
    %v2819 = vpack.c.b16 %v2755, %v2755
    %v2820 = vpack.c.b16 %v2756, %v2756
    %v2821 = vpack.c.b16 %v2757, %v2757
    %v2822 = vpack.c.b16 %v2758, %v2758
    %v2823 = vpack.c.b16 %v2759, %v2759
    %v2824 = vpack.c.b16 %v2760, %v2760
    %v2825 = vpack.c.b16 %v2761, %v2761
    %v2826 = vpack.c.b16 %v2762, %v2762
    %v2827 = vpack.c.b16 %v2763, %v2763
    %v2828 = vpack.c.b16 %v2764, %v2764
    %v2829 = vpack.c.b16 %v2765, %v2765
    %v2830 = vpack.c.b16 %v2766, %v2766
    %v2831 = vpack.c.b16 %v2767, %v2767
    %v2832 = vpack.c.b16 %v2768, %v2768
    %v2833 = vpack.c.b16 %v2769, %v2769
    %v2834 = vpack.c.b16 %v2770, %v2770
    %v2835 = vpack.c.b16 %v2771, %v2771
    %v2836 = vpack.c.b16 %v2772, %v2772
    %v2837 = vpack.c.b16 %v2773, %v2773
    %v2838 = vpack.c.b16 %v2774, %v2774
    %v2839 = vpack.c.b16 %v2775, %v2775
    %v2840 = vpack.c.b16 %v2776, %v2776
    %v2841 = vpack.c.b16 %v2777, %v2777
    %v2842 = vpack.c.b16 %v2778, %v2778
    %v2843 = vpack.c.b16 %v2779, %v2779
    %v2844 = vpack.c.b16 %v2780, %v2780
    %v2845 = vpack.c.b16 %v2781, %v2781
    %v2846 = vpack.c.b16 %v2782, %v2782
    %2911 = vst [vmem:[#allocation16] sm:$0xf] %v2783
    %2912 = vst [vmem:[#allocation16 + $0x4] sm:$0xf] %v2784
    %2913 = vst [vmem:[#allocation16 + $0x8] sm:$0xf] %v2785
    %2914 = vst [vmem:[#allocation16 + $0xc] sm:$0xf] %v2786
    %2915 = vst [vmem:[#allocation16 + $0x10] sm:$0xf] %v2787
    %2916 = vst [vmem:[#allocation16 + $0x14] sm:$0xf] %v2788
    %2917 = vst [vmem:[#allocation16 + $0x18] sm:$0xf] %v2789
    %2918 = vst [vmem:[#allocation16 + $0x1c] sm:$0xf] %v2790
    %2919 = vst [vmem:[#allocation16 + $0x20] sm:$0xf] %v2791
    %2920 = vst [vmem:[#allocation16 + $0x24] sm:$0xf] %v2792
    %2921 = vst [vmem:[#allocation16 + $0x28] sm:$0xf] %v2793
    %2922 = vst [vmem:[#allocation16 + $0x2c] sm:$0xf] %v2794
    %2923 = vst [vmem:[#allocation16 + $0x30] sm:$0xf] %v2795
    %2924 = vst [vmem:[#allocation16 + $0x34] sm:$0xf] %v2796
    %2925 = vst [vmem:[#allocation16 + $0x38] sm:$0xf] %v2797
    %2926 = vst [vmem:[#allocation16 + $0x3c] sm:$0xf] %v2798
    %2927 = vst [vmem:[#allocation16 + $0x40] sm:$0xf] %v2799
    %2928 = vst [vmem:[#allocation16 + $0x44] sm:$0xf] %v2800
    %2929 = vst [vmem:[#allocation16 + $0x48] sm:$0xf] %v2801
    %2930 = vst [vmem:[#allocation16 + $0x4c] sm:$0xf] %v2802
    %2931 = vst [vmem:[#allocation16 + $0x50] sm:$0xf] %v2803
    %2932 = vst [vmem:[#allocation16 + $0x54] sm:$0xf] %v2804
    %2933 = vst [vmem:[#allocation16 + $0x58] sm:$0xf] %v2805
    %2934 = vst [vmem:[#allocation16 + $0x5c] sm:$0xf] %v2806
    %2935 = vst [vmem:[#allocation16 + $0x60] sm:$0xf] %v2807
    %2936 = vst [vmem:[#allocation16 + $0x64] sm:$0xf] %v2808
    %2937 = vst [vmem:[#allocation16 + $0x68] sm:$0xf] %v2809
    %2938 = vst [vmem:[#allocation16 + $0x6c] sm:$0xf] %v2810
    %2939 = vst [vmem:[#allocation16 + $0x70] sm:$0xf] %v2811
    %2940 = vst [vmem:[#allocation16 + $0x74] sm:$0xf] %v2812
    %2941 = vst [vmem:[#allocation16 + $0x78] sm:$0xf] %v2813
    %2942 = vst [vmem:[#allocation16 + $0x7c] sm:$0xf] %v2814
    %2943 = vst [vmem:[#allocation16 + $0x80] sm:$0xf] %v2815
    %2944 = vst [vmem:[#allocation16 + $0x84] sm:$0xf] %v2816
    %2945 = vst [vmem:[#allocation16 + $0x88] sm:$0xf] %v2817
    %2946 = vst [vmem:[#allocation16 + $0x8c] sm:$0xf] %v2818
    %2947 = vst [vmem:[#allocation16 + $0x90] sm:$0xf] %v2819
    %2948 = vst [vmem:[#allocation16 + $0x94] sm:$0xf] %v2820
    %2949 = vst [vmem:[#allocation16 + $0x98] sm:$0xf] %v2821
    %2950 = vst [vmem:[#allocation16 + $0x9c] sm:$0xf] %v2822
    %2951 = vst [vmem:[#allocation16 + $0xa0] sm:$0xf] %v2823
    %2952 = vst [vmem:[#allocation16 + $0xa4] sm:$0xf] %v2824
    %2953 = vst [vmem:[#allocation16 + $0xa8] sm:$0xf] %v2825
    %2954 = vst [vmem:[#allocation16 + $0xac] sm:$0xf] %v2826
    %2955 = vst [vmem:[#allocation16 + $0xb0] sm:$0xf] %v2827
    %2956 = vst [vmem:[#allocation16 + $0xb4] sm:$0xf] %v2828
    %2957 = vst [vmem:[#allocation16 + $0xb8] sm:$0xf] %v2829
    %2958 = vst [vmem:[#allocation16 + $0xbc] sm:$0xf] %v2830
    %2959 = vst [vmem:[#allocation16 + $0xc0] sm:$0xf] %v2831
    %2960 = vst [vmem:[#allocation16 + $0xc4] sm:$0xf] %v2832
    %2961 = vst [vmem:[#allocation16 + $0xc8] sm:$0xf] %v2833
    %2962 = vst [vmem:[#allocation16 + $0xcc] sm:$0xf] %v2834
    %2963 = vst [vmem:[#allocation16 + $0xd0] sm:$0xf] %v2835
    %2964 = vst [vmem:[#allocation16 + $0xd4] sm:$0xf] %v2836
    %2965 = vst [vmem:[#allocation16 + $0xd8] sm:$0xf] %v2837
    %2966 = vst [vmem:[#allocation16 + $0xdc] sm:$0xf] %v2838
    %2967 = vst [vmem:[#allocation16 + $0xe0] sm:$0xf] %v2839
    %2968 = vst [vmem:[#allocation16 + $0xe4] sm:$0xf] %v2840
    %2969 = vst [vmem:[#allocation16 + $0xe8] sm:$0xf] %v2841
    %2970 = vst [vmem:[#allocation16 + $0xec] sm:$0xf] %v2842
    %2971 = vst [vmem:[#allocation16 + $0xf0] sm:$0xf] %v2843
    %2972 = vst [vmem:[#allocation16 + $0xf4] sm:$0xf] %v2844
    %2973 = vst [vmem:[#allocation16 + $0xf8] sm:$0xf] %v2845
    %2974 = vst [vmem:[#allocation16 + $0xfc] sm:$0xf] %v2846
    // Predicated region
    $region62: #{tpu_custom_call.1} parent=1 // pred_check
      _
    $region63: #{tpu_custom_call.1} parent=1 // pred_check_branch
      %2976 = sbr.rel (0) target = $region65
    $region64: #{tpu_custom_call.1} parent=1 // pred_region
      %s2978 = ssub.s32 4096, 4096
      %2979 = vsyncadd [#allocation4], %s2978
      %s2980 = sshll.u32 [#allocation13], 4
      %s2981 = int_to_ptr.vmem [resolvable:$true] %s2980
      %2986 = dma.vmem_to_hbm [thread:$0]  %s2981, 4096, %s9, [#allocation4], 256, 256, 16
    $region65: #{tpu_custom_call.1} parent=1 // pred_fallthru
      _
    // Predicated region
    $region66: #{tpu_custom_call.1} parent=1 // pred_check
      _
    $region67: #{tpu_custom_call.1} parent=1 // pred_check_branch
      %2988 = sbr.rel (0) target = $region69
    $region68: #{tpu_custom_call.1} parent=1 // pred_region
      %s2990 = ssub.s32 4096, 4096
      %2991 = vsyncadd [#allocation15], %s2990
      %s2992 = sshll.u32 [#allocation14], 4
      %s2993 = int_to_ptr.vmem [resolvable:$true] %s2992
      %2998 = dma.vmem_to_hbm [thread:$0]  %s2993, 4096, %s10, [#allocation15], 256, 256, 16
    $region69: #{tpu_custom_call.1} parent=1 // pred_fallthru
      _
    // Predicated region
    $region70: #{tpu_custom_call.1} parent=1 // pred_check
      _
    $region71: #{tpu_custom_call.1} parent=1 // pred_check_branch
      %3000 = sbr.rel (0) target = $region73
    $region72: #{tpu_custom_call.1} parent=1 // pred_region
      %s3002 = ssub.s32 4096, 4096
      %3003 = vsyncadd [#allocation15], %s3002
      %s3004 = sshll.u32 [#allocation16], 4
      %s3005 = int_to_ptr.vmem [resolvable:$true] %s3004
      %3010 = dma.vmem_to_hbm [thread:$0]  %s3005, 4096, %s11, [#allocation15], 64, 64, 4
    $region73: #{tpu_custom_call.1} parent=1 // pred_fallthru
      _
    // Predicated region
    $region74: #{tpu_custom_call.1} parent=1 // pred_check
      _
    $region75: #{tpu_custom_call.1} parent=1 // pred_check_branch
      %3012 = sbr.rel (0) target = $region77
    $region76: #{tpu_custom_call.1} parent=1 // pred_region
      %3013 = dma.done [#allocation4], 4096
    $region77: #{tpu_custom_call.1} parent=1 // pred_fallthru
      _
    // Predicated region
    $region78: #{tpu_custom_call.1} parent=1 // pred_check
      _
    $region79: #{tpu_custom_call.1} parent=1 // pred_check_branch
      %3015 = sbr.rel (0) target = $region81
    $region80: #{tpu_custom_call.1} parent=1 // pred_region
      %3016 = dma.done [#allocation15], 4096
    $region81: #{tpu_custom_call.1} parent=1 // pred_fallthru
      _
    // Predicated region
    $region82: #{tpu_custom_call.1} parent=1 // pred_check
      _
    $region83: #{tpu_custom_call.1} parent=1 // pred_check_branch
      %3018 = sbr.rel (0) target = $region85
    $region84: #{tpu_custom_call.1} parent=1 // pred_region
      %3019 = dma.done [#allocation15], 4096
    $region85: #{tpu_custom_call.1} parent=1 // pred_fallthru
      _
    %3020 = vsyncpa [#allocation3], 1
    %3021 = vsyncpa [#allocation6], 1
    %3022 = vsyncpa [#allocation9], 1
    %3023 = vsyncpa [#allocation12], 1
    %3024 = vsyncpa [#allocation4], 1
    %3025 = vsyncpa [#allocation15], 1

</llo_original>
